<compile_context>
chip_gen: v5e
topology: v5e:2x2
jax: 0.10.0
libtpu: 0.0.40
codegen_flags: <defaults>
</compile_context>

<pallas_src>
import math

import jax
import jax.numpy as jnp
from jax.experimental import pallas as pl
from jax.experimental.pallas import tpu as pltpu

LAYERS = [2, 20, 20, 20, 20, 20, 20, 20, 20, 1]
DEPTH = len(LAYERS) - 1          # 9 linear layers (8 with tanh + final linear)
NUM_MID = DEPTH - 2              # 7 hidden 20->20 layers (bf16 weights)
FPAD = 32                        # padded feature width (sublane axis)
IN_ROWS = 8                      # input slab sublane rows (rows 0..1 real)
HALF = 256                       # lanes per independent stream
PAIR = 2 * HALF                  # lanes per interleaved stream pair
MAX_PAIRS_PER_STEP = 4           # up to 2048 lanes per grid step

# ---- chip-generation gating (host-side, trace-time constants) ----------------
_KIND = jax.devices()[0].device_kind.lower()
# bf16 VPU/EUP exists on v6e and newer; keep f32 tanh path on v5e/v5p/v4/...
BF16_ACT = not any(t in _KIND for t in ("v2", "v3", "v4", "v5"))
# v7x has 2 TensorCores per chip -> shard the grid; older chips: serial grid.
TWO_TC = "v7" in _KIND
ACT_DTYPE = jnp.bfloat16 if BF16_ACT else jnp.float32


def make_mlp_kernel(pairs):
    """Kernel factory: `pairs` 512-lane pairs per grid step (static unroll)."""

    def kernel(x_ref, w0_ref, wm_ref, wl_ref, bh_ref, bl_ref, o_ref):
        # x_ref : (IN_ROWS, tb)        f32, rows 0..1 real, rest zero
        # w0_ref: (FPAD, IN_ROWS)      f32  layer-0 weight (out, in), zero padded
        # wm_ref: (NUM_MID, FPAD, FPAD) bf16 hidden weights (out, in), zero padded
        # wl_ref: (FPAD, 1)            f32  last-layer weight as a column
        # bh_ref: (DEPTH-1, FPAD, 1)   f32  biases of the 8 tanh layers
        # bl_ref: (1, 1)               f32  last-layer bias
        # o_ref : (1, tb)              f32
        w0 = w0_ref[...]                                   # (32, 8)  f32
        wl = wl_ref[...]                                   # (32, 1)  f32
        bl = bl_ref[...]                                   # (1, 1)   f32
        b0 = bh_ref[0]                                     # (32, 1)  f32

        for p in range(pairs):                             # static unroll over pairs
            s0 = p * PAIR                                  # static, 256-aligned
            s1 = s0 + HALF
            # Two independent 256-lane streams -> ILP across the serial chain.
            x0 = x_ref[:, s0:s0 + HALF]                    # (8, 256) f32
            x1 = x_ref[:, s1:s1 + HALF]

            # Layer 0 in f32 (tiny K, keeps raw (x,t) coords exact).
            y0 = jnp.dot(w0, x0, preferred_element_type=jnp.float32) + b0
            y1 = jnp.dot(w0, x1, preferred_element_type=jnp.float32) + b0
            h0 = jnp.tanh(y0.astype(ACT_DTYPE))
            h1 = jnp.tanh(y1.astype(ACT_DTYPE))

            # 7 hidden layers: bf16 MXU matmul, f32 accumulate + bias,
            # generation-gated activation dtype. Zero padding is invariant
            # (padded weight rows/cols and biases are 0, tanh(0) = 0).
            for i in range(NUM_MID):                       # static unroll: 7 layers
                wi = wm_ref[i]                             # (32, 32) bf16
                bi = bh_ref[i + 1]                         # (32, 1)  f32
                y0 = jnp.dot(wi, h0.astype(jnp.bfloat16),
                             preferred_element_type=jnp.float32) + bi
                y1 = jnp.dot(wi, h1.astype(jnp.bfloat16),
                             preferred_element_type=jnp.float32) + bi
                h0 = jnp.tanh(y0.astype(ACT_DTYPE))
                h1 = jnp.tanh(y1.astype(ACT_DTYPE))

            # Final 20 -> 1 layer: lane-wise multiply + sublane (XLU) reduction
            # in f32; produces the single real output row directly.
            o0 = jnp.sum(wl * h0.astype(jnp.float32), axis=0, keepdims=True) + bl
            o1 = jnp.sum(wl * h1.astype(jnp.float32), axis=0, keepdims=True) + bl
            o_ref[:, s0:s0 + HALF] = o0
            o_ref[:, s1:s1 + HALF] = o1

    return kernel


def pack_params(weights, biases):
    """Pack per-layer (in, out) weights / biases into padded slabs. Run ONCE."""
    w0 = jnp.zeros((FPAD, IN_ROWS), jnp.float32)
    w0 = w0.at[:LAYERS[1], :LAYERS[0]].set(weights[0].T)            # (out, in), f32
    wm = jnp.zeros((NUM_MID, FPAD, FPAD), jnp.float32)
    for i in range(1, DEPTH - 1):
        fin, fout = LAYERS[i], LAYERS[i + 1]
        wm = wm.at[i - 1, :fout, :fin].set(weights[i].T)             # (out, in)
    wl = jnp.zeros((FPAD, 1), jnp.float32)
    wl = wl.at[:LAYERS[-2], 0].set(weights[-1][:, 0])                # column vector
    bh = jnp.zeros((DEPTH - 1, FPAD, 1), jnp.float32)
    for i in range(DEPTH - 1):
        bh = bh.at[i, :LAYERS[i + 1], 0].set(biases[i])
    bl = jnp.asarray(biases[-1], jnp.float32).reshape(1, 1)
    return dict(w0=w0, wm=wm.astype(jnp.bfloat16), wl=wl, bh=bh, bl=bl)


def _pick_tiling(n):
    """Lane-tile selection, gated on chip generation (static Python ints)."""
    n_pairs = max(1, -(-n // PAIR))
    if TWO_TC and n_pairs >= 2:
        # v7x: shard the parallel grid axis across 2 TensorCores; keep the
        # grid even so both cores get equal step counts.
        per_step = min(MAX_PAIRS_PER_STEP, -(-n_pairs // 2))
        grid = -(-n_pairs // per_step)
        if grid % 2:
            grid += 1
    else:
        # Single TensorCore: the grid loop is purely serial -> fewest steps.
        per_step = min(MAX_PAIRS_PER_STEP, n_pairs)
        grid = -(-n_pairs // per_step)
    tb = per_step * PAIR
    return tb, grid, grid * tb, per_step


def dnn_forward_fb(x_fb, params):
    """Feature-major forward: x_fb [2, N] -> [1, N] (no wrapper transposes)."""
    in_dim, n = x_fb.shape
    assert in_dim == LAYERS[0]
    tb, grid, n_pad, per_step = _pick_tiling(n)

    # Lane-dense, zero-padded input slab: batch on lanes, features on sublanes.
    x_p = jnp.zeros((IN_ROWS, n_pad), jnp.float32).at[:in_dim, :n].set(x_fb)

    out_pad = pl.pallas_call(
        make_mlp_kernel(per_step),
        out_shape=jax.ShapeDtypeStruct((1, n_pad), jnp.float32),
        grid_spec=pltpu.PrefetchScalarGridSpec(
            num_scalar_prefetch=0,
            grid=(grid,),
            in_specs=[
                pl.BlockSpec((IN_ROWS, tb), lambda i: (0, i)),            # x tile
                pl.BlockSpec((FPAD, IN_ROWS), lambda i: (0, 0)),          # W0 (resident)
                pl.BlockSpec((NUM_MID, FPAD, FPAD), lambda i: (0, 0, 0)), # W1..7
                pl.BlockSpec((FPAD, 1), lambda i: (0, 0)),                # W_last
                pl.BlockSpec((DEPTH - 1, FPAD, 1), lambda i: (0, 0, 0)),  # b0..7
                pl.BlockSpec((1, 1), lambda i: (0, 0)),                   # b_last
            ],
            out_specs=pl.BlockSpec((1, tb), lambda i: (0, i)),
        ),
        compiler_params=pltpu.CompilerParams(
            dimension_semantics=("parallel",)),
    )(x_p, params["w0"], params["wm"], params["wl"], params["bh"], params["bl"])

    return out_pad[:, :n]


def dnn_forward(x, params):
    """Module-equivalent interface: x [N, 2] float32 -> [N, 1] float32."""
    return dnn_forward_fb(x.T, params).T


def init_params(key):
    """Deterministic init mimicking torch.nn.Linear default U[-1/sqrt(fan_in), +]."""
    weights, biases = [], []
    for i in range(DEPTH):
        fin, fout = LAYERS[i], LAYERS[i + 1]
        key, kw, kb = jax.random.split(key, 3)
        bound = 1.0 / math.sqrt(fin)
        # stored as (in, out) so the math reference is x @ W + b
        weights.append(jax.random.uniform(kw, (fin, fout), jnp.float32, -bound, bound))
        biases.append(jax.random.uniform(kb, (fout,), jnp.float32, -bound, bound))
    return weights, biases


if __name__ == "__main__":
    key = jax.random.PRNGKey(0)
    key, kx = jax.random.split(key)

    N = 2048                                              # collocation points (x, t)
    x = jax.random.uniform(kx, (N, 2), jnp.float32, -1.0, 1.0)

    weights, biases = init_params(key)
    params = pack_params(weights, biases)                 # packed once, reused per call

    fwd = jax.jit(dnn_forward)
    out = jax.block_until_ready(fwd(x, params))
    assert out.shape == (N, 1)

    # Reference 1: mirrors the kernel arithmetic (layer 0 and last layer f32,
    # hidden matmuls bf16 with f32 accumulation, generation-gated act dtype).
    h = jnp.tanh((x @ weights[0] + biases[0]).astype(ACT_DTYPE))
    for i in range(1, DEPTH - 1):
        y = jnp.dot(h.astype(jnp.bfloat16), weights[i].astype(jnp.bfloat16),
                    preferred_element_type=jnp.float32) + biases[i]
        h = jnp.tanh(y.astype(ACT_DTYPE))
    ref_matched = jnp.dot(h.astype(jnp.float32), weights[-1]) + biases[-1]
    assert jnp.allclose(out, ref_matched, atol=2e-2, rtol=2e-2), (
        "max |diff| = %f" % float(jnp.max(jnp.abs(out - ref_matched))))

    # Reference 2: pure f32 (loose: bounds the overall low-precision error).
    h = x
    for i in range(DEPTH):
        h = h @ weights[i] + biases[i]
        if i < DEPTH - 1:
            h = jnp.tanh(h)
    ref_f32 = h
    assert jnp.allclose(out, ref_f32, atol=2.5e-1, rtol=2.5e-1)

    print("KERNEL_OK")
</pallas_src>

<mosaic_0001>
module attributes {stable_mosaic.version = 11 : i64} {
  func.func @kernel(%arg0: i32, %arg1: memref<8x2048xf32, #tpu.memory_space<vmem>>, %arg2: memref<32x8xf32, #tpu.memory_space<vmem>>, %arg3: memref<7x32x32xbf16, #tpu.memory_space<vmem>>, %arg4: memref<32x1xf32, #tpu.memory_space<vmem>>, %arg5: memref<8x32x1xf32, #tpu.memory_space<vmem>>, %arg6: memref<1x1xf32, #tpu.memory_space<vmem>>, %arg7: memref<1x2048xf32, #tpu.memory_space<vmem>>) attributes {dimension_semantics = [#tpu.dimension_semantics<parallel>], iteration_bounds = array<i64: 1>, scalar_prefetch = 0 : i64, scratch_operands = 0 : i64, tpu.core_type = #tpu.core_type<tc>, window_params = [{transform_indices = @transform_0, window_bounds = array<i64: 8, 2048>}, {pipeline_mode = #tpu.pipeline_mode<synchronous>, transform_indices = @transform_1, window_bounds = array<i64: 32, 8>}, {pipeline_mode = #tpu.pipeline_mode<synchronous>, transform_indices = @transform_2, window_bounds = array<i64: 7, 32, 32>}, {pipeline_mode = #tpu.pipeline_mode<synchronous>, transform_indices = @transform_3, window_bounds = array<i64: 32, 1>}, {pipeline_mode = #tpu.pipeline_mode<synchronous>, transform_indices = @transform_4, window_bounds = array<i64: 8, 32, 1>}, {pipeline_mode = #tpu.pipeline_mode<synchronous>, transform_indices = @transform_5, window_bounds = array<i64: 1, 1>}, {transform_indices = @transform_6, window_bounds = array<i64: 1, 2048>}]} {
    %c0 = arith.constant 0 : index
    %c0_0 = arith.constant 0 : index
    %0 = vector.load %arg2[%c0, %c0_0] : memref<32x8xf32, #tpu.memory_space<vmem>>, vector<32x8xf32>
    %c0_1 = arith.constant 0 : index
    %c0_2 = arith.constant 0 : index
    %1 = vector.load %arg4[%c0_1, %c0_2] : memref<32x1xf32, #tpu.memory_space<vmem>>, vector<32x1xf32>
    %c0_3 = arith.constant 0 : index
    %c0_4 = arith.constant 0 : index
    %2 = vector.load %arg6[%c0_3, %c0_4] : memref<1x1xf32, #tpu.memory_space<vmem>>, vector<1x1xf32>
    %c0_5 = arith.constant 0 : index
    %c0_6 = arith.constant 0 : index
    %c0_7 = arith.constant 0 : index
    %3 = vector.load %arg5[%c0_5, %c0_6, %c0_7] : memref<8x32x1xf32, #tpu.memory_space<vmem>>, vector<1x32x1xf32>
    %4 = vector.shape_cast %3 : vector<1x32x1xf32> to vector<32x1xf32>
    %c0_8 = arith.constant 0 : index
    %c0_9 = arith.constant 0 : index
    %5 = vector.load %arg1[%c0_8, %c0_9] : memref<8x2048xf32, #tpu.memory_space<vmem>>, vector<8x256xf32>
    %c0_10 = arith.constant 0 : index
    %c256 = arith.constant 256 : index
    %6 = vector.load %arg1[%c0_10, %c256] : memref<8x2048xf32, #tpu.memory_space<vmem>>, vector<8x256xf32>
    %cst = arith.constant dense<0.000000e+00> : vector<32x256xf32>
    %7 = tpu.matmul %0, %5, %cst {dimension_numbers = #tpu.dot_dimension_numbers<[1], [0], [0], [1], [0, 0, 1, 1], [], []>} : vector<32x8xf32>, vector<8x256xf32>, vector<32x256xf32> -> vector<32x256xf32>
    %8 = vector.broadcast %4 : vector<32x1xf32> to vector<32x256xf32>
    %9 = arith.addf %7, %8 : vector<32x256xf32>
    %cst_11 = arith.constant dense<0.000000e+00> : vector<32x256xf32>
    %10 = tpu.matmul %0, %6, %cst_11 {dimension_numbers = #tpu.dot_dimension_numbers<[1], [0], [0], [1], [0, 0, 1, 1], [], []>} : vector<32x8xf32>, vector<8x256xf32>, vector<32x256xf32> -> vector<32x256xf32>
    %11 = vector.broadcast %4 : vector<32x1xf32> to vector<32x256xf32>
    %12 = arith.addf %10, %11 : vector<32x256xf32>
    %13 = arith.truncf %9 : vector<32x256xf32> to vector<32x256xbf16>
    %14 = math.tanh %13 : vector<32x256xbf16>
    %15 = arith.truncf %12 : vector<32x256xf32> to vector<32x256xbf16>
    %16 = math.tanh %15 : vector<32x256xbf16>
    %c0_12 = arith.constant 0 : index
    %c0_13 = arith.constant 0 : index
    %c0_14 = arith.constant 0 : index
    %17 = vector.load %arg3[%c0_12, %c0_13, %c0_14] : memref<7x32x32xbf16, #tpu.memory_space<vmem>>, vector<1x32x32xbf16>
    %18 = vector.shape_cast %17 : vector<1x32x32xbf16> to vector<32x32xbf16>
    %c1 = arith.constant 1 : index
    %c0_15 = arith.constant 0 : index
    %c0_16 = arith.constant 0 : index
    %19 = vector.load %arg5[%c1, %c0_15, %c0_16] : memref<8x32x1xf32, #tpu.memory_space<vmem>>, vector<1x32x1xf32>
    %20 = vector.shape_cast %19 : vector<1x32x1xf32> to vector<32x1xf32>
    %cst_17 = arith.constant dense<0.000000e+00> : vector<32x256xf32>
    %21 = tpu.matmul %18, %14, %cst_17 {dimension_numbers = #tpu.dot_dimension_numbers<[1], [0], [0], [1], [0, 0, 1, 1], [], []>} : vector<32x32xbf16>, vector<32x256xbf16>, vector<32x256xf32> -> vector<32x256xf32>
    %22 = vector.broadcast %20 : vector<32x1xf32> to vector<32x256xf32>
    %23 = arith.addf %21, %22 : vector<32x256xf32>
    %cst_18 = arith.constant dense<0.000000e+00> : vector<32x256xf32>
    %24 = tpu.matmul %18, %16, %cst_18 {dimension_numbers = #tpu.dot_dimension_numbers<[1], [0], [0], [1], [0, 0, 1, 1], [], []>} : vector<32x32xbf16>, vector<32x256xbf16>, vector<32x256xf32> -> vector<32x256xf32>
    %25 = vector.broadcast %20 : vector<32x1xf32> to vector<32x256xf32>
    %26 = arith.addf %24, %25 : vector<32x256xf32>
    %27 = arith.truncf %23 : vector<32x256xf32> to vector<32x256xbf16>
    %28 = math.tanh %27 : vector<32x256xbf16>
    %29 = arith.truncf %26 : vector<32x256xf32> to vector<32x256xbf16>
    %30 = math.tanh %29 : vector<32x256xbf16>
    %c1_19 = arith.constant 1 : index
    %c0_20 = arith.constant 0 : index
    %c0_21 = arith.constant 0 : index
    %31 = vector.load %arg3[%c1_19, %c0_20, %c0_21] : memref<7x32x32xbf16, #tpu.memory_space<vmem>>, vector<1x32x32xbf16>
    %32 = vector.shape_cast %31 : vector<1x32x32xbf16> to vector<32x32xbf16>
    %c2 = arith.constant 2 : index
    %c0_22 = arith.constant 0 : index
    %c0_23 = arith.constant 0 : index
    %33 = vector.load %arg5[%c2, %c0_22, %c0_23] : memref<8x32x1xf32, #tpu.memory_space<vmem>>, vector<1x32x1xf32>
    %34 = vector.shape_cast %33 : vector<1x32x1xf32> to vector<32x1xf32>
    %cst_24 = arith.constant dense<0.000000e+00> : vector<32x256xf32>
    %35 = tpu.matmul %32, %28, %cst_24 {dimension_numbers = #tpu.dot_dimension_numbers<[1], [0], [0], [1], [0, 0, 1, 1], [], []>} : vector<32x32xbf16>, vector<32x256xbf16>, vector<32x256xf32> -> vector<32x256xf32>
    %36 = vector.broadcast %34 : vector<32x1xf32> to vector<32x256xf32>
    %37 = arith.addf %35, %36 : vector<32x256xf32>
    %cst_25 = arith.constant dense<0.000000e+00> : vector<32x256xf32>
    %38 = tpu.matmul %32, %30, %cst_25 {dimension_numbers = #tpu.dot_dimension_numbers<[1], [0], [0], [1], [0, 0, 1, 1], [], []>} : vector<32x32xbf16>, vector<32x256xbf16>, vector<32x256xf32> -> vector<32x256xf32>
    %39 = vector.broadcast %34 : vector<32x1xf32> to vector<32x256xf32>
    %40 = arith.addf %38, %39 : vector<32x256xf32>
    %41 = arith.truncf %37 : vector<32x256xf32> to vector<32x256xbf16>
    %42 = math.tanh %41 : vector<32x256xbf16>
    %43 = arith.truncf %40 : vector<32x256xf32> to vector<32x256xbf16>
    %44 = math.tanh %43 : vector<32x256xbf16>
    %c2_26 = arith.constant 2 : index
    %c0_27 = arith.constant 0 : index
    %c0_28 = arith.constant 0 : index
    %45 = vector.load %arg3[%c2_26, %c0_27, %c0_28] : memref<7x32x32xbf16, #tpu.memory_space<vmem>>, vector<1x32x32xbf16>
    %46 = vector.shape_cast %45 : vector<1x32x32xbf16> to vector<32x32xbf16>
    %c3 = arith.constant 3 : index
    %c0_29 = arith.constant 0 : index
    %c0_30 = arith.constant 0 : index
    %47 = vector.load %arg5[%c3, %c0_29, %c0_30] : memref<8x32x1xf32, #tpu.memory_space<vmem>>, vector<1x32x1xf32>
    %48 = vector.shape_cast %47 : vector<1x32x1xf32> to vector<32x1xf32>
    %cst_31 = arith.constant dense<0.000000e+00> : vector<32x256xf32>
    %49 = tpu.matmul %46, %42, %cst_31 {dimension_numbers = #tpu.dot_dimension_numbers<[1], [0], [0], [1], [0, 0, 1, 1], [], []>} : vector<32x32xbf16>, vector<32x256xbf16>, vector<32x256xf32> -> vector<32x256xf32>
    %50 = vector.broadcast %48 : vector<32x1xf32> to vector<32x256xf32>
    %51 = arith.addf %49, %50 : vector<32x256xf32>
    %cst_32 = arith.constant dense<0.000000e+00> : vector<32x256xf32>
    %52 = tpu.matmul %46, %44, %cst_32 {dimension_numbers = #tpu.dot_dimension_numbers<[1], [0], [0], [1], [0, 0, 1, 1], [], []>} : vector<32x32xbf16>, vector<32x256xbf16>, vector<32x256xf32> -> vector<32x256xf32>
    %53 = vector.broadcast %48 : vector<32x1xf32> to vector<32x256xf32>
    %54 = arith.addf %52, %53 : vector<32x256xf32>
    %55 = arith.truncf %51 : vector<32x256xf32> to vector<32x256xbf16>
    %56 = math.tanh %55 : vector<32x256xbf16>
    %57 = arith.truncf %54 : vector<32x256xf32> to vector<32x256xbf16>
    %58 = math.tanh %57 : vector<32x256xbf16>
    %c3_33 = arith.constant 3 : index
    %c0_34 = arith.constant 0 : index
    %c0_35 = arith.constant 0 : index
    %59 = vector.load %arg3[%c3_33, %c0_34, %c0_35] : memref<7x32x32xbf16, #tpu.memory_space<vmem>>, vector<1x32x32xbf16>
    %60 = vector.shape_cast %59 : vector<1x32x32xbf16> to vector<32x32xbf16>
    %c4 = arith.constant 4 : index
    %c0_36 = arith.constant 0 : index
    %c0_37 = arith.constant 0 : index
    %61 = vector.load %arg5[%c4, %c0_36, %c0_37] : memref<8x32x1xf32, #tpu.memory_space<vmem>>, vector<1x32x1xf32>
    %62 = vector.shape_cast %61 : vector<1x32x1xf32> to vector<32x1xf32>
    %cst_38 = arith.constant dense<0.000000e+00> : vector<32x256xf32>
    %63 = tpu.matmul %60, %56, %cst_38 {dimension_numbers = #tpu.dot_dimension_numbers<[1], [0], [0], [1], [0, 0, 1, 1], [], []>} : vector<32x32xbf16>, vector<32x256xbf16>, vector<32x256xf32> -> vector<32x256xf32>
    %64 = vector.broadcast %62 : vector<32x1xf32> to vector<32x256xf32>
    %65 = arith.addf %63, %64 : vector<32x256xf32>
    %cst_39 = arith.constant dense<0.000000e+00> : vector<32x256xf32>
    %66 = tpu.matmul %60, %58, %cst_39 {dimension_numbers = #tpu.dot_dimension_numbers<[1], [0], [0], [1], [0, 0, 1, 1], [], []>} : vector<32x32xbf16>, vector<32x256xbf16>, vector<32x256xf32> -> vector<32x256xf32>
    %67 = vector.broadcast %62 : vector<32x1xf32> to vector<32x256xf32>
    %68 = arith.addf %66, %67 : vector<32x256xf32>
    %69 = arith.truncf %65 : vector<32x256xf32> to vector<32x256xbf16>
    %70 = math.tanh %69 : vector<32x256xbf16>
    %71 = arith.truncf %68 : vector<32x256xf32> to vector<32x256xbf16>
    %72 = math.tanh %71 : vector<32x256xbf16>
    %c4_40 = arith.constant 4 : index
    %c0_41 = arith.constant 0 : index
    %c0_42 = arith.constant 0 : index
    %73 = vector.load %arg3[%c4_40, %c0_41, %c0_42] : memref<7x32x32xbf16, #tpu.memory_space<vmem>>, vector<1x32x32xbf16>
    %74 = vector.shape_cast %73 : vector<1x32x32xbf16> to vector<32x32xbf16>
    %c5 = arith.constant 5 : index
    %c0_43 = arith.constant 0 : index
    %c0_44 = arith.constant 0 : index
    %75 = vector.load %arg5[%c5, %c0_43, %c0_44] : memref<8x32x1xf32, #tpu.memory_space<vmem>>, vector<1x32x1xf32>
    %76 = vector.shape_cast %75 : vector<1x32x1xf32> to vector<32x1xf32>
    %cst_45 = arith.constant dense<0.000000e+00> : vector<32x256xf32>
    %77 = tpu.matmul %74, %70, %cst_45 {dimension_numbers = #tpu.dot_dimension_numbers<[1], [0], [0], [1], [0, 0, 1, 1], [], []>} : vector<32x32xbf16>, vector<32x256xbf16>, vector<32x256xf32> -> vector<32x256xf32>
    %78 = vector.broadcast %76 : vector<32x1xf32> to vector<32x256xf32>
    %79 = arith.addf %77, %78 : vector<32x256xf32>
    %cst_46 = arith.constant dense<0.000000e+00> : vector<32x256xf32>
    %80 = tpu.matmul %74, %72, %cst_46 {dimension_numbers = #tpu.dot_dimension_numbers<[1], [0], [0], [1], [0, 0, 1, 1], [], []>} : vector<32x32xbf16>, vector<32x256xbf16>, vector<32x256xf32> -> vector<32x256xf32>
    %81 = vector.broadcast %76 : vector<32x1xf32> to vector<32x256xf32>
    %82 = arith.addf %80, %81 : vector<32x256xf32>
    %83 = arith.truncf %79 : vector<32x256xf32> to vector<32x256xbf16>
    %84 = math.tanh %83 : vector<32x256xbf16>
    %85 = arith.truncf %82 : vector<32x256xf32> to vector<32x256xbf16>
    %86 = math.tanh %85 : vector<32x256xbf16>
    %c5_47 = arith.constant 5 : index
    %c0_48 = arith.constant 0 : index
    %c0_49 = arith.constant 0 : index
    %87 = vector.load %arg3[%c5_47, %c0_48, %c0_49] : memref<7x32x32xbf16, #tpu.memory_space<vmem>>, vector<1x32x32xbf16>
    %88 = vector.shape_cast %87 : vector<1x32x32xbf16> to vector<32x32xbf16>
    %c6 = arith.constant 6 : index
    %c0_50 = arith.constant 0 : index
    %c0_51 = arith.constant 0 : index
    %89 = vector.load %arg5[%c6, %c0_50, %c0_51] : memref<8x32x1xf32, #tpu.memory_space<vmem>>, vector<1x32x1xf32>
    %90 = vector.shape_cast %89 : vector<1x32x1xf32> to vector<32x1xf32>
    %cst_52 = arith.constant dense<0.000000e+00> : vector<32x256xf32>
    %91 = tpu.matmul %88, %84, %cst_52 {dimension_numbers = #tpu.dot_dimension_numbers<[1], [0], [0], [1], [0, 0, 1, 1], [], []>} : vector<32x32xbf16>, vector<32x256xbf16>, vector<32x256xf32> -> vector<32x256xf32>
    %92 = vector.broadcast %90 : vector<32x1xf32> to vector<32x256xf32>
    %93 = arith.addf %91, %92 : vector<32x256xf32>
    %cst_53 = arith.constant dense<0.000000e+00> : vector<32x256xf32>
    %94 = tpu.matmul %88, %86, %cst_53 {dimension_numbers = #tpu.dot_dimension_numbers<[1], [0], [0], [1], [0, 0, 1, 1], [], []>} : vector<32x32xbf16>, vector<32x256xbf16>, vector<32x256xf32> -> vector<32x256xf32>
    %95 = vector.broadcast %90 : vector<32x1xf32> to vector<32x256xf32>
    %96 = arith.addf %94, %95 : vector<32x256xf32>
    %97 = arith.truncf %93 : vector<32x256xf32> to vector<32x256xbf16>
    %98 = math.tanh %97 : vector<32x256xbf16>
    %99 = arith.truncf %96 : vector<32x256xf32> to vector<32x256xbf16>
    %100 = math.tanh %99 : vector<32x256xbf16>
    %c6_54 = arith.constant 6 : index
    %c0_55 = arith.constant 0 : index
    %c0_56 = arith.constant 0 : index
    %101 = vector.load %arg3[%c6_54, %c0_55, %c0_56] : memref<7x32x32xbf16, #tpu.memory_space<vmem>>, vector<1x32x32xbf16>
    %102 = vector.shape_cast %101 : vector<1x32x32xbf16> to vector<32x32xbf16>
    %c7 = arith.constant 7 : index
    %c0_57 = arith.constant 0 : index
    %c0_58 = arith.constant 0 : index
    %103 = vector.load %arg5[%c7, %c0_57, %c0_58] : memref<8x32x1xf32, #tpu.memory_space<vmem>>, vector<1x32x1xf32>
    %104 = vector.shape_cast %103 : vector<1x32x1xf32> to vector<32x1xf32>
    %cst_59 = arith.constant dense<0.000000e+00> : vector<32x256xf32>
    %105 = tpu.matmul %102, %98, %cst_59 {dimension_numbers = #tpu.dot_dimension_numbers<[1], [0], [0], [1], [0, 0, 1, 1], [], []>} : vector<32x32xbf16>, vector<32x256xbf16>, vector<32x256xf32> -> vector<32x256xf32>
    %106 = vector.broadcast %104 : vector<32x1xf32> to vector<32x256xf32>
    %107 = arith.addf %105, %106 : vector<32x256xf32>
    %cst_60 = arith.constant dense<0.000000e+00> : vector<32x256xf32>
    %108 = tpu.matmul %102, %100, %cst_60 {dimension_numbers = #tpu.dot_dimension_numbers<[1], [0], [0], [1], [0, 0, 1, 1], [], []>} : vector<32x32xbf16>, vector<32x256xbf16>, vector<32x256xf32> -> vector<32x256xf32>
    %109 = vector.broadcast %104 : vector<32x1xf32> to vector<32x256xf32>
    %110 = arith.addf %108, %109 : vector<32x256xf32>
    %111 = arith.truncf %107 : vector<32x256xf32> to vector<32x256xbf16>
    %112 = math.tanh %111 : vector<32x256xbf16>
    %113 = arith.truncf %110 : vector<32x256xf32> to vector<32x256xbf16>
    %114 = math.tanh %113 : vector<32x256xbf16>
    %115 = arith.extf %112 : vector<32x256xbf16> to vector<32x256xf32>
    %116 = vector.broadcast %1 : vector<32x1xf32> to vector<32x256xf32>
    %117 = arith.mulf %116, %115 : vector<32x256xf32>
    %cst_61 = arith.constant dense<0.000000e+00> : vector<256xf32>
    %118 = vector.multi_reduction <add>, %117, %cst_61 [0] : vector<32x256xf32> to vector<256xf32>
    %119 = vector.shape_cast %118 : vector<256xf32> to vector<1x256xf32>
    %120 = vector.broadcast %2 : vector<1x1xf32> to vector<1x256xf32>
    %121 = arith.addf %119, %120 : vector<1x256xf32>
    %122 = arith.extf %114 : vector<32x256xbf16> to vector<32x256xf32>
    %123 = vector.broadcast %1 : vector<32x1xf32> to vector<32x256xf32>
    %124 = arith.mulf %123, %122 : vector<32x256xf32>
    %cst_62 = arith.constant dense<0.000000e+00> : vector<256xf32>
    %125 = vector.multi_reduction <add>, %124, %cst_62 [0] : vector<32x256xf32> to vector<256xf32>
    %126 = vector.shape_cast %125 : vector<256xf32> to vector<1x256xf32>
    %127 = vector.broadcast %2 : vector<1x1xf32> to vector<1x256xf32>
    %128 = arith.addf %126, %127 : vector<1x256xf32>
    %c0_63 = arith.constant 0 : index
    %c0_64 = arith.constant 0 : index
    %129 = vector.load %arg7[%c0_63, %c0_64] : memref<1x2048xf32, #tpu.memory_space<vmem>>, vector<1x256xf32>
    tpu.vector_store %arg7[%c0_63, %c0_64], %121 {strides = array<i32>} : memref<1x2048xf32, #tpu.memory_space<vmem>>, vector<1x256xf32>,
    %c0_65 = arith.constant 0 : index
    %c256_66 = arith.constant 256 : index
    %130 = vector.load %arg7[%c0_65, %c256_66] : memref<1x2048xf32, #tpu.memory_space<vmem>>, vector<1x256xf32>
    tpu.vector_store %arg7[%c0_65, %c256_66], %128 {strides = array<i32>} : memref<1x2048xf32, #tpu.memory_space<vmem>>, vector<1x256xf32>,
    %c0_67 = arith.constant 0 : index
    %c512 = arith.constant 512 : index
    %131 = vector.load %arg1[%c0_67, %c512] : memref<8x2048xf32, #tpu.memory_space<vmem>>, vector<8x256xf32>
    %c0_68 = arith.constant 0 : index
    %c768 = arith.constant 768 : index
    %132 = vector.load %arg1[%c0_68, %c768] : memref<8x2048xf32, #tpu.memory_space<vmem>>, vector<8x256xf32>
    %cst_69 = arith.constant dense<0.000000e+00> : vector<32x256xf32>
    %133 = tpu.matmul %0, %131, %cst_69 {dimension_numbers = #tpu.dot_dimension_numbers<[1], [0], [0], [1], [0, 0, 1, 1], [], []>} : vector<32x8xf32>, vector<8x256xf32>, vector<32x256xf32> -> vector<32x256xf32>
    %134 = vector.broadcast %4 : vector<32x1xf32> to vector<32x256xf32>
    %135 = arith.addf %133, %134 : vector<32x256xf32>
    %cst_70 = arith.constant dense<0.000000e+00> : vector<32x256xf32>
    %136 = tpu.matmul %0, %132, %cst_70 {dimension_numbers = #tpu.dot_dimension_numbers<[1], [0], [0], [1], [0, 0, 1, 1], [], []>} : vector<32x8xf32>, vector<8x256xf32>, vector<32x256xf32> -> vector<32x256xf32>
    %137 = vector.broadcast %4 : vector<32x1xf32> to vector<32x256xf32>
    %138 = arith.addf %136, %137 : vector<32x256xf32>
    %139 = arith.truncf %135 : vector<32x256xf32> to vector<32x256xbf16>
    %140 = math.tanh %139 : vector<32x256xbf16>
    %141 = arith.truncf %138 : vector<32x256xf32> to vector<32x256xbf16>
    %142 = math.tanh %141 : vector<32x256xbf16>
    %c0_71 = arith.constant 0 : index
    %c0_72 = arith.constant 0 : index
    %c0_73 = arith.constant 0 : index
    %143 = vector.load %arg3[%c0_71, %c0_72, %c0_73] : memref<7x32x32xbf16, #tpu.memory_space<vmem>>, vector<1x32x32xbf16>
    %144 = vector.shape_cast %143 : vector<1x32x32xbf16> to vector<32x32xbf16>
    %c1_74 = arith.constant 1 : index
    %c0_75 = arith.constant 0 : index
    %c0_76 = arith.constant 0 : index
    %145 = vector.load %arg5[%c1_74, %c0_75, %c0_76] : memref<8x32x1xf32, #tpu.memory_space<vmem>>, vector<1x32x1xf32>
    %146 = vector.shape_cast %145 : vector<1x32x1xf32> to vector<32x1xf32>
    %cst_77 = arith.constant dense<0.000000e+00> : vector<32x256xf32>
    %147 = tpu.matmul %144, %140, %cst_77 {dimension_numbers = #tpu.dot_dimension_numbers<[1], [0], [0], [1], [0, 0, 1, 1], [], []>} : vector<32x32xbf16>, vector<32x256xbf16>, vector<32x256xf32> -> vector<32x256xf32>
    %148 = vector.broadcast %146 : vector<32x1xf32> to vector<32x256xf32>
    %149 = arith.addf %147, %148 : vector<32x256xf32>
    %cst_78 = arith.constant dense<0.000000e+00> : vector<32x256xf32>
    %150 = tpu.matmul %144, %142, %cst_78 {dimension_numbers = #tpu.dot_dimension_numbers<[1], [0], [0], [1], [0, 0, 1, 1], [], []>} : vector<32x32xbf16>, vector<32x256xbf16>, vector<32x256xf32> -> vector<32x256xf32>
    %151 = vector.broadcast %146 : vector<32x1xf32> to vector<32x256xf32>
    %152 = arith.addf %150, %151 : vector<32x256xf32>
    %153 = arith.truncf %149 : vector<32x256xf32> to vector<32x256xbf16>
    %154 = math.tanh %153 : vector<32x256xbf16>
    %155 = arith.truncf %152 : vector<32x256xf32> to vector<32x256xbf16>
    %156 = math.tanh %155 : vector<32x256xbf16>
    %c1_79 = arith.constant 1 : index
    %c0_80 = arith.constant 0 : index
    %c0_81 = arith.constant 0 : index
    %157 = vector.load %arg3[%c1_79, %c0_80, %c0_81] : memref<7x32x32xbf16, #tpu.memory_space<vmem>>, vector<1x32x32xbf16>
    %158 = vector.shape_cast %157 : vector<1x32x32xbf16> to vector<32x32xbf16>
    %c2_82 = arith.constant 2 : index
    %c0_83 = arith.constant 0 : index
    %c0_84 = arith.constant 0 : index
    %159 = vector.load %arg5[%c2_82, %c0_83, %c0_84] : memref<8x32x1xf32, #tpu.memory_space<vmem>>, vector<1x32x1xf32>
    %160 = vector.shape_cast %159 : vector<1x32x1xf32> to vector<32x1xf32>
    %cst_85 = arith.constant dense<0.000000e+00> : vector<32x256xf32>
    %161 = tpu.matmul %158, %154, %cst_85 {dimension_numbers = #tpu.dot_dimension_numbers<[1], [0], [0], [1], [0, 0, 1, 1], [], []>} : vector<32x32xbf16>, vector<32x256xbf16>, vector<32x256xf32> -> vector<32x256xf32>
    %162 = vector.broadcast %160 : vector<32x1xf32> to vector<32x256xf32>
    %163 = arith.addf %161, %162 : vector<32x256xf32>
    %cst_86 = arith.constant dense<0.000000e+00> : vector<32x256xf32>
    %164 = tpu.matmul %158, %156, %cst_86 {dimension_numbers = #tpu.dot_dimension_numbers<[1], [0], [0], [1], [0, 0, 1, 1], [], []>} : vector<32x32xbf16>, vector<32x256xbf16>, vector<32x256xf32> -> vector<32x256xf32>
    %165 = vector.broadcast %160 : vector<32x1xf32> to vector<32x256xf32>
    %166 = arith.addf %164, %165 : vector<32x256xf32>
    %167 = arith.truncf %163 : vector<32x256xf32> to vector<32x256xbf16>
    %168 = math.tanh %167 : vector<32x256xbf16>
    %169 = arith.truncf %166 : vector<32x256xf32> to vector<32x256xbf16>
    %170 = math.tanh %169 : vector<32x256xbf16>
    %c2_87 = arith.constant 2 : index
    %c0_88 = arith.constant 0 : index
    %c0_89 = arith.constant 0 : index
    %171 = vector.load %arg3[%c2_87, %c0_88, %c0_89] : memref<7x32x32xbf16, #tpu.memory_space<vmem>>, vector<1x32x32xbf16>
    %172 = vector.shape_cast %171 : vector<1x32x32xbf16> to vector<32x32xbf16>
    %c3_90 = arith.constant 3 : index
    %c0_91 = arith.constant 0 : index
    %c0_92 = arith.constant 0 : index
    %173 = vector.load %arg5[%c3_90, %c0_91, %c0_92] : memref<8x32x1xf32, #tpu.memory_space<vmem>>, vector<1x32x1xf32>
    %174 = vector.shape_cast %173 : vector<1x32x1xf32> to vector<32x1xf32>
    %cst_93 = arith.constant dense<0.000000e+00> : vector<32x256xf32>
    %175 = tpu.matmul %172, %168, %cst_93 {dimension_numbers = #tpu.dot_dimension_numbers<[1], [0], [0], [1], [0, 0, 1, 1], [], []>} : vector<32x32xbf16>, vector<32x256xbf16>, vector<32x256xf32> -> vector<32x256xf32>
    %176 = vector.broadcast %174 : vector<32x1xf32> to vector<32x256xf32>
    %177 = arith.addf %175, %176 : vector<32x256xf32>
    %cst_94 = arith.constant dense<0.000000e+00> : vector<32x256xf32>
    %178 = tpu.matmul %172, %170, %cst_94 {dimension_numbers = #tpu.dot_dimension_numbers<[1], [0], [0], [1], [0, 0, 1, 1], [], []>} : vector<32x32xbf16>, vector<32x256xbf16>, vector<32x256xf32> -> vector<32x256xf32>
    %179 = vector.broadcast %174 : vector<32x1xf32> to vector<32x256xf32>
    %180 = arith.addf %178, %179 : vector<32x256xf32>
    %181 = arith.truncf %177 : vector<32x256xf32> to vector<32x256xbf16>
    %182 = math.tanh %181 : vector<32x256xbf16>
    %183 = arith.truncf %180 : vector<32x256xf32> to vector<32x256xbf16>
    %184 = math.tanh %183 : vector<32x256xbf16>
    %c3_95 = arith.constant 3 : index
    %c0_96 = arith.constant 0 : index
    %c0_97 = arith.constant 0 : index
    %185 = vector.load %arg3[%c3_95, %c0_96, %c0_97] : memref<7x32x32xbf16, #tpu.memory_space<vmem>>, vector<1x32x32xbf16>
    %186 = vector.shape_cast %185 : vector<1x32x32xbf16> to vector<32x32xbf16>
    %c4_98 = arith.constant 4 : index
    %c0_99 = arith.constant 0 : index
    %c0_100 = arith.constant 0 : index
    %187 = vector.load %arg5[%c4_98, %c0_99, %c0_100] : memref<8x32x1xf32, #tpu.memory_space<vmem>>, vector<1x32x1xf32>
    %188 = vector.shape_cast %187 : vector<1x32x1xf32> to vector<32x1xf32>
    %cst_101 = arith.constant dense<0.000000e+00> : vector<32x256xf32>
    %189 = tpu.matmul %186, %182, %cst_101 {dimension_numbers = #tpu.dot_dimension_numbers<[1], [0], [0], [1], [0, 0, 1, 1], [], []>} : vector<32x32xbf16>, vector<32x256xbf16>, vector<32x256xf32> -> vector<32x256xf32>
    %190 = vector.broadcast %188 : vector<32x1xf32> to vector<32x256xf32>
    %191 = arith.addf %189, %190 : vector<32x256xf32>
    %cst_102 = arith.constant dense<0.000000e+00> : vector<32x256xf32>
    %192 = tpu.matmul %186, %184, %cst_102 {dimension_numbers = #tpu.dot_dimension_numbers<[1], [0], [0], [1], [0, 0, 1, 1], [], []>} : vector<32x32xbf16>, vector<32x256xbf16>, vector<32x256xf32> -> vector<32x256xf32>
    %193 = vector.broadcast %188 : vector<32x1xf32> to vector<32x256xf32>
    %194 = arith.addf %192, %193 : vector<32x256xf32>
    %195 = arith.truncf %191 : vector<32x256xf32> to vector<32x256xbf16>
    %196 = math.tanh %195 : vector<32x256xbf16>
    %197 = arith.truncf %194 : vector<32x256xf32> to vector<32x256xbf16>
    %198 = math.tanh %197 : vector<32x256xbf16>
    %c4_103 = arith.constant 4 : index
    %c0_104 = arith.constant 0 : index
    %c0_105 = arith.constant 0 : index
    %199 = vector.load %arg3[%c4_103, %c0_104, %c0_105] : memref<7x32x32xbf16, #tpu.memory_space<vmem>>, vector<1x32x32xbf16>
    %200 = vector.shape_cast %199 : vector<1x32x32xbf16> to vector<32x32xbf16>
    %c5_106 = arith.constant 5 : index
    %c0_107 = arith.constant 0 : index
    %c0_108 = arith.constant 0 : index
    %201 = vector.load %arg5[%c5_106, %c0_107, %c0_108] : memref<8x32x1xf32, #tpu.memory_space<vmem>>, vector<1x32x1xf32>
    %202 = vector.shape_cast %201 : vector<1x32x1xf32> to vector<32x1xf32>
    %cst_109 = arith.constant dense<0.000000e+00> : vector<32x256xf32>
    %203 = tpu.matmul %200, %196, %cst_109 {dimension_numbers = #tpu.dot_dimension_numbers<[1], [0], [0], [1], [0, 0, 1, 1], [], []>} : vector<32x32xbf16>, vector<32x256xbf16>, vector<32x256xf32> -> vector<32x256xf32>
    %204 = vector.broadcast %202 : vector<32x1xf32> to vector<32x256xf32>
    %205 = arith.addf %203, %204 : vector<32x256xf32>
    %cst_110 = arith.constant dense<0.000000e+00> : vector<32x256xf32>
    %206 = tpu.matmul %200, %198, %cst_110 {dimension_numbers = #tpu.dot_dimension_numbers<[1], [0], [0], [1], [0, 0, 1, 1], [], []>} : vector<32x32xbf16>, vector<32x256xbf16>, vector<32x256xf32> -> vector<32x256xf32>
    %207 = vector.broadcast %202 : vector<32x1xf32> to vector<32x256xf32>
    %208 = arith.addf %206, %207 : vector<32x256xf32>
    %209 = arith.truncf %205 : vector<32x256xf32> to vector<32x256xbf16>
    %210 = math.tanh %209 : vector<32x256xbf16>
    %211 = arith.truncf %208 : vector<32x256xf32> to vector<32x256xbf16>
    %212 = math.tanh %211 : vector<32x256xbf16>
    %c5_111 = arith.constant 5 : index
    %c0_112 = arith.constant 0 : index
    %c0_113 = arith.constant 0 : index
    %213 = vector.load %arg3[%c5_111, %c0_112, %c0_113] : memref<7x32x32xbf16, #tpu.memory_space<vmem>>, vector<1x32x32xbf16>
    %214 = vector.shape_cast %213 : vector<1x32x32xbf16> to vector<32x32xbf16>
    %c6_114 = arith.constant 6 : index
    %c0_115 = arith.constant 0 : index
    %c0_116 = arith.constant 0 : index
    %215 = vector.load %arg5[%c6_114, %c0_115, %c0_116] : memref<8x32x1xf32, #tpu.memory_space<vmem>>, vector<1x32x1xf32>
    %216 = vector.shape_cast %215 : vector<1x32x1xf32> to vector<32x1xf32>
    %cst_117 = arith.constant dense<0.000000e+00> : vector<32x256xf32>
    %217 = tpu.matmul %214, %210, %cst_117 {dimension_numbers = #tpu.dot_dimension_numbers<[1], [0], [0], [1], [0, 0, 1, 1], [], []>} : vector<32x32xbf16>, vector<32x256xbf16>, vector<32x256xf32> -> vector<32x256xf32>
    %218 = vector.broadcast %216 : vector<32x1xf32> to vector<32x256xf32>
    %219 = arith.addf %217, %218 : vector<32x256xf32>
    %cst_118 = arith.constant dense<0.000000e+00> : vector<32x256xf32>
    %220 = tpu.matmul %214, %212, %cst_118 {dimension_numbers = #tpu.dot_dimension_numbers<[1], [0], [0], [1], [0, 0, 1, 1], [], []>} : vector<32x32xbf16>, vector<32x256xbf16>, vector<32x256xf32> -> vector<32x256xf32>
    %221 = vector.broadcast %216 : vector<32x1xf32> to vector<32x256xf32>
    %222 = arith.addf %220, %221 : vector<32x256xf32>
    %223 = arith.truncf %219 : vector<32x256xf32> to vector<32x256xbf16>
    %224 = math.tanh %223 : vector<32x256xbf16>
    %225 = arith.truncf %222 : vector<32x256xf32> to vector<32x256xbf16>
    %226 = math.tanh %225 : vector<32x256xbf16>
    %c6_119 = arith.constant 6 : index
    %c0_120 = arith.constant 0 : index
    %c0_121 = arith.constant 0 : index
    %227 = vector.load %arg3[%c6_119, %c0_120, %c0_121] : memref<7x32x32xbf16, #tpu.memory_space<vmem>>, vector<1x32x32xbf16>
    %228 = vector.shape_cast %227 : vector<1x32x32xbf16> to vector<32x32xbf16>
    %c7_122 = arith.constant 7 : index
    %c0_123 = arith.constant 0 : index
    %c0_124 = arith.constant 0 : index
    %229 = vector.load %arg5[%c7_122, %c0_123, %c0_124] : memref<8x32x1xf32, #tpu.memory_space<vmem>>, vector<1x32x1xf32>
    %230 = vector.shape_cast %229 : vector<1x32x1xf32> to vector<32x1xf32>
    %cst_125 = arith.constant dense<0.000000e+00> : vector<32x256xf32>
    %231 = tpu.matmul %228, %224, %cst_125 {dimension_numbers = #tpu.dot_dimension_numbers<[1], [0], [0], [1], [0, 0, 1, 1], [], []>} : vector<32x32xbf16>, vector<32x256xbf16>, vector<32x256xf32> -> vector<32x256xf32>
    %232 = vector.broadcast %230 : vector<32x1xf32> to vector<32x256xf32>
    %233 = arith.addf %231, %232 : vector<32x256xf32>
    %cst_126 = arith.constant dense<0.000000e+00> : vector<32x256xf32>
    %234 = tpu.matmul %228, %226, %cst_126 {dimension_numbers = #tpu.dot_dimension_numbers<[1], [0], [0], [1], [0, 0, 1, 1], [], []>} : vector<32x32xbf16>, vector<32x256xbf16>, vector<32x256xf32> -> vector<32x256xf32>
    %235 = vector.broadcast %230 : vector<32x1xf32> to vector<32x256xf32>
    %236 = arith.addf %234, %235 : vector<32x256xf32>
    %237 = arith.truncf %233 : vector<32x256xf32> to vector<32x256xbf16>
    %238 = math.tanh %237 : vector<32x256xbf16>
    %239 = arith.truncf %236 : vector<32x256xf32> to vector<32x256xbf16>
    %240 = math.tanh %239 : vector<32x256xbf16>
    %241 = arith.extf %238 : vector<32x256xbf16> to vector<32x256xf32>
    %242 = vector.broadcast %1 : vector<32x1xf32> to vector<32x256xf32>
    %243 = arith.mulf %242, %241 : vector<32x256xf32>
    %cst_127 = arith.constant dense<0.000000e+00> : vector<256xf32>
    %244 = vector.multi_reduction <add>, %243, %cst_127 [0] : vector<32x256xf32> to vector<256xf32>
    %245 = vector.shape_cast %244 : vector<256xf32> to vector<1x256xf32>
    %246 = vector.broadcast %2 : vector<1x1xf32> to vector<1x256xf32>
    %247 = arith.addf %245, %246 : vector<1x256xf32>
    %248 = arith.extf %240 : vector<32x256xbf16> to vector<32x256xf32>
    %249 = vector.broadcast %1 : vector<32x1xf32> to vector<32x256xf32>
    %250 = arith.mulf %249, %248 : vector<32x256xf32>
    %cst_128 = arith.constant dense<0.000000e+00> : vector<256xf32>
    %251 = vector.multi_reduction <add>, %250, %cst_128 [0] : vector<32x256xf32> to vector<256xf32>
    %252 = vector.shape_cast %251 : vector<256xf32> to vector<1x256xf32>
    %253 = vector.broadcast %2 : vector<1x1xf32> to vector<1x256xf32>
    %254 = arith.addf %252, %253 : vector<1x256xf32>
    %c0_129 = arith.constant 0 : index
    %c512_130 = arith.constant 512 : index
    %255 = vector.load %arg7[%c0_129, %c512_130] : memref<1x2048xf32, #tpu.memory_space<vmem>>, vector<1x256xf32>
    tpu.vector_store %arg7[%c0_129, %c512_130], %247 {strides = array<i32>} : memref<1x2048xf32, #tpu.memory_space<vmem>>, vector<1x256xf32>,
    %c0_131 = arith.constant 0 : index
    %c768_132 = arith.constant 768 : index
    %256 = vector.load %arg7[%c0_131, %c768_132] : memref<1x2048xf32, #tpu.memory_space<vmem>>, vector<1x256xf32>
    tpu.vector_store %arg7[%c0_131, %c768_132], %254 {strides = array<i32>} : memref<1x2048xf32, #tpu.memory_space<vmem>>, vector<1x256xf32>,
    %c0_133 = arith.constant 0 : index
    %c1024 = arith.constant 1024 : index
    %257 = vector.load %arg1[%c0_133, %c1024] : memref<8x2048xf32, #tpu.memory_space<vmem>>, vector<8x256xf32>
    %c0_134 = arith.constant 0 : index
    %c1280 = arith.constant 1280 : index
    %258 = vector.load %arg1[%c0_134, %c1280] : memref<8x2048xf32, #tpu.memory_space<vmem>>, vector<8x256xf32>
    %cst_135 = arith.constant dense<0.000000e+00> : vector<32x256xf32>
    %259 = tpu.matmul %0, %257, %cst_135 {dimension_numbers = #tpu.dot_dimension_numbers<[1], [0], [0], [1], [0, 0, 1, 1], [], []>} : vector<32x8xf32>, vector<8x256xf32>, vector<32x256xf32> -> vector<32x256xf32>
    %260 = vector.broadcast %4 : vector<32x1xf32> to vector<32x256xf32>
    %261 = arith.addf %259, %260 : vector<32x256xf32>
    %cst_136 = arith.constant dense<0.000000e+00> : vector<32x256xf32>
    %262 = tpu.matmul %0, %258, %cst_136 {dimension_numbers = #tpu.dot_dimension_numbers<[1], [0], [0], [1], [0, 0, 1, 1], [], []>} : vector<32x8xf32>, vector<8x256xf32>, vector<32x256xf32> -> vector<32x256xf32>
    %263 = vector.broadcast %4 : vector<32x1xf32> to vector<32x256xf32>
    %264 = arith.addf %262, %263 : vector<32x256xf32>
    %265 = arith.truncf %261 : vector<32x256xf32> to vector<32x256xbf16>
    %266 = math.tanh %265 : vector<32x256xbf16>
    %267 = arith.truncf %264 : vector<32x256xf32> to vector<32x256xbf16>
    %268 = math.tanh %267 : vector<32x256xbf16>
    %c0_137 = arith.constant 0 : index
    %c0_138 = arith.constant 0 : index
    %c0_139 = arith.constant 0 : index
    %269 = vector.load %arg3[%c0_137, %c0_138, %c0_139] : memref<7x32x32xbf16, #tpu.memory_space<vmem>>, vector<1x32x32xbf16>
    %270 = vector.shape_cast %269 : vector<1x32x32xbf16> to vector<32x32xbf16>
    %c1_140 = arith.constant 1 : index
    %c0_141 = arith.constant 0 : index
    %c0_142 = arith.constant 0 : index
    %271 = vector.load %arg5[%c1_140, %c0_141, %c0_142] : memref<8x32x1xf32, #tpu.memory_space<vmem>>, vector<1x32x1xf32>
    %272 = vector.shape_cast %271 : vector<1x32x1xf32> to vector<32x1xf32>
    %cst_143 = arith.constant dense<0.000000e+00> : vector<32x256xf32>
    %273 = tpu.matmul %270, %266, %cst_143 {dimension_numbers = #tpu.dot_dimension_numbers<[1], [0], [0], [1], [0, 0, 1, 1], [], []>} : vector<32x32xbf16>, vector<32x256xbf16>, vector<32x256xf32> -> vector<32x256xf32>
    %274 = vector.broadcast %272 : vector<32x1xf32> to vector<32x256xf32>
    %275 = arith.addf %273, %274 : vector<32x256xf32>
    %cst_144 = arith.constant dense<0.000000e+00> : vector<32x256xf32>
    %276 = tpu.matmul %270, %268, %cst_144 {dimension_numbers = #tpu.dot_dimension_numbers<[1], [0], [0], [1], [0, 0, 1, 1], [], []>} : vector<32x32xbf16>, vector<32x256xbf16>, vector<32x256xf32> -> vector<32x256xf32>
    %277 = vector.broadcast %272 : vector<32x1xf32> to vector<32x256xf32>
    %278 = arith.addf %276, %277 : vector<32x256xf32>
    %279 = arith.truncf %275 : vector<32x256xf32> to vector<32x256xbf16>
    %280 = math.tanh %279 : vector<32x256xbf16>
    %281 = arith.truncf %278 : vector<32x256xf32> to vector<32x256xbf16>
    %282 = math.tanh %281 : vector<32x256xbf16>
    %c1_145 = arith.constant 1 : index
    %c0_146 = arith.constant 0 : index
    %c0_147 = arith.constant 0 : index
    %283 = vector.load %arg3[%c1_145, %c0_146, %c0_147] : memref<7x32x32xbf16, #tpu.memory_space<vmem>>, vector<1x32x32xbf16>
    %284 = vector.shape_cast %283 : vector<1x32x32xbf16> to vector<32x32xbf16>
    %c2_148 = arith.constant 2 : index
    %c0_149 = arith.constant 0 : index
    %c0_150 = arith.constant 0 : index
    %285 = vector.load %arg5[%c2_148, %c0_149, %c0_150] : memref<8x32x1xf32, #tpu.memory_space<vmem>>, vector<1x32x1xf32>
    %286 = vector.shape_cast %285 : vector<1x32x1xf32> to vector<32x1xf32>
    %cst_151 = arith.constant dense<0.000000e+00> : vector<32x256xf32>
    %287 = tpu.matmul %284, %280, %cst_151 {dimension_numbers = #tpu.dot_dimension_numbers<[1], [0], [0], [1], [0, 0, 1, 1], [], []>} : vector<32x32xbf16>, vector<32x256xbf16>, vector<32x256xf32> -> vector<32x256xf32>
    %288 = vector.broadcast %286 : vector<32x1xf32> to vector<32x256xf32>
    %289 = arith.addf %287, %288 : vector<32x256xf32>
    %cst_152 = arith.constant dense<0.000000e+00> : vector<32x256xf32>
    %290 = tpu.matmul %284, %282, %cst_152 {dimension_numbers = #tpu.dot_dimension_numbers<[1], [0], [0], [1], [0, 0, 1, 1], [], []>} : vector<32x32xbf16>, vector<32x256xbf16>, vector<32x256xf32> -> vector<32x256xf32>
    %291 = vector.broadcast %286 : vector<32x1xf32> to vector<32x256xf32>
    %292 = arith.addf %290, %291 : vector<32x256xf32>
    %293 = arith.truncf %289 : vector<32x256xf32> to vector<32x256xbf16>
    %294 = math.tanh %293 : vector<32x256xbf16>
    %295 = arith.truncf %292 : vector<32x256xf32> to vector<32x256xbf16>
    %296 = math.tanh %295 : vector<32x256xbf16>
    %c2_153 = arith.constant 2 : index
    %c0_154 = arith.constant 0 : index
    %c0_155 = arith.constant 0 : index
    %297 = vector.load %arg3[%c2_153, %c0_154, %c0_155] : memref<7x32x32xbf16, #tpu.memory_space<vmem>>, vector<1x32x32xbf16>
    %298 = vector.shape_cast %297 : vector<1x32x32xbf16> to vector<32x32xbf16>
    %c3_156 = arith.constant 3 : index
    %c0_157 = arith.constant 0 : index
    %c0_158 = arith.constant 0 : index
    %299 = vector.load %arg5[%c3_156, %c0_157, %c0_158] : memref<8x32x1xf32, #tpu.memory_space<vmem>>, vector<1x32x1xf32>
    %300 = vector.shape_cast %299 : vector<1x32x1xf32> to vector<32x1xf32>
    %cst_159 = arith.constant dense<0.000000e+00> : vector<32x256xf32>
    %301 = tpu.matmul %298, %294, %cst_159 {dimension_numbers = #tpu.dot_dimension_numbers<[1], [0], [0], [1], [0, 0, 1, 1], [], []>} : vector<32x32xbf16>, vector<32x256xbf16>, vector<32x256xf32> -> vector<32x256xf32>
    %302 = vector.broadcast %300 : vector<32x1xf32> to vector<32x256xf32>
    %303 = arith.addf %301, %302 : vector<32x256xf32>
    %cst_160 = arith.constant dense<0.000000e+00> : vector<32x256xf32>
    %304 = tpu.matmul %298, %296, %cst_160 {dimension_numbers = #tpu.dot_dimension_numbers<[1], [0], [0], [1], [0, 0, 1, 1], [], []>} : vector<32x32xbf16>, vector<32x256xbf16>, vector<32x256xf32> -> vector<32x256xf32>
    %305 = vector.broadcast %300 : vector<32x1xf32> to vector<32x256xf32>
    %306 = arith.addf %304, %305 : vector<32x256xf32>
    %307 = arith.truncf %303 : vector<32x256xf32> to vector<32x256xbf16>
    %308 = math.tanh %307 : vector<32x256xbf16>
    %309 = arith.truncf %306 : vector<32x256xf32> to vector<32x256xbf16>
    %310 = math.tanh %309 : vector<32x256xbf16>
    %c3_161 = arith.constant 3 : index
    %c0_162 = arith.constant 0 : index
    %c0_163 = arith.constant 0 : index
    %311 = vector.load %arg3[%c3_161, %c0_162, %c0_163] : memref<7x32x32xbf16, #tpu.memory_space<vmem>>, vector<1x32x32xbf16>
    %312 = vector.shape_cast %311 : vector<1x32x32xbf16> to vector<32x32xbf16>
    %c4_164 = arith.constant 4 : index
    %c0_165 = arith.constant 0 : index
    %c0_166 = arith.constant 0 : index
    %313 = vector.load %arg5[%c4_164, %c0_165, %c0_166] : memref<8x32x1xf32, #tpu.memory_space<vmem>>, vector<1x32x1xf32>
    %314 = vector.shape_cast %313 : vector<1x32x1xf32> to vector<32x1xf32>
    %cst_167 = arith.constant dense<0.000000e+00> : vector<32x256xf32>
    %315 = tpu.matmul %312, %308, %cst_167 {dimension_numbers = #tpu.dot_dimension_numbers<[1], [0], [0], [1], [0, 0, 1, 1], [], []>} : vector<32x32xbf16>, vector<32x256xbf16>, vector<32x256xf32> -> vector<32x256xf32>
    %316 = vector.broadcast %314 : vector<32x1xf32> to vector<32x256xf32>
    %317 = arith.addf %315, %316 : vector<32x256xf32>
    %cst_168 = arith.constant dense<0.000000e+00> : vector<32x256xf32>
    %318 = tpu.matmul %312, %310, %cst_168 {dimension_numbers = #tpu.dot_dimension_numbers<[1], [0], [0], [1], [0, 0, 1, 1], [], []>} : vector<32x32xbf16>, vector<32x256xbf16>, vector<32x256xf32> -> vector<32x256xf32>
    %319 = vector.broadcast %314 : vector<32x1xf32> to vector<32x256xf32>
    %320 = arith.addf %318, %319 : vector<32x256xf32>
    %321 = arith.truncf %317 : vector<32x256xf32> to vector<32x256xbf16>
    %322 = math.tanh %321 : vector<32x256xbf16>
    %323 = arith.truncf %320 : vector<32x256xf32> to vector<32x256xbf16>
    %324 = math.tanh %323 : vector<32x256xbf16>
    %c4_169 = arith.constant 4 : index
    %c0_170 = arith.constant 0 : index
    %c0_171 = arith.constant 0 : index
    %325 = vector.load %arg3[%c4_169, %c0_170, %c0_171] : memref<7x32x32xbf16, #tpu.memory_space<vmem>>, vector<1x32x32xbf16>
    %326 = vector.shape_cast %325 : vector<1x32x32xbf16> to vector<32x32xbf16>
    %c5_172 = arith.constant 5 : index
    %c0_173 = arith.constant 0 : index
    %c0_174 = arith.constant 0 : index
    %327 = vector.load %arg5[%c5_172, %c0_173, %c0_174] : memref<8x32x1xf32, #tpu.memory_space<vmem>>, vector<1x32x1xf32>
    %328 = vector.shape_cast %327 : vector<1x32x1xf32> to vector<32x1xf32>
    %cst_175 = arith.constant dense<0.000000e+00> : vector<32x256xf32>
    %329 = tpu.matmul %326, %322, %cst_175 {dimension_numbers = #tpu.dot_dimension_numbers<[1], [0], [0], [1], [0, 0, 1, 1], [], []>} : vector<32x32xbf16>, vector<32x256xbf16>, vector<32x256xf32> -> vector<32x256xf32>
    %330 = vector.broadcast %328 : vector<32x1xf32> to vector<32x256xf32>
    %331 = arith.addf %329, %330 : vector<32x256xf32>
    %cst_176 = arith.constant dense<0.000000e+00> : vector<32x256xf32>
    %332 = tpu.matmul %326, %324, %cst_176 {dimension_numbers = #tpu.dot_dimension_numbers<[1], [0], [0], [1], [0, 0, 1, 1], [], []>} : vector<32x32xbf16>, vector<32x256xbf16>, vector<32x256xf32> -> vector<32x256xf32>
    %333 = vector.broadcast %328 : vector<32x1xf32> to vector<32x256xf32>
    %334 = arith.addf %332, %333 : vector<32x256xf32>
    %335 = arith.truncf %331 : vector<32x256xf32> to vector<32x256xbf16>
    %336 = math.tanh %335 : vector<32x256xbf16>
    %337 = arith.truncf %334 : vector<32x256xf32> to vector<32x256xbf16>
    %338 = math.tanh %337 : vector<32x256xbf16>
    %c5_177 = arith.constant 5 : index
    %c0_178 = arith.constant 0 : index
    %c0_179 = arith.constant 0 : index
    %339 = vector.load %arg3[%c5_177, %c0_178, %c0_179] : memref<7x32x32xbf16, #tpu.memory_space<vmem>>, vector<1x32x32xbf16>
    %340 = vector.shape_cast %339 : vector<1x32x32xbf16> to vector<32x32xbf16>
    %c6_180 = arith.constant 6 : index
    %c0_181 = arith.constant 0 : index
    %c0_182 = arith.constant 0 : index
    %341 = vector.load %arg5[%c6_180, %c0_181, %c0_182] : memref<8x32x1xf32, #tpu.memory_space<vmem>>, vector<1x32x1xf32>
    %342 = vector.shape_cast %341 : vector<1x32x1xf32> to vector<32x1xf32>
    %cst_183 = arith.constant dense<0.000000e+00> : vector<32x256xf32>
    %343 = tpu.matmul %340, %336, %cst_183 {dimension_numbers = #tpu.dot_dimension_numbers<[1], [0], [0], [1], [0, 0, 1, 1], [], []>} : vector<32x32xbf16>, vector<32x256xbf16>, vector<32x256xf32> -> vector<32x256xf32>
    %344 = vector.broadcast %342 : vector<32x1xf32> to vector<32x256xf32>
    %345 = arith.addf %343, %344 : vector<32x256xf32>
    %cst_184 = arith.constant dense<0.000000e+00> : vector<32x256xf32>
    %346 = tpu.matmul %340, %338, %cst_184 {dimension_numbers = #tpu.dot_dimension_numbers<[1], [0], [0], [1], [0, 0, 1, 1], [], []>} : vector<32x32xbf16>, vector<32x256xbf16>, vector<32x256xf32> -> vector<32x256xf32>
    %347 = vector.broadcast %342 : vector<32x1xf32> to vector<32x256xf32>
    %348 = arith.addf %346, %347 : vector<32x256xf32>
    %349 = arith.truncf %345 : vector<32x256xf32> to vector<32x256xbf16>
    %350 = math.tanh %349 : vector<32x256xbf16>
    %351 = arith.truncf %348 : vector<32x256xf32> to vector<32x256xbf16>
    %352 = math.tanh %351 : vector<32x256xbf16>
    %c6_185 = arith.constant 6 : index
    %c0_186 = arith.constant 0 : index
    %c0_187 = arith.constant 0 : index
    %353 = vector.load %arg3[%c6_185, %c0_186, %c0_187] : memref<7x32x32xbf16, #tpu.memory_space<vmem>>, vector<1x32x32xbf16>
    %354 = vector.shape_cast %353 : vector<1x32x32xbf16> to vector<32x32xbf16>
    %c7_188 = arith.constant 7 : index
    %c0_189 = arith.constant 0 : index
    %c0_190 = arith.constant 0 : index
    %355 = vector.load %arg5[%c7_188, %c0_189, %c0_190] : memref<8x32x1xf32, #tpu.memory_space<vmem>>, vector<1x32x1xf32>
    %356 = vector.shape_cast %355 : vector<1x32x1xf32> to vector<32x1xf32>
    %cst_191 = arith.constant dense<0.000000e+00> : vector<32x256xf32>
    %357 = tpu.matmul %354, %350, %cst_191 {dimension_numbers = #tpu.dot_dimension_numbers<[1], [0], [0], [1], [0, 0, 1, 1], [], []>} : vector<32x32xbf16>, vector<32x256xbf16>, vector<32x256xf32> -> vector<32x256xf32>
    %358 = vector.broadcast %356 : vector<32x1xf32> to vector<32x256xf32>
    %359 = arith.addf %357, %358 : vector<32x256xf32>
    %cst_192 = arith.constant dense<0.000000e+00> : vector<32x256xf32>
    %360 = tpu.matmul %354, %352, %cst_192 {dimension_numbers = #tpu.dot_dimension_numbers<[1], [0], [0], [1], [0, 0, 1, 1], [], []>} : vector<32x32xbf16>, vector<32x256xbf16>, vector<32x256xf32> -> vector<32x256xf32>
    %361 = vector.broadcast %356 : vector<32x1xf32> to vector<32x256xf32>
    %362 = arith.addf %360, %361 : vector<32x256xf32>
    %363 = arith.truncf %359 : vector<32x256xf32> to vector<32x256xbf16>
    %364 = math.tanh %363 : vector<32x256xbf16>
    %365 = arith.truncf %362 : vector<32x256xf32> to vector<32x256xbf16>
    %366 = math.tanh %365 : vector<32x256xbf16>
    %367 = arith.extf %364 : vector<32x256xbf16> to vector<32x256xf32>
    %368 = vector.broadcast %1 : vector<32x1xf32> to vector<32x256xf32>
    %369 = arith.mulf %368, %367 : vector<32x256xf32>
    %cst_193 = arith.constant dense<0.000000e+00> : vector<256xf32>
    %370 = vector.multi_reduction <add>, %369, %cst_193 [0] : vector<32x256xf32> to vector<256xf32>
    %371 = vector.shape_cast %370 : vector<256xf32> to vector<1x256xf32>
    %372 = vector.broadcast %2 : vector<1x1xf32> to vector<1x256xf32>
    %373 = arith.addf %371, %372 : vector<1x256xf32>
    %374 = arith.extf %366 : vector<32x256xbf16> to vector<32x256xf32>
    %375 = vector.broadcast %1 : vector<32x1xf32> to vector<32x256xf32>
    %376 = arith.mulf %375, %374 : vector<32x256xf32>
    %cst_194 = arith.constant dense<0.000000e+00> : vector<256xf32>
    %377 = vector.multi_reduction <add>, %376, %cst_194 [0] : vector<32x256xf32> to vector<256xf32>
    %378 = vector.shape_cast %377 : vector<256xf32> to vector<1x256xf32>
    %379 = vector.broadcast %2 : vector<1x1xf32> to vector<1x256xf32>
    %380 = arith.addf %378, %379 : vector<1x256xf32>
    %c0_195 = arith.constant 0 : index
    %c1024_196 = arith.constant 1024 : index
    %381 = vector.load %arg7[%c0_195, %c1024_196] : memref<1x2048xf32, #tpu.memory_space<vmem>>, vector<1x256xf32>
    tpu.vector_store %arg7[%c0_195, %c1024_196], %373 {strides = array<i32>} : memref<1x2048xf32, #tpu.memory_space<vmem>>, vector<1x256xf32>,
    %c0_197 = arith.constant 0 : index
    %c1280_198 = arith.constant 1280 : index
    %382 = vector.load %arg7[%c0_197, %c1280_198] : memref<1x2048xf32, #tpu.memory_space<vmem>>, vector<1x256xf32>
    tpu.vector_store %arg7[%c0_197, %c1280_198], %380 {strides = array<i32>} : memref<1x2048xf32, #tpu.memory_space<vmem>>, vector<1x256xf32>,
    %c0_199 = arith.constant 0 : index
    %c1536 = arith.constant 1536 : index
    %383 = vector.load %arg1[%c0_199, %c1536] : memref<8x2048xf32, #tpu.memory_space<vmem>>, vector<8x256xf32>
    %c0_200 = arith.constant 0 : index
    %c1792 = arith.constant 1792 : index
    %384 = vector.load %arg1[%c0_200, %c1792] : memref<8x2048xf32, #tpu.memory_space<vmem>>, vector<8x256xf32>
    %cst_201 = arith.constant dense<0.000000e+00> : vector<32x256xf32>
    %385 = tpu.matmul %0, %383, %cst_201 {dimension_numbers = #tpu.dot_dimension_numbers<[1], [0], [0], [1], [0, 0, 1, 1], [], []>} : vector<32x8xf32>, vector<8x256xf32>, vector<32x256xf32> -> vector<32x256xf32>
    %386 = vector.broadcast %4 : vector<32x1xf32> to vector<32x256xf32>
    %387 = arith.addf %385, %386 : vector<32x256xf32>
    %cst_202 = arith.constant dense<0.000000e+00> : vector<32x256xf32>
    %388 = tpu.matmul %0, %384, %cst_202 {dimension_numbers = #tpu.dot_dimension_numbers<[1], [0], [0], [1], [0, 0, 1, 1], [], []>} : vector<32x8xf32>, vector<8x256xf32>, vector<32x256xf32> -> vector<32x256xf32>
    %389 = vector.broadcast %4 : vector<32x1xf32> to vector<32x256xf32>
    %390 = arith.addf %388, %389 : vector<32x256xf32>
    %391 = arith.truncf %387 : vector<32x256xf32> to vector<32x256xbf16>
    %392 = math.tanh %391 : vector<32x256xbf16>
    %393 = arith.truncf %390 : vector<32x256xf32> to vector<32x256xbf16>
    %394 = math.tanh %393 : vector<32x256xbf16>
    %c0_203 = arith.constant 0 : index
    %c0_204 = arith.constant 0 : index
    %c0_205 = arith.constant 0 : index
    %395 = vector.load %arg3[%c0_203, %c0_204, %c0_205] : memref<7x32x32xbf16, #tpu.memory_space<vmem>>, vector<1x32x32xbf16>
    %396 = vector.shape_cast %395 : vector<1x32x32xbf16> to vector<32x32xbf16>
    %c1_206 = arith.constant 1 : index
    %c0_207 = arith.constant 0 : index
    %c0_208 = arith.constant 0 : index
    %397 = vector.load %arg5[%c1_206, %c0_207, %c0_208] : memref<8x32x1xf32, #tpu.memory_space<vmem>>, vector<1x32x1xf32>
    %398 = vector.shape_cast %397 : vector<1x32x1xf32> to vector<32x1xf32>
    %cst_209 = arith.constant dense<0.000000e+00> : vector<32x256xf32>
    %399 = tpu.matmul %396, %392, %cst_209 {dimension_numbers = #tpu.dot_dimension_numbers<[1], [0], [0], [1], [0, 0, 1, 1], [], []>} : vector<32x32xbf16>, vector<32x256xbf16>, vector<32x256xf32> -> vector<32x256xf32>
    %400 = vector.broadcast %398 : vector<32x1xf32> to vector<32x256xf32>
    %401 = arith.addf %399, %400 : vector<32x256xf32>
    %cst_210 = arith.constant dense<0.000000e+00> : vector<32x256xf32>
    %402 = tpu.matmul %396, %394, %cst_210 {dimension_numbers = #tpu.dot_dimension_numbers<[1], [0], [0], [1], [0, 0, 1, 1], [], []>} : vector<32x32xbf16>, vector<32x256xbf16>, vector<32x256xf32> -> vector<32x256xf32>
    %403 = vector.broadcast %398 : vector<32x1xf32> to vector<32x256xf32>
    %404 = arith.addf %402, %403 : vector<32x256xf32>
    %405 = arith.truncf %401 : vector<32x256xf32> to vector<32x256xbf16>
    %406 = math.tanh %405 : vector<32x256xbf16>
    %407 = arith.truncf %404 : vector<32x256xf32> to vector<32x256xbf16>
    %408 = math.tanh %407 : vector<32x256xbf16>
    %c1_211 = arith.constant 1 : index
    %c0_212 = arith.constant 0 : index
    %c0_213 = arith.constant 0 : index
    %409 = vector.load %arg3[%c1_211, %c0_212, %c0_213] : memref<7x32x32xbf16, #tpu.memory_space<vmem>>, vector<1x32x32xbf16>
    %410 = vector.shape_cast %409 : vector<1x32x32xbf16> to vector<32x32xbf16>
    %c2_214 = arith.constant 2 : index
    %c0_215 = arith.constant 0 : index
    %c0_216 = arith.constant 0 : index
    %411 = vector.load %arg5[%c2_214, %c0_215, %c0_216] : memref<8x32x1xf32, #tpu.memory_space<vmem>>, vector<1x32x1xf32>
    %412 = vector.shape_cast %411 : vector<1x32x1xf32> to vector<32x1xf32>
    %cst_217 = arith.constant dense<0.000000e+00> : vector<32x256xf32>
    %413 = tpu.matmul %410, %406, %cst_217 {dimension_numbers = #tpu.dot_dimension_numbers<[1], [0], [0], [1], [0, 0, 1, 1], [], []>} : vector<32x32xbf16>, vector<32x256xbf16>, vector<32x256xf32> -> vector<32x256xf32>
    %414 = vector.broadcast %412 : vector<32x1xf32> to vector<32x256xf32>
    %415 = arith.addf %413, %414 : vector<32x256xf32>
    %cst_218 = arith.constant dense<0.000000e+00> : vector<32x256xf32>
    %416 = tpu.matmul %410, %408, %cst_218 {dimension_numbers = #tpu.dot_dimension_numbers<[1], [0], [0], [1], [0, 0, 1, 1], [], []>} : vector<32x32xbf16>, vector<32x256xbf16>, vector<32x256xf32> -> vector<32x256xf32>
    %417 = vector.broadcast %412 : vector<32x1xf32> to vector<32x256xf32>
    %418 = arith.addf %416, %417 : vector<32x256xf32>
    %419 = arith.truncf %415 : vector<32x256xf32> to vector<32x256xbf16>
    %420 = math.tanh %419 : vector<32x256xbf16>
    %421 = arith.truncf %418 : vector<32x256xf32> to vector<32x256xbf16>
    %422 = math.tanh %421 : vector<32x256xbf16>
    %c2_219 = arith.constant 2 : index
    %c0_220 = arith.constant 0 : index
    %c0_221 = arith.constant 0 : index
    %423 = vector.load %arg3[%c2_219, %c0_220, %c0_221] : memref<7x32x32xbf16, #tpu.memory_space<vmem>>, vector<1x32x32xbf16>
    %424 = vector.shape_cast %423 : vector<1x32x32xbf16> to vector<32x32xbf16>
    %c3_222 = arith.constant 3 : index
    %c0_223 = arith.constant 0 : index
    %c0_224 = arith.constant 0 : index
    %425 = vector.load %arg5[%c3_222, %c0_223, %c0_224] : memref<8x32x1xf32, #tpu.memory_space<vmem>>, vector<1x32x1xf32>
    %426 = vector.shape_cast %425 : vector<1x32x1xf32> to vector<32x1xf32>
    %cst_225 = arith.constant dense<0.000000e+00> : vector<32x256xf32>
    %427 = tpu.matmul %424, %420, %cst_225 {dimension_numbers = #tpu.dot_dimension_numbers<[1], [0], [0], [1], [0, 0, 1, 1], [], []>} : vector<32x32xbf16>, vector<32x256xbf16>, vector<32x256xf32> -> vector<32x256xf32>
    %428 = vector.broadcast %426 : vector<32x1xf32> to vector<32x256xf32>
    %429 = arith.addf %427, %428 : vector<32x256xf32>
    %cst_226 = arith.constant dense<0.000000e+00> : vector<32x256xf32>
    %430 = tpu.matmul %424, %422, %cst_226 {dimension_numbers = #tpu.dot_dimension_numbers<[1], [0], [0], [1], [0, 0, 1, 1], [], []>} : vector<32x32xbf16>, vector<32x256xbf16>, vector<32x256xf32> -> vector<32x256xf32>
    %431 = vector.broadcast %426 : vector<32x1xf32> to vector<32x256xf32>
    %432 = arith.addf %430, %431 : vector<32x256xf32>
    %433 = arith.truncf %429 : vector<32x256xf32> to vector<32x256xbf16>
    %434 = math.tanh %433 : vector<32x256xbf16>
    %435 = arith.truncf %432 : vector<32x256xf32> to vector<32x256xbf16>
    %436 = math.tanh %435 : vector<32x256xbf16>
    %c3_227 = arith.constant 3 : index
    %c0_228 = arith.constant 0 : index
    %c0_229 = arith.constant 0 : index
    %437 = vector.load %arg3[%c3_227, %c0_228, %c0_229] : memref<7x32x32xbf16, #tpu.memory_space<vmem>>, vector<1x32x32xbf16>
    %438 = vector.shape_cast %437 : vector<1x32x32xbf16> to vector<32x32xbf16>
    %c4_230 = arith.constant 4 : index
    %c0_231 = arith.constant 0 : index
    %c0_232 = arith.constant 0 : index
    %439 = vector.load %arg5[%c4_230, %c0_231, %c0_232] : memref<8x32x1xf32, #tpu.memory_space<vmem>>, vector<1x32x1xf32>
    %440 = vector.shape_cast %439 : vector<1x32x1xf32> to vector<32x1xf32>
    %cst_233 = arith.constant dense<0.000000e+00> : vector<32x256xf32>
    %441 = tpu.matmul %438, %434, %cst_233 {dimension_numbers = #tpu.dot_dimension_numbers<[1], [0], [0], [1], [0, 0, 1, 1], [], []>} : vector<32x32xbf16>, vector<32x256xbf16>, vector<32x256xf32> -> vector<32x256xf32>
    %442 = vector.broadcast %440 : vector<32x1xf32> to vector<32x256xf32>
    %443 = arith.addf %441, %442 : vector<32x256xf32>
    %cst_234 = arith.constant dense<0.000000e+00> : vector<32x256xf32>
    %444 = tpu.matmul %438, %436, %cst_234 {dimension_numbers = #tpu.dot_dimension_numbers<[1], [0], [0], [1], [0, 0, 1, 1], [], []>} : vector<32x32xbf16>, vector<32x256xbf16>, vector<32x256xf32> -> vector<32x256xf32>
    %445 = vector.broadcast %440 : vector<32x1xf32> to vector<32x256xf32>
    %446 = arith.addf %444, %445 : vector<32x256xf32>
    %447 = arith.truncf %443 : vector<32x256xf32> to vector<32x256xbf16>
    %448 = math.tanh %447 : vector<32x256xbf16>
    %449 = arith.truncf %446 : vector<32x256xf32> to vector<32x256xbf16>
    %450 = math.tanh %449 : vector<32x256xbf16>
    %c4_235 = arith.constant 4 : index
    %c0_236 = arith.constant 0 : index
    %c0_237 = arith.constant 0 : index
    %451 = vector.load %arg3[%c4_235, %c0_236, %c0_237] : memref<7x32x32xbf16, #tpu.memory_space<vmem>>, vector<1x32x32xbf16>
    %452 = vector.shape_cast %451 : vector<1x32x32xbf16> to vector<32x32xbf16>
    %c5_238 = arith.constant 5 : index
    %c0_239 = arith.constant 0 : index
    %c0_240 = arith.constant 0 : index
    %453 = vector.load %arg5[%c5_238, %c0_239, %c0_240] : memref<8x32x1xf32, #tpu.memory_space<vmem>>, vector<1x32x1xf32>
    %454 = vector.shape_cast %453 : vector<1x32x1xf32> to vector<32x1xf32>
    %cst_241 = arith.constant dense<0.000000e+00> : vector<32x256xf32>
    %455 = tpu.matmul %452, %448, %cst_241 {dimension_numbers = #tpu.dot_dimension_numbers<[1], [0], [0], [1], [0, 0, 1, 1], [], []>} : vector<32x32xbf16>, vector<32x256xbf16>, vector<32x256xf32> -> vector<32x256xf32>
    %456 = vector.broadcast %454 : vector<32x1xf32> to vector<32x256xf32>
    %457 = arith.addf %455, %456 : vector<32x256xf32>
    %cst_242 = arith.constant dense<0.000000e+00> : vector<32x256xf32>
    %458 = tpu.matmul %452, %450, %cst_242 {dimension_numbers = #tpu.dot_dimension_numbers<[1], [0], [0], [1], [0, 0, 1, 1], [], []>} : vector<32x32xbf16>, vector<32x256xbf16>, vector<32x256xf32> -> vector<32x256xf32>
    %459 = vector.broadcast %454 : vector<32x1xf32> to vector<32x256xf32>
    %460 = arith.addf %458, %459 : vector<32x256xf32>
    %461 = arith.truncf %457 : vector<32x256xf32> to vector<32x256xbf16>
    %462 = math.tanh %461 : vector<32x256xbf16>
    %463 = arith.truncf %460 : vector<32x256xf32> to vector<32x256xbf16>
    %464 = math.tanh %463 : vector<32x256xbf16>
    %c5_243 = arith.constant 5 : index
    %c0_244 = arith.constant 0 : index
    %c0_245 = arith.constant 0 : index
    %465 = vector.load %arg3[%c5_243, %c0_244, %c0_245] : memref<7x32x32xbf16, #tpu.memory_space<vmem>>, vector<1x32x32xbf16>
    %466 = vector.shape_cast %465 : vector<1x32x32xbf16> to vector<32x32xbf16>
    %c6_246 = arith.constant 6 : index
    %c0_247 = arith.constant 0 : index
    %c0_248 = arith.constant 0 : index
    %467 = vector.load %arg5[%c6_246, %c0_247, %c0_248] : memref<8x32x1xf32, #tpu.memory_space<vmem>>, vector<1x32x1xf32>
    %468 = vector.shape_cast %467 : vector<1x32x1xf32> to vector<32x1xf32>
    %cst_249 = arith.constant dense<0.000000e+00> : vector<32x256xf32>
    %469 = tpu.matmul %466, %462, %cst_249 {dimension_numbers = #tpu.dot_dimension_numbers<[1], [0], [0], [1], [0, 0, 1, 1], [], []>} : vector<32x32xbf16>, vector<32x256xbf16>, vector<32x256xf32> -> vector<32x256xf32>
    %470 = vector.broadcast %468 : vector<32x1xf32> to vector<32x256xf32>
    %471 = arith.addf %469, %470 : vector<32x256xf32>
    %cst_250 = arith.constant dense<0.000000e+00> : vector<32x256xf32>
    %472 = tpu.matmul %466, %464, %cst_250 {dimension_numbers = #tpu.dot_dimension_numbers<[1], [0], [0], [1], [0, 0, 1, 1], [], []>} : vector<32x32xbf16>, vector<32x256xbf16>, vector<32x256xf32> -> vector<32x256xf32>
    %473 = vector.broadcast %468 : vector<32x1xf32> to vector<32x256xf32>
    %474 = arith.addf %472, %473 : vector<32x256xf32>
    %475 = arith.truncf %471 : vector<32x256xf32> to vector<32x256xbf16>
    %476 = math.tanh %475 : vector<32x256xbf16>
    %477 = arith.truncf %474 : vector<32x256xf32> to vector<32x256xbf16>
    %478 = math.tanh %477 : vector<32x256xbf16>
    %c6_251 = arith.constant 6 : index
    %c0_252 = arith.constant 0 : index
    %c0_253 = arith.constant 0 : index
    %479 = vector.load %arg3[%c6_251, %c0_252, %c0_253] : memref<7x32x32xbf16, #tpu.memory_space<vmem>>, vector<1x32x32xbf16>
    %480 = vector.shape_cast %479 : vector<1x32x32xbf16> to vector<32x32xbf16>
    %c7_254 = arith.constant 7 : index
    %c0_255 = arith.constant 0 : index
    %c0_256 = arith.constant 0 : index
    %481 = vector.load %arg5[%c7_254, %c0_255, %c0_256] : memref<8x32x1xf32, #tpu.memory_space<vmem>>, vector<1x32x1xf32>
    %482 = vector.shape_cast %481 : vector<1x32x1xf32> to vector<32x1xf32>
    %cst_257 = arith.constant dense<0.000000e+00> : vector<32x256xf32>
    %483 = tpu.matmul %480, %476, %cst_257 {dimension_numbers = #tpu.dot_dimension_numbers<[1], [0], [0], [1], [0, 0, 1, 1], [], []>} : vector<32x32xbf16>, vector<32x256xbf16>, vector<32x256xf32> -> vector<32x256xf32>
    %484 = vector.broadcast %482 : vector<32x1xf32> to vector<32x256xf32>
    %485 = arith.addf %483, %484 : vector<32x256xf32>
    %cst_258 = arith.constant dense<0.000000e+00> : vector<32x256xf32>
    %486 = tpu.matmul %480, %478, %cst_258 {dimension_numbers = #tpu.dot_dimension_numbers<[1], [0], [0], [1], [0, 0, 1, 1], [], []>} : vector<32x32xbf16>, vector<32x256xbf16>, vector<32x256xf32> -> vector<32x256xf32>
    %487 = vector.broadcast %482 : vector<32x1xf32> to vector<32x256xf32>
    %488 = arith.addf %486, %487 : vector<32x256xf32>
    %489 = arith.truncf %485 : vector<32x256xf32> to vector<32x256xbf16>
    %490 = math.tanh %489 : vector<32x256xbf16>
    %491 = arith.truncf %488 : vector<32x256xf32> to vector<32x256xbf16>
    %492 = math.tanh %491 : vector<32x256xbf16>
    %493 = arith.extf %490 : vector<32x256xbf16> to vector<32x256xf32>
    %494 = vector.broadcast %1 : vector<32x1xf32> to vector<32x256xf32>
    %495 = arith.mulf %494, %493 : vector<32x256xf32>
    %cst_259 = arith.constant dense<0.000000e+00> : vector<256xf32>
    %496 = vector.multi_reduction <add>, %495, %cst_259 [0] : vector<32x256xf32> to vector<256xf32>
    %497 = vector.shape_cast %496 : vector<256xf32> to vector<1x256xf32>
    %498 = vector.broadcast %2 : vector<1x1xf32> to vector<1x256xf32>
    %499 = arith.addf %497, %498 : vector<1x256xf32>
    %500 = arith.extf %492 : vector<32x256xbf16> to vector<32x256xf32>
    %501 = vector.broadcast %1 : vector<32x1xf32> to vector<32x256xf32>
    %502 = arith.mulf %501, %500 : vector<32x256xf32>
    %cst_260 = arith.constant dense<0.000000e+00> : vector<256xf32>
    %503 = vector.multi_reduction <add>, %502, %cst_260 [0] : vector<32x256xf32> to vector<256xf32>
    %504 = vector.shape_cast %503 : vector<256xf32> to vector<1x256xf32>
    %505 = vector.broadcast %2 : vector<1x1xf32> to vector<1x256xf32>
    %506 = arith.addf %504, %505 : vector<1x256xf32>
    %c0_261 = arith.constant 0 : index
    %c1536_262 = arith.constant 1536 : index
    %507 = vector.load %arg7[%c0_261, %c1536_262] : memref<1x2048xf32, #tpu.memory_space<vmem>>, vector<1x256xf32>
    tpu.vector_store %arg7[%c0_261, %c1536_262], %499 {strides = array<i32>} : memref<1x2048xf32, #tpu.memory_space<vmem>>, vector<1x256xf32>,
    %c0_263 = arith.constant 0 : index
    %c1792_264 = arith.constant 1792 : index
    %508 = vector.load %arg7[%c0_263, %c1792_264] : memref<1x2048xf32, #tpu.memory_space<vmem>>, vector<1x256xf32>
    tpu.vector_store %arg7[%c0_263, %c1792_264], %506 {strides = array<i32>} : memref<1x2048xf32, #tpu.memory_space<vmem>>, vector<1x256xf32>,
    return
  }
  func.func @transform_0(%arg0: i32) -> (i32, i32) {
    %c0_i32 = arith.constant 0 : i32
    %c0_i32_0 = arith.constant 0 : i32
    return %c0_i32, %arg0 : i32, i32
  }
  func.func @transform_1(%arg0: i32) -> (i32, i32) {
    %c0_i32 = arith.constant 0 : i32
    %c0_i32_0 = arith.constant 0 : i32
    %c0_i32_1 = arith.constant 0 : i32
    return %c0_i32, %c0_i32_0 : i32, i32
  }
  func.func @transform_2(%arg0: i32) -> (i32, i32, i32) {
    %c0_i32 = arith.constant 0 : i32
    %c0_i32_0 = arith.constant 0 : i32
    %c0_i32_1 = arith.constant 0 : i32
    %c0_i32_2 = arith.constant 0 : i32
    return %c0_i32, %c0_i32_0, %c0_i32_1 : i32, i32, i32
  }
  func.func @transform_3(%arg0: i32) -> (i32, i32) {
    %c0_i32 = arith.constant 0 : i32
    %c0_i32_0 = arith.constant 0 : i32
    %c0_i32_1 = arith.constant 0 : i32
    return %c0_i32, %c0_i32_0 : i32, i32
  }
  func.func @transform_4(%arg0: i32) -> (i32, i32, i32) {
    %c0_i32 = arith.constant 0 : i32
    %c0_i32_0 = arith.constant 0 : i32
    %c0_i32_1 = arith.constant 0 : i32
    %c0_i32_2 = arith.constant 0 : i32
    return %c0_i32, %c0_i32_0, %c0_i32_1 : i32, i32, i32
  }
  func.func @transform_5(%arg0: i32) -> (i32, i32) {
    %c0_i32 = arith.constant 0 : i32
    %c0_i32_0 = arith.constant 0 : i32
    %c0_i32_1 = arith.constant 0 : i32
    return %c0_i32, %c0_i32_0 : i32, i32
  }
  func.func @transform_6(%arg0: i32) -> (i32, i32) {
    %c0_i32 = arith.constant 0 : i32
    %c0_i32_0 = arith.constant 0 : i32
    return %c0_i32, %arg0 : i32, i32
  }
}

</mosaic_0001>

<llo_original>
// kernel: dnn_forward.1
$region0: #{dnn_forward.1}
  #allocation0 [shape = 'u32[]', space=smem, size = 0x4, offset = 0x4, fixed_abs, tag = 'smem constant byte address 0x4 - core index']
  #allocation1 [shape = 'u32[72,128]{1,0:T(1,128)}', space=vmem, size = 0x9000, scoped, tag = 'internal scratch']
  #allocation2 [shape = 'f32[1,1]{1,0:T(1,128)S(1)}', space=vmem, size = 0x200, scoped, tag = 'scoped memory for dnn_forward.1']
  %s0 = inlined_call_operand.vmem [shape: f32[8,2048], index: 0, kind: input, shape index: {}]
  %s1 = inlined_call_operand.vmem [shape: f32[32,8], index: 1, kind: input, shape index: {}]
  %s2 = inlined_call_operand.vmem [shape: bf16[7,32,32], index: 2, kind: input, shape index: {}]
  %s3 = inlined_call_operand.vmem [shape: f32[32,1], index: 3, kind: input, shape index: {}]
  %s4 = inlined_call_operand.vmem [shape: f32[8,32,1], index: 4, kind: input, shape index: {}]
  %s5 = inlined_call_operand.<no memory space> [shape: f32[1,1], index: 5, kind: input, shape index: {}]
  %s6 = inlined_call_operand.hbm [shape: f32[1,2048], index: 6, kind: output, shape index: {}]
  %s7 = sld [smem:[#allocation0]]
  $region34: #{dnn_forward.1} parent=0
    _
  %s9 = ssub.s32 1, %s7
  %s10 = scalar_select 0, %s9, %s7
  %v11 = vstv %s5
  %12 = vst [vmem:[#allocation2] sm:$0x1] %v11
  $region1: #{dnn_forward.1} parent=0
    #allocation3 [shape = 'u8[8192]{0}', space=vmem, size = 0x2000, scoped, tag = 'output window, operand 0, single buffered']
    #allocation4 [shape = 's32[1]{0}', space=sflag, size = 0x4, scoped, tag = 'scoped memory for dnn_forward.1']
    %13 = vsyncpa [#allocation4], 0
    // Predicated region
    $region2: #{dnn_forward.1} parent=1 // pred_check
      _
    $region3: #{dnn_forward.1} parent=1 // pred_check_branch
      %15 = sbr.rel (0) target = $region5
    $region4: #{dnn_forward.1} parent=1 // pred_region
      _
    $region5: #{dnn_forward.1} parent=1 // pred_fallthru
      _
    // Predicated region
    $region6: #{dnn_forward.1} parent=1 // pred_check
      _
    $region7: #{dnn_forward.1} parent=1 // pred_check_branch
      %17 = sbr.rel (0) target = $region9
    $region8: #{dnn_forward.1} parent=1 // pred_region
      _
    $region9: #{dnn_forward.1} parent=1 // pred_fallthru
      _
    // Predicated region
    $region10: #{dnn_forward.1} parent=1 // pred_check
      _
    $region11: #{dnn_forward.1} parent=1 // pred_check_branch
      %19 = sbr.rel (0) target = $region13
    $region12: #{dnn_forward.1} parent=1 // pred_region
      _
    $region13: #{dnn_forward.1} parent=1 // pred_fallthru
      _
    // Predicated region
    $region14: #{dnn_forward.1} parent=1 // pred_check
      _
    $region15: #{dnn_forward.1} parent=1 // pred_check_branch
      %21 = sbr.rel (0) target = $region17
    $region16: #{dnn_forward.1} parent=1 // pred_region
      _
    $region17: #{dnn_forward.1} parent=1 // pred_fallthru
      _
    // Predicated region
    $region18: #{dnn_forward.1} parent=1 // pred_check
      _
    $region19: #{dnn_forward.1} parent=1 // pred_check_branch
      %23 = sbr.rel (0) target = $region21
    $region20: #{dnn_forward.1} parent=1 // pred_region
      _
    $region21: #{dnn_forward.1} parent=1 // pred_fallthru
      _
    // Predicated region
    $region22: #{dnn_forward.1} parent=1 // pred_check
      _
    $region23: #{dnn_forward.1} parent=1 // pred_check_branch
      %25 = sbr.rel (0) target = $region25
    $region24: #{dnn_forward.1} parent=1 // pred_region
      _
    $region25: #{dnn_forward.1} parent=1 // pred_fallthru
      _
    %v27 = vld [vmem:[%s1] sm:$0xff]
    %v28 = vld [vmem:[%s1 + $0x8] sm:$0xff]
    %v29 = vld [vmem:[%s1 + $0x10] sm:$0xff]
    %v30 = vld [vmem:[%s1 + $0x18] sm:$0xff]
    %v31 = vld [vmem:[%s3] sm:$0xff]
    %v32 = vld [vmem:[%s3 + $0x8] sm:$0xff]
    %v33 = vld [vmem:[%s3 + $0x10] sm:$0xff]
    %v34 = vld [vmem:[%s3 + $0x18] sm:$0xff]
    %v35 = vld [vmem:[#allocation2] sm:$0x1]
    %v36 = vld [vmem:[%s4] sm:$0xff]
    %v37 = vld [vmem:[%s4 + $0x8] sm:$0xff]
    %v38 = vld [vmem:[%s4 + $0x10] sm:$0xff]
    %v39 = vld [vmem:[%s4 + $0x18] sm:$0xff]
    %v40 = vld [vmem:[%s0] sm:$0xff]
    %v41 = vld [vmem:[%s0 + $0x8] sm:$0xff]
    %v42 = vld [vmem:[%s0 + $0x10] sm:$0xff]
    %v43 = vld [vmem:[%s0 + $0x18] sm:$0xff]
    %45 = vset.pattern.permute.xlu0 0
    %46 = vperm.xlu0 %45, %v36
    %v47 = vpop.permute.xlu0 %46
    %50 = vset.pattern.permute.xlu0 0
    %51 = vperm.xlu0 %50, %v37
    %v52 = vpop.permute.xlu0 %51
    %55 = vset.pattern.permute.xlu0 0
    %56 = vperm.xlu0 %55, %v38
    %v57 = vpop.permute.xlu0 %56
    %60 = vset.pattern.permute.xlu0 0
    %61 = vperm.xlu0 %60, %v39
    %v62 = vpop.permute.xlu0 %61
    %vm64 = vcmask 64512
    %v66 = vsel %vm64, %v27, 0
    %v69 = vsel %vm64, %v28, 0
    %v72 = vsel %vm64, %v29, 0
    %v75 = vsel %vm64, %v30, 0
    %77 = vmatpush.msra.mxu0 0.0
    %78 = vmatpush.msra.mxu0 0.0
    %79 = vmatpush.msra.mxu0 0.0
    %80 = vmatpush.msra.mxu0 0.0
    %81 = vmatpush.msra.mxu0 0.0
    %82 = vmatpush.msra.mxu0 0.0
    %83 = vmatpush.msra.mxu0 0.0
    %84 = vmatpush.msra.mxu0 0.0
    %85 = vmatpush.msra.mxu0 0.0
    %86 = vmatpush.msra.mxu0 0.0
    %87 = vmatpush.msra.mxu0 0.0
    %88 = vmatpush.msra.mxu0 0.0
    %89 = vmatpush.msra.mxu0 0.0
    %90 = vmatpush.msra.mxu0 0.0
    %91 = vmatpush.msra.mxu0 0.0
    %92 = vmatpush.msra.mxu0 %v40
    %93 = vmatmul.f32.gmra.mxu0 %v66
    %v94 = vpop.f32.mrf.mxu0
    %v95 = vadd.f32 %v47, %v94
    %96 = vmatmul.f32.gmra.mxu0 %v69
    %v97 = vpop.f32.mrf.mxu0
    %v98 = vadd.f32 %v52, %v97
    %99 = vmatmul.f32.gmra.mxu0 %v72
    %v100 = vpop.f32.mrf.mxu0
    %v101 = vadd.f32 %v57, %v100
    %102 = vmatmul.f32.gmra.mxu0 %v75
    %v103 = vpop.f32.mrf.mxu0
    %v104 = vadd.f32 %v62, %v103
    %105 = vdwg.mxu0
    %106 = vmatpush.msra.mxu0 0.0
    %107 = vmatpush.msra.mxu0 0.0
    %108 = vmatpush.msra.mxu0 0.0
    %109 = vmatpush.msra.mxu0 0.0
    %110 = vmatpush.msra.mxu0 0.0
    %111 = vmatpush.msra.mxu0 0.0
    %112 = vmatpush.msra.mxu0 0.0
    %113 = vmatpush.msra.mxu0 0.0
    %114 = vmatpush.msra.mxu0 0.0
    %115 = vmatpush.msra.mxu0 0.0
    %116 = vmatpush.msra.mxu0 0.0
    %117 = vmatpush.msra.mxu0 0.0
    %118 = vmatpush.msra.mxu0 0.0
    %119 = vmatpush.msra.mxu0 0.0
    %120 = vmatpush.msra.mxu0 0.0
    %121 = vmatpush.msra.mxu0 %v41
    %122 = vmatmul.f32.gmra.mxu0 %v66
    %v123 = vpop.f32.mrf.mxu0
    %v124 = vadd.f32 %v47, %v123
    %125 = vmatmul.f32.gmra.mxu0 %v69
    %v126 = vpop.f32.mrf.mxu0
    %v127 = vadd.f32 %v52, %v126
    %128 = vmatmul.f32.gmra.mxu0 %v72
    %v129 = vpop.f32.mrf.mxu0
    %v130 = vadd.f32 %v57, %v129
    %131 = vmatmul.f32.gmra.mxu0 %v75
    %v132 = vpop.f32.mrf.mxu0
    %v133 = vadd.f32 %v62, %v132
    %134 = vdwg.mxu0
    %135 = vmatpush.msra.mxu0 0.0
    %136 = vmatpush.msra.mxu0 0.0
    %137 = vmatpush.msra.mxu0 0.0
    %138 = vmatpush.msra.mxu0 0.0
    %139 = vmatpush.msra.mxu0 0.0
    %140 = vmatpush.msra.mxu0 0.0
    %141 = vmatpush.msra.mxu0 0.0
    %142 = vmatpush.msra.mxu0 0.0
    %143 = vmatpush.msra.mxu0 0.0
    %144 = vmatpush.msra.mxu0 0.0
    %145 = vmatpush.msra.mxu0 0.0
    %146 = vmatpush.msra.mxu0 0.0
    %147 = vmatpush.msra.mxu0 0.0
    %148 = vmatpush.msra.mxu0 0.0
    %149 = vmatpush.msra.mxu0 0.0
    %150 = vmatpush.msra.mxu0 %v42
    %151 = vmatmul.f32.gmra.mxu0 %v66
    %v152 = vpop.f32.mrf.mxu0
    %v153 = vadd.f32 %v47, %v152
    %154 = vmatmul.f32.gmra.mxu0 %v69
    %v155 = vpop.f32.mrf.mxu0
    %v156 = vadd.f32 %v52, %v155
    %157 = vmatmul.f32.gmra.mxu0 %v72
    %v158 = vpop.f32.mrf.mxu0
    %v159 = vadd.f32 %v57, %v158
    %160 = vmatmul.f32.gmra.mxu0 %v75
    %v161 = vpop.f32.mrf.mxu0
    %v162 = vadd.f32 %v62, %v161
    %163 = vdwg.mxu0
    %164 = vmatpush.msra.mxu0 0.0
    %165 = vmatpush.msra.mxu0 0.0
    %166 = vmatpush.msra.mxu0 0.0
    %167 = vmatpush.msra.mxu0 0.0
    %168 = vmatpush.msra.mxu0 0.0
    %169 = vmatpush.msra.mxu0 0.0
    %170 = vmatpush.msra.mxu0 0.0
    %171 = vmatpush.msra.mxu0 0.0
    %172 = vmatpush.msra.mxu0 0.0
    %173 = vmatpush.msra.mxu0 0.0
    %174 = vmatpush.msra.mxu0 0.0
    %175 = vmatpush.msra.mxu0 0.0
    %176 = vmatpush.msra.mxu0 0.0
    %177 = vmatpush.msra.mxu0 0.0
    %178 = vmatpush.msra.mxu0 0.0
    %179 = vmatpush.msra.mxu0 %v43
    %180 = vmatmul.f32.gmra.mxu0 %v66
    %v181 = vpop.f32.mrf.mxu0
    %v182 = vadd.f32 %v47, %v181
    %183 = vmatmul.f32.gmra.mxu0 %v69
    %v184 = vpop.f32.mrf.mxu0
    %v185 = vadd.f32 %v52, %v184
    %186 = vmatmul.f32.gmra.mxu0 %v72
    %v187 = vpop.f32.mrf.mxu0
    %v188 = vadd.f32 %v57, %v187
    %189 = vmatmul.f32.gmra.mxu0 %v75
    %v190 = vpop.f32.mrf.mxu0
    %v191 = vadd.f32 %v62, %v190
    %192 = vdwg.mxu0
    %v193 = vpack.c.bf16 %v98, %v95
    %v194 = vpack.c.bf16 %v127, %v124
    %v195 = vpack.c.bf16 %v104, %v101
    %v196 = vpack.c.bf16 %v133, %v130
    %v197 = vunpack.c.l.bf16 %v193
    %v198 = vunpack.c.l.bf16 %v194
    %v199 = vunpack.c.h.bf16 %v193
    %v200 = vunpack.c.h.bf16 %v194
    %v201 = vunpack.c.l.bf16 %v195
    %v202 = vunpack.c.l.bf16 %v196
    %v203 = vunpack.c.h.bf16 %v195
    %v204 = vunpack.c.h.bf16 %v196
    %v205 = vtanh.pop %v197
    %v206 = vtanh.pop %v198
    %v207 = vtanh.pop %v199
    %v208 = vtanh.pop %v200
    %v209 = vtanh.pop %v201
    %v210 = vtanh.pop %v202
    %v211 = vtanh.pop %v203
    %v212 = vtanh.pop %v204
    %v213 = vpack.c.bf16 %v207, %v205
    %v214 = vpack.c.bf16 %v208, %v206
    %v215 = vpack.c.bf16 %v211, %v209
    %v216 = vpack.c.bf16 %v212, %v210
    %v217 = vpack.c.bf16 %v156, %v153
    %v218 = vpack.c.bf16 %v185, %v182
    %v219 = vpack.c.bf16 %v162, %v159
    %v220 = vpack.c.bf16 %v191, %v188
    %v221 = vunpack.c.l.bf16 %v217
    %v222 = vunpack.c.l.bf16 %v218
    %v223 = vunpack.c.h.bf16 %v217
    %v224 = vunpack.c.h.bf16 %v218
    %v225 = vunpack.c.l.bf16 %v219
    %v226 = vunpack.c.l.bf16 %v220
    %v227 = vunpack.c.h.bf16 %v219
    %v228 = vunpack.c.h.bf16 %v220
    %v229 = vtanh.pop %v221
    %v230 = vtanh.pop %v222
    %v231 = vtanh.pop %v223
    %v232 = vtanh.pop %v224
    %v233 = vtanh.pop %v225
    %v234 = vtanh.pop %v226
    %v235 = vtanh.pop %v227
    %v236 = vtanh.pop %v228
    %v237 = vpack.c.bf16 %v231, %v229
    %v238 = vpack.c.bf16 %v232, %v230
    %v239 = vpack.c.bf16 %v235, %v233
    %v240 = vpack.c.bf16 %v236, %v234
    %v241 = vld [vmem:[%s2] sm:$0xf]
    %v242 = vld [vmem:[%s2 + $0x4] sm:$0xf]
    %v243 = vld [vmem:[%s2 + $0x8] sm:$0xf]
    %v244 = vld [vmem:[%s2 + $0xc] sm:$0xf]
    %s245 = scalar_lea.vmem %s4, 32
    %v246 = vld [vmem:[%s245] sm:$0xff]
    %v247 = vld [vmem:[%s245 + $0x8] sm:$0xff]
    %v248 = vld [vmem:[%s245 + $0x10] sm:$0xff]
    %v249 = vld [vmem:[%s245 + $0x18] sm:$0xff]
    %251 = vset.pattern.permute.xlu0 0
    %252 = vperm.xlu0 %251, %v246
    %v253 = vpop.permute.xlu0 %252
    %256 = vset.pattern.permute.xlu0 0
    %257 = vperm.xlu0 %256, %v247
    %v258 = vpop.permute.xlu0 %257
    %261 = vset.pattern.permute.xlu0 0
    %262 = vperm.xlu0 %261, %v248
    %v263 = vpop.permute.xlu0 %262
    %266 = vset.pattern.permute.xlu0 0
    %267 = vperm.xlu0 %266, %v249
    %v268 = vpop.permute.xlu0 %267
    %v274 = vunpack.c.l.b16 %v241
    %v275 = vunpack.c.l.b16 %v242
    %v276 = vunpack.c.l.b16 %v243
    %v277 = vunpack.c.l.b16 %v244
    %v278 = vpack.c.b16 %v275, %v274
    %v279 = vpack.c.b16 %v277, %v276
    %vm280 = vcmask 261120
    %v282 = vsel %vm280, %v278, 0
    %v285 = vsel %vm280, %v279, 0
    %287 = vmatpush.bf16.msra.mxu0 0
    %288 = vmatpush.bf16.msra.mxu0 0
    %289 = vmatpush.bf16.msra.mxu0 0
    %290 = vmatpush.bf16.msra.mxu0 0
    %291 = vmatpush.bf16.msra.mxu0 0
    %292 = vmatpush.bf16.msra.mxu0 0
    %293 = vmatpush.bf16.msra.mxu0 %v215
    %294 = vmatpush.bf16.msra.mxu0 %v213
    %295 = vmatmul.bf16.gmra.mxu0 %v282
    %v296 = vpop.f32.mrf.mxu0
    %v297 = vadd.f32 %v253, %v296
    %v298 = vpop.f32.mrf.mxu0
    %v299 = vadd.f32 %v258, %v298
    %300 = vmatmul.bf16.gmra.mxu0 %v285
    %v301 = vpop.f32.mrf.mxu0
    %v302 = vadd.f32 %v263, %v301
    %v303 = vpop.f32.mrf.mxu0
    %v304 = vadd.f32 %v268, %v303
    %305 = vdwg.mxu0
    %306 = vmatpush.bf16.msra.mxu0 0
    %307 = vmatpush.bf16.msra.mxu0 0
    %308 = vmatpush.bf16.msra.mxu0 0
    %309 = vmatpush.bf16.msra.mxu0 0
    %310 = vmatpush.bf16.msra.mxu0 0
    %311 = vmatpush.bf16.msra.mxu0 0
    %312 = vmatpush.bf16.msra.mxu0 %v216
    %313 = vmatpush.bf16.msra.mxu0 %v214
    %314 = vmatmul.bf16.gmra.mxu0 %v282
    %v315 = vpop.f32.mrf.mxu0
    %v316 = vadd.f32 %v253, %v315
    %v317 = vpop.f32.mrf.mxu0
    %v318 = vadd.f32 %v258, %v317
    %319 = vmatmul.bf16.gmra.mxu0 %v285
    %v320 = vpop.f32.mrf.mxu0
    %v321 = vadd.f32 %v263, %v320
    %v322 = vpop.f32.mrf.mxu0
    %v323 = vadd.f32 %v268, %v322
    %324 = vdwg.mxu0
    %325 = vmatpush.bf16.msra.mxu0 0
    %326 = vmatpush.bf16.msra.mxu0 0
    %327 = vmatpush.bf16.msra.mxu0 0
    %328 = vmatpush.bf16.msra.mxu0 0
    %329 = vmatpush.bf16.msra.mxu0 0
    %330 = vmatpush.bf16.msra.mxu0 0
    %331 = vmatpush.bf16.msra.mxu0 %v239
    %332 = vmatpush.bf16.msra.mxu0 %v237
    %333 = vmatmul.bf16.gmra.mxu0 %v282
    %v334 = vpop.f32.mrf.mxu0
    %v335 = vadd.f32 %v253, %v334
    %v336 = vpop.f32.mrf.mxu0
    %v337 = vadd.f32 %v258, %v336
    %338 = vmatmul.bf16.gmra.mxu0 %v285
    %v339 = vpop.f32.mrf.mxu0
    %v340 = vadd.f32 %v263, %v339
    %v341 = vpop.f32.mrf.mxu0
    %v342 = vadd.f32 %v268, %v341
    %343 = vdwg.mxu0
    %344 = vmatpush.bf16.msra.mxu0 0
    %345 = vmatpush.bf16.msra.mxu0 0
    %346 = vmatpush.bf16.msra.mxu0 0
    %347 = vmatpush.bf16.msra.mxu0 0
    %348 = vmatpush.bf16.msra.mxu0 0
    %349 = vmatpush.bf16.msra.mxu0 0
    %350 = vmatpush.bf16.msra.mxu0 %v240
    %351 = vmatpush.bf16.msra.mxu0 %v238
    %352 = vmatmul.bf16.gmra.mxu0 %v282
    %v353 = vpop.f32.mrf.mxu0
    %v354 = vadd.f32 %v253, %v353
    %v355 = vpop.f32.mrf.mxu0
    %v356 = vadd.f32 %v258, %v355
    %357 = vmatmul.bf16.gmra.mxu0 %v285
    %v358 = vpop.f32.mrf.mxu0
    %v359 = vadd.f32 %v263, %v358
    %v360 = vpop.f32.mrf.mxu0
    %v361 = vadd.f32 %v268, %v360
    %362 = vdwg.mxu0
    %v363 = vpack.c.bf16 %v299, %v297
    %v364 = vpack.c.bf16 %v318, %v316
    %v365 = vpack.c.bf16 %v304, %v302
    %v366 = vpack.c.bf16 %v323, %v321
    %v367 = vunpack.c.l.bf16 %v363
    %v368 = vunpack.c.l.bf16 %v364
    %v369 = vunpack.c.h.bf16 %v363
    %v370 = vunpack.c.h.bf16 %v364
    %v371 = vunpack.c.l.bf16 %v365
    %v372 = vunpack.c.l.bf16 %v366
    %v373 = vunpack.c.h.bf16 %v365
    %v374 = vunpack.c.h.bf16 %v366
    %v375 = vtanh.pop %v367
    %v376 = vtanh.pop %v368
    %v377 = vtanh.pop %v369
    %v378 = vtanh.pop %v370
    %v379 = vtanh.pop %v371
    %v380 = vtanh.pop %v372
    %v381 = vtanh.pop %v373
    %v382 = vtanh.pop %v374
    %v383 = vpack.c.bf16 %v377, %v375
    %v384 = vpack.c.bf16 %v378, %v376
    %v385 = vpack.c.bf16 %v381, %v379
    %v386 = vpack.c.bf16 %v382, %v380
    %v387 = vpack.c.bf16 %v337, %v335
    %v388 = vpack.c.bf16 %v356, %v354
    %v389 = vpack.c.bf16 %v342, %v340
    %v390 = vpack.c.bf16 %v361, %v359
    %v391 = vunpack.c.l.bf16 %v387
    %v392 = vunpack.c.l.bf16 %v388
    %v393 = vunpack.c.h.bf16 %v387
    %v394 = vunpack.c.h.bf16 %v388
    %v395 = vunpack.c.l.bf16 %v389
    %v396 = vunpack.c.l.bf16 %v390
    %v397 = vunpack.c.h.bf16 %v389
    %v398 = vunpack.c.h.bf16 %v390
    %v399 = vtanh.pop %v391
    %v400 = vtanh.pop %v392
    %v401 = vtanh.pop %v393
    %v402 = vtanh.pop %v394
    %v403 = vtanh.pop %v395
    %v404 = vtanh.pop %v396
    %v405 = vtanh.pop %v397
    %v406 = vtanh.pop %v398
    %v407 = vpack.c.bf16 %v401, %v399
    %v408 = vpack.c.bf16 %v402, %v400
    %v409 = vpack.c.bf16 %v405, %v403
    %v410 = vpack.c.bf16 %v406, %v404
    %s411 = scalar_lea.vmem %s2, 16
    %v412 = vld [vmem:[%s411] sm:$0xf]
    %v413 = vld [vmem:[%s411 + $0x4] sm:$0xf]
    %v414 = vld [vmem:[%s411 + $0x8] sm:$0xf]
    %v415 = vld [vmem:[%s411 + $0xc] sm:$0xf]
    %s416 = scalar_lea.vmem %s4, 64
    %v417 = vld [vmem:[%s416] sm:$0xff]
    %v418 = vld [vmem:[%s416 + $0x8] sm:$0xff]
    %v419 = vld [vmem:[%s416 + $0x10] sm:$0xff]
    %v420 = vld [vmem:[%s416 + $0x18] sm:$0xff]
    %422 = vset.pattern.permute.xlu0 0
    %423 = vperm.xlu0 %422, %v417
    %v424 = vpop.permute.xlu0 %423
    %427 = vset.pattern.permute.xlu0 0
    %428 = vperm.xlu0 %427, %v418
    %v429 = vpop.permute.xlu0 %428
    %432 = vset.pattern.permute.xlu0 0
    %433 = vperm.xlu0 %432, %v419
    %v434 = vpop.permute.xlu0 %433
    %437 = vset.pattern.permute.xlu0 0
    %438 = vperm.xlu0 %437, %v420
    %v439 = vpop.permute.xlu0 %438
    %v445 = vunpack.c.l.b16 %v412
    %v446 = vunpack.c.l.b16 %v413
    %v447 = vunpack.c.l.b16 %v414
    %v448 = vunpack.c.l.b16 %v415
    %v449 = vpack.c.b16 %v446, %v445
    %v450 = vpack.c.b16 %v448, %v447
    %v452 = vsel %vm280, %v449, 0
    %v455 = vsel %vm280, %v450, 0
    %457 = vmatpush.bf16.msra.mxu0 0
    %458 = vmatpush.bf16.msra.mxu0 0
    %459 = vmatpush.bf16.msra.mxu0 0
    %460 = vmatpush.bf16.msra.mxu0 0
    %461 = vmatpush.bf16.msra.mxu0 0
    %462 = vmatpush.bf16.msra.mxu0 0
    %463 = vmatpush.bf16.msra.mxu0 %v385
    %464 = vmatpush.bf16.msra.mxu0 %v383
    %465 = vmatmul.bf16.gmra.mxu0 %v452
    %v466 = vpop.f32.mrf.mxu0
    %v467 = vadd.f32 %v424, %v466
    %v468 = vpop.f32.mrf.mxu0
    %v469 = vadd.f32 %v429, %v468
    %470 = vmatmul.bf16.gmra.mxu0 %v455
    %v471 = vpop.f32.mrf.mxu0
    %v472 = vadd.f32 %v434, %v471
    %v473 = vpop.f32.mrf.mxu0
    %v474 = vadd.f32 %v439, %v473
    %475 = vdwg.mxu0
    %476 = vmatpush.bf16.msra.mxu0 0
    %477 = vmatpush.bf16.msra.mxu0 0
    %478 = vmatpush.bf16.msra.mxu0 0
    %479 = vmatpush.bf16.msra.mxu0 0
    %480 = vmatpush.bf16.msra.mxu0 0
    %481 = vmatpush.bf16.msra.mxu0 0
    %482 = vmatpush.bf16.msra.mxu0 %v386
    %483 = vmatpush.bf16.msra.mxu0 %v384
    %484 = vmatmul.bf16.gmra.mxu0 %v452
    %v485 = vpop.f32.mrf.mxu0
    %v486 = vadd.f32 %v424, %v485
    %v487 = vpop.f32.mrf.mxu0
    %v488 = vadd.f32 %v429, %v487
    %489 = vmatmul.bf16.gmra.mxu0 %v455
    %v490 = vpop.f32.mrf.mxu0
    %v491 = vadd.f32 %v434, %v490
    %v492 = vpop.f32.mrf.mxu0
    %v493 = vadd.f32 %v439, %v492
    %494 = vdwg.mxu0
    %495 = vmatpush.bf16.msra.mxu0 0
    %496 = vmatpush.bf16.msra.mxu0 0
    %497 = vmatpush.bf16.msra.mxu0 0
    %498 = vmatpush.bf16.msra.mxu0 0
    %499 = vmatpush.bf16.msra.mxu0 0
    %500 = vmatpush.bf16.msra.mxu0 0
    %501 = vmatpush.bf16.msra.mxu0 %v409
    %502 = vmatpush.bf16.msra.mxu0 %v407
    %503 = vmatmul.bf16.gmra.mxu0 %v452
    %v504 = vpop.f32.mrf.mxu0
    %v505 = vadd.f32 %v424, %v504
    %v506 = vpop.f32.mrf.mxu0
    %v507 = vadd.f32 %v429, %v506
    %508 = vmatmul.bf16.gmra.mxu0 %v455
    %v509 = vpop.f32.mrf.mxu0
    %v510 = vadd.f32 %v434, %v509
    %v511 = vpop.f32.mrf.mxu0
    %v512 = vadd.f32 %v439, %v511
    %513 = vdwg.mxu0
    %514 = vmatpush.bf16.msra.mxu0 0
    %515 = vmatpush.bf16.msra.mxu0 0
    %516 = vmatpush.bf16.msra.mxu0 0
    %517 = vmatpush.bf16.msra.mxu0 0
    %518 = vmatpush.bf16.msra.mxu0 0
    %519 = vmatpush.bf16.msra.mxu0 0
    %520 = vmatpush.bf16.msra.mxu0 %v410
    %521 = vmatpush.bf16.msra.mxu0 %v408
    %522 = vmatmul.bf16.gmra.mxu0 %v452
    %v523 = vpop.f32.mrf.mxu0
    %v524 = vadd.f32 %v424, %v523
    %v525 = vpop.f32.mrf.mxu0
    %v526 = vadd.f32 %v429, %v525
    %527 = vmatmul.bf16.gmra.mxu0 %v455
    %v528 = vpop.f32.mrf.mxu0
    %v529 = vadd.f32 %v434, %v528
    %v530 = vpop.f32.mrf.mxu0
    %v531 = vadd.f32 %v439, %v530
    %532 = vdwg.mxu0
    %v533 = vpack.c.bf16 %v469, %v467
    %v534 = vpack.c.bf16 %v488, %v486
    %v535 = vpack.c.bf16 %v474, %v472
    %v536 = vpack.c.bf16 %v493, %v491
    %v537 = vunpack.c.l.bf16 %v533
    %v538 = vunpack.c.l.bf16 %v534
    %v539 = vunpack.c.h.bf16 %v533
    %v540 = vunpack.c.h.bf16 %v534
    %v541 = vunpack.c.l.bf16 %v535
    %v542 = vunpack.c.l.bf16 %v536
    %v543 = vunpack.c.h.bf16 %v535
    %v544 = vunpack.c.h.bf16 %v536
    %v545 = vtanh.pop %v537
    %v546 = vtanh.pop %v538
    %v547 = vtanh.pop %v539
    %v548 = vtanh.pop %v540
    %v549 = vtanh.pop %v541
    %v550 = vtanh.pop %v542
    %v551 = vtanh.pop %v543
    %v552 = vtanh.pop %v544
    %v553 = vpack.c.bf16 %v547, %v545
    %v554 = vpack.c.bf16 %v548, %v546
    %v555 = vpack.c.bf16 %v551, %v549
    %v556 = vpack.c.bf16 %v552, %v550
    %v557 = vpack.c.bf16 %v507, %v505
    %v558 = vpack.c.bf16 %v526, %v524
    %v559 = vpack.c.bf16 %v512, %v510
    %v560 = vpack.c.bf16 %v531, %v529
    %v561 = vunpack.c.l.bf16 %v557
    %v562 = vunpack.c.l.bf16 %v558
    %v563 = vunpack.c.h.bf16 %v557
    %v564 = vunpack.c.h.bf16 %v558
    %v565 = vunpack.c.l.bf16 %v559
    %v566 = vunpack.c.l.bf16 %v560
    %v567 = vunpack.c.h.bf16 %v559
    %v568 = vunpack.c.h.bf16 %v560
    %v569 = vtanh.pop %v561
    %v570 = vtanh.pop %v562
    %v571 = vtanh.pop %v563
    %v572 = vtanh.pop %v564
    %v573 = vtanh.pop %v565
    %v574 = vtanh.pop %v566
    %v575 = vtanh.pop %v567
    %v576 = vtanh.pop %v568
    %v577 = vpack.c.bf16 %v571, %v569
    %v578 = vpack.c.bf16 %v572, %v570
    %v579 = vpack.c.bf16 %v575, %v573
    %v580 = vpack.c.bf16 %v576, %v574
    %s581 = scalar_lea.vmem %s2, 32
    %v582 = vld [vmem:[%s581] sm:$0xf]
    %v583 = vld [vmem:[%s581 + $0x4] sm:$0xf]
    %v584 = vld [vmem:[%s581 + $0x8] sm:$0xf]
    %v585 = vld [vmem:[%s581 + $0xc] sm:$0xf]
    %s586 = scalar_lea.vmem %s4, 96
    %v587 = vld [vmem:[%s586] sm:$0xff]
    %v588 = vld [vmem:[%s586 + $0x8] sm:$0xff]
    %v589 = vld [vmem:[%s586 + $0x10] sm:$0xff]
    %v590 = vld [vmem:[%s586 + $0x18] sm:$0xff]
    %592 = vset.pattern.permute.xlu0 0
    %593 = vperm.xlu0 %592, %v587
    %v594 = vpop.permute.xlu0 %593
    %597 = vset.pattern.permute.xlu0 0
    %598 = vperm.xlu0 %597, %v588
    %v599 = vpop.permute.xlu0 %598
    %602 = vset.pattern.permute.xlu0 0
    %603 = vperm.xlu0 %602, %v589
    %v604 = vpop.permute.xlu0 %603
    %607 = vset.pattern.permute.xlu0 0
    %608 = vperm.xlu0 %607, %v590
    %v609 = vpop.permute.xlu0 %608
    %v615 = vunpack.c.l.b16 %v582
    %v616 = vunpack.c.l.b16 %v583
    %v617 = vunpack.c.l.b16 %v584
    %v618 = vunpack.c.l.b16 %v585
    %v619 = vpack.c.b16 %v616, %v615
    %v620 = vpack.c.b16 %v618, %v617
    %v622 = vsel %vm280, %v619, 0
    %v625 = vsel %vm280, %v620, 0
    %627 = vmatpush.bf16.msra.mxu0 0
    %628 = vmatpush.bf16.msra.mxu0 0
    %629 = vmatpush.bf16.msra.mxu0 0
    %630 = vmatpush.bf16.msra.mxu0 0
    %631 = vmatpush.bf16.msra.mxu0 0
    %632 = vmatpush.bf16.msra.mxu0 0
    %633 = vmatpush.bf16.msra.mxu0 %v555
    %634 = vmatpush.bf16.msra.mxu0 %v553
    %635 = vmatmul.bf16.gmra.mxu0 %v622
    %v636 = vpop.f32.mrf.mxu0
    %v637 = vadd.f32 %v594, %v636
    %v638 = vpop.f32.mrf.mxu0
    %v639 = vadd.f32 %v599, %v638
    %640 = vmatmul.bf16.gmra.mxu0 %v625
    %v641 = vpop.f32.mrf.mxu0
    %v642 = vadd.f32 %v604, %v641
    %v643 = vpop.f32.mrf.mxu0
    %v644 = vadd.f32 %v609, %v643
    %645 = vdwg.mxu0
    %646 = vmatpush.bf16.msra.mxu0 0
    %647 = vmatpush.bf16.msra.mxu0 0
    %648 = vmatpush.bf16.msra.mxu0 0
    %649 = vmatpush.bf16.msra.mxu0 0
    %650 = vmatpush.bf16.msra.mxu0 0
    %651 = vmatpush.bf16.msra.mxu0 0
    %652 = vmatpush.bf16.msra.mxu0 %v556
    %653 = vmatpush.bf16.msra.mxu0 %v554
    %654 = vmatmul.bf16.gmra.mxu0 %v622
    %v655 = vpop.f32.mrf.mxu0
    %v656 = vadd.f32 %v594, %v655
    %v657 = vpop.f32.mrf.mxu0
    %v658 = vadd.f32 %v599, %v657
    %659 = vmatmul.bf16.gmra.mxu0 %v625
    %v660 = vpop.f32.mrf.mxu0
    %v661 = vadd.f32 %v604, %v660
    %v662 = vpop.f32.mrf.mxu0
    %v663 = vadd.f32 %v609, %v662
    %664 = vdwg.mxu0
    %665 = vmatpush.bf16.msra.mxu0 0
    %666 = vmatpush.bf16.msra.mxu0 0
    %667 = vmatpush.bf16.msra.mxu0 0
    %668 = vmatpush.bf16.msra.mxu0 0
    %669 = vmatpush.bf16.msra.mxu0 0
    %670 = vmatpush.bf16.msra.mxu0 0
    %671 = vmatpush.bf16.msra.mxu0 %v579
    %672 = vmatpush.bf16.msra.mxu0 %v577
    %673 = vmatmul.bf16.gmra.mxu0 %v622
    %v674 = vpop.f32.mrf.mxu0
    %v675 = vadd.f32 %v594, %v674
    %v676 = vpop.f32.mrf.mxu0
    %v677 = vadd.f32 %v599, %v676
    %678 = vmatmul.bf16.gmra.mxu0 %v625
    %v679 = vpop.f32.mrf.mxu0
    %v680 = vadd.f32 %v604, %v679
    %v681 = vpop.f32.mrf.mxu0
    %v682 = vadd.f32 %v609, %v681
    %683 = vdwg.mxu0
    %684 = vmatpush.bf16.msra.mxu0 0
    %685 = vmatpush.bf16.msra.mxu0 0
    %686 = vmatpush.bf16.msra.mxu0 0
    %687 = vmatpush.bf16.msra.mxu0 0
    %688 = vmatpush.bf16.msra.mxu0 0
    %689 = vmatpush.bf16.msra.mxu0 0
    %690 = vmatpush.bf16.msra.mxu0 %v580
    %691 = vmatpush.bf16.msra.mxu0 %v578
    %692 = vmatmul.bf16.gmra.mxu0 %v622
    %v693 = vpop.f32.mrf.mxu0
    %v694 = vadd.f32 %v594, %v693
    %v695 = vpop.f32.mrf.mxu0
    %v696 = vadd.f32 %v599, %v695
    %697 = vmatmul.bf16.gmra.mxu0 %v625
    %v698 = vpop.f32.mrf.mxu0
    %v699 = vadd.f32 %v604, %v698
    %v700 = vpop.f32.mrf.mxu0
    %v701 = vadd.f32 %v609, %v700
    %702 = vdwg.mxu0
    %v703 = vpack.c.bf16 %v639, %v637
    %v704 = vpack.c.bf16 %v658, %v656
    %v705 = vpack.c.bf16 %v644, %v642
    %v706 = vpack.c.bf16 %v663, %v661
    %v707 = vunpack.c.l.bf16 %v703
    %v708 = vunpack.c.l.bf16 %v704
    %v709 = vunpack.c.h.bf16 %v703
    %v710 = vunpack.c.h.bf16 %v704
    %v711 = vunpack.c.l.bf16 %v705
    %v712 = vunpack.c.l.bf16 %v706
    %v713 = vunpack.c.h.bf16 %v705
    %v714 = vunpack.c.h.bf16 %v706
    %v715 = vtanh.pop %v707
    %v716 = vtanh.pop %v708
    %v717 = vtanh.pop %v709
    %v718 = vtanh.pop %v710
    %v719 = vtanh.pop %v711
    %v720 = vtanh.pop %v712
    %v721 = vtanh.pop %v713
    %v722 = vtanh.pop %v714
    %v723 = vpack.c.bf16 %v717, %v715
    %v724 = vpack.c.bf16 %v718, %v716
    %v725 = vpack.c.bf16 %v721, %v719
    %v726 = vpack.c.bf16 %v722, %v720
    %v727 = vpack.c.bf16 %v677, %v675
    %v728 = vpack.c.bf16 %v696, %v694
    %v729 = vpack.c.bf16 %v682, %v680
    %v730 = vpack.c.bf16 %v701, %v699
    %v731 = vunpack.c.l.bf16 %v727
    %v732 = vunpack.c.l.bf16 %v728
    %v733 = vunpack.c.h.bf16 %v727
    %v734 = vunpack.c.h.bf16 %v728
    %v735 = vunpack.c.l.bf16 %v729
    %v736 = vunpack.c.l.bf16 %v730
    %v737 = vunpack.c.h.bf16 %v729
    %v738 = vunpack.c.h.bf16 %v730
    %v739 = vtanh.pop %v731
    %v740 = vtanh.pop %v732
    %v741 = vtanh.pop %v733
    %v742 = vtanh.pop %v734
    %v743 = vtanh.pop %v735
    %v744 = vtanh.pop %v736
    %v745 = vtanh.pop %v737
    %v746 = vtanh.pop %v738
    %v747 = vpack.c.bf16 %v741, %v739
    %v748 = vpack.c.bf16 %v742, %v740
    %v749 = vpack.c.bf16 %v745, %v743
    %v750 = vpack.c.bf16 %v746, %v744
    %s751 = scalar_lea.vmem %s2, 48
    %v752 = vld [vmem:[%s751] sm:$0xf]
    %v753 = vld [vmem:[%s751 + $0x4] sm:$0xf]
    %v754 = vld [vmem:[%s751 + $0x8] sm:$0xf]
    %v755 = vld [vmem:[%s751 + $0xc] sm:$0xf]
    %s756 = scalar_lea.vmem %s4, 128
    %v757 = vld [vmem:[%s756] sm:$0xff]
    %v758 = vld [vmem:[%s756 + $0x8] sm:$0xff]
    %v759 = vld [vmem:[%s756 + $0x10] sm:$0xff]
    %v760 = vld [vmem:[%s756 + $0x18] sm:$0xff]
    %762 = vset.pattern.permute.xlu0 0
    %763 = vperm.xlu0 %762, %v757
    %v764 = vpop.permute.xlu0 %763
    %767 = vset.pattern.permute.xlu0 0
    %768 = vperm.xlu0 %767, %v758
    %v769 = vpop.permute.xlu0 %768
    %772 = vset.pattern.permute.xlu0 0
    %773 = vperm.xlu0 %772, %v759
    %v774 = vpop.permute.xlu0 %773
    %777 = vset.pattern.permute.xlu0 0
    %778 = vperm.xlu0 %777, %v760
    %v779 = vpop.permute.xlu0 %778
    %v785 = vunpack.c.l.b16 %v752
    %v786 = vunpack.c.l.b16 %v753
    %v787 = vunpack.c.l.b16 %v754
    %v788 = vunpack.c.l.b16 %v755
    %v789 = vpack.c.b16 %v786, %v785
    %v790 = vpack.c.b16 %v788, %v787
    %v792 = vsel %vm280, %v789, 0
    %v795 = vsel %vm280, %v790, 0
    %797 = vmatpush.bf16.msra.mxu0 0
    %798 = vmatpush.bf16.msra.mxu0 0
    %799 = vmatpush.bf16.msra.mxu0 0
    %800 = vmatpush.bf16.msra.mxu0 0
    %801 = vmatpush.bf16.msra.mxu0 0
    %802 = vmatpush.bf16.msra.mxu0 0
    %803 = vmatpush.bf16.msra.mxu0 %v725
    %804 = vmatpush.bf16.msra.mxu0 %v723
    %805 = vmatmul.bf16.gmra.mxu0 %v792
    %v806 = vpop.f32.mrf.mxu0
    %v807 = vadd.f32 %v764, %v806
    %v808 = vpop.f32.mrf.mxu0
    %v809 = vadd.f32 %v769, %v808
    %810 = vmatmul.bf16.gmra.mxu0 %v795
    %v811 = vpop.f32.mrf.mxu0
    %v812 = vadd.f32 %v774, %v811
    %v813 = vpop.f32.mrf.mxu0
    %v814 = vadd.f32 %v779, %v813
    %815 = vdwg.mxu0
    %816 = vmatpush.bf16.msra.mxu0 0
    %817 = vmatpush.bf16.msra.mxu0 0
    %818 = vmatpush.bf16.msra.mxu0 0
    %819 = vmatpush.bf16.msra.mxu0 0
    %820 = vmatpush.bf16.msra.mxu0 0
    %821 = vmatpush.bf16.msra.mxu0 0
    %822 = vmatpush.bf16.msra.mxu0 %v726
    %823 = vmatpush.bf16.msra.mxu0 %v724
    %824 = vmatmul.bf16.gmra.mxu0 %v792
    %v825 = vpop.f32.mrf.mxu0
    %v826 = vadd.f32 %v764, %v825
    %v827 = vpop.f32.mrf.mxu0
    %v828 = vadd.f32 %v769, %v827
    %829 = vmatmul.bf16.gmra.mxu0 %v795
    %v830 = vpop.f32.mrf.mxu0
    %v831 = vadd.f32 %v774, %v830
    %v832 = vpop.f32.mrf.mxu0
    %v833 = vadd.f32 %v779, %v832
    %834 = vdwg.mxu0
    %835 = vmatpush.bf16.msra.mxu0 0
    %836 = vmatpush.bf16.msra.mxu0 0
    %837 = vmatpush.bf16.msra.mxu0 0
    %838 = vmatpush.bf16.msra.mxu0 0
    %839 = vmatpush.bf16.msra.mxu0 0
    %840 = vmatpush.bf16.msra.mxu0 0
    %841 = vmatpush.bf16.msra.mxu0 %v749
    %842 = vmatpush.bf16.msra.mxu0 %v747
    %843 = vmatmul.bf16.gmra.mxu0 %v792
    %v844 = vpop.f32.mrf.mxu0
    %v845 = vadd.f32 %v764, %v844
    %v846 = vpop.f32.mrf.mxu0
    %v847 = vadd.f32 %v769, %v846
    %848 = vmatmul.bf16.gmra.mxu0 %v795
    %v849 = vpop.f32.mrf.mxu0
    %v850 = vadd.f32 %v774, %v849
    %v851 = vpop.f32.mrf.mxu0
    %v852 = vadd.f32 %v779, %v851
    %853 = vdwg.mxu0
    %854 = vmatpush.bf16.msra.mxu0 0
    %855 = vmatpush.bf16.msra.mxu0 0
    %856 = vmatpush.bf16.msra.mxu0 0
    %857 = vmatpush.bf16.msra.mxu0 0
    %858 = vmatpush.bf16.msra.mxu0 0
    %859 = vmatpush.bf16.msra.mxu0 0
    %860 = vmatpush.bf16.msra.mxu0 %v750
    %861 = vmatpush.bf16.msra.mxu0 %v748
    %862 = vmatmul.bf16.gmra.mxu0 %v792
    %v863 = vpop.f32.mrf.mxu0
    %v864 = vadd.f32 %v764, %v863
    %v865 = vpop.f32.mrf.mxu0
    %v866 = vadd.f32 %v769, %v865
    %867 = vmatmul.bf16.gmra.mxu0 %v795
    %v868 = vpop.f32.mrf.mxu0
    %v869 = vadd.f32 %v774, %v868
    %v870 = vpop.f32.mrf.mxu0
    %v871 = vadd.f32 %v779, %v870
    %872 = vdwg.mxu0
    %v873 = vpack.c.bf16 %v809, %v807
    %v874 = vpack.c.bf16 %v828, %v826
    %v875 = vpack.c.bf16 %v814, %v812
    %v876 = vpack.c.bf16 %v833, %v831
    %v877 = vunpack.c.l.bf16 %v873
    %v878 = vunpack.c.l.bf16 %v874
    %v879 = vunpack.c.h.bf16 %v873
    %v880 = vunpack.c.h.bf16 %v874
    %v881 = vunpack.c.l.bf16 %v875
    %v882 = vunpack.c.l.bf16 %v876
    %v883 = vunpack.c.h.bf16 %v875
    %v884 = vunpack.c.h.bf16 %v876
    %v885 = vtanh.pop %v877
    %v886 = vtanh.pop %v878
    %v887 = vtanh.pop %v879
    %v888 = vtanh.pop %v880
    %v889 = vtanh.pop %v881
    %v890 = vtanh.pop %v882
    %v891 = vtanh.pop %v883
    %v892 = vtanh.pop %v884
    %v893 = vpack.c.bf16 %v887, %v885
    %v894 = vpack.c.bf16 %v888, %v886
    %v895 = vpack.c.bf16 %v891, %v889
    %v896 = vpack.c.bf16 %v892, %v890
    %v897 = vpack.c.bf16 %v847, %v845
    %v898 = vpack.c.bf16 %v866, %v864
    %v899 = vpack.c.bf16 %v852, %v850
    %v900 = vpack.c.bf16 %v871, %v869
    %v901 = vunpack.c.l.bf16 %v897
    %v902 = vunpack.c.l.bf16 %v898
    %v903 = vunpack.c.h.bf16 %v897
    %v904 = vunpack.c.h.bf16 %v898
    %v905 = vunpack.c.l.bf16 %v899
    %v906 = vunpack.c.l.bf16 %v900
    %v907 = vunpack.c.h.bf16 %v899
    %v908 = vunpack.c.h.bf16 %v900
    %v909 = vtanh.pop %v901
    %v910 = vtanh.pop %v902
    %v911 = vtanh.pop %v903
    %v912 = vtanh.pop %v904
    %v913 = vtanh.pop %v905
    %v914 = vtanh.pop %v906
    %v915 = vtanh.pop %v907
    %v916 = vtanh.pop %v908
    %v917 = vpack.c.bf16 %v911, %v909
    %v918 = vpack.c.bf16 %v912, %v910
    %v919 = vpack.c.bf16 %v915, %v913
    %v920 = vpack.c.bf16 %v916, %v914
    %s921 = scalar_lea.vmem %s2, 64
    %v922 = vld [vmem:[%s921] sm:$0xf]
    %v923 = vld [vmem:[%s921 + $0x4] sm:$0xf]
    %v924 = vld [vmem:[%s921 + $0x8] sm:$0xf]
    %v925 = vld [vmem:[%s921 + $0xc] sm:$0xf]
    %s926 = scalar_lea.vmem %s4, 160
    %v927 = vld [vmem:[%s926] sm:$0xff]
    %v928 = vld [vmem:[%s926 + $0x8] sm:$0xff]
    %v929 = vld [vmem:[%s926 + $0x10] sm:$0xff]
    %v930 = vld [vmem:[%s926 + $0x18] sm:$0xff]
    %932 = vset.pattern.permute.xlu0 0
    %933 = vperm.xlu0 %932, %v927
    %v934 = vpop.permute.xlu0 %933
    %937 = vset.pattern.permute.xlu0 0
    %938 = vperm.xlu0 %937, %v928
    %v939 = vpop.permute.xlu0 %938
    %942 = vset.pattern.permute.xlu0 0
    %943 = vperm.xlu0 %942, %v929
    %v944 = vpop.permute.xlu0 %943
    %947 = vset.pattern.permute.xlu0 0
    %948 = vperm.xlu0 %947, %v930
    %v949 = vpop.permute.xlu0 %948
    %v955 = vunpack.c.l.b16 %v922
    %v956 = vunpack.c.l.b16 %v923
    %v957 = vunpack.c.l.b16 %v924
    %v958 = vunpack.c.l.b16 %v925
    %v959 = vpack.c.b16 %v956, %v955
    %v960 = vpack.c.b16 %v958, %v957
    %v962 = vsel %vm280, %v959, 0
    %v965 = vsel %vm280, %v960, 0
    %967 = vmatpush.bf16.msra.mxu0 0
    %968 = vmatpush.bf16.msra.mxu0 0
    %969 = vmatpush.bf16.msra.mxu0 0
    %970 = vmatpush.bf16.msra.mxu0 0
    %971 = vmatpush.bf16.msra.mxu0 0
    %972 = vmatpush.bf16.msra.mxu0 0
    %973 = vmatpush.bf16.msra.mxu0 %v895
    %974 = vmatpush.bf16.msra.mxu0 %v893
    %975 = vmatmul.bf16.gmra.mxu0 %v962
    %v976 = vpop.f32.mrf.mxu0
    %v977 = vadd.f32 %v934, %v976
    %v978 = vpop.f32.mrf.mxu0
    %v979 = vadd.f32 %v939, %v978
    %980 = vmatmul.bf16.gmra.mxu0 %v965
    %v981 = vpop.f32.mrf.mxu0
    %v982 = vadd.f32 %v944, %v981
    %v983 = vpop.f32.mrf.mxu0
    %v984 = vadd.f32 %v949, %v983
    %985 = vdwg.mxu0
    %986 = vmatpush.bf16.msra.mxu0 0
    %987 = vmatpush.bf16.msra.mxu0 0
    %988 = vmatpush.bf16.msra.mxu0 0
    %989 = vmatpush.bf16.msra.mxu0 0
    %990 = vmatpush.bf16.msra.mxu0 0
    %991 = vmatpush.bf16.msra.mxu0 0
    %992 = vmatpush.bf16.msra.mxu0 %v896
    %993 = vmatpush.bf16.msra.mxu0 %v894
    %994 = vmatmul.bf16.gmra.mxu0 %v962
    %v995 = vpop.f32.mrf.mxu0
    %v996 = vadd.f32 %v934, %v995
    %v997 = vpop.f32.mrf.mxu0
    %v998 = vadd.f32 %v939, %v997
    %999 = vmatmul.bf16.gmra.mxu0 %v965
    %v1000 = vpop.f32.mrf.mxu0
    %v1001 = vadd.f32 %v944, %v1000
    %v1002 = vpop.f32.mrf.mxu0
    %v1003 = vadd.f32 %v949, %v1002
    %1004 = vdwg.mxu0
    %1005 = vmatpush.bf16.msra.mxu0 0
    %1006 = vmatpush.bf16.msra.mxu0 0
    %1007 = vmatpush.bf16.msra.mxu0 0
    %1008 = vmatpush.bf16.msra.mxu0 0
    %1009 = vmatpush.bf16.msra.mxu0 0
    %1010 = vmatpush.bf16.msra.mxu0 0
    %1011 = vmatpush.bf16.msra.mxu0 %v919
    %1012 = vmatpush.bf16.msra.mxu0 %v917
    %1013 = vmatmul.bf16.gmra.mxu0 %v962
    %v1014 = vpop.f32.mrf.mxu0
    %v1015 = vadd.f32 %v934, %v1014
    %v1016 = vpop.f32.mrf.mxu0
    %v1017 = vadd.f32 %v939, %v1016
    %1018 = vmatmul.bf16.gmra.mxu0 %v965
    %v1019 = vpop.f32.mrf.mxu0
    %v1020 = vadd.f32 %v944, %v1019
    %v1021 = vpop.f32.mrf.mxu0
    %v1022 = vadd.f32 %v949, %v1021
    %1023 = vdwg.mxu0
    %1024 = vmatpush.bf16.msra.mxu0 0
    %1025 = vmatpush.bf16.msra.mxu0 0
    %1026 = vmatpush.bf16.msra.mxu0 0
    %1027 = vmatpush.bf16.msra.mxu0 0
    %1028 = vmatpush.bf16.msra.mxu0 0
    %1029 = vmatpush.bf16.msra.mxu0 0
    %1030 = vmatpush.bf16.msra.mxu0 %v920
    %1031 = vmatpush.bf16.msra.mxu0 %v918
    %1032 = vmatmul.bf16.gmra.mxu0 %v962
    %v1033 = vpop.f32.mrf.mxu0
    %v1034 = vadd.f32 %v934, %v1033
    %v1035 = vpop.f32.mrf.mxu0
    %v1036 = vadd.f32 %v939, %v1035
    %1037 = vmatmul.bf16.gmra.mxu0 %v965
    %v1038 = vpop.f32.mrf.mxu0
    %v1039 = vadd.f32 %v944, %v1038
    %v1040 = vpop.f32.mrf.mxu0
    %v1041 = vadd.f32 %v949, %v1040
    %1042 = vdwg.mxu0
    %v1043 = vpack.c.bf16 %v979, %v977
    %v1044 = vpack.c.bf16 %v998, %v996
    %v1045 = vpack.c.bf16 %v984, %v982
    %v1046 = vpack.c.bf16 %v1003, %v1001
    %v1047 = vunpack.c.l.bf16 %v1043
    %v1048 = vunpack.c.l.bf16 %v1044
    %v1049 = vunpack.c.h.bf16 %v1043
    %v1050 = vunpack.c.h.bf16 %v1044
    %v1051 = vunpack.c.l.bf16 %v1045
    %v1052 = vunpack.c.l.bf16 %v1046
    %v1053 = vunpack.c.h.bf16 %v1045
    %v1054 = vunpack.c.h.bf16 %v1046
    %v1055 = vtanh.pop %v1047
    %v1056 = vtanh.pop %v1048
    %v1057 = vtanh.pop %v1049
    %v1058 = vtanh.pop %v1050
    %v1059 = vtanh.pop %v1051
    %v1060 = vtanh.pop %v1052
    %v1061 = vtanh.pop %v1053
    %v1062 = vtanh.pop %v1054
    %v1063 = vpack.c.bf16 %v1057, %v1055
    %v1064 = vpack.c.bf16 %v1058, %v1056
    %v1065 = vpack.c.bf16 %v1061, %v1059
    %v1066 = vpack.c.bf16 %v1062, %v1060
    %v1067 = vpack.c.bf16 %v1017, %v1015
    %v1068 = vpack.c.bf16 %v1036, %v1034
    %v1069 = vpack.c.bf16 %v1022, %v1020
    %v1070 = vpack.c.bf16 %v1041, %v1039
    %v1071 = vunpack.c.l.bf16 %v1067
    %v1072 = vunpack.c.l.bf16 %v1068
    %v1073 = vunpack.c.h.bf16 %v1067
    %v1074 = vunpack.c.h.bf16 %v1068
    %v1075 = vunpack.c.l.bf16 %v1069
    %v1076 = vunpack.c.l.bf16 %v1070
    %v1077 = vunpack.c.h.bf16 %v1069
    %v1078 = vunpack.c.h.bf16 %v1070
    %v1079 = vtanh.pop %v1071
    %v1080 = vtanh.pop %v1072
    %v1081 = vtanh.pop %v1073
    %v1082 = vtanh.pop %v1074
    %v1083 = vtanh.pop %v1075
    %v1084 = vtanh.pop %v1076
    %v1085 = vtanh.pop %v1077
    %v1086 = vtanh.pop %v1078
    %v1087 = vpack.c.bf16 %v1081, %v1079
    %v1088 = vpack.c.bf16 %v1082, %v1080
    %v1089 = vpack.c.bf16 %v1085, %v1083
    %v1090 = vpack.c.bf16 %v1086, %v1084
    %s1091 = scalar_lea.vmem %s2, 80
    %v1092 = vld [vmem:[%s1091] sm:$0xf]
    %v1093 = vld [vmem:[%s1091 + $0x4] sm:$0xf]
    %v1094 = vld [vmem:[%s1091 + $0x8] sm:$0xf]
    %v1095 = vld [vmem:[%s1091 + $0xc] sm:$0xf]
    %s1096 = scalar_lea.vmem %s4, 192
    %v1097 = vld [vmem:[%s1096] sm:$0xff]
    %v1098 = vld [vmem:[%s1096 + $0x8] sm:$0xff]
    %v1099 = vld [vmem:[%s1096 + $0x10] sm:$0xff]
    %v1100 = vld [vmem:[%s1096 + $0x18] sm:$0xff]
    %1102 = vset.pattern.permute.xlu0 0
    %1103 = vperm.xlu0 %1102, %v1097
    %v1104 = vpop.permute.xlu0 %1103
    %1107 = vset.pattern.permute.xlu0 0
    %1108 = vperm.xlu0 %1107, %v1098
    %v1109 = vpop.permute.xlu0 %1108
    %1112 = vset.pattern.permute.xlu0 0
    %1113 = vperm.xlu0 %1112, %v1099
    %v1114 = vpop.permute.xlu0 %1113
    %1117 = vset.pattern.permute.xlu0 0
    %1118 = vperm.xlu0 %1117, %v1100
    %v1119 = vpop.permute.xlu0 %1118
    %v1125 = vunpack.c.l.b16 %v1092
    %v1126 = vunpack.c.l.b16 %v1093
    %v1127 = vunpack.c.l.b16 %v1094
    %v1128 = vunpack.c.l.b16 %v1095
    %v1129 = vpack.c.b16 %v1126, %v1125
    %v1130 = vpack.c.b16 %v1128, %v1127
    %v1132 = vsel %vm280, %v1129, 0
    %v1135 = vsel %vm280, %v1130, 0
    %1137 = vmatpush.bf16.msra.mxu0 0
    %1138 = vmatpush.bf16.msra.mxu0 0
    %1139 = vmatpush.bf16.msra.mxu0 0
    %1140 = vmatpush.bf16.msra.mxu0 0
    %1141 = vmatpush.bf16.msra.mxu0 0
    %1142 = vmatpush.bf16.msra.mxu0 0
    %1143 = vmatpush.bf16.msra.mxu0 %v1065
    %1144 = vmatpush.bf16.msra.mxu0 %v1063
    %1145 = vmatmul.bf16.gmra.mxu0 %v1132
    %v1146 = vpop.f32.mrf.mxu0
    %v1147 = vadd.f32 %v1104, %v1146
    %v1148 = vpop.f32.mrf.mxu0
    %v1149 = vadd.f32 %v1109, %v1148
    %1150 = vmatmul.bf16.gmra.mxu0 %v1135
    %v1151 = vpop.f32.mrf.mxu0
    %v1152 = vadd.f32 %v1114, %v1151
    %v1153 = vpop.f32.mrf.mxu0
    %v1154 = vadd.f32 %v1119, %v1153
    %1155 = vdwg.mxu0
    %1156 = vmatpush.bf16.msra.mxu0 0
    %1157 = vmatpush.bf16.msra.mxu0 0
    %1158 = vmatpush.bf16.msra.mxu0 0
    %1159 = vmatpush.bf16.msra.mxu0 0
    %1160 = vmatpush.bf16.msra.mxu0 0
    %1161 = vmatpush.bf16.msra.mxu0 0
    %1162 = vmatpush.bf16.msra.mxu0 %v1066
    %1163 = vmatpush.bf16.msra.mxu0 %v1064
    %1164 = vmatmul.bf16.gmra.mxu0 %v1132
    %v1165 = vpop.f32.mrf.mxu0
    %v1166 = vadd.f32 %v1104, %v1165
    %v1167 = vpop.f32.mrf.mxu0
    %v1168 = vadd.f32 %v1109, %v1167
    %1169 = vmatmul.bf16.gmra.mxu0 %v1135
    %v1170 = vpop.f32.mrf.mxu0
    %v1171 = vadd.f32 %v1114, %v1170
    %v1172 = vpop.f32.mrf.mxu0
    %v1173 = vadd.f32 %v1119, %v1172
    %1174 = vdwg.mxu0
    %1175 = vmatpush.bf16.msra.mxu0 0
    %1176 = vmatpush.bf16.msra.mxu0 0
    %1177 = vmatpush.bf16.msra.mxu0 0
    %1178 = vmatpush.bf16.msra.mxu0 0
    %1179 = vmatpush.bf16.msra.mxu0 0
    %1180 = vmatpush.bf16.msra.mxu0 0
    %1181 = vmatpush.bf16.msra.mxu0 %v1089
    %1182 = vmatpush.bf16.msra.mxu0 %v1087
    %1183 = vmatmul.bf16.gmra.mxu0 %v1132
    %v1184 = vpop.f32.mrf.mxu0
    %v1185 = vadd.f32 %v1104, %v1184
    %v1186 = vpop.f32.mrf.mxu0
    %v1187 = vadd.f32 %v1109, %v1186
    %1188 = vmatmul.bf16.gmra.mxu0 %v1135
    %v1189 = vpop.f32.mrf.mxu0
    %v1190 = vadd.f32 %v1114, %v1189
    %v1191 = vpop.f32.mrf.mxu0
    %v1192 = vadd.f32 %v1119, %v1191
    %1193 = vdwg.mxu0
    %1194 = vmatpush.bf16.msra.mxu0 0
    %1195 = vmatpush.bf16.msra.mxu0 0
    %1196 = vmatpush.bf16.msra.mxu0 0
    %1197 = vmatpush.bf16.msra.mxu0 0
    %1198 = vmatpush.bf16.msra.mxu0 0
    %1199 = vmatpush.bf16.msra.mxu0 0
    %1200 = vmatpush.bf16.msra.mxu0 %v1090
    %1201 = vmatpush.bf16.msra.mxu0 %v1088
    %1202 = vmatmul.bf16.gmra.mxu0 %v1132
    %v1203 = vpop.f32.mrf.mxu0
    %v1204 = vadd.f32 %v1104, %v1203
    %v1205 = vpop.f32.mrf.mxu0
    %v1206 = vadd.f32 %v1109, %v1205
    %1207 = vmatmul.bf16.gmra.mxu0 %v1135
    %v1208 = vpop.f32.mrf.mxu0
    %v1209 = vadd.f32 %v1114, %v1208
    %v1210 = vpop.f32.mrf.mxu0
    %v1211 = vadd.f32 %v1119, %v1210
    %1212 = vdwg.mxu0
    %v1213 = vpack.c.bf16 %v1149, %v1147
    %v1214 = vpack.c.bf16 %v1168, %v1166
    %v1215 = vpack.c.bf16 %v1154, %v1152
    %v1216 = vpack.c.bf16 %v1173, %v1171
    %v1217 = vunpack.c.l.bf16 %v1213
    %v1218 = vunpack.c.l.bf16 %v1214
    %v1219 = vunpack.c.h.bf16 %v1213
    %v1220 = vunpack.c.h.bf16 %v1214
    %v1221 = vunpack.c.l.bf16 %v1215
    %v1222 = vunpack.c.l.bf16 %v1216
    %v1223 = vunpack.c.h.bf16 %v1215
    %v1224 = vunpack.c.h.bf16 %v1216
    %v1225 = vtanh.pop %v1217
    %v1226 = vtanh.pop %v1218
    %v1227 = vtanh.pop %v1219
    %v1228 = vtanh.pop %v1220
    %v1229 = vtanh.pop %v1221
    %v1230 = vtanh.pop %v1222
    %v1231 = vtanh.pop %v1223
    %v1232 = vtanh.pop %v1224
    %v1233 = vpack.c.bf16 %v1227, %v1225
    %v1234 = vpack.c.bf16 %v1228, %v1226
    %v1235 = vpack.c.bf16 %v1231, %v1229
    %v1236 = vpack.c.bf16 %v1232, %v1230
    %v1237 = vpack.c.bf16 %v1187, %v1185
    %v1238 = vpack.c.bf16 %v1206, %v1204
    %v1239 = vpack.c.bf16 %v1192, %v1190
    %v1240 = vpack.c.bf16 %v1211, %v1209
    %v1241 = vunpack.c.l.bf16 %v1237
    %v1242 = vunpack.c.l.bf16 %v1238
    %v1243 = vunpack.c.h.bf16 %v1237
    %v1244 = vunpack.c.h.bf16 %v1238
    %v1245 = vunpack.c.l.bf16 %v1239
    %v1246 = vunpack.c.l.bf16 %v1240
    %v1247 = vunpack.c.h.bf16 %v1239
    %v1248 = vunpack.c.h.bf16 %v1240
    %v1249 = vtanh.pop %v1241
    %v1250 = vtanh.pop %v1242
    %v1251 = vtanh.pop %v1243
    %v1252 = vtanh.pop %v1244
    %v1253 = vtanh.pop %v1245
    %v1254 = vtanh.pop %v1246
    %v1255 = vtanh.pop %v1247
    %v1256 = vtanh.pop %v1248
    %v1257 = vpack.c.bf16 %v1251, %v1249
    %v1258 = vpack.c.bf16 %v1252, %v1250
    %v1259 = vpack.c.bf16 %v1255, %v1253
    %v1260 = vpack.c.bf16 %v1256, %v1254
    %s1261 = scalar_lea.vmem %s2, 96
    %v1262 = vld [vmem:[%s1261] sm:$0xf]
    %v1263 = vld [vmem:[%s1261 + $0x4] sm:$0xf]
    %v1264 = vld [vmem:[%s1261 + $0x8] sm:$0xf]
    %v1265 = vld [vmem:[%s1261 + $0xc] sm:$0xf]
    %s1266 = scalar_lea.vmem %s4, 224
    %v1267 = vld [vmem:[%s1266] sm:$0xff]
    %v1268 = vld [vmem:[%s1266 + $0x8] sm:$0xff]
    %v1269 = vld [vmem:[%s1266 + $0x10] sm:$0xff]
    %v1270 = vld [vmem:[%s1266 + $0x18] sm:$0xff]
    %1272 = vset.pattern.permute.xlu0 0
    %1273 = vperm.xlu0 %1272, %v1267
    %v1274 = vpop.permute.xlu0 %1273
    %1277 = vset.pattern.permute.xlu0 0
    %1278 = vperm.xlu0 %1277, %v1268
    %v1279 = vpop.permute.xlu0 %1278
    %1282 = vset.pattern.permute.xlu0 0
    %1283 = vperm.xlu0 %1282, %v1269
    %v1284 = vpop.permute.xlu0 %1283
    %1287 = vset.pattern.permute.xlu0 0
    %1288 = vperm.xlu0 %1287, %v1270
    %v1289 = vpop.permute.xlu0 %1288
    %v1295 = vunpack.c.l.b16 %v1262
    %v1296 = vunpack.c.l.b16 %v1263
    %v1297 = vunpack.c.l.b16 %v1264
    %v1298 = vunpack.c.l.b16 %v1265
    %v1299 = vpack.c.b16 %v1296, %v1295
    %v1300 = vpack.c.b16 %v1298, %v1297
    %v1302 = vsel %vm280, %v1299, 0
    %v1305 = vsel %vm280, %v1300, 0
    %1307 = vmatpush.bf16.msra.mxu0 0
    %1308 = vmatpush.bf16.msra.mxu0 0
    %1309 = vmatpush.bf16.msra.mxu0 0
    %1310 = vmatpush.bf16.msra.mxu0 0
    %1311 = vmatpush.bf16.msra.mxu0 0
    %1312 = vmatpush.bf16.msra.mxu0 0
    %1313 = vmatpush.bf16.msra.mxu0 %v1235
    %1314 = vmatpush.bf16.msra.mxu0 %v1233
    %1315 = vmatmul.bf16.gmra.mxu0 %v1302
    %v1316 = vpop.f32.mrf.mxu0
    %v1317 = vadd.f32 %v1274, %v1316
    %v1318 = vpop.f32.mrf.mxu0
    %v1319 = vadd.f32 %v1279, %v1318
    %1320 = vmatmul.bf16.gmra.mxu0 %v1305
    %v1321 = vpop.f32.mrf.mxu0
    %v1322 = vadd.f32 %v1284, %v1321
    %v1323 = vpop.f32.mrf.mxu0
    %v1324 = vadd.f32 %v1289, %v1323
    %1325 = vdwg.mxu0
    %1326 = vmatpush.bf16.msra.mxu0 0
    %1327 = vmatpush.bf16.msra.mxu0 0
    %1328 = vmatpush.bf16.msra.mxu0 0
    %1329 = vmatpush.bf16.msra.mxu0 0
    %1330 = vmatpush.bf16.msra.mxu0 0
    %1331 = vmatpush.bf16.msra.mxu0 0
    %1332 = vmatpush.bf16.msra.mxu0 %v1236
    %1333 = vmatpush.bf16.msra.mxu0 %v1234
    %1334 = vmatmul.bf16.gmra.mxu0 %v1302
    %v1335 = vpop.f32.mrf.mxu0
    %v1336 = vadd.f32 %v1274, %v1335
    %v1337 = vpop.f32.mrf.mxu0
    %v1338 = vadd.f32 %v1279, %v1337
    %1339 = vmatmul.bf16.gmra.mxu0 %v1305
    %v1340 = vpop.f32.mrf.mxu0
    %v1341 = vadd.f32 %v1284, %v1340
    %v1342 = vpop.f32.mrf.mxu0
    %v1343 = vadd.f32 %v1289, %v1342
    %1344 = vdwg.mxu0
    %1345 = vmatpush.bf16.msra.mxu0 0
    %1346 = vmatpush.bf16.msra.mxu0 0
    %1347 = vmatpush.bf16.msra.mxu0 0
    %1348 = vmatpush.bf16.msra.mxu0 0
    %1349 = vmatpush.bf16.msra.mxu0 0
    %1350 = vmatpush.bf16.msra.mxu0 0
    %1351 = vmatpush.bf16.msra.mxu0 %v1259
    %1352 = vmatpush.bf16.msra.mxu0 %v1257
    %1353 = vmatmul.bf16.gmra.mxu0 %v1302
    %v1354 = vpop.f32.mrf.mxu0
    %v1355 = vadd.f32 %v1274, %v1354
    %v1356 = vpop.f32.mrf.mxu0
    %v1357 = vadd.f32 %v1279, %v1356
    %1358 = vmatmul.bf16.gmra.mxu0 %v1305
    %v1359 = vpop.f32.mrf.mxu0
    %v1360 = vadd.f32 %v1284, %v1359
    %v1361 = vpop.f32.mrf.mxu0
    %v1362 = vadd.f32 %v1289, %v1361
    %1363 = vdwg.mxu0
    %1364 = vmatpush.bf16.msra.mxu0 0
    %1365 = vmatpush.bf16.msra.mxu0 0
    %1366 = vmatpush.bf16.msra.mxu0 0
    %1367 = vmatpush.bf16.msra.mxu0 0
    %1368 = vmatpush.bf16.msra.mxu0 0
    %1369 = vmatpush.bf16.msra.mxu0 0
    %1370 = vmatpush.bf16.msra.mxu0 %v1260
    %1371 = vmatpush.bf16.msra.mxu0 %v1258
    %1372 = vmatmul.bf16.gmra.mxu0 %v1302
    %v1373 = vpop.f32.mrf.mxu0
    %v1374 = vadd.f32 %v1274, %v1373
    %v1375 = vpop.f32.mrf.mxu0
    %v1376 = vadd.f32 %v1279, %v1375
    %1377 = vmatmul.bf16.gmra.mxu0 %v1305
    %v1378 = vpop.f32.mrf.mxu0
    %v1379 = vadd.f32 %v1284, %v1378
    %v1380 = vpop.f32.mrf.mxu0
    %v1381 = vadd.f32 %v1289, %v1380
    %1382 = vdwg.mxu0
    %v1383 = vpack.c.bf16 %v1336, %v1317
    %v1384 = vpack.c.bf16 %v1338, %v1319
    %v1385 = vpack.c.bf16 %v1341, %v1322
    %v1386 = vpack.c.bf16 %v1343, %v1324
    %v1387 = vunpack.c.l.bf16 %v1383
    %v1388 = vunpack.c.h.bf16 %v1383
    %v1389 = vunpack.c.l.bf16 %v1384
    %v1390 = vunpack.c.h.bf16 %v1384
    %v1391 = vunpack.c.l.bf16 %v1385
    %v1392 = vunpack.c.h.bf16 %v1385
    %v1393 = vunpack.c.l.bf16 %v1386
    %v1394 = vunpack.c.h.bf16 %v1386
    %v1395 = vtanh.pop %v1387
    %v1396 = vtanh.pop %v1388
    %v1397 = vtanh.pop %v1389
    %v1398 = vtanh.pop %v1390
    %v1399 = vtanh.pop %v1391
    %v1400 = vtanh.pop %v1392
    %v1401 = vtanh.pop %v1393
    %v1402 = vtanh.pop %v1394
    %v1403 = vpack.c.bf16 %v1396, %v1395
    %v1404 = vpack.c.bf16 %v1398, %v1397
    %v1405 = vpack.c.bf16 %v1400, %v1399
    %v1406 = vpack.c.bf16 %v1402, %v1401
    %v1407 = vpack.c.bf16 %v1374, %v1355
    %v1408 = vpack.c.bf16 %v1376, %v1357
    %v1409 = vpack.c.bf16 %v1379, %v1360
    %v1410 = vpack.c.bf16 %v1381, %v1362
    %v1411 = vunpack.c.l.bf16 %v1407
    %v1412 = vunpack.c.h.bf16 %v1407
    %v1413 = vunpack.c.l.bf16 %v1408
    %v1414 = vunpack.c.h.bf16 %v1408
    %v1415 = vunpack.c.l.bf16 %v1409
    %v1416 = vunpack.c.h.bf16 %v1409
    %v1417 = vunpack.c.l.bf16 %v1410
    %v1418 = vunpack.c.h.bf16 %v1410
    %v1419 = vtanh.pop %v1411
    %v1420 = vtanh.pop %v1412
    %v1421 = vtanh.pop %v1413
    %v1422 = vtanh.pop %v1414
    %v1423 = vtanh.pop %v1415
    %v1424 = vtanh.pop %v1416
    %v1425 = vtanh.pop %v1417
    %v1426 = vtanh.pop %v1418
    %v1427 = vpack.c.bf16 %v1420, %v1419
    %v1428 = vpack.c.bf16 %v1422, %v1421
    %v1429 = vpack.c.bf16 %v1424, %v1423
    %v1430 = vpack.c.bf16 %v1426, %v1425
    %v1431 = vunpack.c.l.bf16 %v1403
    %v1432 = vunpack.c.h.bf16 %v1403
    %v1433 = vunpack.c.l.bf16 %v1404
    %v1434 = vunpack.c.h.bf16 %v1404
    %v1435 = vunpack.c.l.bf16 %v1405
    %v1436 = vunpack.c.h.bf16 %v1405
    %v1437 = vunpack.c.l.bf16 %v1406
    %v1438 = vunpack.c.h.bf16 %v1406
    %1440 = vset.pattern.permute.xlu0 0
    %1441 = vperm.xlu0 %1440, %v31
    %v1442 = vpop.permute.xlu0 %1441
    %1445 = vset.pattern.permute.xlu0 0
    %1446 = vperm.xlu0 %1445, %v32
    %v1447 = vpop.permute.xlu0 %1446
    %1450 = vset.pattern.permute.xlu0 0
    %1451 = vperm.xlu0 %1450, %v33
    %v1452 = vpop.permute.xlu0 %1451
    %1455 = vset.pattern.permute.xlu0 0
    %1456 = vperm.xlu0 %1455, %v34
    %v1457 = vpop.permute.xlu0 %1456
    %v1459 = vmul.f32 %v1442, %v1431
    %v1460 = vmul.f32 %v1442, %v1432
    %v1461 = vmul.f32 %v1447, %v1433
    %v1462 = vmul.f32 %v1447, %v1434
    %v1463 = vmul.f32 %v1452, %v1435
    %v1464 = vmul.f32 %v1452, %v1436
    %v1465 = vmul.f32 %v1457, %v1437
    %v1466 = vmul.f32 %v1457, %v1438
    %v1467 = vadd.f32 %v1459, %v1461
    %v1468 = vadd.f32 %v1467, %v1463
    %v1469 = vadd.f32 %v1468, %v1465
    %v1470 = vrot.slane %v1469, 4
    %v1471 = vadd.f32 %v1469, %v1470
    %v1472 = vrot.slane %v1471, 2
    %v1473 = vadd.f32 %v1471, %v1472
    %v1474 = vrot.slane %v1473, 1
    %v1475 = vadd.f32 %v1473, %v1474
    %v1476 = vadd.f32 %v1460, %v1462
    %v1477 = vadd.f32 %v1476, %v1464
    %v1478 = vadd.f32 %v1477, %v1466
    %v1479 = vrot.slane %v1478, 4
    %v1480 = vadd.f32 %v1478, %v1479
    %v1481 = vrot.slane %v1480, 2
    %v1482 = vadd.f32 %v1480, %v1481
    %v1483 = vrot.slane %v1482, 1
    %v1484 = vadd.f32 %v1482, %v1483
    %1486 = vset.pattern.permute.xlu0 0
    %1487 = vperm.xlu0 %1486, %v35
    %v1488 = vpop.permute.xlu0 %1487
    %v1490 = vperm.slane %v1488, 0
    %v1491 = vadd.f32 %v1475, %v1490
    %v1492 = vadd.f32 %v1484, %v1490
    %v1493 = vunpack.c.l.bf16 %v1427
    %v1494 = vunpack.c.h.bf16 %v1427
    %v1495 = vunpack.c.l.bf16 %v1428
    %v1496 = vunpack.c.h.bf16 %v1428
    %v1497 = vunpack.c.l.bf16 %v1429
    %v1498 = vunpack.c.h.bf16 %v1429
    %v1499 = vunpack.c.l.bf16 %v1430
    %v1500 = vunpack.c.h.bf16 %v1430
    %v1501 = vmul.f32 %v1442, %v1493
    %v1502 = vmul.f32 %v1442, %v1494
    %v1503 = vmul.f32 %v1447, %v1495
    %v1504 = vmul.f32 %v1447, %v1496
    %v1505 = vmul.f32 %v1452, %v1497
    %v1506 = vmul.f32 %v1452, %v1498
    %v1507 = vmul.f32 %v1457, %v1499
    %v1508 = vmul.f32 %v1457, %v1500
    %v1509 = vadd.f32 %v1501, %v1503
    %v1510 = vadd.f32 %v1509, %v1505
    %v1511 = vadd.f32 %v1510, %v1507
    %v1512 = vrot.slane %v1511, 4
    %v1513 = vadd.f32 %v1511, %v1512
    %v1514 = vrot.slane %v1513, 2
    %v1515 = vadd.f32 %v1513, %v1514
    %v1516 = vrot.slane %v1515, 1
    %v1517 = vadd.f32 %v1515, %v1516
    %v1518 = vadd.f32 %v1502, %v1504
    %v1519 = vadd.f32 %v1518, %v1506
    %v1520 = vadd.f32 %v1519, %v1508
    %v1521 = vrot.slane %v1520, 4
    %v1522 = vadd.f32 %v1520, %v1521
    %v1523 = vrot.slane %v1522, 2
    %v1524 = vadd.f32 %v1522, %v1523
    %v1525 = vrot.slane %v1524, 1
    %v1526 = vadd.f32 %v1524, %v1525
    %v1527 = vadd.f32 %v1517, %v1490
    %v1528 = vadd.f32 %v1526, %v1490
    %v1531 = vrot.slane %v1492, 7
    %vm1532 = vcmask 1040384
    %v1533 = vsel %vm1532, %v1491, %v1531
    %v1535 = vlaneseq
    %vm1536 = vcmp.ge.s32.totalorder %v1535, 0
    %vm1537 = vcmp.lt.s32.totalorder %v1535, 256
    %vm1538 = vmand %vm1536, %vm1537
    %1539 = vst.msk [vmem:[#allocation3] sm:$0x3] %vm1538, %v1533
    %v1542 = vrot.slane %v1528, 7
    %v1543 = vsel %vm1532, %v1527, %v1542
    %1545 = vst.msk [vmem:[#allocation3 + $0x2] sm:$0x3] %vm1538, %v1543
    %v1546 = vld [vmem:[%s0 + $0x20] sm:$0xff]
    %v1547 = vld [vmem:[%s0 + $0x28] sm:$0xff]
    %v1548 = vld [vmem:[%s0 + $0x30] sm:$0xff]
    %v1549 = vld [vmem:[%s0 + $0x38] sm:$0xff]
    %1550 = vmatpush.msra.mxu0 0.0
    %1551 = vmatpush.msra.mxu0 0.0
    %1552 = vmatpush.msra.mxu0 0.0
    %1553 = vmatpush.msra.mxu0 0.0
    %1554 = vmatpush.msra.mxu0 0.0
    %1555 = vmatpush.msra.mxu0 0.0
    %1556 = vmatpush.msra.mxu0 0.0
    %1557 = vmatpush.msra.mxu0 0.0
    %1558 = vmatpush.msra.mxu0 0.0
    %1559 = vmatpush.msra.mxu0 0.0
    %1560 = vmatpush.msra.mxu0 0.0
    %1561 = vmatpush.msra.mxu0 0.0
    %1562 = vmatpush.msra.mxu0 0.0
    %1563 = vmatpush.msra.mxu0 0.0
    %1564 = vmatpush.msra.mxu0 0.0
    %1565 = vmatpush.msra.mxu0 %v1546
    %1566 = vmatmul.f32.gmra.mxu0 %v66
    %v1567 = vpop.f32.mrf.mxu0
    %v1568 = vadd.f32 %v47, %v1567
    %1569 = vmatmul.f32.gmra.mxu0 %v69
    %v1570 = vpop.f32.mrf.mxu0
    %v1571 = vadd.f32 %v52, %v1570
    %1572 = vmatmul.f32.gmra.mxu0 %v72
    %v1573 = vpop.f32.mrf.mxu0
    %v1574 = vadd.f32 %v57, %v1573
    %1575 = vmatmul.f32.gmra.mxu0 %v75
    %v1576 = vpop.f32.mrf.mxu0
    %v1577 = vadd.f32 %v62, %v1576
    %1578 = vdwg.mxu0
    %1579 = vmatpush.msra.mxu0 0.0
    %1580 = vmatpush.msra.mxu0 0.0
    %1581 = vmatpush.msra.mxu0 0.0
    %1582 = vmatpush.msra.mxu0 0.0
    %1583 = vmatpush.msra.mxu0 0.0
    %1584 = vmatpush.msra.mxu0 0.0
    %1585 = vmatpush.msra.mxu0 0.0
    %1586 = vmatpush.msra.mxu0 0.0
    %1587 = vmatpush.msra.mxu0 0.0
    %1588 = vmatpush.msra.mxu0 0.0
    %1589 = vmatpush.msra.mxu0 0.0
    %1590 = vmatpush.msra.mxu0 0.0
    %1591 = vmatpush.msra.mxu0 0.0
    %1592 = vmatpush.msra.mxu0 0.0
    %1593 = vmatpush.msra.mxu0 0.0
    %1594 = vmatpush.msra.mxu0 %v1547
    %1595 = vmatmul.f32.gmra.mxu0 %v66
    %v1596 = vpop.f32.mrf.mxu0
    %v1597 = vadd.f32 %v47, %v1596
    %1598 = vmatmul.f32.gmra.mxu0 %v69
    %v1599 = vpop.f32.mrf.mxu0
    %v1600 = vadd.f32 %v52, %v1599
    %1601 = vmatmul.f32.gmra.mxu0 %v72
    %v1602 = vpop.f32.mrf.mxu0
    %v1603 = vadd.f32 %v57, %v1602
    %1604 = vmatmul.f32.gmra.mxu0 %v75
    %v1605 = vpop.f32.mrf.mxu0
    %v1606 = vadd.f32 %v62, %v1605
    %1607 = vdwg.mxu0
    %1608 = vmatpush.msra.mxu0 0.0
    %1609 = vmatpush.msra.mxu0 0.0
    %1610 = vmatpush.msra.mxu0 0.0
    %1611 = vmatpush.msra.mxu0 0.0
    %1612 = vmatpush.msra.mxu0 0.0
    %1613 = vmatpush.msra.mxu0 0.0
    %1614 = vmatpush.msra.mxu0 0.0
    %1615 = vmatpush.msra.mxu0 0.0
    %1616 = vmatpush.msra.mxu0 0.0
    %1617 = vmatpush.msra.mxu0 0.0
    %1618 = vmatpush.msra.mxu0 0.0
    %1619 = vmatpush.msra.mxu0 0.0
    %1620 = vmatpush.msra.mxu0 0.0
    %1621 = vmatpush.msra.mxu0 0.0
    %1622 = vmatpush.msra.mxu0 0.0
    %1623 = vmatpush.msra.mxu0 %v1548
    %1624 = vmatmul.f32.gmra.mxu0 %v66
    %v1625 = vpop.f32.mrf.mxu0
    %v1626 = vadd.f32 %v47, %v1625
    %1627 = vmatmul.f32.gmra.mxu0 %v69
    %v1628 = vpop.f32.mrf.mxu0
    %v1629 = vadd.f32 %v52, %v1628
    %1630 = vmatmul.f32.gmra.mxu0 %v72
    %v1631 = vpop.f32.mrf.mxu0
    %v1632 = vadd.f32 %v57, %v1631
    %1633 = vmatmul.f32.gmra.mxu0 %v75
    %v1634 = vpop.f32.mrf.mxu0
    %v1635 = vadd.f32 %v62, %v1634
    %1636 = vdwg.mxu0
    %1637 = vmatpush.msra.mxu0 0.0
    %1638 = vmatpush.msra.mxu0 0.0
    %1639 = vmatpush.msra.mxu0 0.0
    %1640 = vmatpush.msra.mxu0 0.0
    %1641 = vmatpush.msra.mxu0 0.0
    %1642 = vmatpush.msra.mxu0 0.0
    %1643 = vmatpush.msra.mxu0 0.0
    %1644 = vmatpush.msra.mxu0 0.0
    %1645 = vmatpush.msra.mxu0 0.0
    %1646 = vmatpush.msra.mxu0 0.0
    %1647 = vmatpush.msra.mxu0 0.0
    %1648 = vmatpush.msra.mxu0 0.0
    %1649 = vmatpush.msra.mxu0 0.0
    %1650 = vmatpush.msra.mxu0 0.0
    %1651 = vmatpush.msra.mxu0 0.0
    %1652 = vmatpush.msra.mxu0 %v1549
    %1653 = vmatmul.f32.gmra.mxu0 %v66
    %v1654 = vpop.f32.mrf.mxu0
    %v1655 = vadd.f32 %v47, %v1654
    %1656 = vmatmul.f32.gmra.mxu0 %v69
    %v1657 = vpop.f32.mrf.mxu0
    %v1658 = vadd.f32 %v52, %v1657
    %1659 = vmatmul.f32.gmra.mxu0 %v72
    %v1660 = vpop.f32.mrf.mxu0
    %v1661 = vadd.f32 %v57, %v1660
    %1662 = vmatmul.f32.gmra.mxu0 %v75
    %v1663 = vpop.f32.mrf.mxu0
    %v1664 = vadd.f32 %v62, %v1663
    %1665 = vdwg.mxu0
    %v1666 = vpack.c.bf16 %v1571, %v1568
    %v1667 = vpack.c.bf16 %v1600, %v1597
    %v1668 = vpack.c.bf16 %v1577, %v1574
    %v1669 = vpack.c.bf16 %v1606, %v1603
    %v1670 = vunpack.c.l.bf16 %v1666
    %v1671 = vunpack.c.l.bf16 %v1667
    %v1672 = vunpack.c.h.bf16 %v1666
    %v1673 = vunpack.c.h.bf16 %v1667
    %v1674 = vunpack.c.l.bf16 %v1668
    %v1675 = vunpack.c.l.bf16 %v1669
    %v1676 = vunpack.c.h.bf16 %v1668
    %v1677 = vunpack.c.h.bf16 %v1669
    %v1678 = vtanh.pop %v1670
    %v1679 = vtanh.pop %v1671
    %v1680 = vtanh.pop %v1672
    %v1681 = vtanh.pop %v1673
    %v1682 = vtanh.pop %v1674
    %v1683 = vtanh.pop %v1675
    %v1684 = vtanh.pop %v1676
    %v1685 = vtanh.pop %v1677
    %v1686 = vpack.c.bf16 %v1680, %v1678
    %v1687 = vpack.c.bf16 %v1681, %v1679
    %v1688 = vpack.c.bf16 %v1684, %v1682
    %v1689 = vpack.c.bf16 %v1685, %v1683
    %v1690 = vpack.c.bf16 %v1629, %v1626
    %v1691 = vpack.c.bf16 %v1658, %v1655
    %v1692 = vpack.c.bf16 %v1635, %v1632
    %v1693 = vpack.c.bf16 %v1664, %v1661
    %v1694 = vunpack.c.l.bf16 %v1690
    %v1695 = vunpack.c.l.bf16 %v1691
    %v1696 = vunpack.c.h.bf16 %v1690
    %v1697 = vunpack.c.h.bf16 %v1691
    %v1698 = vunpack.c.l.bf16 %v1692
    %v1699 = vunpack.c.l.bf16 %v1693
    %v1700 = vunpack.c.h.bf16 %v1692
    %v1701 = vunpack.c.h.bf16 %v1693
    %v1702 = vtanh.pop %v1694
    %v1703 = vtanh.pop %v1695
    %v1704 = vtanh.pop %v1696
    %v1705 = vtanh.pop %v1697
    %v1706 = vtanh.pop %v1698
    %v1707 = vtanh.pop %v1699
    %v1708 = vtanh.pop %v1700
    %v1709 = vtanh.pop %v1701
    %v1710 = vpack.c.bf16 %v1704, %v1702
    %v1711 = vpack.c.bf16 %v1705, %v1703
    %v1712 = vpack.c.bf16 %v1708, %v1706
    %v1713 = vpack.c.bf16 %v1709, %v1707
    %v1714 = vld [vmem:[%s2] sm:$0xf]
    %v1715 = vld [vmem:[%s2 + $0x4] sm:$0xf]
    %v1716 = vld [vmem:[%s2 + $0x8] sm:$0xf]
    %v1717 = vld [vmem:[%s2 + $0xc] sm:$0xf]
    %v1718 = vld [vmem:[%s245] sm:$0xff]
    %v1719 = vld [vmem:[%s245 + $0x8] sm:$0xff]
    %v1720 = vld [vmem:[%s245 + $0x10] sm:$0xff]
    %v1721 = vld [vmem:[%s245 + $0x18] sm:$0xff]
    %1723 = vset.pattern.permute.xlu0 0
    %1724 = vperm.xlu0 %1723, %v1718
    %v1725 = vpop.permute.xlu0 %1724
    %1728 = vset.pattern.permute.xlu0 0
    %1729 = vperm.xlu0 %1728, %v1719
    %v1730 = vpop.permute.xlu0 %1729
    %1733 = vset.pattern.permute.xlu0 0
    %1734 = vperm.xlu0 %1733, %v1720
    %v1735 = vpop.permute.xlu0 %1734
    %1738 = vset.pattern.permute.xlu0 0
    %1739 = vperm.xlu0 %1738, %v1721
    %v1740 = vpop.permute.xlu0 %1739
    %v1746 = vunpack.c.l.b16 %v1714
    %v1747 = vunpack.c.l.b16 %v1715
    %v1748 = vunpack.c.l.b16 %v1716
    %v1749 = vunpack.c.l.b16 %v1717
    %v1750 = vpack.c.b16 %v1747, %v1746
    %v1751 = vpack.c.b16 %v1749, %v1748
    %v1753 = vsel %vm280, %v1750, 0
    %v1756 = vsel %vm280, %v1751, 0
    %1758 = vmatpush.bf16.msra.mxu0 0
    %1759 = vmatpush.bf16.msra.mxu0 0
    %1760 = vmatpush.bf16.msra.mxu0 0
    %1761 = vmatpush.bf16.msra.mxu0 0
    %1762 = vmatpush.bf16.msra.mxu0 0
    %1763 = vmatpush.bf16.msra.mxu0 0
    %1764 = vmatpush.bf16.msra.mxu0 %v1688
    %1765 = vmatpush.bf16.msra.mxu0 %v1686
    %1766 = vmatmul.bf16.gmra.mxu0 %v1753
    %v1767 = vpop.f32.mrf.mxu0
    %v1768 = vadd.f32 %v1725, %v1767
    %v1769 = vpop.f32.mrf.mxu0
    %v1770 = vadd.f32 %v1730, %v1769
    %1771 = vmatmul.bf16.gmra.mxu0 %v1756
    %v1772 = vpop.f32.mrf.mxu0
    %v1773 = vadd.f32 %v1735, %v1772
    %v1774 = vpop.f32.mrf.mxu0
    %v1775 = vadd.f32 %v1740, %v1774
    %1776 = vdwg.mxu0
    %1777 = vmatpush.bf16.msra.mxu0 0
    %1778 = vmatpush.bf16.msra.mxu0 0
    %1779 = vmatpush.bf16.msra.mxu0 0
    %1780 = vmatpush.bf16.msra.mxu0 0
    %1781 = vmatpush.bf16.msra.mxu0 0
    %1782 = vmatpush.bf16.msra.mxu0 0
    %1783 = vmatpush.bf16.msra.mxu0 %v1689
    %1784 = vmatpush.bf16.msra.mxu0 %v1687
    %1785 = vmatmul.bf16.gmra.mxu0 %v1753
    %v1786 = vpop.f32.mrf.mxu0
    %v1787 = vadd.f32 %v1725, %v1786
    %v1788 = vpop.f32.mrf.mxu0
    %v1789 = vadd.f32 %v1730, %v1788
    %1790 = vmatmul.bf16.gmra.mxu0 %v1756
    %v1791 = vpop.f32.mrf.mxu0
    %v1792 = vadd.f32 %v1735, %v1791
    %v1793 = vpop.f32.mrf.mxu0
    %v1794 = vadd.f32 %v1740, %v1793
    %1795 = vdwg.mxu0
    %1796 = vmatpush.bf16.msra.mxu0 0
    %1797 = vmatpush.bf16.msra.mxu0 0
    %1798 = vmatpush.bf16.msra.mxu0 0
    %1799 = vmatpush.bf16.msra.mxu0 0
    %1800 = vmatpush.bf16.msra.mxu0 0
    %1801 = vmatpush.bf16.msra.mxu0 0
    %1802 = vmatpush.bf16.msra.mxu0 %v1712
    %1803 = vmatpush.bf16.msra.mxu0 %v1710
    %1804 = vmatmul.bf16.gmra.mxu0 %v1753
    %v1805 = vpop.f32.mrf.mxu0
    %v1806 = vadd.f32 %v1725, %v1805
    %v1807 = vpop.f32.mrf.mxu0
    %v1808 = vadd.f32 %v1730, %v1807
    %1809 = vmatmul.bf16.gmra.mxu0 %v1756
    %v1810 = vpop.f32.mrf.mxu0
    %v1811 = vadd.f32 %v1735, %v1810
    %v1812 = vpop.f32.mrf.mxu0
    %v1813 = vadd.f32 %v1740, %v1812
    %1814 = vdwg.mxu0
    %1815 = vmatpush.bf16.msra.mxu0 0
    %1816 = vmatpush.bf16.msra.mxu0 0
    %1817 = vmatpush.bf16.msra.mxu0 0
    %1818 = vmatpush.bf16.msra.mxu0 0
    %1819 = vmatpush.bf16.msra.mxu0 0
    %1820 = vmatpush.bf16.msra.mxu0 0
    %1821 = vmatpush.bf16.msra.mxu0 %v1713
    %1822 = vmatpush.bf16.msra.mxu0 %v1711
    %1823 = vmatmul.bf16.gmra.mxu0 %v1753
    %v1824 = vpop.f32.mrf.mxu0
    %v1825 = vadd.f32 %v1725, %v1824
    %v1826 = vpop.f32.mrf.mxu0
    %v1827 = vadd.f32 %v1730, %v1826
    %1828 = vmatmul.bf16.gmra.mxu0 %v1756
    %v1829 = vpop.f32.mrf.mxu0
    %v1830 = vadd.f32 %v1735, %v1829
    %v1831 = vpop.f32.mrf.mxu0
    %v1832 = vadd.f32 %v1740, %v1831
    %1833 = vdwg.mxu0
    %v1834 = vpack.c.bf16 %v1770, %v1768
    %v1835 = vpack.c.bf16 %v1789, %v1787
    %v1836 = vpack.c.bf16 %v1775, %v1773
    %v1837 = vpack.c.bf16 %v1794, %v1792
    %v1838 = vunpack.c.l.bf16 %v1834
    %v1839 = vunpack.c.l.bf16 %v1835
    %v1840 = vunpack.c.h.bf16 %v1834
    %v1841 = vunpack.c.h.bf16 %v1835
    %v1842 = vunpack.c.l.bf16 %v1836
    %v1843 = vunpack.c.l.bf16 %v1837
    %v1844 = vunpack.c.h.bf16 %v1836
    %v1845 = vunpack.c.h.bf16 %v1837
    %v1846 = vtanh.pop %v1838
    %v1847 = vtanh.pop %v1839
    %v1848 = vtanh.pop %v1840
    %v1849 = vtanh.pop %v1841
    %v1850 = vtanh.pop %v1842
    %v1851 = vtanh.pop %v1843
    %v1852 = vtanh.pop %v1844
    %v1853 = vtanh.pop %v1845
    %v1854 = vpack.c.bf16 %v1848, %v1846
    %v1855 = vpack.c.bf16 %v1849, %v1847
    %v1856 = vpack.c.bf16 %v1852, %v1850
    %v1857 = vpack.c.bf16 %v1853, %v1851
    %v1858 = vpack.c.bf16 %v1808, %v1806
    %v1859 = vpack.c.bf16 %v1827, %v1825
    %v1860 = vpack.c.bf16 %v1813, %v1811
    %v1861 = vpack.c.bf16 %v1832, %v1830
    %v1862 = vunpack.c.l.bf16 %v1858
    %v1863 = vunpack.c.l.bf16 %v1859
    %v1864 = vunpack.c.h.bf16 %v1858
    %v1865 = vunpack.c.h.bf16 %v1859
    %v1866 = vunpack.c.l.bf16 %v1860
    %v1867 = vunpack.c.l.bf16 %v1861
    %v1868 = vunpack.c.h.bf16 %v1860
    %v1869 = vunpack.c.h.bf16 %v1861
    %v1870 = vtanh.pop %v1862
    %v1871 = vtanh.pop %v1863
    %v1872 = vtanh.pop %v1864
    %v1873 = vtanh.pop %v1865
    %v1874 = vtanh.pop %v1866
    %v1875 = vtanh.pop %v1867
    %v1876 = vtanh.pop %v1868
    %v1877 = vtanh.pop %v1869
    %v1878 = vpack.c.bf16 %v1872, %v1870
    %v1879 = vpack.c.bf16 %v1873, %v1871
    %v1880 = vpack.c.bf16 %v1876, %v1874
    %v1881 = vpack.c.bf16 %v1877, %v1875
    %v1882 = vld [vmem:[%s411] sm:$0xf]
    %v1883 = vld [vmem:[%s411 + $0x4] sm:$0xf]
    %v1884 = vld [vmem:[%s411 + $0x8] sm:$0xf]
    %v1885 = vld [vmem:[%s411 + $0xc] sm:$0xf]
    %v1886 = vld [vmem:[%s416] sm:$0xff]
    %v1887 = vld [vmem:[%s416 + $0x8] sm:$0xff]
    %v1888 = vld [vmem:[%s416 + $0x10] sm:$0xff]
    %v1889 = vld [vmem:[%s416 + $0x18] sm:$0xff]
    %1891 = vset.pattern.permute.xlu0 0
    %1892 = vperm.xlu0 %1891, %v1886
    %v1893 = vpop.permute.xlu0 %1892
    %1896 = vset.pattern.permute.xlu0 0
    %1897 = vperm.xlu0 %1896, %v1887
    %v1898 = vpop.permute.xlu0 %1897
    %1901 = vset.pattern.permute.xlu0 0
    %1902 = vperm.xlu0 %1901, %v1888
    %v1903 = vpop.permute.xlu0 %1902
    %1906 = vset.pattern.permute.xlu0 0
    %1907 = vperm.xlu0 %1906, %v1889
    %v1908 = vpop.permute.xlu0 %1907
    %v1914 = vunpack.c.l.b16 %v1882
    %v1915 = vunpack.c.l.b16 %v1883
    %v1916 = vunpack.c.l.b16 %v1884
    %v1917 = vunpack.c.l.b16 %v1885
    %v1918 = vpack.c.b16 %v1915, %v1914
    %v1919 = vpack.c.b16 %v1917, %v1916
    %v1921 = vsel %vm280, %v1918, 0
    %v1924 = vsel %vm280, %v1919, 0
    %1926 = vmatpush.bf16.msra.mxu0 0
    %1927 = vmatpush.bf16.msra.mxu0 0
    %1928 = vmatpush.bf16.msra.mxu0 0
    %1929 = vmatpush.bf16.msra.mxu0 0
    %1930 = vmatpush.bf16.msra.mxu0 0
    %1931 = vmatpush.bf16.msra.mxu0 0
    %1932 = vmatpush.bf16.msra.mxu0 %v1856
    %1933 = vmatpush.bf16.msra.mxu0 %v1854
    %1934 = vmatmul.bf16.gmra.mxu0 %v1921
    %v1935 = vpop.f32.mrf.mxu0
    %v1936 = vadd.f32 %v1893, %v1935
    %v1937 = vpop.f32.mrf.mxu0
    %v1938 = vadd.f32 %v1898, %v1937
    %1939 = vmatmul.bf16.gmra.mxu0 %v1924
    %v1940 = vpop.f32.mrf.mxu0
    %v1941 = vadd.f32 %v1903, %v1940
    %v1942 = vpop.f32.mrf.mxu0
    %v1943 = vadd.f32 %v1908, %v1942
    %1944 = vdwg.mxu0
    %1945 = vmatpush.bf16.msra.mxu0 0
    %1946 = vmatpush.bf16.msra.mxu0 0
    %1947 = vmatpush.bf16.msra.mxu0 0
    %1948 = vmatpush.bf16.msra.mxu0 0
    %1949 = vmatpush.bf16.msra.mxu0 0
    %1950 = vmatpush.bf16.msra.mxu0 0
    %1951 = vmatpush.bf16.msra.mxu0 %v1857
    %1952 = vmatpush.bf16.msra.mxu0 %v1855
    %1953 = vmatmul.bf16.gmra.mxu0 %v1921
    %v1954 = vpop.f32.mrf.mxu0
    %v1955 = vadd.f32 %v1893, %v1954
    %v1956 = vpop.f32.mrf.mxu0
    %v1957 = vadd.f32 %v1898, %v1956
    %1958 = vmatmul.bf16.gmra.mxu0 %v1924
    %v1959 = vpop.f32.mrf.mxu0
    %v1960 = vadd.f32 %v1903, %v1959
    %v1961 = vpop.f32.mrf.mxu0
    %v1962 = vadd.f32 %v1908, %v1961
    %1963 = vdwg.mxu0
    %1964 = vmatpush.bf16.msra.mxu0 0
    %1965 = vmatpush.bf16.msra.mxu0 0
    %1966 = vmatpush.bf16.msra.mxu0 0
    %1967 = vmatpush.bf16.msra.mxu0 0
    %1968 = vmatpush.bf16.msra.mxu0 0
    %1969 = vmatpush.bf16.msra.mxu0 0
    %1970 = vmatpush.bf16.msra.mxu0 %v1880
    %1971 = vmatpush.bf16.msra.mxu0 %v1878
    %1972 = vmatmul.bf16.gmra.mxu0 %v1921
    %v1973 = vpop.f32.mrf.mxu0
    %v1974 = vadd.f32 %v1893, %v1973
    %v1975 = vpop.f32.mrf.mxu0
    %v1976 = vadd.f32 %v1898, %v1975
    %1977 = vmatmul.bf16.gmra.mxu0 %v1924
    %v1978 = vpop.f32.mrf.mxu0
    %v1979 = vadd.f32 %v1903, %v1978
    %v1980 = vpop.f32.mrf.mxu0
    %v1981 = vadd.f32 %v1908, %v1980
    %1982 = vdwg.mxu0
    %1983 = vmatpush.bf16.msra.mxu0 0
    %1984 = vmatpush.bf16.msra.mxu0 0
    %1985 = vmatpush.bf16.msra.mxu0 0
    %1986 = vmatpush.bf16.msra.mxu0 0
    %1987 = vmatpush.bf16.msra.mxu0 0
    %1988 = vmatpush.bf16.msra.mxu0 0
    %1989 = vmatpush.bf16.msra.mxu0 %v1881
    %1990 = vmatpush.bf16.msra.mxu0 %v1879
    %1991 = vmatmul.bf16.gmra.mxu0 %v1921
    %v1992 = vpop.f32.mrf.mxu0
    %v1993 = vadd.f32 %v1893, %v1992
    %v1994 = vpop.f32.mrf.mxu0
    %v1995 = vadd.f32 %v1898, %v1994
    %1996 = vmatmul.bf16.gmra.mxu0 %v1924
    %v1997 = vpop.f32.mrf.mxu0
    %v1998 = vadd.f32 %v1903, %v1997
    %v1999 = vpop.f32.mrf.mxu0
    %v2000 = vadd.f32 %v1908, %v1999
    %2001 = vdwg.mxu0
    %v2002 = vpack.c.bf16 %v1938, %v1936
    %v2003 = vpack.c.bf16 %v1957, %v1955
    %v2004 = vpack.c.bf16 %v1943, %v1941
    %v2005 = vpack.c.bf16 %v1962, %v1960
    %v2006 = vunpack.c.l.bf16 %v2002
    %v2007 = vunpack.c.l.bf16 %v2003
    %v2008 = vunpack.c.h.bf16 %v2002
    %v2009 = vunpack.c.h.bf16 %v2003
    %v2010 = vunpack.c.l.bf16 %v2004
    %v2011 = vunpack.c.l.bf16 %v2005
    %v2012 = vunpack.c.h.bf16 %v2004
    %v2013 = vunpack.c.h.bf16 %v2005
    %v2014 = vtanh.pop %v2006
    %v2015 = vtanh.pop %v2007
    %v2016 = vtanh.pop %v2008
    %v2017 = vtanh.pop %v2009
    %v2018 = vtanh.pop %v2010
    %v2019 = vtanh.pop %v2011
    %v2020 = vtanh.pop %v2012
    %v2021 = vtanh.pop %v2013
    %v2022 = vpack.c.bf16 %v2016, %v2014
    %v2023 = vpack.c.bf16 %v2017, %v2015
    %v2024 = vpack.c.bf16 %v2020, %v2018
    %v2025 = vpack.c.bf16 %v2021, %v2019
    %v2026 = vpack.c.bf16 %v1976, %v1974
    %v2027 = vpack.c.bf16 %v1995, %v1993
    %v2028 = vpack.c.bf16 %v1981, %v1979
    %v2029 = vpack.c.bf16 %v2000, %v1998
    %v2030 = vunpack.c.l.bf16 %v2026
    %v2031 = vunpack.c.l.bf16 %v2027
    %v2032 = vunpack.c.h.bf16 %v2026
    %v2033 = vunpack.c.h.bf16 %v2027
    %v2034 = vunpack.c.l.bf16 %v2028
    %v2035 = vunpack.c.l.bf16 %v2029
    %v2036 = vunpack.c.h.bf16 %v2028
    %v2037 = vunpack.c.h.bf16 %v2029
    %v2038 = vtanh.pop %v2030
    %v2039 = vtanh.pop %v2031
    %v2040 = vtanh.pop %v2032
    %v2041 = vtanh.pop %v2033
    %v2042 = vtanh.pop %v2034
    %v2043 = vtanh.pop %v2035
    %v2044 = vtanh.pop %v2036
    %v2045 = vtanh.pop %v2037
    %v2046 = vpack.c.bf16 %v2040, %v2038
    %v2047 = vpack.c.bf16 %v2041, %v2039
    %v2048 = vpack.c.bf16 %v2044, %v2042
    %v2049 = vpack.c.bf16 %v2045, %v2043
    %v2050 = vld [vmem:[%s581] sm:$0xf]
    %v2051 = vld [vmem:[%s581 + $0x4] sm:$0xf]
    %v2052 = vld [vmem:[%s581 + $0x8] sm:$0xf]
    %v2053 = vld [vmem:[%s581 + $0xc] sm:$0xf]
    %v2054 = vld [vmem:[%s586] sm:$0xff]
    %v2055 = vld [vmem:[%s586 + $0x8] sm:$0xff]
    %v2056 = vld [vmem:[%s586 + $0x10] sm:$0xff]
    %v2057 = vld [vmem:[%s586 + $0x18] sm:$0xff]
    %2059 = vset.pattern.permute.xlu0 0
    %2060 = vperm.xlu0 %2059, %v2054
    %v2061 = vpop.permute.xlu0 %2060
    %2064 = vset.pattern.permute.xlu0 0
    %2065 = vperm.xlu0 %2064, %v2055
    %v2066 = vpop.permute.xlu0 %2065
    %2069 = vset.pattern.permute.xlu0 0
    %2070 = vperm.xlu0 %2069, %v2056
    %v2071 = vpop.permute.xlu0 %2070
    %2074 = vset.pattern.permute.xlu0 0
    %2075 = vperm.xlu0 %2074, %v2057
    %v2076 = vpop.permute.xlu0 %2075
    %v2082 = vunpack.c.l.b16 %v2050
    %v2083 = vunpack.c.l.b16 %v2051
    %v2084 = vunpack.c.l.b16 %v2052
    %v2085 = vunpack.c.l.b16 %v2053
    %v2086 = vpack.c.b16 %v2083, %v2082
    %v2087 = vpack.c.b16 %v2085, %v2084
    %v2089 = vsel %vm280, %v2086, 0
    %v2092 = vsel %vm280, %v2087, 0
    %2094 = vmatpush.bf16.msra.mxu0 0
    %2095 = vmatpush.bf16.msra.mxu0 0
    %2096 = vmatpush.bf16.msra.mxu0 0
    %2097 = vmatpush.bf16.msra.mxu0 0
    %2098 = vmatpush.bf16.msra.mxu0 0
    %2099 = vmatpush.bf16.msra.mxu0 0
    %2100 = vmatpush.bf16.msra.mxu0 %v2024
    %2101 = vmatpush.bf16.msra.mxu0 %v2022
    %2102 = vmatmul.bf16.gmra.mxu0 %v2089
    %v2103 = vpop.f32.mrf.mxu0
    %v2104 = vadd.f32 %v2061, %v2103
    %v2105 = vpop.f32.mrf.mxu0
    %v2106 = vadd.f32 %v2066, %v2105
    %2107 = vmatmul.bf16.gmra.mxu0 %v2092
    %v2108 = vpop.f32.mrf.mxu0
    %v2109 = vadd.f32 %v2071, %v2108
    %v2110 = vpop.f32.mrf.mxu0
    %v2111 = vadd.f32 %v2076, %v2110
    %2112 = vdwg.mxu0
    %2113 = vmatpush.bf16.msra.mxu0 0
    %2114 = vmatpush.bf16.msra.mxu0 0
    %2115 = vmatpush.bf16.msra.mxu0 0
    %2116 = vmatpush.bf16.msra.mxu0 0
    %2117 = vmatpush.bf16.msra.mxu0 0
    %2118 = vmatpush.bf16.msra.mxu0 0
    %2119 = vmatpush.bf16.msra.mxu0 %v2025
    %2120 = vmatpush.bf16.msra.mxu0 %v2023
    %2121 = vmatmul.bf16.gmra.mxu0 %v2089
    %v2122 = vpop.f32.mrf.mxu0
    %v2123 = vadd.f32 %v2061, %v2122
    %v2124 = vpop.f32.mrf.mxu0
    %v2125 = vadd.f32 %v2066, %v2124
    %2126 = vmatmul.bf16.gmra.mxu0 %v2092
    %v2127 = vpop.f32.mrf.mxu0
    %v2128 = vadd.f32 %v2071, %v2127
    %v2129 = vpop.f32.mrf.mxu0
    %v2130 = vadd.f32 %v2076, %v2129
    %2131 = vdwg.mxu0
    %2132 = vmatpush.bf16.msra.mxu0 0
    %2133 = vmatpush.bf16.msra.mxu0 0
    %2134 = vmatpush.bf16.msra.mxu0 0
    %2135 = vmatpush.bf16.msra.mxu0 0
    %2136 = vmatpush.bf16.msra.mxu0 0
    %2137 = vmatpush.bf16.msra.mxu0 0
    %2138 = vmatpush.bf16.msra.mxu0 %v2048
    %2139 = vmatpush.bf16.msra.mxu0 %v2046
    %2140 = vmatmul.bf16.gmra.mxu0 %v2089
    %v2141 = vpop.f32.mrf.mxu0
    %v2142 = vadd.f32 %v2061, %v2141
    %v2143 = vpop.f32.mrf.mxu0
    %v2144 = vadd.f32 %v2066, %v2143
    %2145 = vmatmul.bf16.gmra.mxu0 %v2092
    %v2146 = vpop.f32.mrf.mxu0
    %v2147 = vadd.f32 %v2071, %v2146
    %v2148 = vpop.f32.mrf.mxu0
    %v2149 = vadd.f32 %v2076, %v2148
    %2150 = vdwg.mxu0
    %2151 = vmatpush.bf16.msra.mxu0 0
    %2152 = vmatpush.bf16.msra.mxu0 0
    %2153 = vmatpush.bf16.msra.mxu0 0
    %2154 = vmatpush.bf16.msra.mxu0 0
    %2155 = vmatpush.bf16.msra.mxu0 0
    %2156 = vmatpush.bf16.msra.mxu0 0
    %2157 = vmatpush.bf16.msra.mxu0 %v2049
    %2158 = vmatpush.bf16.msra.mxu0 %v2047
    %2159 = vmatmul.bf16.gmra.mxu0 %v2089
    %v2160 = vpop.f32.mrf.mxu0
    %v2161 = vadd.f32 %v2061, %v2160
    %v2162 = vpop.f32.mrf.mxu0
    %v2163 = vadd.f32 %v2066, %v2162
    %2164 = vmatmul.bf16.gmra.mxu0 %v2092
    %v2165 = vpop.f32.mrf.mxu0
    %v2166 = vadd.f32 %v2071, %v2165
    %v2167 = vpop.f32.mrf.mxu0
    %v2168 = vadd.f32 %v2076, %v2167
    %2169 = vdwg.mxu0
    %v2170 = vpack.c.bf16 %v2106, %v2104
    %v2171 = vpack.c.bf16 %v2125, %v2123
    %v2172 = vpack.c.bf16 %v2111, %v2109
    %v2173 = vpack.c.bf16 %v2130, %v2128
    %v2174 = vunpack.c.l.bf16 %v2170
    %v2175 = vunpack.c.l.bf16 %v2171
    %v2176 = vunpack.c.h.bf16 %v2170
    %v2177 = vunpack.c.h.bf16 %v2171
    %v2178 = vunpack.c.l.bf16 %v2172
    %v2179 = vunpack.c.l.bf16 %v2173
    %v2180 = vunpack.c.h.bf16 %v2172
    %v2181 = vunpack.c.h.bf16 %v2173
    %v2182 = vtanh.pop %v2174
    %v2183 = vtanh.pop %v2175
    %v2184 = vtanh.pop %v2176
    %v2185 = vtanh.pop %v2177
    %v2186 = vtanh.pop %v2178
    %v2187 = vtanh.pop %v2179
    %v2188 = vtanh.pop %v2180
    %v2189 = vtanh.pop %v2181
    %v2190 = vpack.c.bf16 %v2184, %v2182
    %v2191 = vpack.c.bf16 %v2185, %v2183
    %v2192 = vpack.c.bf16 %v2188, %v2186
    %v2193 = vpack.c.bf16 %v2189, %v2187
    %v2194 = vpack.c.bf16 %v2144, %v2142
    %v2195 = vpack.c.bf16 %v2163, %v2161
    %v2196 = vpack.c.bf16 %v2149, %v2147
    %v2197 = vpack.c.bf16 %v2168, %v2166
    %v2198 = vunpack.c.l.bf16 %v2194
    %v2199 = vunpack.c.l.bf16 %v2195
    %v2200 = vunpack.c.h.bf16 %v2194
    %v2201 = vunpack.c.h.bf16 %v2195
    %v2202 = vunpack.c.l.bf16 %v2196
    %v2203 = vunpack.c.l.bf16 %v2197
    %v2204 = vunpack.c.h.bf16 %v2196
    %v2205 = vunpack.c.h.bf16 %v2197
    %v2206 = vtanh.pop %v2198
    %v2207 = vtanh.pop %v2199
    %v2208 = vtanh.pop %v2200
    %v2209 = vtanh.pop %v2201
    %v2210 = vtanh.pop %v2202
    %v2211 = vtanh.pop %v2203
    %v2212 = vtanh.pop %v2204
    %v2213 = vtanh.pop %v2205
    %v2214 = vpack.c.bf16 %v2208, %v2206
    %v2215 = vpack.c.bf16 %v2209, %v2207
    %v2216 = vpack.c.bf16 %v2212, %v2210
    %v2217 = vpack.c.bf16 %v2213, %v2211
    %v2218 = vld [vmem:[%s751] sm:$0xf]
    %v2219 = vld [vmem:[%s751 + $0x4] sm:$0xf]
    %v2220 = vld [vmem:[%s751 + $0x8] sm:$0xf]
    %v2221 = vld [vmem:[%s751 + $0xc] sm:$0xf]
    %v2222 = vld [vmem:[%s756] sm:$0xff]
    %v2223 = vld [vmem:[%s756 + $0x8] sm:$0xff]
    %v2224 = vld [vmem:[%s756 + $0x10] sm:$0xff]
    %v2225 = vld [vmem:[%s756 + $0x18] sm:$0xff]
    %2227 = vset.pattern.permute.xlu0 0
    %2228 = vperm.xlu0 %2227, %v2222
    %v2229 = vpop.permute.xlu0 %2228
    %2232 = vset.pattern.permute.xlu0 0
    %2233 = vperm.xlu0 %2232, %v2223
    %v2234 = vpop.permute.xlu0 %2233
    %2237 = vset.pattern.permute.xlu0 0
    %2238 = vperm.xlu0 %2237, %v2224
    %v2239 = vpop.permute.xlu0 %2238
    %2242 = vset.pattern.permute.xlu0 0
    %2243 = vperm.xlu0 %2242, %v2225
    %v2244 = vpop.permute.xlu0 %2243
    %v2250 = vunpack.c.l.b16 %v2218
    %v2251 = vunpack.c.l.b16 %v2219
    %v2252 = vunpack.c.l.b16 %v2220
    %v2253 = vunpack.c.l.b16 %v2221
    %v2254 = vpack.c.b16 %v2251, %v2250
    %v2255 = vpack.c.b16 %v2253, %v2252
    %v2257 = vsel %vm280, %v2254, 0
    %v2260 = vsel %vm280, %v2255, 0
    %2262 = vmatpush.bf16.msra.mxu0 0
    %2263 = vmatpush.bf16.msra.mxu0 0
    %2264 = vmatpush.bf16.msra.mxu0 0
    %2265 = vmatpush.bf16.msra.mxu0 0
    %2266 = vmatpush.bf16.msra.mxu0 0
    %2267 = vmatpush.bf16.msra.mxu0 0
    %2268 = vmatpush.bf16.msra.mxu0 %v2192
    %2269 = vmatpush.bf16.msra.mxu0 %v2190
    %2270 = vmatmul.bf16.gmra.mxu0 %v2257
    %v2271 = vpop.f32.mrf.mxu0
    %v2272 = vadd.f32 %v2229, %v2271
    %v2273 = vpop.f32.mrf.mxu0
    %v2274 = vadd.f32 %v2234, %v2273
    %2275 = vmatmul.bf16.gmra.mxu0 %v2260
    %v2276 = vpop.f32.mrf.mxu0
    %v2277 = vadd.f32 %v2239, %v2276
    %v2278 = vpop.f32.mrf.mxu0
    %v2279 = vadd.f32 %v2244, %v2278
    %2280 = vdwg.mxu0
    %2281 = vmatpush.bf16.msra.mxu0 0
    %2282 = vmatpush.bf16.msra.mxu0 0
    %2283 = vmatpush.bf16.msra.mxu0 0
    %2284 = vmatpush.bf16.msra.mxu0 0
    %2285 = vmatpush.bf16.msra.mxu0 0
    %2286 = vmatpush.bf16.msra.mxu0 0
    %2287 = vmatpush.bf16.msra.mxu0 %v2193
    %2288 = vmatpush.bf16.msra.mxu0 %v2191
    %2289 = vmatmul.bf16.gmra.mxu0 %v2257
    %v2290 = vpop.f32.mrf.mxu0
    %v2291 = vadd.f32 %v2229, %v2290
    %v2292 = vpop.f32.mrf.mxu0
    %v2293 = vadd.f32 %v2234, %v2292
    %2294 = vmatmul.bf16.gmra.mxu0 %v2260
    %v2295 = vpop.f32.mrf.mxu0
    %v2296 = vadd.f32 %v2239, %v2295
    %v2297 = vpop.f32.mrf.mxu0
    %v2298 = vadd.f32 %v2244, %v2297
    %2299 = vdwg.mxu0
    %2300 = vmatpush.bf16.msra.mxu0 0
    %2301 = vmatpush.bf16.msra.mxu0 0
    %2302 = vmatpush.bf16.msra.mxu0 0
    %2303 = vmatpush.bf16.msra.mxu0 0
    %2304 = vmatpush.bf16.msra.mxu0 0
    %2305 = vmatpush.bf16.msra.mxu0 0
    %2306 = vmatpush.bf16.msra.mxu0 %v2216
    %2307 = vmatpush.bf16.msra.mxu0 %v2214
    %2308 = vmatmul.bf16.gmra.mxu0 %v2257
    %v2309 = vpop.f32.mrf.mxu0
    %v2310 = vadd.f32 %v2229, %v2309
    %v2311 = vpop.f32.mrf.mxu0
    %v2312 = vadd.f32 %v2234, %v2311
    %2313 = vmatmul.bf16.gmra.mxu0 %v2260
    %v2314 = vpop.f32.mrf.mxu0
    %v2315 = vadd.f32 %v2239, %v2314
    %v2316 = vpop.f32.mrf.mxu0
    %v2317 = vadd.f32 %v2244, %v2316
    %2318 = vdwg.mxu0
    %2319 = vmatpush.bf16.msra.mxu0 0
    %2320 = vmatpush.bf16.msra.mxu0 0
    %2321 = vmatpush.bf16.msra.mxu0 0
    %2322 = vmatpush.bf16.msra.mxu0 0
    %2323 = vmatpush.bf16.msra.mxu0 0
    %2324 = vmatpush.bf16.msra.mxu0 0
    %2325 = vmatpush.bf16.msra.mxu0 %v2217
    %2326 = vmatpush.bf16.msra.mxu0 %v2215
    %2327 = vmatmul.bf16.gmra.mxu0 %v2257
    %v2328 = vpop.f32.mrf.mxu0
    %v2329 = vadd.f32 %v2229, %v2328
    %v2330 = vpop.f32.mrf.mxu0
    %v2331 = vadd.f32 %v2234, %v2330
    %2332 = vmatmul.bf16.gmra.mxu0 %v2260
    %v2333 = vpop.f32.mrf.mxu0
    %v2334 = vadd.f32 %v2239, %v2333
    %v2335 = vpop.f32.mrf.mxu0
    %v2336 = vadd.f32 %v2244, %v2335
    %2337 = vdwg.mxu0
    %v2338 = vpack.c.bf16 %v2274, %v2272
    %v2339 = vpack.c.bf16 %v2293, %v2291
    %v2340 = vpack.c.bf16 %v2279, %v2277
    %v2341 = vpack.c.bf16 %v2298, %v2296
    %v2342 = vunpack.c.l.bf16 %v2338
    %v2343 = vunpack.c.l.bf16 %v2339
    %v2344 = vunpack.c.h.bf16 %v2338
    %v2345 = vunpack.c.h.bf16 %v2339
    %v2346 = vunpack.c.l.bf16 %v2340
    %v2347 = vunpack.c.l.bf16 %v2341
    %v2348 = vunpack.c.h.bf16 %v2340
    %v2349 = vunpack.c.h.bf16 %v2341
    %v2350 = vtanh.pop %v2342
    %v2351 = vtanh.pop %v2343
    %v2352 = vtanh.pop %v2344
    %v2353 = vtanh.pop %v2345
    %v2354 = vtanh.pop %v2346
    %v2355 = vtanh.pop %v2347
    %v2356 = vtanh.pop %v2348
    %v2357 = vtanh.pop %v2349
    %v2358 = vpack.c.bf16 %v2352, %v2350
    %v2359 = vpack.c.bf16 %v2353, %v2351
    %v2360 = vpack.c.bf16 %v2356, %v2354
    %v2361 = vpack.c.bf16 %v2357, %v2355
    %v2362 = vpack.c.bf16 %v2312, %v2310
    %v2363 = vpack.c.bf16 %v2331, %v2329
    %v2364 = vpack.c.bf16 %v2317, %v2315
    %v2365 = vpack.c.bf16 %v2336, %v2334
    %v2366 = vunpack.c.l.bf16 %v2362
    %v2367 = vunpack.c.l.bf16 %v2363
    %v2368 = vunpack.c.h.bf16 %v2362
    %v2369 = vunpack.c.h.bf16 %v2363
    %v2370 = vunpack.c.l.bf16 %v2364
    %v2371 = vunpack.c.l.bf16 %v2365
    %v2372 = vunpack.c.h.bf16 %v2364
    %v2373 = vunpack.c.h.bf16 %v2365
    %v2374 = vtanh.pop %v2366
    %v2375 = vtanh.pop %v2367
    %v2376 = vtanh.pop %v2368
    %v2377 = vtanh.pop %v2369
    %v2378 = vtanh.pop %v2370
    %v2379 = vtanh.pop %v2371
    %v2380 = vtanh.pop %v2372
    %v2381 = vtanh.pop %v2373
    %v2382 = vpack.c.bf16 %v2376, %v2374
    %v2383 = vpack.c.bf16 %v2377, %v2375
    %v2384 = vpack.c.bf16 %v2380, %v2378
    %v2385 = vpack.c.bf16 %v2381, %v2379
    %v2386 = vld [vmem:[%s921] sm:$0xf]
    %v2387 = vld [vmem:[%s921 + $0x4] sm:$0xf]
    %v2388 = vld [vmem:[%s921 + $0x8] sm:$0xf]
    %v2389 = vld [vmem:[%s921 + $0xc] sm:$0xf]
    %v2390 = vld [vmem:[%s926] sm:$0xff]
    %v2391 = vld [vmem:[%s926 + $0x8] sm:$0xff]
    %v2392 = vld [vmem:[%s926 + $0x10] sm:$0xff]
    %v2393 = vld [vmem:[%s926 + $0x18] sm:$0xff]
    %2395 = vset.pattern.permute.xlu0 0
    %2396 = vperm.xlu0 %2395, %v2390
    %v2397 = vpop.permute.xlu0 %2396
    %2400 = vset.pattern.permute.xlu0 0
    %2401 = vperm.xlu0 %2400, %v2391
    %v2402 = vpop.permute.xlu0 %2401
    %2405 = vset.pattern.permute.xlu0 0
    %2406 = vperm.xlu0 %2405, %v2392
    %v2407 = vpop.permute.xlu0 %2406
    %2410 = vset.pattern.permute.xlu0 0
    %2411 = vperm.xlu0 %2410, %v2393
    %v2412 = vpop.permute.xlu0 %2411
    %v2418 = vunpack.c.l.b16 %v2386
    %v2419 = vunpack.c.l.b16 %v2387
    %v2420 = vunpack.c.l.b16 %v2388
    %v2421 = vunpack.c.l.b16 %v2389
    %v2422 = vpack.c.b16 %v2419, %v2418
    %v2423 = vpack.c.b16 %v2421, %v2420
    %v2425 = vsel %vm280, %v2422, 0
    %v2428 = vsel %vm280, %v2423, 0
    %2430 = vmatpush.bf16.msra.mxu0 0
    %2431 = vmatpush.bf16.msra.mxu0 0
    %2432 = vmatpush.bf16.msra.mxu0 0
    %2433 = vmatpush.bf16.msra.mxu0 0
    %2434 = vmatpush.bf16.msra.mxu0 0
    %2435 = vmatpush.bf16.msra.mxu0 0
    %2436 = vmatpush.bf16.msra.mxu0 %v2360
    %2437 = vmatpush.bf16.msra.mxu0 %v2358
    %2438 = vmatmul.bf16.gmra.mxu0 %v2425
    %v2439 = vpop.f32.mrf.mxu0
    %v2440 = vadd.f32 %v2397, %v2439
    %v2441 = vpop.f32.mrf.mxu0
    %v2442 = vadd.f32 %v2402, %v2441
    %2443 = vmatmul.bf16.gmra.mxu0 %v2428
    %v2444 = vpop.f32.mrf.mxu0
    %v2445 = vadd.f32 %v2407, %v2444
    %v2446 = vpop.f32.mrf.mxu0
    %v2447 = vadd.f32 %v2412, %v2446
    %2448 = vdwg.mxu0
    %2449 = vmatpush.bf16.msra.mxu0 0
    %2450 = vmatpush.bf16.msra.mxu0 0
    %2451 = vmatpush.bf16.msra.mxu0 0
    %2452 = vmatpush.bf16.msra.mxu0 0
    %2453 = vmatpush.bf16.msra.mxu0 0
    %2454 = vmatpush.bf16.msra.mxu0 0
    %2455 = vmatpush.bf16.msra.mxu0 %v2361
    %2456 = vmatpush.bf16.msra.mxu0 %v2359
    %2457 = vmatmul.bf16.gmra.mxu0 %v2425
    %v2458 = vpop.f32.mrf.mxu0
    %v2459 = vadd.f32 %v2397, %v2458
    %v2460 = vpop.f32.mrf.mxu0
    %v2461 = vadd.f32 %v2402, %v2460
    %2462 = vmatmul.bf16.gmra.mxu0 %v2428
    %v2463 = vpop.f32.mrf.mxu0
    %v2464 = vadd.f32 %v2407, %v2463
    %v2465 = vpop.f32.mrf.mxu0
    %v2466 = vadd.f32 %v2412, %v2465
    %2467 = vdwg.mxu0
    %2468 = vmatpush.bf16.msra.mxu0 0
    %2469 = vmatpush.bf16.msra.mxu0 0
    %2470 = vmatpush.bf16.msra.mxu0 0
    %2471 = vmatpush.bf16.msra.mxu0 0
    %2472 = vmatpush.bf16.msra.mxu0 0
    %2473 = vmatpush.bf16.msra.mxu0 0
    %2474 = vmatpush.bf16.msra.mxu0 %v2384
    %2475 = vmatpush.bf16.msra.mxu0 %v2382
    %2476 = vmatmul.bf16.gmra.mxu0 %v2425
    %v2477 = vpop.f32.mrf.mxu0
    %v2478 = vadd.f32 %v2397, %v2477
    %v2479 = vpop.f32.mrf.mxu0
    %v2480 = vadd.f32 %v2402, %v2479
    %2481 = vmatmul.bf16.gmra.mxu0 %v2428
    %v2482 = vpop.f32.mrf.mxu0
    %v2483 = vadd.f32 %v2407, %v2482
    %v2484 = vpop.f32.mrf.mxu0
    %v2485 = vadd.f32 %v2412, %v2484
    %2486 = vdwg.mxu0
    %2487 = vmatpush.bf16.msra.mxu0 0
    %2488 = vmatpush.bf16.msra.mxu0 0
    %2489 = vmatpush.bf16.msra.mxu0 0
    %2490 = vmatpush.bf16.msra.mxu0 0
    %2491 = vmatpush.bf16.msra.mxu0 0
    %2492 = vmatpush.bf16.msra.mxu0 0
    %2493 = vmatpush.bf16.msra.mxu0 %v2385
    %2494 = vmatpush.bf16.msra.mxu0 %v2383
    %2495 = vmatmul.bf16.gmra.mxu0 %v2425
    %v2496 = vpop.f32.mrf.mxu0
    %v2497 = vadd.f32 %v2397, %v2496
    %v2498 = vpop.f32.mrf.mxu0
    %v2499 = vadd.f32 %v2402, %v2498
    %2500 = vmatmul.bf16.gmra.mxu0 %v2428
    %v2501 = vpop.f32.mrf.mxu0
    %v2502 = vadd.f32 %v2407, %v2501
    %v2503 = vpop.f32.mrf.mxu0
    %v2504 = vadd.f32 %v2412, %v2503
    %2505 = vdwg.mxu0
    %v2506 = vpack.c.bf16 %v2442, %v2440
    %v2507 = vpack.c.bf16 %v2461, %v2459
    %v2508 = vpack.c.bf16 %v2447, %v2445
    %v2509 = vpack.c.bf16 %v2466, %v2464
    %v2510 = vunpack.c.l.bf16 %v2506
    %v2511 = vunpack.c.l.bf16 %v2507
    %v2512 = vunpack.c.h.bf16 %v2506
    %v2513 = vunpack.c.h.bf16 %v2507
    %v2514 = vunpack.c.l.bf16 %v2508
    %v2515 = vunpack.c.l.bf16 %v2509
    %v2516 = vunpack.c.h.bf16 %v2508
    %v2517 = vunpack.c.h.bf16 %v2509
    %v2518 = vtanh.pop %v2510
    %v2519 = vtanh.pop %v2511
    %v2520 = vtanh.pop %v2512
    %v2521 = vtanh.pop %v2513
    %v2522 = vtanh.pop %v2514
    %v2523 = vtanh.pop %v2515
    %v2524 = vtanh.pop %v2516
    %v2525 = vtanh.pop %v2517
    %v2526 = vpack.c.bf16 %v2520, %v2518
    %v2527 = vpack.c.bf16 %v2521, %v2519
    %v2528 = vpack.c.bf16 %v2524, %v2522
    %v2529 = vpack.c.bf16 %v2525, %v2523
    %v2530 = vpack.c.bf16 %v2480, %v2478
    %v2531 = vpack.c.bf16 %v2499, %v2497
    %v2532 = vpack.c.bf16 %v2485, %v2483
    %v2533 = vpack.c.bf16 %v2504, %v2502
    %v2534 = vunpack.c.l.bf16 %v2530
    %v2535 = vunpack.c.l.bf16 %v2531
    %v2536 = vunpack.c.h.bf16 %v2530
    %v2537 = vunpack.c.h.bf16 %v2531
    %v2538 = vunpack.c.l.bf16 %v2532
    %v2539 = vunpack.c.l.bf16 %v2533
    %v2540 = vunpack.c.h.bf16 %v2532
    %v2541 = vunpack.c.h.bf16 %v2533
    %v2542 = vtanh.pop %v2534
    %v2543 = vtanh.pop %v2535
    %v2544 = vtanh.pop %v2536
    %v2545 = vtanh.pop %v2537
    %v2546 = vtanh.pop %v2538
    %v2547 = vtanh.pop %v2539
    %v2548 = vtanh.pop %v2540
    %v2549 = vtanh.pop %v2541
    %v2550 = vpack.c.bf16 %v2544, %v2542
    %v2551 = vpack.c.bf16 %v2545, %v2543
    %v2552 = vpack.c.bf16 %v2548, %v2546
    %v2553 = vpack.c.bf16 %v2549, %v2547
    %v2554 = vld [vmem:[%s1091] sm:$0xf]
    %v2555 = vld [vmem:[%s1091 + $0x4] sm:$0xf]
    %v2556 = vld [vmem:[%s1091 + $0x8] sm:$0xf]
    %v2557 = vld [vmem:[%s1091 + $0xc] sm:$0xf]
    %v2558 = vld [vmem:[%s1096] sm:$0xff]
    %v2559 = vld [vmem:[%s1096 + $0x8] sm:$0xff]
    %v2560 = vld [vmem:[%s1096 + $0x10] sm:$0xff]
    %v2561 = vld [vmem:[%s1096 + $0x18] sm:$0xff]
    %2563 = vset.pattern.permute.xlu0 0
    %2564 = vperm.xlu0 %2563, %v2558
    %v2565 = vpop.permute.xlu0 %2564
    %2568 = vset.pattern.permute.xlu0 0
    %2569 = vperm.xlu0 %2568, %v2559
    %v2570 = vpop.permute.xlu0 %2569
    %2573 = vset.pattern.permute.xlu0 0
    %2574 = vperm.xlu0 %2573, %v2560
    %v2575 = vpop.permute.xlu0 %2574
    %2578 = vset.pattern.permute.xlu0 0
    %2579 = vperm.xlu0 %2578, %v2561
    %v2580 = vpop.permute.xlu0 %2579
    %v2586 = vunpack.c.l.b16 %v2554
    %v2587 = vunpack.c.l.b16 %v2555
    %v2588 = vunpack.c.l.b16 %v2556
    %v2589 = vunpack.c.l.b16 %v2557
    %v2590 = vpack.c.b16 %v2587, %v2586
    %v2591 = vpack.c.b16 %v2589, %v2588
    %v2593 = vsel %vm280, %v2590, 0
    %v2596 = vsel %vm280, %v2591, 0
    %2598 = vmatpush.bf16.msra.mxu0 0
    %2599 = vmatpush.bf16.msra.mxu0 0
    %2600 = vmatpush.bf16.msra.mxu0 0
    %2601 = vmatpush.bf16.msra.mxu0 0
    %2602 = vmatpush.bf16.msra.mxu0 0
    %2603 = vmatpush.bf16.msra.mxu0 0
    %2604 = vmatpush.bf16.msra.mxu0 %v2528
    %2605 = vmatpush.bf16.msra.mxu0 %v2526
    %2606 = vmatmul.bf16.gmra.mxu0 %v2593
    %v2607 = vpop.f32.mrf.mxu0
    %v2608 = vadd.f32 %v2565, %v2607
    %v2609 = vpop.f32.mrf.mxu0
    %v2610 = vadd.f32 %v2570, %v2609
    %2611 = vmatmul.bf16.gmra.mxu0 %v2596
    %v2612 = vpop.f32.mrf.mxu0
    %v2613 = vadd.f32 %v2575, %v2612
    %v2614 = vpop.f32.mrf.mxu0
    %v2615 = vadd.f32 %v2580, %v2614
    %2616 = vdwg.mxu0
    %2617 = vmatpush.bf16.msra.mxu0 0
    %2618 = vmatpush.bf16.msra.mxu0 0
    %2619 = vmatpush.bf16.msra.mxu0 0
    %2620 = vmatpush.bf16.msra.mxu0 0
    %2621 = vmatpush.bf16.msra.mxu0 0
    %2622 = vmatpush.bf16.msra.mxu0 0
    %2623 = vmatpush.bf16.msra.mxu0 %v2529
    %2624 = vmatpush.bf16.msra.mxu0 %v2527
    %2625 = vmatmul.bf16.gmra.mxu0 %v2593
    %v2626 = vpop.f32.mrf.mxu0
    %v2627 = vadd.f32 %v2565, %v2626
    %v2628 = vpop.f32.mrf.mxu0
    %v2629 = vadd.f32 %v2570, %v2628
    %2630 = vmatmul.bf16.gmra.mxu0 %v2596
    %v2631 = vpop.f32.mrf.mxu0
    %v2632 = vadd.f32 %v2575, %v2631
    %v2633 = vpop.f32.mrf.mxu0
    %v2634 = vadd.f32 %v2580, %v2633
    %2635 = vdwg.mxu0
    %2636 = vmatpush.bf16.msra.mxu0 0
    %2637 = vmatpush.bf16.msra.mxu0 0
    %2638 = vmatpush.bf16.msra.mxu0 0
    %2639 = vmatpush.bf16.msra.mxu0 0
    %2640 = vmatpush.bf16.msra.mxu0 0
    %2641 = vmatpush.bf16.msra.mxu0 0
    %2642 = vmatpush.bf16.msra.mxu0 %v2552
    %2643 = vmatpush.bf16.msra.mxu0 %v2550
    %2644 = vmatmul.bf16.gmra.mxu0 %v2593
    %v2645 = vpop.f32.mrf.mxu0
    %v2646 = vadd.f32 %v2565, %v2645
    %v2647 = vpop.f32.mrf.mxu0
    %v2648 = vadd.f32 %v2570, %v2647
    %2649 = vmatmul.bf16.gmra.mxu0 %v2596
    %v2650 = vpop.f32.mrf.mxu0
    %v2651 = vadd.f32 %v2575, %v2650
    %v2652 = vpop.f32.mrf.mxu0
    %v2653 = vadd.f32 %v2580, %v2652
    %2654 = vdwg.mxu0
    %2655 = vmatpush.bf16.msra.mxu0 0
    %2656 = vmatpush.bf16.msra.mxu0 0
    %2657 = vmatpush.bf16.msra.mxu0 0
    %2658 = vmatpush.bf16.msra.mxu0 0
    %2659 = vmatpush.bf16.msra.mxu0 0
    %2660 = vmatpush.bf16.msra.mxu0 0
    %2661 = vmatpush.bf16.msra.mxu0 %v2553
    %2662 = vmatpush.bf16.msra.mxu0 %v2551
    %2663 = vmatmul.bf16.gmra.mxu0 %v2593
    %v2664 = vpop.f32.mrf.mxu0
    %v2665 = vadd.f32 %v2565, %v2664
    %v2666 = vpop.f32.mrf.mxu0
    %v2667 = vadd.f32 %v2570, %v2666
    %2668 = vmatmul.bf16.gmra.mxu0 %v2596
    %v2669 = vpop.f32.mrf.mxu0
    %v2670 = vadd.f32 %v2575, %v2669
    %v2671 = vpop.f32.mrf.mxu0
    %v2672 = vadd.f32 %v2580, %v2671
    %2673 = vdwg.mxu0
    %v2674 = vpack.c.bf16 %v2610, %v2608
    %v2675 = vpack.c.bf16 %v2629, %v2627
    %v2676 = vpack.c.bf16 %v2615, %v2613
    %v2677 = vpack.c.bf16 %v2634, %v2632
    %v2678 = vunpack.c.l.bf16 %v2674
    %v2679 = vunpack.c.l.bf16 %v2675
    %v2680 = vunpack.c.h.bf16 %v2674
    %v2681 = vunpack.c.h.bf16 %v2675
    %v2682 = vunpack.c.l.bf16 %v2676
    %v2683 = vunpack.c.l.bf16 %v2677
    %v2684 = vunpack.c.h.bf16 %v2676
    %v2685 = vunpack.c.h.bf16 %v2677
    %v2686 = vtanh.pop %v2678
    %v2687 = vtanh.pop %v2679
    %v2688 = vtanh.pop %v2680
    %v2689 = vtanh.pop %v2681
    %v2690 = vtanh.pop %v2682
    %v2691 = vtanh.pop %v2683
    %v2692 = vtanh.pop %v2684
    %v2693 = vtanh.pop %v2685
    %v2694 = vpack.c.bf16 %v2688, %v2686
    %v2695 = vpack.c.bf16 %v2689, %v2687
    %v2696 = vpack.c.bf16 %v2692, %v2690
    %v2697 = vpack.c.bf16 %v2693, %v2691
    %v2698 = vpack.c.bf16 %v2648, %v2646
    %v2699 = vpack.c.bf16 %v2667, %v2665
    %v2700 = vpack.c.bf16 %v2653, %v2651
    %v2701 = vpack.c.bf16 %v2672, %v2670
    %v2702 = vunpack.c.l.bf16 %v2698
    %v2703 = vunpack.c.l.bf16 %v2699
    %v2704 = vunpack.c.h.bf16 %v2698
    %v2705 = vunpack.c.h.bf16 %v2699
    %v2706 = vunpack.c.l.bf16 %v2700
    %v2707 = vunpack.c.l.bf16 %v2701
    %v2708 = vunpack.c.h.bf16 %v2700
    %v2709 = vunpack.c.h.bf16 %v2701
    %v2710 = vtanh.pop %v2702
    %v2711 = vtanh.pop %v2703
    %v2712 = vtanh.pop %v2704
    %v2713 = vtanh.pop %v2705
    %v2714 = vtanh.pop %v2706
    %v2715 = vtanh.pop %v2707
    %v2716 = vtanh.pop %v2708
    %v2717 = vtanh.pop %v2709
    %v2718 = vpack.c.bf16 %v2712, %v2710
    %v2719 = vpack.c.bf16 %v2713, %v2711
    %v2720 = vpack.c.bf16 %v2716, %v2714
    %v2721 = vpack.c.bf16 %v2717, %v2715
    %v2722 = vld [vmem:[%s1261] sm:$0xf]
    %v2723 = vld [vmem:[%s1261 + $0x4] sm:$0xf]
    %v2724 = vld [vmem:[%s1261 + $0x8] sm:$0xf]
    %v2725 = vld [vmem:[%s1261 + $0xc] sm:$0xf]
    %v2726 = vld [vmem:[%s1266] sm:$0xff]
    %v2727 = vld [vmem:[%s1266 + $0x8] sm:$0xff]
    %v2728 = vld [vmem:[%s1266 + $0x10] sm:$0xff]
    %v2729 = vld [vmem:[%s1266 + $0x18] sm:$0xff]
    %2731 = vset.pattern.permute.xlu0 0
    %2732 = vperm.xlu0 %2731, %v2726
    %v2733 = vpop.permute.xlu0 %2732
    %2736 = vset.pattern.permute.xlu0 0
    %2737 = vperm.xlu0 %2736, %v2727
    %v2738 = vpop.permute.xlu0 %2737
    %2741 = vset.pattern.permute.xlu0 0
    %2742 = vperm.xlu0 %2741, %v2728
    %v2743 = vpop.permute.xlu0 %2742
    %2746 = vset.pattern.permute.xlu0 0
    %2747 = vperm.xlu0 %2746, %v2729
    %v2748 = vpop.permute.xlu0 %2747
    %v2754 = vunpack.c.l.b16 %v2722
    %v2755 = vunpack.c.l.b16 %v2723
    %v2756 = vunpack.c.l.b16 %v2724
    %v2757 = vunpack.c.l.b16 %v2725
    %v2758 = vpack.c.b16 %v2755, %v2754
    %v2759 = vpack.c.b16 %v2757, %v2756
    %v2761 = vsel %vm280, %v2758, 0
    %v2764 = vsel %vm280, %v2759, 0
    %2766 = vmatpush.bf16.msra.mxu0 0
    %2767 = vmatpush.bf16.msra.mxu0 0
    %2768 = vmatpush.bf16.msra.mxu0 0
    %2769 = vmatpush.bf16.msra.mxu0 0
    %2770 = vmatpush.bf16.msra.mxu0 0
    %2771 = vmatpush.bf16.msra.mxu0 0
    %2772 = vmatpush.bf16.msra.mxu0 %v2696
    %2773 = vmatpush.bf16.msra.mxu0 %v2694
    %2774 = vmatmul.bf16.gmra.mxu0 %v2761
    %v2775 = vpop.f32.mrf.mxu0
    %v2776 = vadd.f32 %v2733, %v2775
    %v2777 = vpop.f32.mrf.mxu0
    %v2778 = vadd.f32 %v2738, %v2777
    %2779 = vmatmul.bf16.gmra.mxu0 %v2764
    %v2780 = vpop.f32.mrf.mxu0
    %v2781 = vadd.f32 %v2743, %v2780
    %v2782 = vpop.f32.mrf.mxu0
    %v2783 = vadd.f32 %v2748, %v2782
    %2784 = vdwg.mxu0
    %2785 = vmatpush.bf16.msra.mxu0 0
    %2786 = vmatpush.bf16.msra.mxu0 0
    %2787 = vmatpush.bf16.msra.mxu0 0
    %2788 = vmatpush.bf16.msra.mxu0 0
    %2789 = vmatpush.bf16.msra.mxu0 0
    %2790 = vmatpush.bf16.msra.mxu0 0
    %2791 = vmatpush.bf16.msra.mxu0 %v2697
    %2792 = vmatpush.bf16.msra.mxu0 %v2695
    %2793 = vmatmul.bf16.gmra.mxu0 %v2761
    %v2794 = vpop.f32.mrf.mxu0
    %v2795 = vadd.f32 %v2733, %v2794
    %v2796 = vpop.f32.mrf.mxu0
    %v2797 = vadd.f32 %v2738, %v2796
    %2798 = vmatmul.bf16.gmra.mxu0 %v2764
    %v2799 = vpop.f32.mrf.mxu0
    %v2800 = vadd.f32 %v2743, %v2799
    %v2801 = vpop.f32.mrf.mxu0
    %v2802 = vadd.f32 %v2748, %v2801
    %2803 = vdwg.mxu0
    %2804 = vmatpush.bf16.msra.mxu0 0
    %2805 = vmatpush.bf16.msra.mxu0 0
    %2806 = vmatpush.bf16.msra.mxu0 0
    %2807 = vmatpush.bf16.msra.mxu0 0
    %2808 = vmatpush.bf16.msra.mxu0 0
    %2809 = vmatpush.bf16.msra.mxu0 0
    %2810 = vmatpush.bf16.msra.mxu0 %v2720
    %2811 = vmatpush.bf16.msra.mxu0 %v2718
    %2812 = vmatmul.bf16.gmra.mxu0 %v2761
    %v2813 = vpop.f32.mrf.mxu0
    %v2814 = vadd.f32 %v2733, %v2813
    %v2815 = vpop.f32.mrf.mxu0
    %v2816 = vadd.f32 %v2738, %v2815
    %2817 = vmatmul.bf16.gmra.mxu0 %v2764
    %v2818 = vpop.f32.mrf.mxu0
    %v2819 = vadd.f32 %v2743, %v2818
    %v2820 = vpop.f32.mrf.mxu0
    %v2821 = vadd.f32 %v2748, %v2820
    %2822 = vdwg.mxu0
    %2823 = vmatpush.bf16.msra.mxu0 0
    %2824 = vmatpush.bf16.msra.mxu0 0
    %2825 = vmatpush.bf16.msra.mxu0 0
    %2826 = vmatpush.bf16.msra.mxu0 0
    %2827 = vmatpush.bf16.msra.mxu0 0
    %2828 = vmatpush.bf16.msra.mxu0 0
    %2829 = vmatpush.bf16.msra.mxu0 %v2721
    %2830 = vmatpush.bf16.msra.mxu0 %v2719
    %2831 = vmatmul.bf16.gmra.mxu0 %v2761
    %v2832 = vpop.f32.mrf.mxu0
    %v2833 = vadd.f32 %v2733, %v2832
    %v2834 = vpop.f32.mrf.mxu0
    %v2835 = vadd.f32 %v2738, %v2834
    %2836 = vmatmul.bf16.gmra.mxu0 %v2764
    %v2837 = vpop.f32.mrf.mxu0
    %v2838 = vadd.f32 %v2743, %v2837
    %v2839 = vpop.f32.mrf.mxu0
    %v2840 = vadd.f32 %v2748, %v2839
    %2841 = vdwg.mxu0
    %v2842 = vpack.c.bf16 %v2795, %v2776
    %v2843 = vpack.c.bf16 %v2797, %v2778
    %v2844 = vpack.c.bf16 %v2800, %v2781
    %v2845 = vpack.c.bf16 %v2802, %v2783
    %v2846 = vunpack.c.l.bf16 %v2842
    %v2847 = vunpack.c.h.bf16 %v2842
    %v2848 = vunpack.c.l.bf16 %v2843
    %v2849 = vunpack.c.h.bf16 %v2843
    %v2850 = vunpack.c.l.bf16 %v2844
    %v2851 = vunpack.c.h.bf16 %v2844
    %v2852 = vunpack.c.l.bf16 %v2845
    %v2853 = vunpack.c.h.bf16 %v2845
    %v2854 = vtanh.pop %v2846
    %v2855 = vtanh.pop %v2847
    %v2856 = vtanh.pop %v2848
    %v2857 = vtanh.pop %v2849
    %v2858 = vtanh.pop %v2850
    %v2859 = vtanh.pop %v2851
    %v2860 = vtanh.pop %v2852
    %v2861 = vtanh.pop %v2853
    %v2862 = vpack.c.bf16 %v2855, %v2854
    %v2863 = vpack.c.bf16 %v2857, %v2856
    %v2864 = vpack.c.bf16 %v2859, %v2858
    %v2865 = vpack.c.bf16 %v2861, %v2860
    %v2866 = vpack.c.bf16 %v2833, %v2814
    %v2867 = vpack.c.bf16 %v2835, %v2816
    %v2868 = vpack.c.bf16 %v2838, %v2819
    %v2869 = vpack.c.bf16 %v2840, %v2821
    %v2870 = vunpack.c.l.bf16 %v2866
    %v2871 = vunpack.c.h.bf16 %v2866
    %v2872 = vunpack.c.l.bf16 %v2867
    %v2873 = vunpack.c.h.bf16 %v2867
    %v2874 = vunpack.c.l.bf16 %v2868
    %v2875 = vunpack.c.h.bf16 %v2868
    %v2876 = vunpack.c.l.bf16 %v2869
    %v2877 = vunpack.c.h.bf16 %v2869
    %v2878 = vtanh.pop %v2870
    %v2879 = vtanh.pop %v2871
    %v2880 = vtanh.pop %v2872
    %v2881 = vtanh.pop %v2873
    %v2882 = vtanh.pop %v2874
    %v2883 = vtanh.pop %v2875
    %v2884 = vtanh.pop %v2876
    %v2885 = vtanh.pop %v2877
    %v2886 = vpack.c.bf16 %v2879, %v2878
    %v2887 = vpack.c.bf16 %v2881, %v2880
    %v2888 = vpack.c.bf16 %v2883, %v2882
    %v2889 = vpack.c.bf16 %v2885, %v2884
    %v2890 = vunpack.c.l.bf16 %v2862
    %v2891 = vunpack.c.h.bf16 %v2862
    %v2892 = vunpack.c.l.bf16 %v2863
    %v2893 = vunpack.c.h.bf16 %v2863
    %v2894 = vunpack.c.l.bf16 %v2864
    %v2895 = vunpack.c.h.bf16 %v2864
    %v2896 = vunpack.c.l.bf16 %v2865
    %v2897 = vunpack.c.h.bf16 %v2865
    %v2898 = vmul.f32 %v1442, %v2890
    %v2899 = vmul.f32 %v1442, %v2891
    %v2900 = vmul.f32 %v1447, %v2892
    %v2901 = vmul.f32 %v1447, %v2893
    %v2902 = vmul.f32 %v1452, %v2894
    %v2903 = vmul.f32 %v1452, %v2895
    %v2904 = vmul.f32 %v1457, %v2896
    %v2905 = vmul.f32 %v1457, %v2897
    %v2906 = vadd.f32 %v2898, %v2900
    %v2907 = vadd.f32 %v2906, %v2902
    %v2908 = vadd.f32 %v2907, %v2904
    %v2909 = vrot.slane %v2908, 4
    %v2910 = vadd.f32 %v2908, %v2909
    %v2911 = vrot.slane %v2910, 2
    %v2912 = vadd.f32 %v2910, %v2911
    %v2913 = vrot.slane %v2912, 1
    %v2914 = vadd.f32 %v2912, %v2913
    %v2915 = vadd.f32 %v2899, %v2901
    %v2916 = vadd.f32 %v2915, %v2903
    %v2917 = vadd.f32 %v2916, %v2905
    %v2918 = vrot.slane %v2917, 4
    %v2919 = vadd.f32 %v2917, %v2918
    %v2920 = vrot.slane %v2919, 2
    %v2921 = vadd.f32 %v2919, %v2920
    %v2922 = vrot.slane %v2921, 1
    %v2923 = vadd.f32 %v2921, %v2922
    %v2924 = vadd.f32 %v2914, %v1490
    %v2925 = vadd.f32 %v2923, %v1490
    %v2926 = vunpack.c.l.bf16 %v2886
    %v2927 = vunpack.c.h.bf16 %v2886
    %v2928 = vunpack.c.l.bf16 %v2887
    %v2929 = vunpack.c.h.bf16 %v2887
    %v2930 = vunpack.c.l.bf16 %v2888
    %v2931 = vunpack.c.h.bf16 %v2888
    %v2932 = vunpack.c.l.bf16 %v2889
    %v2933 = vunpack.c.h.bf16 %v2889
    %v2934 = vmul.f32 %v1442, %v2926
    %v2935 = vmul.f32 %v1442, %v2927
    %v2936 = vmul.f32 %v1447, %v2928
    %v2937 = vmul.f32 %v1447, %v2929
    %v2938 = vmul.f32 %v1452, %v2930
    %v2939 = vmul.f32 %v1452, %v2931
    %v2940 = vmul.f32 %v1457, %v2932
    %v2941 = vmul.f32 %v1457, %v2933
    %v2942 = vadd.f32 %v2934, %v2936
    %v2943 = vadd.f32 %v2942, %v2938
    %v2944 = vadd.f32 %v2943, %v2940
    %v2945 = vrot.slane %v2944, 4
    %v2946 = vadd.f32 %v2944, %v2945
    %v2947 = vrot.slane %v2946, 2
    %v2948 = vadd.f32 %v2946, %v2947
    %v2949 = vrot.slane %v2948, 1
    %v2950 = vadd.f32 %v2948, %v2949
    %v2951 = vadd.f32 %v2935, %v2937
    %v2952 = vadd.f32 %v2951, %v2939
    %v2953 = vadd.f32 %v2952, %v2941
    %v2954 = vrot.slane %v2953, 4
    %v2955 = vadd.f32 %v2953, %v2954
    %v2956 = vrot.slane %v2955, 2
    %v2957 = vadd.f32 %v2955, %v2956
    %v2958 = vrot.slane %v2957, 1
    %v2959 = vadd.f32 %v2957, %v2958
    %v2960 = vadd.f32 %v2950, %v1490
    %v2961 = vadd.f32 %v2959, %v1490
    %v2964 = vrot.slane %v2925, 7
    %v2965 = vsel %vm1532, %v2924, %v2964
    %2967 = vst.msk [vmem:[#allocation3 + $0x4] sm:$0x3] %vm1538, %v2965
    %v2970 = vrot.slane %v2961, 7
    %v2971 = vsel %vm1532, %v2960, %v2970
    %2973 = vst.msk [vmem:[#allocation3 + $0x6] sm:$0x3] %vm1538, %v2971
    %v2974 = vld [vmem:[%s0 + $0x40] sm:$0xff]
    %v2975 = vld [vmem:[%s0 + $0x48] sm:$0xff]
    %v2976 = vld [vmem:[%s0 + $0x50] sm:$0xff]
    %v2977 = vld [vmem:[%s0 + $0x58] sm:$0xff]
    %2978 = vmatpush.msra.mxu0 0.0
    %2979 = vmatpush.msra.mxu0 0.0
    %2980 = vmatpush.msra.mxu0 0.0
    %2981 = vmatpush.msra.mxu0 0.0
    %2982 = vmatpush.msra.mxu0 0.0
    %2983 = vmatpush.msra.mxu0 0.0
    %2984 = vmatpush.msra.mxu0 0.0
    %2985 = vmatpush.msra.mxu0 0.0
    %2986 = vmatpush.msra.mxu0 0.0
    %2987 = vmatpush.msra.mxu0 0.0
    %2988 = vmatpush.msra.mxu0 0.0
    %2989 = vmatpush.msra.mxu0 0.0
    %2990 = vmatpush.msra.mxu0 0.0
    %2991 = vmatpush.msra.mxu0 0.0
    %2992 = vmatpush.msra.mxu0 0.0
    %2993 = vmatpush.msra.mxu0 %v2974
    %2994 = vmatmul.f32.gmra.mxu0 %v66
    %v2995 = vpop.f32.mrf.mxu0
    %v2996 = vadd.f32 %v47, %v2995
    %2997 = vmatmul.f32.gmra.mxu0 %v69
    %v2998 = vpop.f32.mrf.mxu0
    %v2999 = vadd.f32 %v52, %v2998
    %3000 = vmatmul.f32.gmra.mxu0 %v72
    %v3001 = vpop.f32.mrf.mxu0
    %v3002 = vadd.f32 %v57, %v3001
    %3003 = vmatmul.f32.gmra.mxu0 %v75
    %v3004 = vpop.f32.mrf.mxu0
    %v3005 = vadd.f32 %v62, %v3004
    %3006 = vdwg.mxu0
    %3007 = vmatpush.msra.mxu0 0.0
    %3008 = vmatpush.msra.mxu0 0.0
    %3009 = vmatpush.msra.mxu0 0.0
    %3010 = vmatpush.msra.mxu0 0.0
    %3011 = vmatpush.msra.mxu0 0.0
    %3012 = vmatpush.msra.mxu0 0.0
    %3013 = vmatpush.msra.mxu0 0.0
    %3014 = vmatpush.msra.mxu0 0.0
    %3015 = vmatpush.msra.mxu0 0.0
    %3016 = vmatpush.msra.mxu0 0.0
    %3017 = vmatpush.msra.mxu0 0.0
    %3018 = vmatpush.msra.mxu0 0.0
    %3019 = vmatpush.msra.mxu0 0.0
    %3020 = vmatpush.msra.mxu0 0.0
    %3021 = vmatpush.msra.mxu0 0.0
    %3022 = vmatpush.msra.mxu0 %v2975
    %3023 = vmatmul.f32.gmra.mxu0 %v66
    %v3024 = vpop.f32.mrf.mxu0
    %v3025 = vadd.f32 %v47, %v3024
    %3026 = vmatmul.f32.gmra.mxu0 %v69
    %v3027 = vpop.f32.mrf.mxu0
    %v3028 = vadd.f32 %v52, %v3027
    %3029 = vmatmul.f32.gmra.mxu0 %v72
    %v3030 = vpop.f32.mrf.mxu0
    %v3031 = vadd.f32 %v57, %v3030
    %3032 = vmatmul.f32.gmra.mxu0 %v75
    %v3033 = vpop.f32.mrf.mxu0
    %v3034 = vadd.f32 %v62, %v3033
    %3035 = vdwg.mxu0
    %3036 = vmatpush.msra.mxu0 0.0
    %3037 = vmatpush.msra.mxu0 0.0
    %3038 = vmatpush.msra.mxu0 0.0
    %3039 = vmatpush.msra.mxu0 0.0
    %3040 = vmatpush.msra.mxu0 0.0
    %3041 = vmatpush.msra.mxu0 0.0
    %3042 = vmatpush.msra.mxu0 0.0
    %3043 = vmatpush.msra.mxu0 0.0
    %3044 = vmatpush.msra.mxu0 0.0
    %3045 = vmatpush.msra.mxu0 0.0
    %3046 = vmatpush.msra.mxu0 0.0
    %3047 = vmatpush.msra.mxu0 0.0
    %3048 = vmatpush.msra.mxu0 0.0
    %3049 = vmatpush.msra.mxu0 0.0
    %3050 = vmatpush.msra.mxu0 0.0
    %3051 = vmatpush.msra.mxu0 %v2976
    %3052 = vmatmul.f32.gmra.mxu0 %v66
    %v3053 = vpop.f32.mrf.mxu0
    %v3054 = vadd.f32 %v47, %v3053
    %3055 = vmatmul.f32.gmra.mxu0 %v69
    %v3056 = vpop.f32.mrf.mxu0
    %v3057 = vadd.f32 %v52, %v3056
    %3058 = vmatmul.f32.gmra.mxu0 %v72
    %v3059 = vpop.f32.mrf.mxu0
    %v3060 = vadd.f32 %v57, %v3059
    %3061 = vmatmul.f32.gmra.mxu0 %v75
    %v3062 = vpop.f32.mrf.mxu0
    %v3063 = vadd.f32 %v62, %v3062
    %3064 = vdwg.mxu0
    %3065 = vmatpush.msra.mxu0 0.0
    %3066 = vmatpush.msra.mxu0 0.0
    %3067 = vmatpush.msra.mxu0 0.0
    %3068 = vmatpush.msra.mxu0 0.0
    %3069 = vmatpush.msra.mxu0 0.0
    %3070 = vmatpush.msra.mxu0 0.0
    %3071 = vmatpush.msra.mxu0 0.0
    %3072 = vmatpush.msra.mxu0 0.0
    %3073 = vmatpush.msra.mxu0 0.0
    %3074 = vmatpush.msra.mxu0 0.0
    %3075 = vmatpush.msra.mxu0 0.0
    %3076 = vmatpush.msra.mxu0 0.0
    %3077 = vmatpush.msra.mxu0 0.0
    %3078 = vmatpush.msra.mxu0 0.0
    %3079 = vmatpush.msra.mxu0 0.0
    %3080 = vmatpush.msra.mxu0 %v2977
    %3081 = vmatmul.f32.gmra.mxu0 %v66
    %v3082 = vpop.f32.mrf.mxu0
    %v3083 = vadd.f32 %v47, %v3082
    %3084 = vmatmul.f32.gmra.mxu0 %v69
    %v3085 = vpop.f32.mrf.mxu0
    %v3086 = vadd.f32 %v52, %v3085
    %3087 = vmatmul.f32.gmra.mxu0 %v72
    %v3088 = vpop.f32.mrf.mxu0
    %v3089 = vadd.f32 %v57, %v3088
    %3090 = vmatmul.f32.gmra.mxu0 %v75
    %v3091 = vpop.f32.mrf.mxu0
    %v3092 = vadd.f32 %v62, %v3091
    %3093 = vdwg.mxu0
    %v3094 = vpack.c.bf16 %v2999, %v2996
    %v3095 = vpack.c.bf16 %v3028, %v3025
    %v3096 = vpack.c.bf16 %v3005, %v3002
    %v3097 = vpack.c.bf16 %v3034, %v3031
    %v3098 = vunpack.c.l.bf16 %v3094
    %v3099 = vunpack.c.l.bf16 %v3095
    %v3100 = vunpack.c.h.bf16 %v3094
    %v3101 = vunpack.c.h.bf16 %v3095
    %v3102 = vunpack.c.l.bf16 %v3096
    %v3103 = vunpack.c.l.bf16 %v3097
    %v3104 = vunpack.c.h.bf16 %v3096
    %v3105 = vunpack.c.h.bf16 %v3097
    %v3106 = vtanh.pop %v3098
    %v3107 = vtanh.pop %v3099
    %v3108 = vtanh.pop %v3100
    %v3109 = vtanh.pop %v3101
    %v3110 = vtanh.pop %v3102
    %v3111 = vtanh.pop %v3103
    %v3112 = vtanh.pop %v3104
    %v3113 = vtanh.pop %v3105
    %v3114 = vpack.c.bf16 %v3108, %v3106
    %v3115 = vpack.c.bf16 %v3109, %v3107
    %v3116 = vpack.c.bf16 %v3112, %v3110
    %v3117 = vpack.c.bf16 %v3113, %v3111
    %v3118 = vpack.c.bf16 %v3057, %v3054
    %v3119 = vpack.c.bf16 %v3086, %v3083
    %v3120 = vpack.c.bf16 %v3063, %v3060
    %v3121 = vpack.c.bf16 %v3092, %v3089
    %v3122 = vunpack.c.l.bf16 %v3118
    %v3123 = vunpack.c.l.bf16 %v3119
    %v3124 = vunpack.c.h.bf16 %v3118
    %v3125 = vunpack.c.h.bf16 %v3119
    %v3126 = vunpack.c.l.bf16 %v3120
    %v3127 = vunpack.c.l.bf16 %v3121
    %v3128 = vunpack.c.h.bf16 %v3120
    %v3129 = vunpack.c.h.bf16 %v3121
    %v3130 = vtanh.pop %v3122
    %v3131 = vtanh.pop %v3123
    %v3132 = vtanh.pop %v3124
    %v3133 = vtanh.pop %v3125
    %v3134 = vtanh.pop %v3126
    %v3135 = vtanh.pop %v3127
    %v3136 = vtanh.pop %v3128
    %v3137 = vtanh.pop %v3129
    %v3138 = vpack.c.bf16 %v3132, %v3130
    %v3139 = vpack.c.bf16 %v3133, %v3131
    %v3140 = vpack.c.bf16 %v3136, %v3134
    %v3141 = vpack.c.bf16 %v3137, %v3135
    %v3142 = vld [vmem:[%s2] sm:$0xf]
    %v3143 = vld [vmem:[%s2 + $0x4] sm:$0xf]
    %v3144 = vld [vmem:[%s2 + $0x8] sm:$0xf]
    %v3145 = vld [vmem:[%s2 + $0xc] sm:$0xf]
    %v3146 = vld [vmem:[%s245] sm:$0xff]
    %v3147 = vld [vmem:[%s245 + $0x8] sm:$0xff]
    %v3148 = vld [vmem:[%s245 + $0x10] sm:$0xff]
    %v3149 = vld [vmem:[%s245 + $0x18] sm:$0xff]
    %3151 = vset.pattern.permute.xlu0 0
    %3152 = vperm.xlu0 %3151, %v3146
    %v3153 = vpop.permute.xlu0 %3152
    %3156 = vset.pattern.permute.xlu0 0
    %3157 = vperm.xlu0 %3156, %v3147
    %v3158 = vpop.permute.xlu0 %3157
    %3161 = vset.pattern.permute.xlu0 0
    %3162 = vperm.xlu0 %3161, %v3148
    %v3163 = vpop.permute.xlu0 %3162
    %3166 = vset.pattern.permute.xlu0 0
    %3167 = vperm.xlu0 %3166, %v3149
    %v3168 = vpop.permute.xlu0 %3167
    %v3174 = vunpack.c.l.b16 %v3142
    %v3175 = vunpack.c.l.b16 %v3143
    %v3176 = vunpack.c.l.b16 %v3144
    %v3177 = vunpack.c.l.b16 %v3145
    %v3178 = vpack.c.b16 %v3175, %v3174
    %v3179 = vpack.c.b16 %v3177, %v3176
    %v3181 = vsel %vm280, %v3178, 0
    %v3184 = vsel %vm280, %v3179, 0
    %3186 = vmatpush.bf16.msra.mxu0 0
    %3187 = vmatpush.bf16.msra.mxu0 0
    %3188 = vmatpush.bf16.msra.mxu0 0
    %3189 = vmatpush.bf16.msra.mxu0 0
    %3190 = vmatpush.bf16.msra.mxu0 0
    %3191 = vmatpush.bf16.msra.mxu0 0
    %3192 = vmatpush.bf16.msra.mxu0 %v3116
    %3193 = vmatpush.bf16.msra.mxu0 %v3114
    %3194 = vmatmul.bf16.gmra.mxu0 %v3181
    %v3195 = vpop.f32.mrf.mxu0
    %v3196 = vadd.f32 %v3153, %v3195
    %v3197 = vpop.f32.mrf.mxu0
    %v3198 = vadd.f32 %v3158, %v3197
    %3199 = vmatmul.bf16.gmra.mxu0 %v3184
    %v3200 = vpop.f32.mrf.mxu0
    %v3201 = vadd.f32 %v3163, %v3200
    %v3202 = vpop.f32.mrf.mxu0
    %v3203 = vadd.f32 %v3168, %v3202
    %3204 = vdwg.mxu0
    %3205 = vmatpush.bf16.msra.mxu0 0
    %3206 = vmatpush.bf16.msra.mxu0 0
    %3207 = vmatpush.bf16.msra.mxu0 0
    %3208 = vmatpush.bf16.msra.mxu0 0
    %3209 = vmatpush.bf16.msra.mxu0 0
    %3210 = vmatpush.bf16.msra.mxu0 0
    %3211 = vmatpush.bf16.msra.mxu0 %v3117
    %3212 = vmatpush.bf16.msra.mxu0 %v3115
    %3213 = vmatmul.bf16.gmra.mxu0 %v3181
    %v3214 = vpop.f32.mrf.mxu0
    %v3215 = vadd.f32 %v3153, %v3214
    %v3216 = vpop.f32.mrf.mxu0
    %v3217 = vadd.f32 %v3158, %v3216
    %3218 = vmatmul.bf16.gmra.mxu0 %v3184
    %v3219 = vpop.f32.mrf.mxu0
    %v3220 = vadd.f32 %v3163, %v3219
    %v3221 = vpop.f32.mrf.mxu0
    %v3222 = vadd.f32 %v3168, %v3221
    %3223 = vdwg.mxu0
    %3224 = vmatpush.bf16.msra.mxu0 0
    %3225 = vmatpush.bf16.msra.mxu0 0
    %3226 = vmatpush.bf16.msra.mxu0 0
    %3227 = vmatpush.bf16.msra.mxu0 0
    %3228 = vmatpush.bf16.msra.mxu0 0
    %3229 = vmatpush.bf16.msra.mxu0 0
    %3230 = vmatpush.bf16.msra.mxu0 %v3140
    %3231 = vmatpush.bf16.msra.mxu0 %v3138
    %3232 = vmatmul.bf16.gmra.mxu0 %v3181
    %v3233 = vpop.f32.mrf.mxu0
    %v3234 = vadd.f32 %v3153, %v3233
    %v3235 = vpop.f32.mrf.mxu0
    %v3236 = vadd.f32 %v3158, %v3235
    %3237 = vmatmul.bf16.gmra.mxu0 %v3184
    %v3238 = vpop.f32.mrf.mxu0
    %v3239 = vadd.f32 %v3163, %v3238
    %v3240 = vpop.f32.mrf.mxu0
    %v3241 = vadd.f32 %v3168, %v3240
    %3242 = vdwg.mxu0
    %3243 = vmatpush.bf16.msra.mxu0 0
    %3244 = vmatpush.bf16.msra.mxu0 0
    %3245 = vmatpush.bf16.msra.mxu0 0
    %3246 = vmatpush.bf16.msra.mxu0 0
    %3247 = vmatpush.bf16.msra.mxu0 0
    %3248 = vmatpush.bf16.msra.mxu0 0
    %3249 = vmatpush.bf16.msra.mxu0 %v3141
    %3250 = vmatpush.bf16.msra.mxu0 %v3139
    %3251 = vmatmul.bf16.gmra.mxu0 %v3181
    %v3252 = vpop.f32.mrf.mxu0
    %v3253 = vadd.f32 %v3153, %v3252
    %v3254 = vpop.f32.mrf.mxu0
    %v3255 = vadd.f32 %v3158, %v3254
    %3256 = vmatmul.bf16.gmra.mxu0 %v3184
    %v3257 = vpop.f32.mrf.mxu0
    %v3258 = vadd.f32 %v3163, %v3257
    %v3259 = vpop.f32.mrf.mxu0
    %v3260 = vadd.f32 %v3168, %v3259
    %3261 = vdwg.mxu0
    %v3262 = vpack.c.bf16 %v3198, %v3196
    %v3263 = vpack.c.bf16 %v3217, %v3215
    %v3264 = vpack.c.bf16 %v3203, %v3201
    %v3265 = vpack.c.bf16 %v3222, %v3220
    %v3266 = vunpack.c.l.bf16 %v3262
    %v3267 = vunpack.c.l.bf16 %v3263
    %v3268 = vunpack.c.h.bf16 %v3262
    %v3269 = vunpack.c.h.bf16 %v3263
    %v3270 = vunpack.c.l.bf16 %v3264
    %v3271 = vunpack.c.l.bf16 %v3265
    %v3272 = vunpack.c.h.bf16 %v3264
    %v3273 = vunpack.c.h.bf16 %v3265
    %v3274 = vtanh.pop %v3266
    %v3275 = vtanh.pop %v3267
    %v3276 = vtanh.pop %v3268
    %v3277 = vtanh.pop %v3269
    %v3278 = vtanh.pop %v3270
    %v3279 = vtanh.pop %v3271
    %v3280 = vtanh.pop %v3272
    %v3281 = vtanh.pop %v3273
    %v3282 = vpack.c.bf16 %v3276, %v3274
    %v3283 = vpack.c.bf16 %v3277, %v3275
    %v3284 = vpack.c.bf16 %v3280, %v3278
    %v3285 = vpack.c.bf16 %v3281, %v3279
    %v3286 = vpack.c.bf16 %v3236, %v3234
    %v3287 = vpack.c.bf16 %v3255, %v3253
    %v3288 = vpack.c.bf16 %v3241, %v3239
    %v3289 = vpack.c.bf16 %v3260, %v3258
    %v3290 = vunpack.c.l.bf16 %v3286
    %v3291 = vunpack.c.l.bf16 %v3287
    %v3292 = vunpack.c.h.bf16 %v3286
    %v3293 = vunpack.c.h.bf16 %v3287
    %v3294 = vunpack.c.l.bf16 %v3288
    %v3295 = vunpack.c.l.bf16 %v3289
    %v3296 = vunpack.c.h.bf16 %v3288
    %v3297 = vunpack.c.h.bf16 %v3289
    %v3298 = vtanh.pop %v3290
    %v3299 = vtanh.pop %v3291
    %v3300 = vtanh.pop %v3292
    %v3301 = vtanh.pop %v3293
    %v3302 = vtanh.pop %v3294
    %v3303 = vtanh.pop %v3295
    %v3304 = vtanh.pop %v3296
    %v3305 = vtanh.pop %v3297
    %v3306 = vpack.c.bf16 %v3300, %v3298
    %v3307 = vpack.c.bf16 %v3301, %v3299
    %v3308 = vpack.c.bf16 %v3304, %v3302
    %v3309 = vpack.c.bf16 %v3305, %v3303
    %v3310 = vld [vmem:[%s411] sm:$0xf]
    %v3311 = vld [vmem:[%s411 + $0x4] sm:$0xf]
    %v3312 = vld [vmem:[%s411 + $0x8] sm:$0xf]
    %v3313 = vld [vmem:[%s411 + $0xc] sm:$0xf]
    %v3314 = vld [vmem:[%s416] sm:$0xff]
    %v3315 = vld [vmem:[%s416 + $0x8] sm:$0xff]
    %v3316 = vld [vmem:[%s416 + $0x10] sm:$0xff]
    %v3317 = vld [vmem:[%s416 + $0x18] sm:$0xff]
    %3319 = vset.pattern.permute.xlu0 0
    %3320 = vperm.xlu0 %3319, %v3314
    %v3321 = vpop.permute.xlu0 %3320
    %3324 = vset.pattern.permute.xlu0 0
    %3325 = vperm.xlu0 %3324, %v3315
    %v3326 = vpop.permute.xlu0 %3325
    %3329 = vset.pattern.permute.xlu0 0
    %3330 = vperm.xlu0 %3329, %v3316
    %v3331 = vpop.permute.xlu0 %3330
    %3334 = vset.pattern.permute.xlu0 0
    %3335 = vperm.xlu0 %3334, %v3317
    %v3336 = vpop.permute.xlu0 %3335
    %v3342 = vunpack.c.l.b16 %v3310
    %v3343 = vunpack.c.l.b16 %v3311
    %v3344 = vunpack.c.l.b16 %v3312
    %v3345 = vunpack.c.l.b16 %v3313
    %v3346 = vpack.c.b16 %v3343, %v3342
    %v3347 = vpack.c.b16 %v3345, %v3344
    %v3349 = vsel %vm280, %v3346, 0
    %v3352 = vsel %vm280, %v3347, 0
    %3354 = vmatpush.bf16.msra.mxu0 0
    %3355 = vmatpush.bf16.msra.mxu0 0
    %3356 = vmatpush.bf16.msra.mxu0 0
    %3357 = vmatpush.bf16.msra.mxu0 0
    %3358 = vmatpush.bf16.msra.mxu0 0
    %3359 = vmatpush.bf16.msra.mxu0 0
    %3360 = vmatpush.bf16.msra.mxu0 %v3284
    %3361 = vmatpush.bf16.msra.mxu0 %v3282
    %3362 = vmatmul.bf16.gmra.mxu0 %v3349
    %v3363 = vpop.f32.mrf.mxu0
    %v3364 = vadd.f32 %v3321, %v3363
    %v3365 = vpop.f32.mrf.mxu0
    %v3366 = vadd.f32 %v3326, %v3365
    %3367 = vmatmul.bf16.gmra.mxu0 %v3352
    %v3368 = vpop.f32.mrf.mxu0
    %v3369 = vadd.f32 %v3331, %v3368
    %v3370 = vpop.f32.mrf.mxu0
    %v3371 = vadd.f32 %v3336, %v3370
    %3372 = vdwg.mxu0
    %3373 = vmatpush.bf16.msra.mxu0 0
    %3374 = vmatpush.bf16.msra.mxu0 0
    %3375 = vmatpush.bf16.msra.mxu0 0
    %3376 = vmatpush.bf16.msra.mxu0 0
    %3377 = vmatpush.bf16.msra.mxu0 0
    %3378 = vmatpush.bf16.msra.mxu0 0
    %3379 = vmatpush.bf16.msra.mxu0 %v3285
    %3380 = vmatpush.bf16.msra.mxu0 %v3283
    %3381 = vmatmul.bf16.gmra.mxu0 %v3349
    %v3382 = vpop.f32.mrf.mxu0
    %v3383 = vadd.f32 %v3321, %v3382
    %v3384 = vpop.f32.mrf.mxu0
    %v3385 = vadd.f32 %v3326, %v3384
    %3386 = vmatmul.bf16.gmra.mxu0 %v3352
    %v3387 = vpop.f32.mrf.mxu0
    %v3388 = vadd.f32 %v3331, %v3387
    %v3389 = vpop.f32.mrf.mxu0
    %v3390 = vadd.f32 %v3336, %v3389
    %3391 = vdwg.mxu0
    %3392 = vmatpush.bf16.msra.mxu0 0
    %3393 = vmatpush.bf16.msra.mxu0 0
    %3394 = vmatpush.bf16.msra.mxu0 0
    %3395 = vmatpush.bf16.msra.mxu0 0
    %3396 = vmatpush.bf16.msra.mxu0 0
    %3397 = vmatpush.bf16.msra.mxu0 0
    %3398 = vmatpush.bf16.msra.mxu0 %v3308
    %3399 = vmatpush.bf16.msra.mxu0 %v3306
    %3400 = vmatmul.bf16.gmra.mxu0 %v3349
    %v3401 = vpop.f32.mrf.mxu0
    %v3402 = vadd.f32 %v3321, %v3401
    %v3403 = vpop.f32.mrf.mxu0
    %v3404 = vadd.f32 %v3326, %v3403
    %3405 = vmatmul.bf16.gmra.mxu0 %v3352
    %v3406 = vpop.f32.mrf.mxu0
    %v3407 = vadd.f32 %v3331, %v3406
    %v3408 = vpop.f32.mrf.mxu0
    %v3409 = vadd.f32 %v3336, %v3408
    %3410 = vdwg.mxu0
    %3411 = vmatpush.bf16.msra.mxu0 0
    %3412 = vmatpush.bf16.msra.mxu0 0
    %3413 = vmatpush.bf16.msra.mxu0 0
    %3414 = vmatpush.bf16.msra.mxu0 0
    %3415 = vmatpush.bf16.msra.mxu0 0
    %3416 = vmatpush.bf16.msra.mxu0 0
    %3417 = vmatpush.bf16.msra.mxu0 %v3309
    %3418 = vmatpush.bf16.msra.mxu0 %v3307
    %3419 = vmatmul.bf16.gmra.mxu0 %v3349
    %v3420 = vpop.f32.mrf.mxu0
    %v3421 = vadd.f32 %v3321, %v3420
    %v3422 = vpop.f32.mrf.mxu0
    %v3423 = vadd.f32 %v3326, %v3422
    %3424 = vmatmul.bf16.gmra.mxu0 %v3352
    %v3425 = vpop.f32.mrf.mxu0
    %v3426 = vadd.f32 %v3331, %v3425
    %v3427 = vpop.f32.mrf.mxu0
    %v3428 = vadd.f32 %v3336, %v3427
    %3429 = vdwg.mxu0
    %v3430 = vpack.c.bf16 %v3366, %v3364
    %v3431 = vpack.c.bf16 %v3385, %v3383
    %v3432 = vpack.c.bf16 %v3371, %v3369
    %v3433 = vpack.c.bf16 %v3390, %v3388
    %v3434 = vunpack.c.l.bf16 %v3430
    %v3435 = vunpack.c.l.bf16 %v3431
    %v3436 = vunpack.c.h.bf16 %v3430
    %v3437 = vunpack.c.h.bf16 %v3431
    %v3438 = vunpack.c.l.bf16 %v3432
    %v3439 = vunpack.c.l.bf16 %v3433
    %v3440 = vunpack.c.h.bf16 %v3432
    %v3441 = vunpack.c.h.bf16 %v3433
    %v3442 = vtanh.pop %v3434
    %v3443 = vtanh.pop %v3435
    %v3444 = vtanh.pop %v3436
    %v3445 = vtanh.pop %v3437
    %v3446 = vtanh.pop %v3438
    %v3447 = vtanh.pop %v3439
    %v3448 = vtanh.pop %v3440
    %v3449 = vtanh.pop %v3441
    %v3450 = vpack.c.bf16 %v3444, %v3442
    %v3451 = vpack.c.bf16 %v3445, %v3443
    %v3452 = vpack.c.bf16 %v3448, %v3446
    %v3453 = vpack.c.bf16 %v3449, %v3447
    %v3454 = vpack.c.bf16 %v3404, %v3402
    %v3455 = vpack.c.bf16 %v3423, %v3421
    %v3456 = vpack.c.bf16 %v3409, %v3407
    %v3457 = vpack.c.bf16 %v3428, %v3426
    %v3458 = vunpack.c.l.bf16 %v3454
    %v3459 = vunpack.c.l.bf16 %v3455
    %v3460 = vunpack.c.h.bf16 %v3454
    %v3461 = vunpack.c.h.bf16 %v3455
    %v3462 = vunpack.c.l.bf16 %v3456
    %v3463 = vunpack.c.l.bf16 %v3457
    %v3464 = vunpack.c.h.bf16 %v3456
    %v3465 = vunpack.c.h.bf16 %v3457
    %v3466 = vtanh.pop %v3458
    %v3467 = vtanh.pop %v3459
    %v3468 = vtanh.pop %v3460
    %v3469 = vtanh.pop %v3461
    %v3470 = vtanh.pop %v3462
    %v3471 = vtanh.pop %v3463
    %v3472 = vtanh.pop %v3464
    %v3473 = vtanh.pop %v3465
    %v3474 = vpack.c.bf16 %v3468, %v3466
    %v3475 = vpack.c.bf16 %v3469, %v3467
    %v3476 = vpack.c.bf16 %v3472, %v3470
    %v3477 = vpack.c.bf16 %v3473, %v3471
    %v3478 = vld [vmem:[%s581] sm:$0xf]
    %v3479 = vld [vmem:[%s581 + $0x4] sm:$0xf]
    %v3480 = vld [vmem:[%s581 + $0x8] sm:$0xf]
    %v3481 = vld [vmem:[%s581 + $0xc] sm:$0xf]
    %v3482 = vld [vmem:[%s586] sm:$0xff]
    %v3483 = vld [vmem:[%s586 + $0x8] sm:$0xff]
    %v3484 = vld [vmem:[%s586 + $0x10] sm:$0xff]
    %v3485 = vld [vmem:[%s586 + $0x18] sm:$0xff]
    %3487 = vset.pattern.permute.xlu0 0
    %3488 = vperm.xlu0 %3487, %v3482
    %v3489 = vpop.permute.xlu0 %3488
    %3492 = vset.pattern.permute.xlu0 0
    %3493 = vperm.xlu0 %3492, %v3483
    %v3494 = vpop.permute.xlu0 %3493
    %3497 = vset.pattern.permute.xlu0 0
    %3498 = vperm.xlu0 %3497, %v3484
    %v3499 = vpop.permute.xlu0 %3498
    %3502 = vset.pattern.permute.xlu0 0
    %3503 = vperm.xlu0 %3502, %v3485
    %v3504 = vpop.permute.xlu0 %3503
    %v3510 = vunpack.c.l.b16 %v3478
    %v3511 = vunpack.c.l.b16 %v3479
    %v3512 = vunpack.c.l.b16 %v3480
    %v3513 = vunpack.c.l.b16 %v3481
    %v3514 = vpack.c.b16 %v3511, %v3510
    %v3515 = vpack.c.b16 %v3513, %v3512
    %v3517 = vsel %vm280, %v3514, 0
    %v3520 = vsel %vm280, %v3515, 0
    %3522 = vmatpush.bf16.msra.mxu0 0
    %3523 = vmatpush.bf16.msra.mxu0 0
    %3524 = vmatpush.bf16.msra.mxu0 0
    %3525 = vmatpush.bf16.msra.mxu0 0
    %3526 = vmatpush.bf16.msra.mxu0 0
    %3527 = vmatpush.bf16.msra.mxu0 0
    %3528 = vmatpush.bf16.msra.mxu0 %v3452
    %3529 = vmatpush.bf16.msra.mxu0 %v3450
    %3530 = vmatmul.bf16.gmra.mxu0 %v3517
    %v3531 = vpop.f32.mrf.mxu0
    %v3532 = vadd.f32 %v3489, %v3531
    %v3533 = vpop.f32.mrf.mxu0
    %v3534 = vadd.f32 %v3494, %v3533
    %3535 = vmatmul.bf16.gmra.mxu0 %v3520
    %v3536 = vpop.f32.mrf.mxu0
    %v3537 = vadd.f32 %v3499, %v3536
    %v3538 = vpop.f32.mrf.mxu0
    %v3539 = vadd.f32 %v3504, %v3538
    %3540 = vdwg.mxu0
    %3541 = vmatpush.bf16.msra.mxu0 0
    %3542 = vmatpush.bf16.msra.mxu0 0
    %3543 = vmatpush.bf16.msra.mxu0 0
    %3544 = vmatpush.bf16.msra.mxu0 0
    %3545 = vmatpush.bf16.msra.mxu0 0
    %3546 = vmatpush.bf16.msra.mxu0 0
    %3547 = vmatpush.bf16.msra.mxu0 %v3453
    %3548 = vmatpush.bf16.msra.mxu0 %v3451
    %3549 = vmatmul.bf16.gmra.mxu0 %v3517
    %v3550 = vpop.f32.mrf.mxu0
    %v3551 = vadd.f32 %v3489, %v3550
    %v3552 = vpop.f32.mrf.mxu0
    %v3553 = vadd.f32 %v3494, %v3552
    %3554 = vmatmul.bf16.gmra.mxu0 %v3520
    %v3555 = vpop.f32.mrf.mxu0
    %v3556 = vadd.f32 %v3499, %v3555
    %v3557 = vpop.f32.mrf.mxu0
    %v3558 = vadd.f32 %v3504, %v3557
    %3559 = vdwg.mxu0
    %3560 = vmatpush.bf16.msra.mxu0 0
    %3561 = vmatpush.bf16.msra.mxu0 0
    %3562 = vmatpush.bf16.msra.mxu0 0
    %3563 = vmatpush.bf16.msra.mxu0 0
    %3564 = vmatpush.bf16.msra.mxu0 0
    %3565 = vmatpush.bf16.msra.mxu0 0
    %3566 = vmatpush.bf16.msra.mxu0 %v3476
    %3567 = vmatpush.bf16.msra.mxu0 %v3474
    %3568 = vmatmul.bf16.gmra.mxu0 %v3517
    %v3569 = vpop.f32.mrf.mxu0
    %v3570 = vadd.f32 %v3489, %v3569
    %v3571 = vpop.f32.mrf.mxu0
    %v3572 = vadd.f32 %v3494, %v3571
    %3573 = vmatmul.bf16.gmra.mxu0 %v3520
    %v3574 = vpop.f32.mrf.mxu0
    %v3575 = vadd.f32 %v3499, %v3574
    %v3576 = vpop.f32.mrf.mxu0
    %v3577 = vadd.f32 %v3504, %v3576
    %3578 = vdwg.mxu0
    %3579 = vmatpush.bf16.msra.mxu0 0
    %3580 = vmatpush.bf16.msra.mxu0 0
    %3581 = vmatpush.bf16.msra.mxu0 0
    %3582 = vmatpush.bf16.msra.mxu0 0
    %3583 = vmatpush.bf16.msra.mxu0 0
    %3584 = vmatpush.bf16.msra.mxu0 0
    %3585 = vmatpush.bf16.msra.mxu0 %v3477
    %3586 = vmatpush.bf16.msra.mxu0 %v3475
    %3587 = vmatmul.bf16.gmra.mxu0 %v3517
    %v3588 = vpop.f32.mrf.mxu0
    %v3589 = vadd.f32 %v3489, %v3588
    %v3590 = vpop.f32.mrf.mxu0
    %v3591 = vadd.f32 %v3494, %v3590
    %3592 = vmatmul.bf16.gmra.mxu0 %v3520
    %v3593 = vpop.f32.mrf.mxu0
    %v3594 = vadd.f32 %v3499, %v3593
    %v3595 = vpop.f32.mrf.mxu0
    %v3596 = vadd.f32 %v3504, %v3595
    %3597 = vdwg.mxu0
    %v3598 = vpack.c.bf16 %v3534, %v3532
    %v3599 = vpack.c.bf16 %v3553, %v3551
    %v3600 = vpack.c.bf16 %v3539, %v3537
    %v3601 = vpack.c.bf16 %v3558, %v3556
    %v3602 = vunpack.c.l.bf16 %v3598
    %v3603 = vunpack.c.l.bf16 %v3599
    %v3604 = vunpack.c.h.bf16 %v3598
    %v3605 = vunpack.c.h.bf16 %v3599
    %v3606 = vunpack.c.l.bf16 %v3600
    %v3607 = vunpack.c.l.bf16 %v3601
    %v3608 = vunpack.c.h.bf16 %v3600
    %v3609 = vunpack.c.h.bf16 %v3601
    %v3610 = vtanh.pop %v3602
    %v3611 = vtanh.pop %v3603
    %v3612 = vtanh.pop %v3604
    %v3613 = vtanh.pop %v3605
    %v3614 = vtanh.pop %v3606
    %v3615 = vtanh.pop %v3607
    %v3616 = vtanh.pop %v3608
    %v3617 = vtanh.pop %v3609
    %v3618 = vpack.c.bf16 %v3612, %v3610
    %v3619 = vpack.c.bf16 %v3613, %v3611
    %v3620 = vpack.c.bf16 %v3616, %v3614
    %v3621 = vpack.c.bf16 %v3617, %v3615
    %v3622 = vpack.c.bf16 %v3572, %v3570
    %v3623 = vpack.c.bf16 %v3591, %v3589
    %v3624 = vpack.c.bf16 %v3577, %v3575
    %v3625 = vpack.c.bf16 %v3596, %v3594
    %v3626 = vunpack.c.l.bf16 %v3622
    %v3627 = vunpack.c.l.bf16 %v3623
    %v3628 = vunpack.c.h.bf16 %v3622
    %v3629 = vunpack.c.h.bf16 %v3623
    %v3630 = vunpack.c.l.bf16 %v3624
    %v3631 = vunpack.c.l.bf16 %v3625
    %v3632 = vunpack.c.h.bf16 %v3624
    %v3633 = vunpack.c.h.bf16 %v3625
    %v3634 = vtanh.pop %v3626
    %v3635 = vtanh.pop %v3627
    %v3636 = vtanh.pop %v3628
    %v3637 = vtanh.pop %v3629
    %v3638 = vtanh.pop %v3630
    %v3639 = vtanh.pop %v3631
    %v3640 = vtanh.pop %v3632
    %v3641 = vtanh.pop %v3633
    %v3642 = vpack.c.bf16 %v3636, %v3634
    %v3643 = vpack.c.bf16 %v3637, %v3635
    %v3644 = vpack.c.bf16 %v3640, %v3638
    %v3645 = vpack.c.bf16 %v3641, %v3639
    %v3646 = vld [vmem:[%s751] sm:$0xf]
    %v3647 = vld [vmem:[%s751 + $0x4] sm:$0xf]
    %v3648 = vld [vmem:[%s751 + $0x8] sm:$0xf]
    %v3649 = vld [vmem:[%s751 + $0xc] sm:$0xf]
    %v3650 = vld [vmem:[%s756] sm:$0xff]
    %v3651 = vld [vmem:[%s756 + $0x8] sm:$0xff]
    %v3652 = vld [vmem:[%s756 + $0x10] sm:$0xff]
    %v3653 = vld [vmem:[%s756 + $0x18] sm:$0xff]
    %3655 = vset.pattern.permute.xlu0 0
    %3656 = vperm.xlu0 %3655, %v3650
    %v3657 = vpop.permute.xlu0 %3656
    %3660 = vset.pattern.permute.xlu0 0
    %3661 = vperm.xlu0 %3660, %v3651
    %v3662 = vpop.permute.xlu0 %3661
    %3665 = vset.pattern.permute.xlu0 0
    %3666 = vperm.xlu0 %3665, %v3652
    %v3667 = vpop.permute.xlu0 %3666
    %3670 = vset.pattern.permute.xlu0 0
    %3671 = vperm.xlu0 %3670, %v3653
    %v3672 = vpop.permute.xlu0 %3671
    %v3678 = vunpack.c.l.b16 %v3646
    %v3679 = vunpack.c.l.b16 %v3647
    %v3680 = vunpack.c.l.b16 %v3648
    %v3681 = vunpack.c.l.b16 %v3649
    %v3682 = vpack.c.b16 %v3679, %v3678
    %v3683 = vpack.c.b16 %v3681, %v3680
    %v3685 = vsel %vm280, %v3682, 0
    %v3688 = vsel %vm280, %v3683, 0
    %3690 = vmatpush.bf16.msra.mxu0 0
    %3691 = vmatpush.bf16.msra.mxu0 0
    %3692 = vmatpush.bf16.msra.mxu0 0
    %3693 = vmatpush.bf16.msra.mxu0 0
    %3694 = vmatpush.bf16.msra.mxu0 0
    %3695 = vmatpush.bf16.msra.mxu0 0
    %3696 = vmatpush.bf16.msra.mxu0 %v3620
    %3697 = vmatpush.bf16.msra.mxu0 %v3618
    %3698 = vmatmul.bf16.gmra.mxu0 %v3685
    %v3699 = vpop.f32.mrf.mxu0
    %v3700 = vadd.f32 %v3657, %v3699
    %v3701 = vpop.f32.mrf.mxu0
    %v3702 = vadd.f32 %v3662, %v3701
    %3703 = vmatmul.bf16.gmra.mxu0 %v3688
    %v3704 = vpop.f32.mrf.mxu0
    %v3705 = vadd.f32 %v3667, %v3704
    %v3706 = vpop.f32.mrf.mxu0
    %v3707 = vadd.f32 %v3672, %v3706
    %3708 = vdwg.mxu0
    %3709 = vmatpush.bf16.msra.mxu0 0
    %3710 = vmatpush.bf16.msra.mxu0 0
    %3711 = vmatpush.bf16.msra.mxu0 0
    %3712 = vmatpush.bf16.msra.mxu0 0
    %3713 = vmatpush.bf16.msra.mxu0 0
    %3714 = vmatpush.bf16.msra.mxu0 0
    %3715 = vmatpush.bf16.msra.mxu0 %v3621
    %3716 = vmatpush.bf16.msra.mxu0 %v3619
    %3717 = vmatmul.bf16.gmra.mxu0 %v3685
    %v3718 = vpop.f32.mrf.mxu0
    %v3719 = vadd.f32 %v3657, %v3718
    %v3720 = vpop.f32.mrf.mxu0
    %v3721 = vadd.f32 %v3662, %v3720
    %3722 = vmatmul.bf16.gmra.mxu0 %v3688
    %v3723 = vpop.f32.mrf.mxu0
    %v3724 = vadd.f32 %v3667, %v3723
    %v3725 = vpop.f32.mrf.mxu0
    %v3726 = vadd.f32 %v3672, %v3725
    %3727 = vdwg.mxu0
    %3728 = vmatpush.bf16.msra.mxu0 0
    %3729 = vmatpush.bf16.msra.mxu0 0
    %3730 = vmatpush.bf16.msra.mxu0 0
    %3731 = vmatpush.bf16.msra.mxu0 0
    %3732 = vmatpush.bf16.msra.mxu0 0
    %3733 = vmatpush.bf16.msra.mxu0 0
    %3734 = vmatpush.bf16.msra.mxu0 %v3644
    %3735 = vmatpush.bf16.msra.mxu0 %v3642
    %3736 = vmatmul.bf16.gmra.mxu0 %v3685
    %v3737 = vpop.f32.mrf.mxu0
    %v3738 = vadd.f32 %v3657, %v3737
    %v3739 = vpop.f32.mrf.mxu0
    %v3740 = vadd.f32 %v3662, %v3739
    %3741 = vmatmul.bf16.gmra.mxu0 %v3688
    %v3742 = vpop.f32.mrf.mxu0
    %v3743 = vadd.f32 %v3667, %v3742
    %v3744 = vpop.f32.mrf.mxu0
    %v3745 = vadd.f32 %v3672, %v3744
    %3746 = vdwg.mxu0
    %3747 = vmatpush.bf16.msra.mxu0 0
    %3748 = vmatpush.bf16.msra.mxu0 0
    %3749 = vmatpush.bf16.msra.mxu0 0
    %3750 = vmatpush.bf16.msra.mxu0 0
    %3751 = vmatpush.bf16.msra.mxu0 0
    %3752 = vmatpush.bf16.msra.mxu0 0
    %3753 = vmatpush.bf16.msra.mxu0 %v3645
    %3754 = vmatpush.bf16.msra.mxu0 %v3643
    %3755 = vmatmul.bf16.gmra.mxu0 %v3685
    %v3756 = vpop.f32.mrf.mxu0
    %v3757 = vadd.f32 %v3657, %v3756
    %v3758 = vpop.f32.mrf.mxu0
    %v3759 = vadd.f32 %v3662, %v3758
    %3760 = vmatmul.bf16.gmra.mxu0 %v3688
    %v3761 = vpop.f32.mrf.mxu0
    %v3762 = vadd.f32 %v3667, %v3761
    %v3763 = vpop.f32.mrf.mxu0
    %v3764 = vadd.f32 %v3672, %v3763
    %3765 = vdwg.mxu0
    %v3766 = vpack.c.bf16 %v3702, %v3700
    %v3767 = vpack.c.bf16 %v3721, %v3719
    %v3768 = vpack.c.bf16 %v3707, %v3705
    %v3769 = vpack.c.bf16 %v3726, %v3724
    %v3770 = vunpack.c.l.bf16 %v3766
    %v3771 = vunpack.c.l.bf16 %v3767
    %v3772 = vunpack.c.h.bf16 %v3766
    %v3773 = vunpack.c.h.bf16 %v3767
    %v3774 = vunpack.c.l.bf16 %v3768
    %v3775 = vunpack.c.l.bf16 %v3769
    %v3776 = vunpack.c.h.bf16 %v3768
    %v3777 = vunpack.c.h.bf16 %v3769
    %v3778 = vtanh.pop %v3770
    %v3779 = vtanh.pop %v3771
    %v3780 = vtanh.pop %v3772
    %v3781 = vtanh.pop %v3773
    %v3782 = vtanh.pop %v3774
    %v3783 = vtanh.pop %v3775
    %v3784 = vtanh.pop %v3776
    %v3785 = vtanh.pop %v3777
    %v3786 = vpack.c.bf16 %v3780, %v3778
    %v3787 = vpack.c.bf16 %v3781, %v3779
    %v3788 = vpack.c.bf16 %v3784, %v3782
    %v3789 = vpack.c.bf16 %v3785, %v3783
    %v3790 = vpack.c.bf16 %v3740, %v3738
    %v3791 = vpack.c.bf16 %v3759, %v3757
    %v3792 = vpack.c.bf16 %v3745, %v3743
    %v3793 = vpack.c.bf16 %v3764, %v3762
    %v3794 = vunpack.c.l.bf16 %v3790
    %v3795 = vunpack.c.l.bf16 %v3791
    %v3796 = vunpack.c.h.bf16 %v3790
    %v3797 = vunpack.c.h.bf16 %v3791
    %v3798 = vunpack.c.l.bf16 %v3792
    %v3799 = vunpack.c.l.bf16 %v3793
    %v3800 = vunpack.c.h.bf16 %v3792
    %v3801 = vunpack.c.h.bf16 %v3793
    %v3802 = vtanh.pop %v3794
    %v3803 = vtanh.pop %v3795
    %v3804 = vtanh.pop %v3796
    %v3805 = vtanh.pop %v3797
    %v3806 = vtanh.pop %v3798
    %v3807 = vtanh.pop %v3799
    %v3808 = vtanh.pop %v3800
    %v3809 = vtanh.pop %v3801
    %v3810 = vpack.c.bf16 %v3804, %v3802
    %v3811 = vpack.c.bf16 %v3805, %v3803
    %v3812 = vpack.c.bf16 %v3808, %v3806
    %v3813 = vpack.c.bf16 %v3809, %v3807
    %v3814 = vld [vmem:[%s921] sm:$0xf]
    %v3815 = vld [vmem:[%s921 + $0x4] sm:$0xf]
    %v3816 = vld [vmem:[%s921 + $0x8] sm:$0xf]
    %v3817 = vld [vmem:[%s921 + $0xc] sm:$0xf]
    %v3818 = vld [vmem:[%s926] sm:$0xff]
    %v3819 = vld [vmem:[%s926 + $0x8] sm:$0xff]
    %v3820 = vld [vmem:[%s926 + $0x10] sm:$0xff]
    %v3821 = vld [vmem:[%s926 + $0x18] sm:$0xff]
    %3823 = vset.pattern.permute.xlu0 0
    %3824 = vperm.xlu0 %3823, %v3818
    %v3825 = vpop.permute.xlu0 %3824
    %3828 = vset.pattern.permute.xlu0 0
    %3829 = vperm.xlu0 %3828, %v3819
    %v3830 = vpop.permute.xlu0 %3829
    %3833 = vset.pattern.permute.xlu0 0
    %3834 = vperm.xlu0 %3833, %v3820
    %v3835 = vpop.permute.xlu0 %3834
    %3838 = vset.pattern.permute.xlu0 0
    %3839 = vperm.xlu0 %3838, %v3821
    %v3840 = vpop.permute.xlu0 %3839
    %v3846 = vunpack.c.l.b16 %v3814
    %v3847 = vunpack.c.l.b16 %v3815
    %v3848 = vunpack.c.l.b16 %v3816
    %v3849 = vunpack.c.l.b16 %v3817
    %v3850 = vpack.c.b16 %v3847, %v3846
    %v3851 = vpack.c.b16 %v3849, %v3848
    %v3853 = vsel %vm280, %v3850, 0
    %v3856 = vsel %vm280, %v3851, 0
    %3858 = vmatpush.bf16.msra.mxu0 0
    %3859 = vmatpush.bf16.msra.mxu0 0
    %3860 = vmatpush.bf16.msra.mxu0 0
    %3861 = vmatpush.bf16.msra.mxu0 0
    %3862 = vmatpush.bf16.msra.mxu0 0
    %3863 = vmatpush.bf16.msra.mxu0 0
    %3864 = vmatpush.bf16.msra.mxu0 %v3788
    %3865 = vmatpush.bf16.msra.mxu0 %v3786
    %3866 = vmatmul.bf16.gmra.mxu0 %v3853
    %v3867 = vpop.f32.mrf.mxu0
    %v3868 = vadd.f32 %v3825, %v3867
    %v3869 = vpop.f32.mrf.mxu0
    %v3870 = vadd.f32 %v3830, %v3869
    %3871 = vmatmul.bf16.gmra.mxu0 %v3856
    %v3872 = vpop.f32.mrf.mxu0
    %v3873 = vadd.f32 %v3835, %v3872
    %v3874 = vpop.f32.mrf.mxu0
    %v3875 = vadd.f32 %v3840, %v3874
    %3876 = vdwg.mxu0
    %3877 = vmatpush.bf16.msra.mxu0 0
    %3878 = vmatpush.bf16.msra.mxu0 0
    %3879 = vmatpush.bf16.msra.mxu0 0
    %3880 = vmatpush.bf16.msra.mxu0 0
    %3881 = vmatpush.bf16.msra.mxu0 0
    %3882 = vmatpush.bf16.msra.mxu0 0
    %3883 = vmatpush.bf16.msra.mxu0 %v3789
    %3884 = vmatpush.bf16.msra.mxu0 %v3787
    %3885 = vmatmul.bf16.gmra.mxu0 %v3853
    %v3886 = vpop.f32.mrf.mxu0
    %v3887 = vadd.f32 %v3825, %v3886
    %v3888 = vpop.f32.mrf.mxu0
    %v3889 = vadd.f32 %v3830, %v3888
    %3890 = vmatmul.bf16.gmra.mxu0 %v3856
    %v3891 = vpop.f32.mrf.mxu0
    %v3892 = vadd.f32 %v3835, %v3891
    %v3893 = vpop.f32.mrf.mxu0
    %v3894 = vadd.f32 %v3840, %v3893
    %3895 = vdwg.mxu0
    %3896 = vmatpush.bf16.msra.mxu0 0
    %3897 = vmatpush.bf16.msra.mxu0 0
    %3898 = vmatpush.bf16.msra.mxu0 0
    %3899 = vmatpush.bf16.msra.mxu0 0
    %3900 = vmatpush.bf16.msra.mxu0 0
    %3901 = vmatpush.bf16.msra.mxu0 0
    %3902 = vmatpush.bf16.msra.mxu0 %v3812
    %3903 = vmatpush.bf16.msra.mxu0 %v3810
    %3904 = vmatmul.bf16.gmra.mxu0 %v3853
    %v3905 = vpop.f32.mrf.mxu0
    %v3906 = vadd.f32 %v3825, %v3905
    %v3907 = vpop.f32.mrf.mxu0
    %v3908 = vadd.f32 %v3830, %v3907
    %3909 = vmatmul.bf16.gmra.mxu0 %v3856
    %v3910 = vpop.f32.mrf.mxu0
    %v3911 = vadd.f32 %v3835, %v3910
    %v3912 = vpop.f32.mrf.mxu0
    %v3913 = vadd.f32 %v3840, %v3912
    %3914 = vdwg.mxu0
    %3915 = vmatpush.bf16.msra.mxu0 0
    %3916 = vmatpush.bf16.msra.mxu0 0
    %3917 = vmatpush.bf16.msra.mxu0 0
    %3918 = vmatpush.bf16.msra.mxu0 0
    %3919 = vmatpush.bf16.msra.mxu0 0
    %3920 = vmatpush.bf16.msra.mxu0 0
    %3921 = vmatpush.bf16.msra.mxu0 %v3813
    %3922 = vmatpush.bf16.msra.mxu0 %v3811
    %3923 = vmatmul.bf16.gmra.mxu0 %v3853
    %v3924 = vpop.f32.mrf.mxu0
    %v3925 = vadd.f32 %v3825, %v3924
    %v3926 = vpop.f32.mrf.mxu0
    %v3927 = vadd.f32 %v3830, %v3926
    %3928 = vmatmul.bf16.gmra.mxu0 %v3856
    %v3929 = vpop.f32.mrf.mxu0
    %v3930 = vadd.f32 %v3835, %v3929
    %v3931 = vpop.f32.mrf.mxu0
    %v3932 = vadd.f32 %v3840, %v3931
    %3933 = vdwg.mxu0
    %v3934 = vpack.c.bf16 %v3870, %v3868
    %v3935 = vpack.c.bf16 %v3889, %v3887
    %v3936 = vpack.c.bf16 %v3875, %v3873
    %v3937 = vpack.c.bf16 %v3894, %v3892
    %v3938 = vunpack.c.l.bf16 %v3934
    %v3939 = vunpack.c.l.bf16 %v3935
    %v3940 = vunpack.c.h.bf16 %v3934
    %v3941 = vunpack.c.h.bf16 %v3935
    %v3942 = vunpack.c.l.bf16 %v3936
    %v3943 = vunpack.c.l.bf16 %v3937
    %v3944 = vunpack.c.h.bf16 %v3936
    %v3945 = vunpack.c.h.bf16 %v3937
    %v3946 = vtanh.pop %v3938
    %v3947 = vtanh.pop %v3939
    %v3948 = vtanh.pop %v3940
    %v3949 = vtanh.pop %v3941
    %v3950 = vtanh.pop %v3942
    %v3951 = vtanh.pop %v3943
    %v3952 = vtanh.pop %v3944
    %v3953 = vtanh.pop %v3945
    %v3954 = vpack.c.bf16 %v3948, %v3946
    %v3955 = vpack.c.bf16 %v3949, %v3947
    %v3956 = vpack.c.bf16 %v3952, %v3950
    %v3957 = vpack.c.bf16 %v3953, %v3951
    %v3958 = vpack.c.bf16 %v3908, %v3906
    %v3959 = vpack.c.bf16 %v3927, %v3925
    %v3960 = vpack.c.bf16 %v3913, %v3911
    %v3961 = vpack.c.bf16 %v3932, %v3930
    %v3962 = vunpack.c.l.bf16 %v3958
    %v3963 = vunpack.c.l.bf16 %v3959
    %v3964 = vunpack.c.h.bf16 %v3958
    %v3965 = vunpack.c.h.bf16 %v3959
    %v3966 = vunpack.c.l.bf16 %v3960
    %v3967 = vunpack.c.l.bf16 %v3961
    %v3968 = vunpack.c.h.bf16 %v3960
    %v3969 = vunpack.c.h.bf16 %v3961
    %v3970 = vtanh.pop %v3962
    %v3971 = vtanh.pop %v3963
    %v3972 = vtanh.pop %v3964
    %v3973 = vtanh.pop %v3965
    %v3974 = vtanh.pop %v3966
    %v3975 = vtanh.pop %v3967
    %v3976 = vtanh.pop %v3968
    %v3977 = vtanh.pop %v3969
    %v3978 = vpack.c.bf16 %v3972, %v3970
    %v3979 = vpack.c.bf16 %v3973, %v3971
    %v3980 = vpack.c.bf16 %v3976, %v3974
    %v3981 = vpack.c.bf16 %v3977, %v3975
    %v3982 = vld [vmem:[%s1091] sm:$0xf]
    %v3983 = vld [vmem:[%s1091 + $0x4] sm:$0xf]
    %v3984 = vld [vmem:[%s1091 + $0x8] sm:$0xf]
    %v3985 = vld [vmem:[%s1091 + $0xc] sm:$0xf]
    %v3986 = vld [vmem:[%s1096] sm:$0xff]
    %v3987 = vld [vmem:[%s1096 + $0x8] sm:$0xff]
    %v3988 = vld [vmem:[%s1096 + $0x10] sm:$0xff]
    %v3989 = vld [vmem:[%s1096 + $0x18] sm:$0xff]
    %3991 = vset.pattern.permute.xlu0 0
    %3992 = vperm.xlu0 %3991, %v3986
    %v3993 = vpop.permute.xlu0 %3992
    %3996 = vset.pattern.permute.xlu0 0
    %3997 = vperm.xlu0 %3996, %v3987
    %v3998 = vpop.permute.xlu0 %3997
    %4001 = vset.pattern.permute.xlu0 0
    %4002 = vperm.xlu0 %4001, %v3988
    %v4003 = vpop.permute.xlu0 %4002
    %4006 = vset.pattern.permute.xlu0 0
    %4007 = vperm.xlu0 %4006, %v3989
    %v4008 = vpop.permute.xlu0 %4007
    %v4014 = vunpack.c.l.b16 %v3982
    %v4015 = vunpack.c.l.b16 %v3983
    %v4016 = vunpack.c.l.b16 %v3984
    %v4017 = vunpack.c.l.b16 %v3985
    %v4018 = vpack.c.b16 %v4015, %v4014
    %v4019 = vpack.c.b16 %v4017, %v4016
    %v4021 = vsel %vm280, %v4018, 0
    %v4024 = vsel %vm280, %v4019, 0
    %4026 = vmatpush.bf16.msra.mxu0 0
    %4027 = vmatpush.bf16.msra.mxu0 0
    %4028 = vmatpush.bf16.msra.mxu0 0
    %4029 = vmatpush.bf16.msra.mxu0 0
    %4030 = vmatpush.bf16.msra.mxu0 0
    %4031 = vmatpush.bf16.msra.mxu0 0
    %4032 = vmatpush.bf16.msra.mxu0 %v3956
    %4033 = vmatpush.bf16.msra.mxu0 %v3954
    %4034 = vmatmul.bf16.gmra.mxu0 %v4021
    %v4035 = vpop.f32.mrf.mxu0
    %v4036 = vadd.f32 %v3993, %v4035
    %v4037 = vpop.f32.mrf.mxu0
    %v4038 = vadd.f32 %v3998, %v4037
    %4039 = vmatmul.bf16.gmra.mxu0 %v4024
    %v4040 = vpop.f32.mrf.mxu0
    %v4041 = vadd.f32 %v4003, %v4040
    %v4042 = vpop.f32.mrf.mxu0
    %v4043 = vadd.f32 %v4008, %v4042
    %4044 = vdwg.mxu0
    %4045 = vmatpush.bf16.msra.mxu0 0
    %4046 = vmatpush.bf16.msra.mxu0 0
    %4047 = vmatpush.bf16.msra.mxu0 0
    %4048 = vmatpush.bf16.msra.mxu0 0
    %4049 = vmatpush.bf16.msra.mxu0 0
    %4050 = vmatpush.bf16.msra.mxu0 0
    %4051 = vmatpush.bf16.msra.mxu0 %v3957
    %4052 = vmatpush.bf16.msra.mxu0 %v3955
    %4053 = vmatmul.bf16.gmra.mxu0 %v4021
    %v4054 = vpop.f32.mrf.mxu0
    %v4055 = vadd.f32 %v3993, %v4054
    %v4056 = vpop.f32.mrf.mxu0
    %v4057 = vadd.f32 %v3998, %v4056
    %4058 = vmatmul.bf16.gmra.mxu0 %v4024
    %v4059 = vpop.f32.mrf.mxu0
    %v4060 = vadd.f32 %v4003, %v4059
    %v4061 = vpop.f32.mrf.mxu0
    %v4062 = vadd.f32 %v4008, %v4061
    %4063 = vdwg.mxu0
    %4064 = vmatpush.bf16.msra.mxu0 0
    %4065 = vmatpush.bf16.msra.mxu0 0
    %4066 = vmatpush.bf16.msra.mxu0 0
    %4067 = vmatpush.bf16.msra.mxu0 0
    %4068 = vmatpush.bf16.msra.mxu0 0
    %4069 = vmatpush.bf16.msra.mxu0 0
    %4070 = vmatpush.bf16.msra.mxu0 %v3980
    %4071 = vmatpush.bf16.msra.mxu0 %v3978
    %4072 = vmatmul.bf16.gmra.mxu0 %v4021
    %v4073 = vpop.f32.mrf.mxu0
    %v4074 = vadd.f32 %v3993, %v4073
    %v4075 = vpop.f32.mrf.mxu0
    %v4076 = vadd.f32 %v3998, %v4075
    %4077 = vmatmul.bf16.gmra.mxu0 %v4024
    %v4078 = vpop.f32.mrf.mxu0
    %v4079 = vadd.f32 %v4003, %v4078
    %v4080 = vpop.f32.mrf.mxu0
    %v4081 = vadd.f32 %v4008, %v4080
    %4082 = vdwg.mxu0
    %4083 = vmatpush.bf16.msra.mxu0 0
    %4084 = vmatpush.bf16.msra.mxu0 0
    %4085 = vmatpush.bf16.msra.mxu0 0
    %4086 = vmatpush.bf16.msra.mxu0 0
    %4087 = vmatpush.bf16.msra.mxu0 0
    %4088 = vmatpush.bf16.msra.mxu0 0
    %4089 = vmatpush.bf16.msra.mxu0 %v3981
    %4090 = vmatpush.bf16.msra.mxu0 %v3979
    %4091 = vmatmul.bf16.gmra.mxu0 %v4021
    %v4092 = vpop.f32.mrf.mxu0
    %v4093 = vadd.f32 %v3993, %v4092
    %v4094 = vpop.f32.mrf.mxu0
    %v4095 = vadd.f32 %v3998, %v4094
    %4096 = vmatmul.bf16.gmra.mxu0 %v4024
    %v4097 = vpop.f32.mrf.mxu0
    %v4098 = vadd.f32 %v4003, %v4097
    %v4099 = vpop.f32.mrf.mxu0
    %v4100 = vadd.f32 %v4008, %v4099
    %4101 = vdwg.mxu0
    %v4102 = vpack.c.bf16 %v4038, %v4036
    %v4103 = vpack.c.bf16 %v4057, %v4055
    %v4104 = vpack.c.bf16 %v4043, %v4041
    %v4105 = vpack.c.bf16 %v4062, %v4060
    %v4106 = vunpack.c.l.bf16 %v4102
    %v4107 = vunpack.c.l.bf16 %v4103
    %v4108 = vunpack.c.h.bf16 %v4102
    %v4109 = vunpack.c.h.bf16 %v4103
    %v4110 = vunpack.c.l.bf16 %v4104
    %v4111 = vunpack.c.l.bf16 %v4105
    %v4112 = vunpack.c.h.bf16 %v4104
    %v4113 = vunpack.c.h.bf16 %v4105
    %v4114 = vtanh.pop %v4106
    %v4115 = vtanh.pop %v4107
    %v4116 = vtanh.pop %v4108
    %v4117 = vtanh.pop %v4109
    %v4118 = vtanh.pop %v4110
    %v4119 = vtanh.pop %v4111
    %v4120 = vtanh.pop %v4112
    %v4121 = vtanh.pop %v4113
    %v4122 = vpack.c.bf16 %v4116, %v4114
    %v4123 = vpack.c.bf16 %v4117, %v4115
    %v4124 = vpack.c.bf16 %v4120, %v4118
    %v4125 = vpack.c.bf16 %v4121, %v4119
    %v4126 = vpack.c.bf16 %v4076, %v4074
    %v4127 = vpack.c.bf16 %v4095, %v4093
    %v4128 = vpack.c.bf16 %v4081, %v4079
    %v4129 = vpack.c.bf16 %v4100, %v4098
    %v4130 = vunpack.c.l.bf16 %v4126
    %v4131 = vunpack.c.l.bf16 %v4127
    %v4132 = vunpack.c.h.bf16 %v4126
    %v4133 = vunpack.c.h.bf16 %v4127
    %v4134 = vunpack.c.l.bf16 %v4128
    %v4135 = vunpack.c.l.bf16 %v4129
    %v4136 = vunpack.c.h.bf16 %v4128
    %v4137 = vunpack.c.h.bf16 %v4129
    %v4138 = vtanh.pop %v4130
    %v4139 = vtanh.pop %v4131
    %v4140 = vtanh.pop %v4132
    %v4141 = vtanh.pop %v4133
    %v4142 = vtanh.pop %v4134
    %v4143 = vtanh.pop %v4135
    %v4144 = vtanh.pop %v4136
    %v4145 = vtanh.pop %v4137
    %v4146 = vpack.c.bf16 %v4140, %v4138
    %v4147 = vpack.c.bf16 %v4141, %v4139
    %v4148 = vpack.c.bf16 %v4144, %v4142
    %v4149 = vpack.c.bf16 %v4145, %v4143
    %v4150 = vld [vmem:[%s1261] sm:$0xf]
    %v4151 = vld [vmem:[%s1261 + $0x4] sm:$0xf]
    %v4152 = vld [vmem:[%s1261 + $0x8] sm:$0xf]
    %v4153 = vld [vmem:[%s1261 + $0xc] sm:$0xf]
    %v4154 = vld [vmem:[%s1266] sm:$0xff]
    %v4155 = vld [vmem:[%s1266 + $0x8] sm:$0xff]
    %v4156 = vld [vmem:[%s1266 + $0x10] sm:$0xff]
    %v4157 = vld [vmem:[%s1266 + $0x18] sm:$0xff]
    %4159 = vset.pattern.permute.xlu0 0
    %4160 = vperm.xlu0 %4159, %v4154
    %v4161 = vpop.permute.xlu0 %4160
    %4164 = vset.pattern.permute.xlu0 0
    %4165 = vperm.xlu0 %4164, %v4155
    %v4166 = vpop.permute.xlu0 %4165
    %4169 = vset.pattern.permute.xlu0 0
    %4170 = vperm.xlu0 %4169, %v4156
    %v4171 = vpop.permute.xlu0 %4170
    %4174 = vset.pattern.permute.xlu0 0
    %4175 = vperm.xlu0 %4174, %v4157
    %v4176 = vpop.permute.xlu0 %4175
    %v4182 = vunpack.c.l.b16 %v4150
    %v4183 = vunpack.c.l.b16 %v4151
    %v4184 = vunpack.c.l.b16 %v4152
    %v4185 = vunpack.c.l.b16 %v4153
    %v4186 = vpack.c.b16 %v4183, %v4182
    %v4187 = vpack.c.b16 %v4185, %v4184
    %v4189 = vsel %vm280, %v4186, 0
    %v4192 = vsel %vm280, %v4187, 0
    %4194 = vmatpush.bf16.msra.mxu0 0
    %4195 = vmatpush.bf16.msra.mxu0 0
    %4196 = vmatpush.bf16.msra.mxu0 0
    %4197 = vmatpush.bf16.msra.mxu0 0
    %4198 = vmatpush.bf16.msra.mxu0 0
    %4199 = vmatpush.bf16.msra.mxu0 0
    %4200 = vmatpush.bf16.msra.mxu0 %v4124
    %4201 = vmatpush.bf16.msra.mxu0 %v4122
    %4202 = vmatmul.bf16.gmra.mxu0 %v4189
    %v4203 = vpop.f32.mrf.mxu0
    %v4204 = vadd.f32 %v4161, %v4203
    %v4205 = vpop.f32.mrf.mxu0
    %v4206 = vadd.f32 %v4166, %v4205
    %4207 = vmatmul.bf16.gmra.mxu0 %v4192
    %v4208 = vpop.f32.mrf.mxu0
    %v4209 = vadd.f32 %v4171, %v4208
    %v4210 = vpop.f32.mrf.mxu0
    %v4211 = vadd.f32 %v4176, %v4210
    %4212 = vdwg.mxu0
    %4213 = vmatpush.bf16.msra.mxu0 0
    %4214 = vmatpush.bf16.msra.mxu0 0
    %4215 = vmatpush.bf16.msra.mxu0 0
    %4216 = vmatpush.bf16.msra.mxu0 0
    %4217 = vmatpush.bf16.msra.mxu0 0
    %4218 = vmatpush.bf16.msra.mxu0 0
    %4219 = vmatpush.bf16.msra.mxu0 %v4125
    %4220 = vmatpush.bf16.msra.mxu0 %v4123
    %4221 = vmatmul.bf16.gmra.mxu0 %v4189
    %v4222 = vpop.f32.mrf.mxu0
    %v4223 = vadd.f32 %v4161, %v4222
    %v4224 = vpop.f32.mrf.mxu0
    %v4225 = vadd.f32 %v4166, %v4224
    %4226 = vmatmul.bf16.gmra.mxu0 %v4192
    %v4227 = vpop.f32.mrf.mxu0
    %v4228 = vadd.f32 %v4171, %v4227
    %v4229 = vpop.f32.mrf.mxu0
    %v4230 = vadd.f32 %v4176, %v4229
    %4231 = vdwg.mxu0
    %4232 = vmatpush.bf16.msra.mxu0 0
    %4233 = vmatpush.bf16.msra.mxu0 0
    %4234 = vmatpush.bf16.msra.mxu0 0
    %4235 = vmatpush.bf16.msra.mxu0 0
    %4236 = vmatpush.bf16.msra.mxu0 0
    %4237 = vmatpush.bf16.msra.mxu0 0
    %4238 = vmatpush.bf16.msra.mxu0 %v4148
    %4239 = vmatpush.bf16.msra.mxu0 %v4146
    %4240 = vmatmul.bf16.gmra.mxu0 %v4189
    %v4241 = vpop.f32.mrf.mxu0
    %v4242 = vadd.f32 %v4161, %v4241
    %v4243 = vpop.f32.mrf.mxu0
    %v4244 = vadd.f32 %v4166, %v4243
    %4245 = vmatmul.bf16.gmra.mxu0 %v4192
    %v4246 = vpop.f32.mrf.mxu0
    %v4247 = vadd.f32 %v4171, %v4246
    %v4248 = vpop.f32.mrf.mxu0
    %v4249 = vadd.f32 %v4176, %v4248
    %4250 = vdwg.mxu0
    %4251 = vmatpush.bf16.msra.mxu0 0
    %4252 = vmatpush.bf16.msra.mxu0 0
    %4253 = vmatpush.bf16.msra.mxu0 0
    %4254 = vmatpush.bf16.msra.mxu0 0
    %4255 = vmatpush.bf16.msra.mxu0 0
    %4256 = vmatpush.bf16.msra.mxu0 0
    %4257 = vmatpush.bf16.msra.mxu0 %v4149
    %4258 = vmatpush.bf16.msra.mxu0 %v4147
    %4259 = vmatmul.bf16.gmra.mxu0 %v4189
    %v4260 = vpop.f32.mrf.mxu0
    %v4261 = vadd.f32 %v4161, %v4260
    %v4262 = vpop.f32.mrf.mxu0
    %v4263 = vadd.f32 %v4166, %v4262
    %4264 = vmatmul.bf16.gmra.mxu0 %v4192
    %v4265 = vpop.f32.mrf.mxu0
    %v4266 = vadd.f32 %v4171, %v4265
    %v4267 = vpop.f32.mrf.mxu0
    %v4268 = vadd.f32 %v4176, %v4267
    %4269 = vdwg.mxu0
    %v4270 = vpack.c.bf16 %v4223, %v4204
    %v4271 = vpack.c.bf16 %v4225, %v4206
    %v4272 = vpack.c.bf16 %v4228, %v4209
    %v4273 = vpack.c.bf16 %v4230, %v4211
    %v4274 = vunpack.c.l.bf16 %v4270
    %v4275 = vunpack.c.h.bf16 %v4270
    %v4276 = vunpack.c.l.bf16 %v4271
    %v4277 = vunpack.c.h.bf16 %v4271
    %v4278 = vunpack.c.l.bf16 %v4272
    %v4279 = vunpack.c.h.bf16 %v4272
    %v4280 = vunpack.c.l.bf16 %v4273
    %v4281 = vunpack.c.h.bf16 %v4273
    %v4282 = vtanh.pop %v4274
    %v4283 = vtanh.pop %v4275
    %v4284 = vtanh.pop %v4276
    %v4285 = vtanh.pop %v4277
    %v4286 = vtanh.pop %v4278
    %v4287 = vtanh.pop %v4279
    %v4288 = vtanh.pop %v4280
    %v4289 = vtanh.pop %v4281
    %v4290 = vpack.c.bf16 %v4283, %v4282
    %v4291 = vpack.c.bf16 %v4285, %v4284
    %v4292 = vpack.c.bf16 %v4287, %v4286
    %v4293 = vpack.c.bf16 %v4289, %v4288
    %v4294 = vpack.c.bf16 %v4261, %v4242
    %v4295 = vpack.c.bf16 %v4263, %v4244
    %v4296 = vpack.c.bf16 %v4266, %v4247
    %v4297 = vpack.c.bf16 %v4268, %v4249
    %v4298 = vunpack.c.l.bf16 %v4294
    %v4299 = vunpack.c.h.bf16 %v4294
    %v4300 = vunpack.c.l.bf16 %v4295
    %v4301 = vunpack.c.h.bf16 %v4295
    %v4302 = vunpack.c.l.bf16 %v4296
    %v4303 = vunpack.c.h.bf16 %v4296
    %v4304 = vunpack.c.l.bf16 %v4297
    %v4305 = vunpack.c.h.bf16 %v4297
    %v4306 = vtanh.pop %v4298
    %v4307 = vtanh.pop %v4299
    %v4308 = vtanh.pop %v4300
    %v4309 = vtanh.pop %v4301
    %v4310 = vtanh.pop %v4302
    %v4311 = vtanh.pop %v4303
    %v4312 = vtanh.pop %v4304
    %v4313 = vtanh.pop %v4305
    %v4314 = vpack.c.bf16 %v4307, %v4306
    %v4315 = vpack.c.bf16 %v4309, %v4308
    %v4316 = vpack.c.bf16 %v4311, %v4310
    %v4317 = vpack.c.bf16 %v4313, %v4312
    %v4318 = vunpack.c.l.bf16 %v4290
    %v4319 = vunpack.c.h.bf16 %v4290
    %v4320 = vunpack.c.l.bf16 %v4291
    %v4321 = vunpack.c.h.bf16 %v4291
    %v4322 = vunpack.c.l.bf16 %v4292
    %v4323 = vunpack.c.h.bf16 %v4292
    %v4324 = vunpack.c.l.bf16 %v4293
    %v4325 = vunpack.c.h.bf16 %v4293
    %v4326 = vmul.f32 %v1442, %v4318
    %v4327 = vmul.f32 %v1442, %v4319
    %v4328 = vmul.f32 %v1447, %v4320
    %v4329 = vmul.f32 %v1447, %v4321
    %v4330 = vmul.f32 %v1452, %v4322
    %v4331 = vmul.f32 %v1452, %v4323
    %v4332 = vmul.f32 %v1457, %v4324
    %v4333 = vmul.f32 %v1457, %v4325
    %v4334 = vadd.f32 %v4326, %v4328
    %v4335 = vadd.f32 %v4334, %v4330
    %v4336 = vadd.f32 %v4335, %v4332
    %v4337 = vrot.slane %v4336, 4
    %v4338 = vadd.f32 %v4336, %v4337
    %v4339 = vrot.slane %v4338, 2
    %v4340 = vadd.f32 %v4338, %v4339
    %v4341 = vrot.slane %v4340, 1
    %v4342 = vadd.f32 %v4340, %v4341
    %v4343 = vadd.f32 %v4327, %v4329
    %v4344 = vadd.f32 %v4343, %v4331
    %v4345 = vadd.f32 %v4344, %v4333
    %v4346 = vrot.slane %v4345, 4
    %v4347 = vadd.f32 %v4345, %v4346
    %v4348 = vrot.slane %v4347, 2
    %v4349 = vadd.f32 %v4347, %v4348
    %v4350 = vrot.slane %v4349, 1
    %v4351 = vadd.f32 %v4349, %v4350
    %v4352 = vadd.f32 %v4342, %v1490
    %v4353 = vadd.f32 %v4351, %v1490
    %v4354 = vunpack.c.l.bf16 %v4314
    %v4355 = vunpack.c.h.bf16 %v4314
    %v4356 = vunpack.c.l.bf16 %v4315
    %v4357 = vunpack.c.h.bf16 %v4315
    %v4358 = vunpack.c.l.bf16 %v4316
    %v4359 = vunpack.c.h.bf16 %v4316
    %v4360 = vunpack.c.l.bf16 %v4317
    %v4361 = vunpack.c.h.bf16 %v4317
    %v4362 = vmul.f32 %v1442, %v4354
    %v4363 = vmul.f32 %v1442, %v4355
    %v4364 = vmul.f32 %v1447, %v4356
    %v4365 = vmul.f32 %v1447, %v4357
    %v4366 = vmul.f32 %v1452, %v4358
    %v4367 = vmul.f32 %v1452, %v4359
    %v4368 = vmul.f32 %v1457, %v4360
    %v4369 = vmul.f32 %v1457, %v4361
    %v4370 = vadd.f32 %v4362, %v4364
    %v4371 = vadd.f32 %v4370, %v4366
    %v4372 = vadd.f32 %v4371, %v4368
    %v4373 = vrot.slane %v4372, 4
    %v4374 = vadd.f32 %v4372, %v4373
    %v4375 = vrot.slane %v4374, 2
    %v4376 = vadd.f32 %v4374, %v4375
    %v4377 = vrot.slane %v4376, 1
    %v4378 = vadd.f32 %v4376, %v4377
    %v4379 = vadd.f32 %v4363, %v4365
    %v4380 = vadd.f32 %v4379, %v4367
    %v4381 = vadd.f32 %v4380, %v4369
    %v4382 = vrot.slane %v4381, 4
    %v4383 = vadd.f32 %v4381, %v4382
    %v4384 = vrot.slane %v4383, 2
    %v4385 = vadd.f32 %v4383, %v4384
    %v4386 = vrot.slane %v4385, 1
    %v4387 = vadd.f32 %v4385, %v4386
    %v4388 = vadd.f32 %v4378, %v1490
    %v4389 = vadd.f32 %v4387, %v1490
    %v4392 = vrot.slane %v4353, 7
    %v4393 = vsel %vm1532, %v4352, %v4392
    %4395 = vst.msk [vmem:[#allocation3 + $0x8] sm:$0x3] %vm1538, %v4393
    %v4398 = vrot.slane %v4389, 7
    %v4399 = vsel %vm1532, %v4388, %v4398
    %4401 = vst.msk [vmem:[#allocation3 + $0xa] sm:$0x3] %vm1538, %v4399
    %v4402 = vld [vmem:[%s0 + $0x60] sm:$0xff]
    %v4403 = vld [vmem:[%s0 + $0x68] sm:$0xff]
    %v4404 = vld [vmem:[%s0 + $0x70] sm:$0xff]
    %v4405 = vld [vmem:[%s0 + $0x78] sm:$0xff]
    %4406 = vmatpush.msra.mxu0 0.0
    %4407 = vmatpush.msra.mxu0 0.0
    %4408 = vmatpush.msra.mxu0 0.0
    %4409 = vmatpush.msra.mxu0 0.0
    %4410 = vmatpush.msra.mxu0 0.0
    %4411 = vmatpush.msra.mxu0 0.0
    %4412 = vmatpush.msra.mxu0 0.0
    %4413 = vmatpush.msra.mxu0 0.0
    %4414 = vmatpush.msra.mxu0 0.0
    %4415 = vmatpush.msra.mxu0 0.0
    %4416 = vmatpush.msra.mxu0 0.0
    %4417 = vmatpush.msra.mxu0 0.0
    %4418 = vmatpush.msra.mxu0 0.0
    %4419 = vmatpush.msra.mxu0 0.0
    %4420 = vmatpush.msra.mxu0 0.0
    %4421 = vmatpush.msra.mxu0 %v4402
    %4422 = vmatmul.f32.gmra.mxu0 %v66
    %v4423 = vpop.f32.mrf.mxu0
    %v4424 = vadd.f32 %v47, %v4423
    %4425 = vmatmul.f32.gmra.mxu0 %v69
    %v4426 = vpop.f32.mrf.mxu0
    %v4427 = vadd.f32 %v52, %v4426
    %4428 = vmatmul.f32.gmra.mxu0 %v72
    %v4429 = vpop.f32.mrf.mxu0
    %v4430 = vadd.f32 %v57, %v4429
    %4431 = vmatmul.f32.gmra.mxu0 %v75
    %v4432 = vpop.f32.mrf.mxu0
    %v4433 = vadd.f32 %v62, %v4432
    %4434 = vdwg.mxu0
    %4435 = vmatpush.msra.mxu0 0.0
    %4436 = vmatpush.msra.mxu0 0.0
    %4437 = vmatpush.msra.mxu0 0.0
    %4438 = vmatpush.msra.mxu0 0.0
    %4439 = vmatpush.msra.mxu0 0.0
    %4440 = vmatpush.msra.mxu0 0.0
    %4441 = vmatpush.msra.mxu0 0.0
    %4442 = vmatpush.msra.mxu0 0.0
    %4443 = vmatpush.msra.mxu0 0.0
    %4444 = vmatpush.msra.mxu0 0.0
    %4445 = vmatpush.msra.mxu0 0.0
    %4446 = vmatpush.msra.mxu0 0.0
    %4447 = vmatpush.msra.mxu0 0.0
    %4448 = vmatpush.msra.mxu0 0.0
    %4449 = vmatpush.msra.mxu0 0.0
    %4450 = vmatpush.msra.mxu0 %v4403
    %4451 = vmatmul.f32.gmra.mxu0 %v66
    %v4452 = vpop.f32.mrf.mxu0
    %v4453 = vadd.f32 %v47, %v4452
    %4454 = vmatmul.f32.gmra.mxu0 %v69
    %v4455 = vpop.f32.mrf.mxu0
    %v4456 = vadd.f32 %v52, %v4455
    %4457 = vmatmul.f32.gmra.mxu0 %v72
    %v4458 = vpop.f32.mrf.mxu0
    %v4459 = vadd.f32 %v57, %v4458
    %4460 = vmatmul.f32.gmra.mxu0 %v75
    %v4461 = vpop.f32.mrf.mxu0
    %v4462 = vadd.f32 %v62, %v4461
    %4463 = vdwg.mxu0
    %4464 = vmatpush.msra.mxu0 0.0
    %4465 = vmatpush.msra.mxu0 0.0
    %4466 = vmatpush.msra.mxu0 0.0
    %4467 = vmatpush.msra.mxu0 0.0
    %4468 = vmatpush.msra.mxu0 0.0
    %4469 = vmatpush.msra.mxu0 0.0
    %4470 = vmatpush.msra.mxu0 0.0
    %4471 = vmatpush.msra.mxu0 0.0
    %4472 = vmatpush.msra.mxu0 0.0
    %4473 = vmatpush.msra.mxu0 0.0
    %4474 = vmatpush.msra.mxu0 0.0
    %4475 = vmatpush.msra.mxu0 0.0
    %4476 = vmatpush.msra.mxu0 0.0
    %4477 = vmatpush.msra.mxu0 0.0
    %4478 = vmatpush.msra.mxu0 0.0
    %4479 = vmatpush.msra.mxu0 %v4404
    %4480 = vmatmul.f32.gmra.mxu0 %v66
    %v4481 = vpop.f32.mrf.mxu0
    %v4482 = vadd.f32 %v47, %v4481
    %4483 = vmatmul.f32.gmra.mxu0 %v69
    %v4484 = vpop.f32.mrf.mxu0
    %v4485 = vadd.f32 %v52, %v4484
    %4486 = vmatmul.f32.gmra.mxu0 %v72
    %v4487 = vpop.f32.mrf.mxu0
    %v4488 = vadd.f32 %v57, %v4487
    %4489 = vmatmul.f32.gmra.mxu0 %v75
    %v4490 = vpop.f32.mrf.mxu0
    %v4491 = vadd.f32 %v62, %v4490
    %4492 = vdwg.mxu0
    %4493 = vmatpush.msra.mxu0 0.0
    %4494 = vmatpush.msra.mxu0 0.0
    %4495 = vmatpush.msra.mxu0 0.0
    %4496 = vmatpush.msra.mxu0 0.0
    %4497 = vmatpush.msra.mxu0 0.0
    %4498 = vmatpush.msra.mxu0 0.0
    %4499 = vmatpush.msra.mxu0 0.0
    %4500 = vmatpush.msra.mxu0 0.0
    %4501 = vmatpush.msra.mxu0 0.0
    %4502 = vmatpush.msra.mxu0 0.0
    %4503 = vmatpush.msra.mxu0 0.0
    %4504 = vmatpush.msra.mxu0 0.0
    %4505 = vmatpush.msra.mxu0 0.0
    %4506 = vmatpush.msra.mxu0 0.0
    %4507 = vmatpush.msra.mxu0 0.0
    %4508 = vmatpush.msra.mxu0 %v4405
    %4509 = vmatmul.f32.gmra.mxu0 %v66
    %v4510 = vpop.f32.mrf.mxu0
    %v4511 = vadd.f32 %v47, %v4510
    %4512 = vmatmul.f32.gmra.mxu0 %v69
    %v4513 = vpop.f32.mrf.mxu0
    %v4514 = vadd.f32 %v52, %v4513
    %4515 = vmatmul.f32.gmra.mxu0 %v72
    %v4516 = vpop.f32.mrf.mxu0
    %v4517 = vadd.f32 %v57, %v4516
    %4518 = vmatmul.f32.gmra.mxu0 %v75
    %v4519 = vpop.f32.mrf.mxu0
    %v4520 = vadd.f32 %v62, %v4519
    %4521 = vdwg.mxu0
    %v4522 = vpack.c.bf16 %v4427, %v4424
    %v4523 = vpack.c.bf16 %v4456, %v4453
    %v4524 = vpack.c.bf16 %v4433, %v4430
    %v4525 = vpack.c.bf16 %v4462, %v4459
    %v4526 = vunpack.c.l.bf16 %v4522
    %v4527 = vunpack.c.l.bf16 %v4523
    %v4528 = vunpack.c.h.bf16 %v4522
    %v4529 = vunpack.c.h.bf16 %v4523
    %v4530 = vunpack.c.l.bf16 %v4524
    %v4531 = vunpack.c.l.bf16 %v4525
    %v4532 = vunpack.c.h.bf16 %v4524
    %v4533 = vunpack.c.h.bf16 %v4525
    %v4534 = vtanh.pop %v4526
    %v4535 = vtanh.pop %v4527
    %v4536 = vtanh.pop %v4528
    %v4537 = vtanh.pop %v4529
    %v4538 = vtanh.pop %v4530
    %v4539 = vtanh.pop %v4531
    %v4540 = vtanh.pop %v4532
    %v4541 = vtanh.pop %v4533
    %v4542 = vpack.c.bf16 %v4536, %v4534
    %v4543 = vpack.c.bf16 %v4537, %v4535
    %v4544 = vpack.c.bf16 %v4540, %v4538
    %v4545 = vpack.c.bf16 %v4541, %v4539
    %v4546 = vpack.c.bf16 %v4485, %v4482
    %v4547 = vpack.c.bf16 %v4514, %v4511
    %v4548 = vpack.c.bf16 %v4491, %v4488
    %v4549 = vpack.c.bf16 %v4520, %v4517
    %v4550 = vunpack.c.l.bf16 %v4546
    %v4551 = vunpack.c.l.bf16 %v4547
    %v4552 = vunpack.c.h.bf16 %v4546
    %v4553 = vunpack.c.h.bf16 %v4547
    %v4554 = vunpack.c.l.bf16 %v4548
    %v4555 = vunpack.c.l.bf16 %v4549
    %v4556 = vunpack.c.h.bf16 %v4548
    %v4557 = vunpack.c.h.bf16 %v4549
    %v4558 = vtanh.pop %v4550
    %v4559 = vtanh.pop %v4551
    %v4560 = vtanh.pop %v4552
    %v4561 = vtanh.pop %v4553
    %v4562 = vtanh.pop %v4554
    %v4563 = vtanh.pop %v4555
    %v4564 = vtanh.pop %v4556
    %v4565 = vtanh.pop %v4557
    %v4566 = vpack.c.bf16 %v4560, %v4558
    %v4567 = vpack.c.bf16 %v4561, %v4559
    %v4568 = vpack.c.bf16 %v4564, %v4562
    %v4569 = vpack.c.bf16 %v4565, %v4563
    %v4570 = vld [vmem:[%s2] sm:$0xf]
    %v4571 = vld [vmem:[%s2 + $0x4] sm:$0xf]
    %v4572 = vld [vmem:[%s2 + $0x8] sm:$0xf]
    %v4573 = vld [vmem:[%s2 + $0xc] sm:$0xf]
    %v4574 = vld [vmem:[%s245] sm:$0xff]
    %v4575 = vld [vmem:[%s245 + $0x8] sm:$0xff]
    %v4576 = vld [vmem:[%s245 + $0x10] sm:$0xff]
    %v4577 = vld [vmem:[%s245 + $0x18] sm:$0xff]
    %4579 = vset.pattern.permute.xlu0 0
    %4580 = vperm.xlu0 %4579, %v4574
    %v4581 = vpop.permute.xlu0 %4580
    %4584 = vset.pattern.permute.xlu0 0
    %4585 = vperm.xlu0 %4584, %v4575
    %v4586 = vpop.permute.xlu0 %4585
    %4589 = vset.pattern.permute.xlu0 0
    %4590 = vperm.xlu0 %4589, %v4576
    %v4591 = vpop.permute.xlu0 %4590
    %4594 = vset.pattern.permute.xlu0 0
    %4595 = vperm.xlu0 %4594, %v4577
    %v4596 = vpop.permute.xlu0 %4595
    %v4602 = vunpack.c.l.b16 %v4570
    %v4603 = vunpack.c.l.b16 %v4571
    %v4604 = vunpack.c.l.b16 %v4572
    %v4605 = vunpack.c.l.b16 %v4573
    %v4606 = vpack.c.b16 %v4603, %v4602
    %v4607 = vpack.c.b16 %v4605, %v4604
    %v4609 = vsel %vm280, %v4606, 0
    %v4612 = vsel %vm280, %v4607, 0
    %4614 = vmatpush.bf16.msra.mxu0 0
    %4615 = vmatpush.bf16.msra.mxu0 0
    %4616 = vmatpush.bf16.msra.mxu0 0
    %4617 = vmatpush.bf16.msra.mxu0 0
    %4618 = vmatpush.bf16.msra.mxu0 0
    %4619 = vmatpush.bf16.msra.mxu0 0
    %4620 = vmatpush.bf16.msra.mxu0 %v4544
    %4621 = vmatpush.bf16.msra.mxu0 %v4542
    %4622 = vmatmul.bf16.gmra.mxu0 %v4609
    %v4623 = vpop.f32.mrf.mxu0
    %v4624 = vadd.f32 %v4581, %v4623
    %v4625 = vpop.f32.mrf.mxu0
    %v4626 = vadd.f32 %v4586, %v4625
    %4627 = vmatmul.bf16.gmra.mxu0 %v4612
    %v4628 = vpop.f32.mrf.mxu0
    %v4629 = vadd.f32 %v4591, %v4628
    %v4630 = vpop.f32.mrf.mxu0
    %v4631 = vadd.f32 %v4596, %v4630
    %4632 = vdwg.mxu0
    %4633 = vmatpush.bf16.msra.mxu0 0
    %4634 = vmatpush.bf16.msra.mxu0 0
    %4635 = vmatpush.bf16.msra.mxu0 0
    %4636 = vmatpush.bf16.msra.mxu0 0
    %4637 = vmatpush.bf16.msra.mxu0 0
    %4638 = vmatpush.bf16.msra.mxu0 0
    %4639 = vmatpush.bf16.msra.mxu0 %v4545
    %4640 = vmatpush.bf16.msra.mxu0 %v4543
    %4641 = vmatmul.bf16.gmra.mxu0 %v4609
    %v4642 = vpop.f32.mrf.mxu0
    %v4643 = vadd.f32 %v4581, %v4642
    %v4644 = vpop.f32.mrf.mxu0
    %v4645 = vadd.f32 %v4586, %v4644
    %4646 = vmatmul.bf16.gmra.mxu0 %v4612
    %v4647 = vpop.f32.mrf.mxu0
    %v4648 = vadd.f32 %v4591, %v4647
    %v4649 = vpop.f32.mrf.mxu0
    %v4650 = vadd.f32 %v4596, %v4649
    %4651 = vdwg.mxu0
    %4652 = vmatpush.bf16.msra.mxu0 0
    %4653 = vmatpush.bf16.msra.mxu0 0
    %4654 = vmatpush.bf16.msra.mxu0 0
    %4655 = vmatpush.bf16.msra.mxu0 0
    %4656 = vmatpush.bf16.msra.mxu0 0
    %4657 = vmatpush.bf16.msra.mxu0 0
    %4658 = vmatpush.bf16.msra.mxu0 %v4568
    %4659 = vmatpush.bf16.msra.mxu0 %v4566
    %4660 = vmatmul.bf16.gmra.mxu0 %v4609
    %v4661 = vpop.f32.mrf.mxu0
    %v4662 = vadd.f32 %v4581, %v4661
    %v4663 = vpop.f32.mrf.mxu0
    %v4664 = vadd.f32 %v4586, %v4663
    %4665 = vmatmul.bf16.gmra.mxu0 %v4612
    %v4666 = vpop.f32.mrf.mxu0
    %v4667 = vadd.f32 %v4591, %v4666
    %v4668 = vpop.f32.mrf.mxu0
    %v4669 = vadd.f32 %v4596, %v4668
    %4670 = vdwg.mxu0
    %4671 = vmatpush.bf16.msra.mxu0 0
    %4672 = vmatpush.bf16.msra.mxu0 0
    %4673 = vmatpush.bf16.msra.mxu0 0
    %4674 = vmatpush.bf16.msra.mxu0 0
    %4675 = vmatpush.bf16.msra.mxu0 0
    %4676 = vmatpush.bf16.msra.mxu0 0
    %4677 = vmatpush.bf16.msra.mxu0 %v4569
    %4678 = vmatpush.bf16.msra.mxu0 %v4567
    %4679 = vmatmul.bf16.gmra.mxu0 %v4609
    %v4680 = vpop.f32.mrf.mxu0
    %v4681 = vadd.f32 %v4581, %v4680
    %v4682 = vpop.f32.mrf.mxu0
    %v4683 = vadd.f32 %v4586, %v4682
    %4684 = vmatmul.bf16.gmra.mxu0 %v4612
    %v4685 = vpop.f32.mrf.mxu0
    %v4686 = vadd.f32 %v4591, %v4685
    %v4687 = vpop.f32.mrf.mxu0
    %v4688 = vadd.f32 %v4596, %v4687
    %4689 = vdwg.mxu0
    %v4690 = vpack.c.bf16 %v4626, %v4624
    %v4691 = vpack.c.bf16 %v4645, %v4643
    %v4692 = vpack.c.bf16 %v4631, %v4629
    %v4693 = vpack.c.bf16 %v4650, %v4648
    %v4694 = vunpack.c.l.bf16 %v4690
    %v4695 = vunpack.c.l.bf16 %v4691
    %v4696 = vunpack.c.h.bf16 %v4690
    %v4697 = vunpack.c.h.bf16 %v4691
    %v4698 = vunpack.c.l.bf16 %v4692
    %v4699 = vunpack.c.l.bf16 %v4693
    %v4700 = vunpack.c.h.bf16 %v4692
    %v4701 = vunpack.c.h.bf16 %v4693
    %v4702 = vtanh.pop %v4694
    %v4703 = vtanh.pop %v4695
    %v4704 = vtanh.pop %v4696
    %v4705 = vtanh.pop %v4697
    %v4706 = vtanh.pop %v4698
    %v4707 = vtanh.pop %v4699
    %v4708 = vtanh.pop %v4700
    %v4709 = vtanh.pop %v4701
    %v4710 = vpack.c.bf16 %v4704, %v4702
    %v4711 = vpack.c.bf16 %v4705, %v4703
    %v4712 = vpack.c.bf16 %v4708, %v4706
    %v4713 = vpack.c.bf16 %v4709, %v4707
    %v4714 = vpack.c.bf16 %v4664, %v4662
    %v4715 = vpack.c.bf16 %v4683, %v4681
    %v4716 = vpack.c.bf16 %v4669, %v4667
    %v4717 = vpack.c.bf16 %v4688, %v4686
    %v4718 = vunpack.c.l.bf16 %v4714
    %v4719 = vunpack.c.l.bf16 %v4715
    %v4720 = vunpack.c.h.bf16 %v4714
    %v4721 = vunpack.c.h.bf16 %v4715
    %v4722 = vunpack.c.l.bf16 %v4716
    %v4723 = vunpack.c.l.bf16 %v4717
    %v4724 = vunpack.c.h.bf16 %v4716
    %v4725 = vunpack.c.h.bf16 %v4717
    %v4726 = vtanh.pop %v4718
    %v4727 = vtanh.pop %v4719
    %v4728 = vtanh.pop %v4720
    %v4729 = vtanh.pop %v4721
    %v4730 = vtanh.pop %v4722
    %v4731 = vtanh.pop %v4723
    %v4732 = vtanh.pop %v4724
    %v4733 = vtanh.pop %v4725
    %v4734 = vpack.c.bf16 %v4728, %v4726
    %v4735 = vpack.c.bf16 %v4729, %v4727
    %v4736 = vpack.c.bf16 %v4732, %v4730
    %v4737 = vpack.c.bf16 %v4733, %v4731
    %v4738 = vld [vmem:[%s411] sm:$0xf]
    %v4739 = vld [vmem:[%s411 + $0x4] sm:$0xf]
    %v4740 = vld [vmem:[%s411 + $0x8] sm:$0xf]
    %v4741 = vld [vmem:[%s411 + $0xc] sm:$0xf]
    %v4742 = vld [vmem:[%s416] sm:$0xff]
    %v4743 = vld [vmem:[%s416 + $0x8] sm:$0xff]
    %v4744 = vld [vmem:[%s416 + $0x10] sm:$0xff]
    %v4745 = vld [vmem:[%s416 + $0x18] sm:$0xff]
    %4747 = vset.pattern.permute.xlu0 0
    %4748 = vperm.xlu0 %4747, %v4742
    %v4749 = vpop.permute.xlu0 %4748
    %4752 = vset.pattern.permute.xlu0 0
    %4753 = vperm.xlu0 %4752, %v4743
    %v4754 = vpop.permute.xlu0 %4753
    %4757 = vset.pattern.permute.xlu0 0
    %4758 = vperm.xlu0 %4757, %v4744
    %v4759 = vpop.permute.xlu0 %4758
    %4762 = vset.pattern.permute.xlu0 0
    %4763 = vperm.xlu0 %4762, %v4745
    %v4764 = vpop.permute.xlu0 %4763
    %v4770 = vunpack.c.l.b16 %v4738
    %v4771 = vunpack.c.l.b16 %v4739
    %v4772 = vunpack.c.l.b16 %v4740
    %v4773 = vunpack.c.l.b16 %v4741
    %v4774 = vpack.c.b16 %v4771, %v4770
    %v4775 = vpack.c.b16 %v4773, %v4772
    %v4777 = vsel %vm280, %v4774, 0
    %v4780 = vsel %vm280, %v4775, 0
    %4782 = vmatpush.bf16.msra.mxu0 0
    %4783 = vmatpush.bf16.msra.mxu0 0
    %4784 = vmatpush.bf16.msra.mxu0 0
    %4785 = vmatpush.bf16.msra.mxu0 0
    %4786 = vmatpush.bf16.msra.mxu0 0
    %4787 = vmatpush.bf16.msra.mxu0 0
    %4788 = vmatpush.bf16.msra.mxu0 %v4712
    %4789 = vmatpush.bf16.msra.mxu0 %v4710
    %4790 = vmatmul.bf16.gmra.mxu0 %v4777
    %v4791 = vpop.f32.mrf.mxu0
    %v4792 = vadd.f32 %v4749, %v4791
    %v4793 = vpop.f32.mrf.mxu0
    %v4794 = vadd.f32 %v4754, %v4793
    %4795 = vmatmul.bf16.gmra.mxu0 %v4780
    %v4796 = vpop.f32.mrf.mxu0
    %v4797 = vadd.f32 %v4759, %v4796
    %v4798 = vpop.f32.mrf.mxu0
    %v4799 = vadd.f32 %v4764, %v4798
    %4800 = vdwg.mxu0
    %4801 = vmatpush.bf16.msra.mxu0 0
    %4802 = vmatpush.bf16.msra.mxu0 0
    %4803 = vmatpush.bf16.msra.mxu0 0
    %4804 = vmatpush.bf16.msra.mxu0 0
    %4805 = vmatpush.bf16.msra.mxu0 0
    %4806 = vmatpush.bf16.msra.mxu0 0
    %4807 = vmatpush.bf16.msra.mxu0 %v4713
    %4808 = vmatpush.bf16.msra.mxu0 %v4711
    %4809 = vmatmul.bf16.gmra.mxu0 %v4777
    %v4810 = vpop.f32.mrf.mxu0
    %v4811 = vadd.f32 %v4749, %v4810
    %v4812 = vpop.f32.mrf.mxu0
    %v4813 = vadd.f32 %v4754, %v4812
    %4814 = vmatmul.bf16.gmra.mxu0 %v4780
    %v4815 = vpop.f32.mrf.mxu0
    %v4816 = vadd.f32 %v4759, %v4815
    %v4817 = vpop.f32.mrf.mxu0
    %v4818 = vadd.f32 %v4764, %v4817
    %4819 = vdwg.mxu0
    %4820 = vmatpush.bf16.msra.mxu0 0
    %4821 = vmatpush.bf16.msra.mxu0 0
    %4822 = vmatpush.bf16.msra.mxu0 0
    %4823 = vmatpush.bf16.msra.mxu0 0
    %4824 = vmatpush.bf16.msra.mxu0 0
    %4825 = vmatpush.bf16.msra.mxu0 0
    %4826 = vmatpush.bf16.msra.mxu0 %v4736
    %4827 = vmatpush.bf16.msra.mxu0 %v4734
    %4828 = vmatmul.bf16.gmra.mxu0 %v4777
    %v4829 = vpop.f32.mrf.mxu0
    %v4830 = vadd.f32 %v4749, %v4829
    %v4831 = vpop.f32.mrf.mxu0
    %v4832 = vadd.f32 %v4754, %v4831
    %4833 = vmatmul.bf16.gmra.mxu0 %v4780
    %v4834 = vpop.f32.mrf.mxu0
    %v4835 = vadd.f32 %v4759, %v4834
    %v4836 = vpop.f32.mrf.mxu0
    %v4837 = vadd.f32 %v4764, %v4836
    %4838 = vdwg.mxu0
    %4839 = vmatpush.bf16.msra.mxu0 0
    %4840 = vmatpush.bf16.msra.mxu0 0
    %4841 = vmatpush.bf16.msra.mxu0 0
    %4842 = vmatpush.bf16.msra.mxu0 0
    %4843 = vmatpush.bf16.msra.mxu0 0
    %4844 = vmatpush.bf16.msra.mxu0 0
    %4845 = vmatpush.bf16.msra.mxu0 %v4737
    %4846 = vmatpush.bf16.msra.mxu0 %v4735
    %4847 = vmatmul.bf16.gmra.mxu0 %v4777
    %v4848 = vpop.f32.mrf.mxu0
    %v4849 = vadd.f32 %v4749, %v4848
    %v4850 = vpop.f32.mrf.mxu0
    %v4851 = vadd.f32 %v4754, %v4850
    %4852 = vmatmul.bf16.gmra.mxu0 %v4780
    %v4853 = vpop.f32.mrf.mxu0
    %v4854 = vadd.f32 %v4759, %v4853
    %v4855 = vpop.f32.mrf.mxu0
    %v4856 = vadd.f32 %v4764, %v4855
    %4857 = vdwg.mxu0
    %v4858 = vpack.c.bf16 %v4794, %v4792
    %v4859 = vpack.c.bf16 %v4813, %v4811
    %v4860 = vpack.c.bf16 %v4799, %v4797
    %v4861 = vpack.c.bf16 %v4818, %v4816
    %v4862 = vunpack.c.l.bf16 %v4858
    %v4863 = vunpack.c.l.bf16 %v4859
    %v4864 = vunpack.c.h.bf16 %v4858
    %v4865 = vunpack.c.h.bf16 %v4859
    %v4866 = vunpack.c.l.bf16 %v4860
    %v4867 = vunpack.c.l.bf16 %v4861
    %v4868 = vunpack.c.h.bf16 %v4860
    %v4869 = vunpack.c.h.bf16 %v4861
    %v4870 = vtanh.pop %v4862
    %v4871 = vtanh.pop %v4863
    %v4872 = vtanh.pop %v4864
    %v4873 = vtanh.pop %v4865
    %v4874 = vtanh.pop %v4866
    %v4875 = vtanh.pop %v4867
    %v4876 = vtanh.pop %v4868
    %v4877 = vtanh.pop %v4869
    %v4878 = vpack.c.bf16 %v4872, %v4870
    %v4879 = vpack.c.bf16 %v4873, %v4871
    %v4880 = vpack.c.bf16 %v4876, %v4874
    %v4881 = vpack.c.bf16 %v4877, %v4875
    %v4882 = vpack.c.bf16 %v4832, %v4830
    %v4883 = vpack.c.bf16 %v4851, %v4849
    %v4884 = vpack.c.bf16 %v4837, %v4835
    %v4885 = vpack.c.bf16 %v4856, %v4854
    %v4886 = vunpack.c.l.bf16 %v4882
    %v4887 = vunpack.c.l.bf16 %v4883
    %v4888 = vunpack.c.h.bf16 %v4882
    %v4889 = vunpack.c.h.bf16 %v4883
    %v4890 = vunpack.c.l.bf16 %v4884
    %v4891 = vunpack.c.l.bf16 %v4885
    %v4892 = vunpack.c.h.bf16 %v4884
    %v4893 = vunpack.c.h.bf16 %v4885
    %v4894 = vtanh.pop %v4886
    %v4895 = vtanh.pop %v4887
    %v4896 = vtanh.pop %v4888
    %v4897 = vtanh.pop %v4889
    %v4898 = vtanh.pop %v4890
    %v4899 = vtanh.pop %v4891
    %v4900 = vtanh.pop %v4892
    %v4901 = vtanh.pop %v4893
    %v4902 = vpack.c.bf16 %v4896, %v4894
    %v4903 = vpack.c.bf16 %v4897, %v4895
    %v4904 = vpack.c.bf16 %v4900, %v4898
    %v4905 = vpack.c.bf16 %v4901, %v4899
    %v4906 = vld [vmem:[%s581] sm:$0xf]
    %v4907 = vld [vmem:[%s581 + $0x4] sm:$0xf]
    %v4908 = vld [vmem:[%s581 + $0x8] sm:$0xf]
    %v4909 = vld [vmem:[%s581 + $0xc] sm:$0xf]
    %v4910 = vld [vmem:[%s586] sm:$0xff]
    %v4911 = vld [vmem:[%s586 + $0x8] sm:$0xff]
    %v4912 = vld [vmem:[%s586 + $0x10] sm:$0xff]
    %v4913 = vld [vmem:[%s586 + $0x18] sm:$0xff]
    %4915 = vset.pattern.permute.xlu0 0
    %4916 = vperm.xlu0 %4915, %v4910
    %v4917 = vpop.permute.xlu0 %4916
    %4920 = vset.pattern.permute.xlu0 0
    %4921 = vperm.xlu0 %4920, %v4911
    %v4922 = vpop.permute.xlu0 %4921
    %4925 = vset.pattern.permute.xlu0 0
    %4926 = vperm.xlu0 %4925, %v4912
    %v4927 = vpop.permute.xlu0 %4926
    %4930 = vset.pattern.permute.xlu0 0
    %4931 = vperm.xlu0 %4930, %v4913
    %v4932 = vpop.permute.xlu0 %4931
    %v4938 = vunpack.c.l.b16 %v4906
    %v4939 = vunpack.c.l.b16 %v4907
    %v4940 = vunpack.c.l.b16 %v4908
    %v4941 = vunpack.c.l.b16 %v4909
    %v4942 = vpack.c.b16 %v4939, %v4938
    %v4943 = vpack.c.b16 %v4941, %v4940
    %v4945 = vsel %vm280, %v4942, 0
    %v4948 = vsel %vm280, %v4943, 0
    %4950 = vmatpush.bf16.msra.mxu0 0
    %4951 = vmatpush.bf16.msra.mxu0 0
    %4952 = vmatpush.bf16.msra.mxu0 0
    %4953 = vmatpush.bf16.msra.mxu0 0
    %4954 = vmatpush.bf16.msra.mxu0 0
    %4955 = vmatpush.bf16.msra.mxu0 0
    %4956 = vmatpush.bf16.msra.mxu0 %v4880
    %4957 = vmatpush.bf16.msra.mxu0 %v4878
    %4958 = vmatmul.bf16.gmra.mxu0 %v4945
    %v4959 = vpop.f32.mrf.mxu0
    %v4960 = vadd.f32 %v4917, %v4959
    %v4961 = vpop.f32.mrf.mxu0
    %v4962 = vadd.f32 %v4922, %v4961
    %4963 = vmatmul.bf16.gmra.mxu0 %v4948
    %v4964 = vpop.f32.mrf.mxu0
    %v4965 = vadd.f32 %v4927, %v4964
    %v4966 = vpop.f32.mrf.mxu0
    %v4967 = vadd.f32 %v4932, %v4966
    %4968 = vdwg.mxu0
    %4969 = vmatpush.bf16.msra.mxu0 0
    %4970 = vmatpush.bf16.msra.mxu0 0
    %4971 = vmatpush.bf16.msra.mxu0 0
    %4972 = vmatpush.bf16.msra.mxu0 0
    %4973 = vmatpush.bf16.msra.mxu0 0
    %4974 = vmatpush.bf16.msra.mxu0 0
    %4975 = vmatpush.bf16.msra.mxu0 %v4881
    %4976 = vmatpush.bf16.msra.mxu0 %v4879
    %4977 = vmatmul.bf16.gmra.mxu0 %v4945
    %v4978 = vpop.f32.mrf.mxu0
    %v4979 = vadd.f32 %v4917, %v4978
    %v4980 = vpop.f32.mrf.mxu0
    %v4981 = vadd.f32 %v4922, %v4980
    %4982 = vmatmul.bf16.gmra.mxu0 %v4948
    %v4983 = vpop.f32.mrf.mxu0
    %v4984 = vadd.f32 %v4927, %v4983
    %v4985 = vpop.f32.mrf.mxu0
    %v4986 = vadd.f32 %v4932, %v4985
    %4987 = vdwg.mxu0
    %4988 = vmatpush.bf16.msra.mxu0 0
    %4989 = vmatpush.bf16.msra.mxu0 0
    %4990 = vmatpush.bf16.msra.mxu0 0
    %4991 = vmatpush.bf16.msra.mxu0 0
    %4992 = vmatpush.bf16.msra.mxu0 0
    %4993 = vmatpush.bf16.msra.mxu0 0
    %4994 = vmatpush.bf16.msra.mxu0 %v4904
    %4995 = vmatpush.bf16.msra.mxu0 %v4902
    %4996 = vmatmul.bf16.gmra.mxu0 %v4945
    %v4997 = vpop.f32.mrf.mxu0
    %v4998 = vadd.f32 %v4917, %v4997
    %v4999 = vpop.f32.mrf.mxu0
    %v5000 = vadd.f32 %v4922, %v4999
    %5001 = vmatmul.bf16.gmra.mxu0 %v4948
    %v5002 = vpop.f32.mrf.mxu0
    %v5003 = vadd.f32 %v4927, %v5002
    %v5004 = vpop.f32.mrf.mxu0
    %v5005 = vadd.f32 %v4932, %v5004
    %5006 = vdwg.mxu0
    %5007 = vmatpush.bf16.msra.mxu0 0
    %5008 = vmatpush.bf16.msra.mxu0 0
    %5009 = vmatpush.bf16.msra.mxu0 0
    %5010 = vmatpush.bf16.msra.mxu0 0
    %5011 = vmatpush.bf16.msra.mxu0 0
    %5012 = vmatpush.bf16.msra.mxu0 0
    %5013 = vmatpush.bf16.msra.mxu0 %v4905
    %5014 = vmatpush.bf16.msra.mxu0 %v4903
    %5015 = vmatmul.bf16.gmra.mxu0 %v4945
    %v5016 = vpop.f32.mrf.mxu0
    %v5017 = vadd.f32 %v4917, %v5016
    %v5018 = vpop.f32.mrf.mxu0
    %v5019 = vadd.f32 %v4922, %v5018
    %5020 = vmatmul.bf16.gmra.mxu0 %v4948
    %v5021 = vpop.f32.mrf.mxu0
    %v5022 = vadd.f32 %v4927, %v5021
    %v5023 = vpop.f32.mrf.mxu0
    %v5024 = vadd.f32 %v4932, %v5023
    %5025 = vdwg.mxu0
    %v5026 = vpack.c.bf16 %v4962, %v4960
    %v5027 = vpack.c.bf16 %v4981, %v4979
    %v5028 = vpack.c.bf16 %v4967, %v4965
    %v5029 = vpack.c.bf16 %v4986, %v4984
    %v5030 = vunpack.c.l.bf16 %v5026
    %v5031 = vunpack.c.l.bf16 %v5027
    %v5032 = vunpack.c.h.bf16 %v5026
    %v5033 = vunpack.c.h.bf16 %v5027
    %v5034 = vunpack.c.l.bf16 %v5028
    %v5035 = vunpack.c.l.bf16 %v5029
    %v5036 = vunpack.c.h.bf16 %v5028
    %v5037 = vunpack.c.h.bf16 %v5029
    %v5038 = vtanh.pop %v5030
    %v5039 = vtanh.pop %v5031
    %v5040 = vtanh.pop %v5032
    %v5041 = vtanh.pop %v5033
    %v5042 = vtanh.pop %v5034
    %v5043 = vtanh.pop %v5035
    %v5044 = vtanh.pop %v5036
    %v5045 = vtanh.pop %v5037
    %v5046 = vpack.c.bf16 %v5040, %v5038
    %v5047 = vpack.c.bf16 %v5041, %v5039
    %v5048 = vpack.c.bf16 %v5044, %v5042
    %v5049 = vpack.c.bf16 %v5045, %v5043
    %v5050 = vpack.c.bf16 %v5000, %v4998
    %v5051 = vpack.c.bf16 %v5019, %v5017
    %v5052 = vpack.c.bf16 %v5005, %v5003
    %v5053 = vpack.c.bf16 %v5024, %v5022
    %v5054 = vunpack.c.l.bf16 %v5050
    %v5055 = vunpack.c.l.bf16 %v5051
    %v5056 = vunpack.c.h.bf16 %v5050
    %v5057 = vunpack.c.h.bf16 %v5051
    %v5058 = vunpack.c.l.bf16 %v5052
    %v5059 = vunpack.c.l.bf16 %v5053
    %v5060 = vunpack.c.h.bf16 %v5052
    %v5061 = vunpack.c.h.bf16 %v5053
    %v5062 = vtanh.pop %v5054
    %v5063 = vtanh.pop %v5055
    %v5064 = vtanh.pop %v5056
    %v5065 = vtanh.pop %v5057
    %v5066 = vtanh.pop %v5058
    %v5067 = vtanh.pop %v5059
    %v5068 = vtanh.pop %v5060
    %v5069 = vtanh.pop %v5061
    %v5070 = vpack.c.bf16 %v5064, %v5062
    %v5071 = vpack.c.bf16 %v5065, %v5063
    %v5072 = vpack.c.bf16 %v5068, %v5066
    %v5073 = vpack.c.bf16 %v5069, %v5067
    %v5074 = vld [vmem:[%s751] sm:$0xf]
    %v5075 = vld [vmem:[%s751 + $0x4] sm:$0xf]
    %v5076 = vld [vmem:[%s751 + $0x8] sm:$0xf]
    %v5077 = vld [vmem:[%s751 + $0xc] sm:$0xf]
    %v5078 = vld [vmem:[%s756] sm:$0xff]
    %v5079 = vld [vmem:[%s756 + $0x8] sm:$0xff]
    %v5080 = vld [vmem:[%s756 + $0x10] sm:$0xff]
    %v5081 = vld [vmem:[%s756 + $0x18] sm:$0xff]
    %5083 = vset.pattern.permute.xlu0 0
    %5084 = vperm.xlu0 %5083, %v5078
    %v5085 = vpop.permute.xlu0 %5084
    %5088 = vset.pattern.permute.xlu0 0
    %5089 = vperm.xlu0 %5088, %v5079
    %v5090 = vpop.permute.xlu0 %5089
    %5093 = vset.pattern.permute.xlu0 0
    %5094 = vperm.xlu0 %5093, %v5080
    %v5095 = vpop.permute.xlu0 %5094
    %5098 = vset.pattern.permute.xlu0 0
    %5099 = vperm.xlu0 %5098, %v5081
    %v5100 = vpop.permute.xlu0 %5099
    %v5106 = vunpack.c.l.b16 %v5074
    %v5107 = vunpack.c.l.b16 %v5075
    %v5108 = vunpack.c.l.b16 %v5076
    %v5109 = vunpack.c.l.b16 %v5077
    %v5110 = vpack.c.b16 %v5107, %v5106
    %v5111 = vpack.c.b16 %v5109, %v5108
    %v5113 = vsel %vm280, %v5110, 0
    %v5116 = vsel %vm280, %v5111, 0
    %5118 = vmatpush.bf16.msra.mxu0 0
    %5119 = vmatpush.bf16.msra.mxu0 0
    %5120 = vmatpush.bf16.msra.mxu0 0
    %5121 = vmatpush.bf16.msra.mxu0 0
    %5122 = vmatpush.bf16.msra.mxu0 0
    %5123 = vmatpush.bf16.msra.mxu0 0
    %5124 = vmatpush.bf16.msra.mxu0 %v5048
    %5125 = vmatpush.bf16.msra.mxu0 %v5046
    %5126 = vmatmul.bf16.gmra.mxu0 %v5113
    %v5127 = vpop.f32.mrf.mxu0
    %v5128 = vadd.f32 %v5085, %v5127
    %v5129 = vpop.f32.mrf.mxu0
    %v5130 = vadd.f32 %v5090, %v5129
    %5131 = vmatmul.bf16.gmra.mxu0 %v5116
    %v5132 = vpop.f32.mrf.mxu0
    %v5133 = vadd.f32 %v5095, %v5132
    %v5134 = vpop.f32.mrf.mxu0
    %v5135 = vadd.f32 %v5100, %v5134
    %5136 = vdwg.mxu0
    %5137 = vmatpush.bf16.msra.mxu0 0
    %5138 = vmatpush.bf16.msra.mxu0 0
    %5139 = vmatpush.bf16.msra.mxu0 0
    %5140 = vmatpush.bf16.msra.mxu0 0
    %5141 = vmatpush.bf16.msra.mxu0 0
    %5142 = vmatpush.bf16.msra.mxu0 0
    %5143 = vmatpush.bf16.msra.mxu0 %v5049
    %5144 = vmatpush.bf16.msra.mxu0 %v5047
    %5145 = vmatmul.bf16.gmra.mxu0 %v5113
    %v5146 = vpop.f32.mrf.mxu0
    %v5147 = vadd.f32 %v5085, %v5146
    %v5148 = vpop.f32.mrf.mxu0
    %v5149 = vadd.f32 %v5090, %v5148
    %5150 = vmatmul.bf16.gmra.mxu0 %v5116
    %v5151 = vpop.f32.mrf.mxu0
    %v5152 = vadd.f32 %v5095, %v5151
    %v5153 = vpop.f32.mrf.mxu0
    %v5154 = vadd.f32 %v5100, %v5153
    %5155 = vdwg.mxu0
    %5156 = vmatpush.bf16.msra.mxu0 0
    %5157 = vmatpush.bf16.msra.mxu0 0
    %5158 = vmatpush.bf16.msra.mxu0 0
    %5159 = vmatpush.bf16.msra.mxu0 0
    %5160 = vmatpush.bf16.msra.mxu0 0
    %5161 = vmatpush.bf16.msra.mxu0 0
    %5162 = vmatpush.bf16.msra.mxu0 %v5072
    %5163 = vmatpush.bf16.msra.mxu0 %v5070
    %5164 = vmatmul.bf16.gmra.mxu0 %v5113
    %v5165 = vpop.f32.mrf.mxu0
    %v5166 = vadd.f32 %v5085, %v5165
    %v5167 = vpop.f32.mrf.mxu0
    %v5168 = vadd.f32 %v5090, %v5167
    %5169 = vmatmul.bf16.gmra.mxu0 %v5116
    %v5170 = vpop.f32.mrf.mxu0
    %v5171 = vadd.f32 %v5095, %v5170
    %v5172 = vpop.f32.mrf.mxu0
    %v5173 = vadd.f32 %v5100, %v5172
    %5174 = vdwg.mxu0
    %5175 = vmatpush.bf16.msra.mxu0 0
    %5176 = vmatpush.bf16.msra.mxu0 0
    %5177 = vmatpush.bf16.msra.mxu0 0
    %5178 = vmatpush.bf16.msra.mxu0 0
    %5179 = vmatpush.bf16.msra.mxu0 0
    %5180 = vmatpush.bf16.msra.mxu0 0
    %5181 = vmatpush.bf16.msra.mxu0 %v5073
    %5182 = vmatpush.bf16.msra.mxu0 %v5071
    %5183 = vmatmul.bf16.gmra.mxu0 %v5113
    %v5184 = vpop.f32.mrf.mxu0
    %v5185 = vadd.f32 %v5085, %v5184
    %v5186 = vpop.f32.mrf.mxu0
    %v5187 = vadd.f32 %v5090, %v5186
    %5188 = vmatmul.bf16.gmra.mxu0 %v5116
    %v5189 = vpop.f32.mrf.mxu0
    %v5190 = vadd.f32 %v5095, %v5189
    %v5191 = vpop.f32.mrf.mxu0
    %v5192 = vadd.f32 %v5100, %v5191
    %5193 = vdwg.mxu0
    %v5194 = vpack.c.bf16 %v5130, %v5128
    %v5195 = vpack.c.bf16 %v5149, %v5147
    %v5196 = vpack.c.bf16 %v5135, %v5133
    %v5197 = vpack.c.bf16 %v5154, %v5152
    %v5198 = vunpack.c.l.bf16 %v5194
    %v5199 = vunpack.c.l.bf16 %v5195
    %v5200 = vunpack.c.h.bf16 %v5194
    %v5201 = vunpack.c.h.bf16 %v5195
    %v5202 = vunpack.c.l.bf16 %v5196
    %v5203 = vunpack.c.l.bf16 %v5197
    %v5204 = vunpack.c.h.bf16 %v5196
    %v5205 = vunpack.c.h.bf16 %v5197
    %v5206 = vtanh.pop %v5198
    %v5207 = vtanh.pop %v5199
    %v5208 = vtanh.pop %v5200
    %v5209 = vtanh.pop %v5201
    %v5210 = vtanh.pop %v5202
    %v5211 = vtanh.pop %v5203
    %v5212 = vtanh.pop %v5204
    %v5213 = vtanh.pop %v5205
    %v5214 = vpack.c.bf16 %v5208, %v5206
    %v5215 = vpack.c.bf16 %v5209, %v5207
    %v5216 = vpack.c.bf16 %v5212, %v5210
    %v5217 = vpack.c.bf16 %v5213, %v5211
    %v5218 = vpack.c.bf16 %v5168, %v5166
    %v5219 = vpack.c.bf16 %v5187, %v5185
    %v5220 = vpack.c.bf16 %v5173, %v5171
    %v5221 = vpack.c.bf16 %v5192, %v5190
    %v5222 = vunpack.c.l.bf16 %v5218
    %v5223 = vunpack.c.l.bf16 %v5219
    %v5224 = vunpack.c.h.bf16 %v5218
    %v5225 = vunpack.c.h.bf16 %v5219
    %v5226 = vunpack.c.l.bf16 %v5220
    %v5227 = vunpack.c.l.bf16 %v5221
    %v5228 = vunpack.c.h.bf16 %v5220
    %v5229 = vunpack.c.h.bf16 %v5221
    %v5230 = vtanh.pop %v5222
    %v5231 = vtanh.pop %v5223
    %v5232 = vtanh.pop %v5224
    %v5233 = vtanh.pop %v5225
    %v5234 = vtanh.pop %v5226
    %v5235 = vtanh.pop %v5227
    %v5236 = vtanh.pop %v5228
    %v5237 = vtanh.pop %v5229
    %v5238 = vpack.c.bf16 %v5232, %v5230
    %v5239 = vpack.c.bf16 %v5233, %v5231
    %v5240 = vpack.c.bf16 %v5236, %v5234
    %v5241 = vpack.c.bf16 %v5237, %v5235
    %v5242 = vld [vmem:[%s921] sm:$0xf]
    %v5243 = vld [vmem:[%s921 + $0x4] sm:$0xf]
    %v5244 = vld [vmem:[%s921 + $0x8] sm:$0xf]
    %v5245 = vld [vmem:[%s921 + $0xc] sm:$0xf]
    %v5246 = vld [vmem:[%s926] sm:$0xff]
    %v5247 = vld [vmem:[%s926 + $0x8] sm:$0xff]
    %v5248 = vld [vmem:[%s926 + $0x10] sm:$0xff]
    %v5249 = vld [vmem:[%s926 + $0x18] sm:$0xff]
    %5251 = vset.pattern.permute.xlu0 0
    %5252 = vperm.xlu0 %5251, %v5246
    %v5253 = vpop.permute.xlu0 %5252
    %5256 = vset.pattern.permute.xlu0 0
    %5257 = vperm.xlu0 %5256, %v5247
    %v5258 = vpop.permute.xlu0 %5257
    %5261 = vset.pattern.permute.xlu0 0
    %5262 = vperm.xlu0 %5261, %v5248
    %v5263 = vpop.permute.xlu0 %5262
    %5266 = vset.pattern.permute.xlu0 0
    %5267 = vperm.xlu0 %5266, %v5249
    %v5268 = vpop.permute.xlu0 %5267
    %v5274 = vunpack.c.l.b16 %v5242
    %v5275 = vunpack.c.l.b16 %v5243
    %v5276 = vunpack.c.l.b16 %v5244
    %v5277 = vunpack.c.l.b16 %v5245
    %v5278 = vpack.c.b16 %v5275, %v5274
    %v5279 = vpack.c.b16 %v5277, %v5276
    %v5281 = vsel %vm280, %v5278, 0
    %v5284 = vsel %vm280, %v5279, 0
    %5286 = vmatpush.bf16.msra.mxu0 0
    %5287 = vmatpush.bf16.msra.mxu0 0
    %5288 = vmatpush.bf16.msra.mxu0 0
    %5289 = vmatpush.bf16.msra.mxu0 0
    %5290 = vmatpush.bf16.msra.mxu0 0
    %5291 = vmatpush.bf16.msra.mxu0 0
    %5292 = vmatpush.bf16.msra.mxu0 %v5216
    %5293 = vmatpush.bf16.msra.mxu0 %v5214
    %5294 = vmatmul.bf16.gmra.mxu0 %v5281
    %v5295 = vpop.f32.mrf.mxu0
    %v5296 = vadd.f32 %v5253, %v5295
    %v5297 = vpop.f32.mrf.mxu0
    %v5298 = vadd.f32 %v5258, %v5297
    %5299 = vmatmul.bf16.gmra.mxu0 %v5284
    %v5300 = vpop.f32.mrf.mxu0
    %v5301 = vadd.f32 %v5263, %v5300
    %v5302 = vpop.f32.mrf.mxu0
    %v5303 = vadd.f32 %v5268, %v5302
    %5304 = vdwg.mxu0
    %5305 = vmatpush.bf16.msra.mxu0 0
    %5306 = vmatpush.bf16.msra.mxu0 0
    %5307 = vmatpush.bf16.msra.mxu0 0
    %5308 = vmatpush.bf16.msra.mxu0 0
    %5309 = vmatpush.bf16.msra.mxu0 0
    %5310 = vmatpush.bf16.msra.mxu0 0
    %5311 = vmatpush.bf16.msra.mxu0 %v5217
    %5312 = vmatpush.bf16.msra.mxu0 %v5215
    %5313 = vmatmul.bf16.gmra.mxu0 %v5281
    %v5314 = vpop.f32.mrf.mxu0
    %v5315 = vadd.f32 %v5253, %v5314
    %v5316 = vpop.f32.mrf.mxu0
    %v5317 = vadd.f32 %v5258, %v5316
    %5318 = vmatmul.bf16.gmra.mxu0 %v5284
    %v5319 = vpop.f32.mrf.mxu0
    %v5320 = vadd.f32 %v5263, %v5319
    %v5321 = vpop.f32.mrf.mxu0
    %v5322 = vadd.f32 %v5268, %v5321
    %5323 = vdwg.mxu0
    %5324 = vmatpush.bf16.msra.mxu0 0
    %5325 = vmatpush.bf16.msra.mxu0 0
    %5326 = vmatpush.bf16.msra.mxu0 0
    %5327 = vmatpush.bf16.msra.mxu0 0
    %5328 = vmatpush.bf16.msra.mxu0 0
    %5329 = vmatpush.bf16.msra.mxu0 0
    %5330 = vmatpush.bf16.msra.mxu0 %v5240
    %5331 = vmatpush.bf16.msra.mxu0 %v5238
    %5332 = vmatmul.bf16.gmra.mxu0 %v5281
    %v5333 = vpop.f32.mrf.mxu0
    %v5334 = vadd.f32 %v5253, %v5333
    %v5335 = vpop.f32.mrf.mxu0
    %v5336 = vadd.f32 %v5258, %v5335
    %5337 = vmatmul.bf16.gmra.mxu0 %v5284
    %v5338 = vpop.f32.mrf.mxu0
    %v5339 = vadd.f32 %v5263, %v5338
    %v5340 = vpop.f32.mrf.mxu0
    %v5341 = vadd.f32 %v5268, %v5340
    %5342 = vdwg.mxu0
    %5343 = vmatpush.bf16.msra.mxu0 0
    %5344 = vmatpush.bf16.msra.mxu0 0
    %5345 = vmatpush.bf16.msra.mxu0 0
    %5346 = vmatpush.bf16.msra.mxu0 0
    %5347 = vmatpush.bf16.msra.mxu0 0
    %5348 = vmatpush.bf16.msra.mxu0 0
    %5349 = vmatpush.bf16.msra.mxu0 %v5241
    %5350 = vmatpush.bf16.msra.mxu0 %v5239
    %5351 = vmatmul.bf16.gmra.mxu0 %v5281
    %v5352 = vpop.f32.mrf.mxu0
    %v5353 = vadd.f32 %v5253, %v5352
    %v5354 = vpop.f32.mrf.mxu0
    %v5355 = vadd.f32 %v5258, %v5354
    %5356 = vmatmul.bf16.gmra.mxu0 %v5284
    %v5357 = vpop.f32.mrf.mxu0
    %v5358 = vadd.f32 %v5263, %v5357
    %v5359 = vpop.f32.mrf.mxu0
    %v5360 = vadd.f32 %v5268, %v5359
    %5361 = vdwg.mxu0
    %v5362 = vpack.c.bf16 %v5298, %v5296
    %v5363 = vpack.c.bf16 %v5317, %v5315
    %v5364 = vpack.c.bf16 %v5303, %v5301
    %v5365 = vpack.c.bf16 %v5322, %v5320
    %v5366 = vunpack.c.l.bf16 %v5362
    %v5367 = vunpack.c.l.bf16 %v5363
    %v5368 = vunpack.c.h.bf16 %v5362
    %v5369 = vunpack.c.h.bf16 %v5363
    %v5370 = vunpack.c.l.bf16 %v5364
    %v5371 = vunpack.c.l.bf16 %v5365
    %v5372 = vunpack.c.h.bf16 %v5364
    %v5373 = vunpack.c.h.bf16 %v5365
    %v5374 = vtanh.pop %v5366
    %v5375 = vtanh.pop %v5367
    %v5376 = vtanh.pop %v5368
    %v5377 = vtanh.pop %v5369
    %v5378 = vtanh.pop %v5370
    %v5379 = vtanh.pop %v5371
    %v5380 = vtanh.pop %v5372
    %v5381 = vtanh.pop %v5373
    %v5382 = vpack.c.bf16 %v5376, %v5374
    %v5383 = vpack.c.bf16 %v5377, %v5375
    %v5384 = vpack.c.bf16 %v5380, %v5378
    %v5385 = vpack.c.bf16 %v5381, %v5379
    %v5386 = vpack.c.bf16 %v5336, %v5334
    %v5387 = vpack.c.bf16 %v5355, %v5353
    %v5388 = vpack.c.bf16 %v5341, %v5339
    %v5389 = vpack.c.bf16 %v5360, %v5358
    %v5390 = vunpack.c.l.bf16 %v5386
    %v5391 = vunpack.c.l.bf16 %v5387
    %v5392 = vunpack.c.h.bf16 %v5386
    %v5393 = vunpack.c.h.bf16 %v5387
    %v5394 = vunpack.c.l.bf16 %v5388
    %v5395 = vunpack.c.l.bf16 %v5389
    %v5396 = vunpack.c.h.bf16 %v5388
    %v5397 = vunpack.c.h.bf16 %v5389
    %v5398 = vtanh.pop %v5390
    %v5399 = vtanh.pop %v5391
    %v5400 = vtanh.pop %v5392
    %v5401 = vtanh.pop %v5393
    %v5402 = vtanh.pop %v5394
    %v5403 = vtanh.pop %v5395
    %v5404 = vtanh.pop %v5396
    %v5405 = vtanh.pop %v5397
    %v5406 = vpack.c.bf16 %v5400, %v5398
    %v5407 = vpack.c.bf16 %v5401, %v5399
    %v5408 = vpack.c.bf16 %v5404, %v5402
    %v5409 = vpack.c.bf16 %v5405, %v5403
    %v5410 = vld [vmem:[%s1091] sm:$0xf]
    %v5411 = vld [vmem:[%s1091 + $0x4] sm:$0xf]
    %v5412 = vld [vmem:[%s1091 + $0x8] sm:$0xf]
    %v5413 = vld [vmem:[%s1091 + $0xc] sm:$0xf]
    %v5414 = vld [vmem:[%s1096] sm:$0xff]
    %v5415 = vld [vmem:[%s1096 + $0x8] sm:$0xff]
    %v5416 = vld [vmem:[%s1096 + $0x10] sm:$0xff]
    %v5417 = vld [vmem:[%s1096 + $0x18] sm:$0xff]
    %5419 = vset.pattern.permute.xlu0 0
    %5420 = vperm.xlu0 %5419, %v5414
    %v5421 = vpop.permute.xlu0 %5420
    %5424 = vset.pattern.permute.xlu0 0
    %5425 = vperm.xlu0 %5424, %v5415
    %v5426 = vpop.permute.xlu0 %5425
    %5429 = vset.pattern.permute.xlu0 0
    %5430 = vperm.xlu0 %5429, %v5416
    %v5431 = vpop.permute.xlu0 %5430
    %5434 = vset.pattern.permute.xlu0 0
    %5435 = vperm.xlu0 %5434, %v5417
    %v5436 = vpop.permute.xlu0 %5435
    %v5442 = vunpack.c.l.b16 %v5410
    %v5443 = vunpack.c.l.b16 %v5411
    %v5444 = vunpack.c.l.b16 %v5412
    %v5445 = vunpack.c.l.b16 %v5413
    %v5446 = vpack.c.b16 %v5443, %v5442
    %v5447 = vpack.c.b16 %v5445, %v5444
    %v5449 = vsel %vm280, %v5446, 0
    %v5452 = vsel %vm280, %v5447, 0
    %5454 = vmatpush.bf16.msra.mxu0 0
    %5455 = vmatpush.bf16.msra.mxu0 0
    %5456 = vmatpush.bf16.msra.mxu0 0
    %5457 = vmatpush.bf16.msra.mxu0 0
    %5458 = vmatpush.bf16.msra.mxu0 0
    %5459 = vmatpush.bf16.msra.mxu0 0
    %5460 = vmatpush.bf16.msra.mxu0 %v5384
    %5461 = vmatpush.bf16.msra.mxu0 %v5382
    %5462 = vmatmul.bf16.gmra.mxu0 %v5449
    %v5463 = vpop.f32.mrf.mxu0
    %v5464 = vadd.f32 %v5421, %v5463
    %v5465 = vpop.f32.mrf.mxu0
    %v5466 = vadd.f32 %v5426, %v5465
    %5467 = vmatmul.bf16.gmra.mxu0 %v5452
    %v5468 = vpop.f32.mrf.mxu0
    %v5469 = vadd.f32 %v5431, %v5468
    %v5470 = vpop.f32.mrf.mxu0
    %v5471 = vadd.f32 %v5436, %v5470
    %5472 = vdwg.mxu0
    %5473 = vmatpush.bf16.msra.mxu0 0
    %5474 = vmatpush.bf16.msra.mxu0 0
    %5475 = vmatpush.bf16.msra.mxu0 0
    %5476 = vmatpush.bf16.msra.mxu0 0
    %5477 = vmatpush.bf16.msra.mxu0 0
    %5478 = vmatpush.bf16.msra.mxu0 0
    %5479 = vmatpush.bf16.msra.mxu0 %v5385
    %5480 = vmatpush.bf16.msra.mxu0 %v5383
    %5481 = vmatmul.bf16.gmra.mxu0 %v5449
    %v5482 = vpop.f32.mrf.mxu0
    %v5483 = vadd.f32 %v5421, %v5482
    %v5484 = vpop.f32.mrf.mxu0
    %v5485 = vadd.f32 %v5426, %v5484
    %5486 = vmatmul.bf16.gmra.mxu0 %v5452
    %v5487 = vpop.f32.mrf.mxu0
    %v5488 = vadd.f32 %v5431, %v5487
    %v5489 = vpop.f32.mrf.mxu0
    %v5490 = vadd.f32 %v5436, %v5489
    %5491 = vdwg.mxu0
    %5492 = vmatpush.bf16.msra.mxu0 0
    %5493 = vmatpush.bf16.msra.mxu0 0
    %5494 = vmatpush.bf16.msra.mxu0 0
    %5495 = vmatpush.bf16.msra.mxu0 0
    %5496 = vmatpush.bf16.msra.mxu0 0
    %5497 = vmatpush.bf16.msra.mxu0 0
    %5498 = vmatpush.bf16.msra.mxu0 %v5408
    %5499 = vmatpush.bf16.msra.mxu0 %v5406
    %5500 = vmatmul.bf16.gmra.mxu0 %v5449
    %v5501 = vpop.f32.mrf.mxu0
    %v5502 = vadd.f32 %v5421, %v5501
    %v5503 = vpop.f32.mrf.mxu0
    %v5504 = vadd.f32 %v5426, %v5503
    %5505 = vmatmul.bf16.gmra.mxu0 %v5452
    %v5506 = vpop.f32.mrf.mxu0
    %v5507 = vadd.f32 %v5431, %v5506
    %v5508 = vpop.f32.mrf.mxu0
    %v5509 = vadd.f32 %v5436, %v5508
    %5510 = vdwg.mxu0
    %5511 = vmatpush.bf16.msra.mxu0 0
    %5512 = vmatpush.bf16.msra.mxu0 0
    %5513 = vmatpush.bf16.msra.mxu0 0
    %5514 = vmatpush.bf16.msra.mxu0 0
    %5515 = vmatpush.bf16.msra.mxu0 0
    %5516 = vmatpush.bf16.msra.mxu0 0
    %5517 = vmatpush.bf16.msra.mxu0 %v5409
    %5518 = vmatpush.bf16.msra.mxu0 %v5407
    %5519 = vmatmul.bf16.gmra.mxu0 %v5449
    %v5520 = vpop.f32.mrf.mxu0
    %v5521 = vadd.f32 %v5421, %v5520
    %v5522 = vpop.f32.mrf.mxu0
    %v5523 = vadd.f32 %v5426, %v5522
    %5524 = vmatmul.bf16.gmra.mxu0 %v5452
    %v5525 = vpop.f32.mrf.mxu0
    %v5526 = vadd.f32 %v5431, %v5525
    %v5527 = vpop.f32.mrf.mxu0
    %v5528 = vadd.f32 %v5436, %v5527
    %5529 = vdwg.mxu0
    %v5530 = vpack.c.bf16 %v5466, %v5464
    %v5531 = vpack.c.bf16 %v5485, %v5483
    %v5532 = vpack.c.bf16 %v5471, %v5469
    %v5533 = vpack.c.bf16 %v5490, %v5488
    %v5534 = vunpack.c.l.bf16 %v5530
    %v5535 = vunpack.c.l.bf16 %v5531
    %v5536 = vunpack.c.h.bf16 %v5530
    %v5537 = vunpack.c.h.bf16 %v5531
    %v5538 = vunpack.c.l.bf16 %v5532
    %v5539 = vunpack.c.l.bf16 %v5533
    %v5540 = vunpack.c.h.bf16 %v5532
    %v5541 = vunpack.c.h.bf16 %v5533
    %v5542 = vtanh.pop %v5534
    %v5543 = vtanh.pop %v5535
    %v5544 = vtanh.pop %v5536
    %v5545 = vtanh.pop %v5537
    %v5546 = vtanh.pop %v5538
    %v5547 = vtanh.pop %v5539
    %v5548 = vtanh.pop %v5540
    %v5549 = vtanh.pop %v5541
    %v5550 = vpack.c.bf16 %v5544, %v5542
    %v5551 = vpack.c.bf16 %v5545, %v5543
    %v5552 = vpack.c.bf16 %v5548, %v5546
    %v5553 = vpack.c.bf16 %v5549, %v5547
    %v5554 = vpack.c.bf16 %v5504, %v5502
    %v5555 = vpack.c.bf16 %v5523, %v5521
    %v5556 = vpack.c.bf16 %v5509, %v5507
    %v5557 = vpack.c.bf16 %v5528, %v5526
    %v5558 = vunpack.c.l.bf16 %v5554
    %v5559 = vunpack.c.l.bf16 %v5555
    %v5560 = vunpack.c.h.bf16 %v5554
    %v5561 = vunpack.c.h.bf16 %v5555
    %v5562 = vunpack.c.l.bf16 %v5556
    %v5563 = vunpack.c.l.bf16 %v5557
    %v5564 = vunpack.c.h.bf16 %v5556
    %v5565 = vunpack.c.h.bf16 %v5557
    %v5566 = vtanh.pop %v5558
    %v5567 = vtanh.pop %v5559
    %v5568 = vtanh.pop %v5560
    %v5569 = vtanh.pop %v5561
    %v5570 = vtanh.pop %v5562
    %v5571 = vtanh.pop %v5563
    %v5572 = vtanh.pop %v5564
    %v5573 = vtanh.pop %v5565
    %v5574 = vpack.c.bf16 %v5568, %v5566
    %v5575 = vpack.c.bf16 %v5569, %v5567
    %v5576 = vpack.c.bf16 %v5572, %v5570
    %v5577 = vpack.c.bf16 %v5573, %v5571
    %v5578 = vld [vmem:[%s1261] sm:$0xf]
    %v5579 = vld [vmem:[%s1261 + $0x4] sm:$0xf]
    %v5580 = vld [vmem:[%s1261 + $0x8] sm:$0xf]
    %v5581 = vld [vmem:[%s1261 + $0xc] sm:$0xf]
    %v5582 = vld [vmem:[%s1266] sm:$0xff]
    %v5583 = vld [vmem:[%s1266 + $0x8] sm:$0xff]
    %v5584 = vld [vmem:[%s1266 + $0x10] sm:$0xff]
    %v5585 = vld [vmem:[%s1266 + $0x18] sm:$0xff]
    %5587 = vset.pattern.permute.xlu0 0
    %5588 = vperm.xlu0 %5587, %v5582
    %v5589 = vpop.permute.xlu0 %5588
    %5592 = vset.pattern.permute.xlu0 0
    %5593 = vperm.xlu0 %5592, %v5583
    %v5594 = vpop.permute.xlu0 %5593
    %5597 = vset.pattern.permute.xlu0 0
    %5598 = vperm.xlu0 %5597, %v5584
    %v5599 = vpop.permute.xlu0 %5598
    %5602 = vset.pattern.permute.xlu0 0
    %5603 = vperm.xlu0 %5602, %v5585
    %v5604 = vpop.permute.xlu0 %5603
    %v5610 = vunpack.c.l.b16 %v5578
    %v5611 = vunpack.c.l.b16 %v5579
    %v5612 = vunpack.c.l.b16 %v5580
    %v5613 = vunpack.c.l.b16 %v5581
    %v5614 = vpack.c.b16 %v5611, %v5610
    %v5615 = vpack.c.b16 %v5613, %v5612
    %v5617 = vsel %vm280, %v5614, 0
    %v5620 = vsel %vm280, %v5615, 0
    %5622 = vmatpush.bf16.msra.mxu0 0
    %5623 = vmatpush.bf16.msra.mxu0 0
    %5624 = vmatpush.bf16.msra.mxu0 0
    %5625 = vmatpush.bf16.msra.mxu0 0
    %5626 = vmatpush.bf16.msra.mxu0 0
    %5627 = vmatpush.bf16.msra.mxu0 0
    %5628 = vmatpush.bf16.msra.mxu0 %v5552
    %5629 = vmatpush.bf16.msra.mxu0 %v5550
    %5630 = vmatmul.bf16.gmra.mxu0 %v5617
    %v5631 = vpop.f32.mrf.mxu0
    %v5632 = vadd.f32 %v5589, %v5631
    %v5633 = vpop.f32.mrf.mxu0
    %v5634 = vadd.f32 %v5594, %v5633
    %5635 = vmatmul.bf16.gmra.mxu0 %v5620
    %v5636 = vpop.f32.mrf.mxu0
    %v5637 = vadd.f32 %v5599, %v5636
    %v5638 = vpop.f32.mrf.mxu0
    %v5639 = vadd.f32 %v5604, %v5638
    %5640 = vdwg.mxu0
    %5641 = vmatpush.bf16.msra.mxu0 0
    %5642 = vmatpush.bf16.msra.mxu0 0
    %5643 = vmatpush.bf16.msra.mxu0 0
    %5644 = vmatpush.bf16.msra.mxu0 0
    %5645 = vmatpush.bf16.msra.mxu0 0
    %5646 = vmatpush.bf16.msra.mxu0 0
    %5647 = vmatpush.bf16.msra.mxu0 %v5553
    %5648 = vmatpush.bf16.msra.mxu0 %v5551
    %5649 = vmatmul.bf16.gmra.mxu0 %v5617
    %v5650 = vpop.f32.mrf.mxu0
    %v5651 = vadd.f32 %v5589, %v5650
    %v5652 = vpop.f32.mrf.mxu0
    %v5653 = vadd.f32 %v5594, %v5652
    %5654 = vmatmul.bf16.gmra.mxu0 %v5620
    %v5655 = vpop.f32.mrf.mxu0
    %v5656 = vadd.f32 %v5599, %v5655
    %v5657 = vpop.f32.mrf.mxu0
    %v5658 = vadd.f32 %v5604, %v5657
    %5659 = vdwg.mxu0
    %5660 = vmatpush.bf16.msra.mxu0 0
    %5661 = vmatpush.bf16.msra.mxu0 0
    %5662 = vmatpush.bf16.msra.mxu0 0
    %5663 = vmatpush.bf16.msra.mxu0 0
    %5664 = vmatpush.bf16.msra.mxu0 0
    %5665 = vmatpush.bf16.msra.mxu0 0
    %5666 = vmatpush.bf16.msra.mxu0 %v5576
    %5667 = vmatpush.bf16.msra.mxu0 %v5574
    %5668 = vmatmul.bf16.gmra.mxu0 %v5617
    %v5669 = vpop.f32.mrf.mxu0
    %v5670 = vadd.f32 %v5589, %v5669
    %v5671 = vpop.f32.mrf.mxu0
    %v5672 = vadd.f32 %v5594, %v5671
    %5673 = vmatmul.bf16.gmra.mxu0 %v5620
    %v5674 = vpop.f32.mrf.mxu0
    %v5675 = vadd.f32 %v5599, %v5674
    %v5676 = vpop.f32.mrf.mxu0
    %v5677 = vadd.f32 %v5604, %v5676
    %5678 = vdwg.mxu0
    %5679 = vmatpush.bf16.msra.mxu0 0
    %5680 = vmatpush.bf16.msra.mxu0 0
    %5681 = vmatpush.bf16.msra.mxu0 0
    %5682 = vmatpush.bf16.msra.mxu0 0
    %5683 = vmatpush.bf16.msra.mxu0 0
    %5684 = vmatpush.bf16.msra.mxu0 0
    %5685 = vmatpush.bf16.msra.mxu0 %v5577
    %5686 = vmatpush.bf16.msra.mxu0 %v5575
    %5687 = vmatmul.bf16.gmra.mxu0 %v5617
    %v5688 = vpop.f32.mrf.mxu0
    %v5689 = vadd.f32 %v5589, %v5688
    %v5690 = vpop.f32.mrf.mxu0
    %v5691 = vadd.f32 %v5594, %v5690
    %5692 = vmatmul.bf16.gmra.mxu0 %v5620
    %v5693 = vpop.f32.mrf.mxu0
    %v5694 = vadd.f32 %v5599, %v5693
    %v5695 = vpop.f32.mrf.mxu0
    %v5696 = vadd.f32 %v5604, %v5695
    %5697 = vdwg.mxu0
    %v5698 = vpack.c.bf16 %v5651, %v5632
    %v5699 = vpack.c.bf16 %v5653, %v5634
    %v5700 = vpack.c.bf16 %v5656, %v5637
    %v5701 = vpack.c.bf16 %v5658, %v5639
    %v5702 = vunpack.c.l.bf16 %v5698
    %v5703 = vunpack.c.h.bf16 %v5698
    %v5704 = vunpack.c.l.bf16 %v5699
    %v5705 = vunpack.c.h.bf16 %v5699
    %v5706 = vunpack.c.l.bf16 %v5700
    %v5707 = vunpack.c.h.bf16 %v5700
    %v5708 = vunpack.c.l.bf16 %v5701
    %v5709 = vunpack.c.h.bf16 %v5701
    %v5710 = vtanh.pop %v5702
    %v5711 = vtanh.pop %v5703
    %v5712 = vtanh.pop %v5704
    %v5713 = vtanh.pop %v5705
    %v5714 = vtanh.pop %v5706
    %v5715 = vtanh.pop %v5707
    %v5716 = vtanh.pop %v5708
    %v5717 = vtanh.pop %v5709
    %v5718 = vpack.c.bf16 %v5711, %v5710
    %v5719 = vpack.c.bf16 %v5713, %v5712
    %v5720 = vpack.c.bf16 %v5715, %v5714
    %v5721 = vpack.c.bf16 %v5717, %v5716
    %v5722 = vpack.c.bf16 %v5689, %v5670
    %v5723 = vpack.c.bf16 %v5691, %v5672
    %v5724 = vpack.c.bf16 %v5694, %v5675
    %v5725 = vpack.c.bf16 %v5696, %v5677
    %v5726 = vunpack.c.l.bf16 %v5722
    %v5727 = vunpack.c.h.bf16 %v5722
    %v5728 = vunpack.c.l.bf16 %v5723
    %v5729 = vunpack.c.h.bf16 %v5723
    %v5730 = vunpack.c.l.bf16 %v5724
    %v5731 = vunpack.c.h.bf16 %v5724
    %v5732 = vunpack.c.l.bf16 %v5725
    %v5733 = vunpack.c.h.bf16 %v5725
    %v5734 = vtanh.pop %v5726
    %v5735 = vtanh.pop %v5727
    %v5736 = vtanh.pop %v5728
    %v5737 = vtanh.pop %v5729
    %v5738 = vtanh.pop %v5730
    %v5739 = vtanh.pop %v5731
    %v5740 = vtanh.pop %v5732
    %v5741 = vtanh.pop %v5733
    %v5742 = vpack.c.bf16 %v5735, %v5734
    %v5743 = vpack.c.bf16 %v5737, %v5736
    %v5744 = vpack.c.bf16 %v5739, %v5738
    %v5745 = vpack.c.bf16 %v5741, %v5740
    %v5746 = vunpack.c.l.bf16 %v5718
    %v5747 = vunpack.c.h.bf16 %v5718
    %v5748 = vunpack.c.l.bf16 %v5719
    %v5749 = vunpack.c.h.bf16 %v5719
    %v5750 = vunpack.c.l.bf16 %v5720
    %v5751 = vunpack.c.h.bf16 %v5720
    %v5752 = vunpack.c.l.bf16 %v5721
    %v5753 = vunpack.c.h.bf16 %v5721
    %v5754 = vmul.f32 %v1442, %v5746
    %v5755 = vmul.f32 %v1442, %v5747
    %v5756 = vmul.f32 %v1447, %v5748
    %v5757 = vmul.f32 %v1447, %v5749
    %v5758 = vmul.f32 %v1452, %v5750
    %v5759 = vmul.f32 %v1452, %v5751
    %v5760 = vmul.f32 %v1457, %v5752
    %v5761 = vmul.f32 %v1457, %v5753
    %v5762 = vadd.f32 %v5754, %v5756
    %v5763 = vadd.f32 %v5762, %v5758
    %v5764 = vadd.f32 %v5763, %v5760
    %v5765 = vrot.slane %v5764, 4
    %v5766 = vadd.f32 %v5764, %v5765
    %v5767 = vrot.slane %v5766, 2
    %v5768 = vadd.f32 %v5766, %v5767
    %v5769 = vrot.slane %v5768, 1
    %v5770 = vadd.f32 %v5768, %v5769
    %v5771 = vadd.f32 %v5755, %v5757
    %v5772 = vadd.f32 %v5771, %v5759
    %v5773 = vadd.f32 %v5772, %v5761
    %v5774 = vrot.slane %v5773, 4
    %v5775 = vadd.f32 %v5773, %v5774
    %v5776 = vrot.slane %v5775, 2
    %v5777 = vadd.f32 %v5775, %v5776
    %v5778 = vrot.slane %v5777, 1
    %v5779 = vadd.f32 %v5777, %v5778
    %v5780 = vadd.f32 %v5770, %v1490
    %v5781 = vadd.f32 %v5779, %v1490
    %v5782 = vunpack.c.l.bf16 %v5742
    %v5783 = vunpack.c.h.bf16 %v5742
    %v5784 = vunpack.c.l.bf16 %v5743
    %v5785 = vunpack.c.h.bf16 %v5743
    %v5786 = vunpack.c.l.bf16 %v5744
    %v5787 = vunpack.c.h.bf16 %v5744
    %v5788 = vunpack.c.l.bf16 %v5745
    %v5789 = vunpack.c.h.bf16 %v5745
    %v5790 = vmul.f32 %v1442, %v5782
    %v5791 = vmul.f32 %v1442, %v5783
    %v5792 = vmul.f32 %v1447, %v5784
    %v5793 = vmul.f32 %v1447, %v5785
    %v5794 = vmul.f32 %v1452, %v5786
    %v5795 = vmul.f32 %v1452, %v5787
    %v5796 = vmul.f32 %v1457, %v5788
    %v5797 = vmul.f32 %v1457, %v5789
    %v5798 = vadd.f32 %v5790, %v5792
    %v5799 = vadd.f32 %v5798, %v5794
    %v5800 = vadd.f32 %v5799, %v5796
    %v5801 = vrot.slane %v5800, 4
    %v5802 = vadd.f32 %v5800, %v5801
    %v5803 = vrot.slane %v5802, 2
    %v5804 = vadd.f32 %v5802, %v5803
    %v5805 = vrot.slane %v5804, 1
    %v5806 = vadd.f32 %v5804, %v5805
    %v5807 = vadd.f32 %v5791, %v5793
    %v5808 = vadd.f32 %v5807, %v5795
    %v5809 = vadd.f32 %v5808, %v5797
    %v5810 = vrot.slane %v5809, 4
    %v5811 = vadd.f32 %v5809, %v5810
    %v5812 = vrot.slane %v5811, 2
    %v5813 = vadd.f32 %v5811, %v5812
    %v5814 = vrot.slane %v5813, 1
    %v5815 = vadd.f32 %v5813, %v5814
    %v5816 = vadd.f32 %v5806, %v1490
    %v5817 = vadd.f32 %v5815, %v1490
    %v5820 = vrot.slane %v5781, 7
    %v5821 = vsel %vm1532, %v5780, %v5820
    %5823 = vst.msk [vmem:[#allocation3 + $0xc] sm:$0x3] %vm1538, %v5821
    %v5826 = vrot.slane %v5817, 7
    %v5827 = vsel %vm1532, %v5816, %v5826
    %5829 = vst.msk [vmem:[#allocation3 + $0xe] sm:$0x3] %vm1538, %v5827
    // Predicated region
    $region26: #{dnn_forward.1} parent=1 // pred_check
      _
    $region27: #{dnn_forward.1} parent=1 // pred_check_branch
      %5831 = sbr.rel (0) target = $region29
    $region28: #{dnn_forward.1} parent=1 // pred_region
      %5833 = vsyncadd [#allocation4], 0
      %s5835 = sshll.u32 [#allocation3], 4
      %s5836 = int_to_ptr.vmem [resolvable:$true] %s5835
      %s5837 = sshll.u32 %s6, 4
      %s5838 = int_to_ptr.hbm [resolvable:$true] %s5837
      %5840 = dma.vmem_to_hbm [thread:$0]  %s5836, 256, %s5838, [#allocation4]
    $region29: #{dnn_forward.1} parent=1 // pred_fallthru
      _
    // Predicated region
    $region30: #{dnn_forward.1} parent=1 // pred_check
      _
    $region31: #{dnn_forward.1} parent=1 // pred_check_branch
      %5842 = sbr.rel (0) target = $region33
    $region32: #{dnn_forward.1} parent=1 // pred_region
      %5844 = dma.done [#allocation4], 256
    $region33: #{dnn_forward.1} parent=1 // pred_fallthru
      _
    %5845 = vsyncpa [#allocation4], 1

</llo_original>
